<compile_context>
chip_gen: v5e
topology: v5e:2x2
jax: 0.10.0
libtpu: 0.0.40
codegen_flags: <defaults>
</compile_context>

<pallas_src>
import functools
import math

import jax
import jax.numpy as jnp
import numpy as np
from jax.experimental import pallas as pl
from jax.experimental.pallas import tpu as pltpu


def _round_up(x, m):
    return (x + m - 1) // m * m


# ----------------------------------------------------------------------------
# Fused Inception-block kernel
# ----------------------------------------------------------------------------
def _inception_kernel(P, M, B, C1, C3r, C5r,
                      x_ref, mask_ref,
                      wf_ref, bf_ref, wp_ref, bp_ref,
                      w2_ref, b2_ref, w3a_ref, b3a_ref, w3b_ref, b3b_ref,
                      o_ref,
                      fe2_ref, fe3_ref, y3a_ref):
    xv = x_ref[0]                                   # ((H+3)*P, Cin) bf16, zero-padded
    mlf = mask_ref[...]                             # (Lf, 1) f32; 1.0 at valid pixels
    valid = mlf[P + 1:P + 1 + M, :]                 # (M, 1) validity of output rows

    # ---- front-end: b1 / b2-reduce / b3-reduce 1x1 convs as ONE MXU matmul ----
    xc = xv[P + 1:P + 1 + M, :]                     # centre view = the unpadded pixels
    a = jnp.dot(xc, wf_ref[...], preferred_element_type=jnp.float32)
    a = jnp.maximum(a + bf_ref[...], 0.0)
    y1 = a[:, :C1]
    fe2 = a[:, C1:C1 + C3r] * valid                 # zero junk columns: conv halo = 0
    fe3 = a[:, C1 + C3r:] * valid

    # park the reduce outputs in zero-haloed padded-flat scratch for the 3x3 convs
    fe2_ref[...] = jnp.zeros_like(fe2_ref)
    fe3_ref[...] = jnp.zeros_like(fe3_ref)
    y3a_ref[...] = jnp.zeros_like(y3a_ref)
    fe2_ref[pl.ds(B, M), :] = fe2.astype(fe2_ref.dtype)   # B is a multiple of 8
    fe3_ref[pl.ds(B, M), :] = fe3.astype(fe3_ref.dtype)

    # ---- 3x3 conv: in-kernel im2col packed along K -> ONE MXU matmul per conv ----
    def conv3x3(src_ref, w_ref, b_ref):
        base = B - P - 1                            # di*P offsets stay sublane-aligned
        cols = [src_ref[pl.ds(base + di * P + dj, M), :]
                for di in range(3) for dj in range(3)]
        patches = jnp.concatenate(cols, axis=-1)    # (M, 9*Cin) bf16
        y = jnp.dot(patches, w_ref[...], preferred_element_type=jnp.float32)
        return jnp.maximum(y + b_ref[...], 0.0)

    y2 = conv3x3(fe2_ref, w2_ref, b2_ref)                         # b2: 3x3

    y3a = conv3x3(fe3_ref, w3a_ref, b3a_ref)                      # b3: first 3x3
    y3a_ref[pl.ds(B, M), :] = (y3a * valid).astype(y3a_ref.dtype)
    y3 = conv3x3(y3a_ref, w3b_ref, b3b_ref)                       # b3: second 3x3

    # ---- b4: 3x3 stride-1 max-pool (separable) + 1x1 projection ----------------
    # pad positions get a huge negative value (finite, so arithmetic masking below
    # cannot create NaN); the window centre is always valid so it never wins.
    negoff = ((mlf - 1.0) * 1e30).astype(xv.dtype)  # (Lf, 1): 0 valid, -1e30 pad
    xneg = xv + negoff
    L = M + 2 * P
    cm = jnp.maximum(jnp.maximum(xneg[0:L, :], xneg[1:L + 1, :]), xneg[2:L + 2, :])
    pooled = jnp.maximum(jnp.maximum(cm[0:M, :], cm[P:P + M, :]),
                         cm[2 * P:2 * P + M, :])
    pooled = (pooled.astype(jnp.float32) * valid).astype(xv.dtype)
    y4 = jnp.dot(pooled, wp_ref[...], preferred_element_type=jnp.float32)
    y4 = jnp.maximum(y4 + bp_ref[...], 0.0)

    # ---- single lane-dense store of torch.cat([y1, y2, y3, y4], channel) -------
    o_ref[0] = jnp.concatenate([y1, y2, y3, y4], axis=-1).astype(o_ref.dtype)


# ----------------------------------------------------------------------------
# Wrapper: padded-flat layout + one pallas_call
# ----------------------------------------------------------------------------
def inception_block(x_nhwc, p):
    """x: (N, H, W, Cin) bf16 -> (N, H, W, C1+C3+C5+Cp) bf16."""
    N, H, W, Cin = x_nhwc.shape
    C1 = p['w1'].shape[1]
    C3r = p['w2r'].shape[1]
    C3 = p['w2'].shape[1]
    C5r = p['w3r'].shape[1]
    C5 = p['w3b'].shape[1]
    Cp = p['wp'].shape[1]
    Cfront = C1 + C3r + C5r
    Ctot = C1 + C3 + C5 + Cp

    P = _round_up(W + 2, 8)        # flat row pitch, sublane aligned
    M = H * P                      # flat output rows (junk cols sliced after the call)
    Lf = (H + 3) * P               # padded-flat input rows
    B = P + 8                      # scratch base offset (multiple of 8)
    Ls = M + 2 * P + 16            # scratch rows (covers all 9 tap views)

    # zero-padded flat input slab: pixel (h, w) lives at flat row (h+1)*P + (w+1)
    xp = jnp.pad(x_nhwc, ((0, 0), (1, 2), (1, P - W - 1), (0, 0)))
    xf = xp.reshape(N, Lf, Cin)

    # validity mask over padded-flat rows (compile-time constant, shared by batch)
    r = np.arange(Lf)
    i, j = r // P, r % P
    mask = ((i >= 1) & (i <= H) & (j >= 1) & (j <= W)).astype(np.float32)
    mask = jnp.asarray(mask.reshape(Lf, 1))

    wf = jnp.concatenate([p['w1'], p['w2r'], p['w3r']], axis=1)     # fused 1x1 weights
    bf = jnp.concatenate([p['b1'], p['b2r'], p['b3r']]).reshape(1, Cfront)

    kernel = functools.partial(_inception_kernel, P, M, B, C1, C3r, C5r)
    out = pl.pallas_call(
        kernel,
        out_shape=jax.ShapeDtypeStruct((N, M, Ctot), x_nhwc.dtype),
        grid=(N,),
        in_specs=[
            pl.BlockSpec((1, Lf, Cin), lambda n: (n, 0, 0)),
            pl.BlockSpec((Lf, 1), lambda n: (0, 0)),
            pl.BlockSpec((Cin, Cfront), lambda n: (0, 0)),
            pl.BlockSpec((1, Cfront), lambda n: (0, 0)),
            pl.BlockSpec((Cin, Cp), lambda n: (0, 0)),
            pl.BlockSpec((1, Cp), lambda n: (0, 0)),
            pl.BlockSpec((9 * C3r, C3), lambda n: (0, 0)),
            pl.BlockSpec((1, C3), lambda n: (0, 0)),
            pl.BlockSpec((9 * C5r, C5), lambda n: (0, 0)),
            pl.BlockSpec((1, C5), lambda n: (0, 0)),
            pl.BlockSpec((9 * C5, C5), lambda n: (0, 0)),
            pl.BlockSpec((1, C5), lambda n: (0, 0)),
        ],
        out_specs=pl.BlockSpec((1, M, Ctot), lambda n: (n, 0, 0)),
        scratch_shapes=[
            pltpu.VMEM((Ls, C3r), jnp.bfloat16),
            pltpu.VMEM((Ls, C5r), jnp.bfloat16),
            pltpu.VMEM((Ls, C5), jnp.bfloat16),
        ],
        compiler_params=pltpu.CompilerParams(
            dimension_semantics=("parallel",),          # one image per TensorCore
            vmem_limit_bytes=32 * 1024 * 1024),
    )(xf, mask,
      wf, bf, p['wp'], p['bp'].reshape(1, Cp),
      p['w2'], p['b2'].reshape(1, C3),
      p['w3a'], p['b3a'].reshape(1, C5),
      p['w3b'], p['b3b'].reshape(1, C5))

    # drop the P-W junk columns per flat row: (N, M, Ctot) -> (N, H, W, Ctot)
    return out.reshape(N, H, P, Ctot)[:, :, :W, :]


# ----------------------------------------------------------------------------
# Parameters (deterministic synthetic; eval-mode BN folded into conv)
# ----------------------------------------------------------------------------
def init_conv_bn(key, cin, cout, k):
    k1, k2, k3, k4, k5, k6 = jax.random.split(key, 6)
    fan_in = cin * k * k
    w = jax.random.normal(k1, (k, k, cin, cout), jnp.float32) / math.sqrt(fan_in)
    b_conv = 0.05 * jax.random.normal(k2, (cout,), jnp.float32)
    gamma = 1.0 + 0.1 * jax.random.normal(k3, (cout,), jnp.float32)
    beta = 0.05 * jax.random.normal(k4, (cout,), jnp.float32)
    mean = 0.05 * jax.random.normal(k5, (cout,), jnp.float32)
    var = 1.0 + 0.1 * jnp.abs(jax.random.normal(k6, (cout,), jnp.float32))
    scale = gamma / jnp.sqrt(var + 1e-5)
    eff_bias = (b_conv - mean) * scale + beta
    wf = (w * scale).astype(jnp.bfloat16)          # fold BN scale; bf16 for the MXU
    # k=1 -> (Cin, Cout); k=3 -> (9*Cin, Cout), rows ordered (tap di*3+dj, cin)
    return wf.reshape(k * k * cin, cout), eff_bias


def init_inception(key, in_planes, n1, n3r, n3, n5r, n5, pp):
    ks = jax.random.split(key, 7)
    p = {}
    p['w1'], p['b1'] = init_conv_bn(ks[0], in_planes, n1, 1)
    p['w2r'], p['b2r'] = init_conv_bn(ks[1], in_planes, n3r, 1)
    p['w2'], p['b2'] = init_conv_bn(ks[2], n3r, n3, 3)
    p['w3r'], p['b3r'] = init_conv_bn(ks[3], in_planes, n5r, 1)
    p['w3a'], p['b3a'] = init_conv_bn(ks[4], n5r, n5, 3)
    p['w3b'], p['b3b'] = init_conv_bn(ks[5], n5, n5, 3)
    p['wp'], p['bp'] = init_conv_bn(ks[6], in_planes, pp, 1)
    return p


# ----------------------------------------------------------------------------
# Pure-JAX reference (same folded bf16 weights, same bf16 intermediate rounding)
# ----------------------------------------------------------------------------
def reference_inception(x_nhwc_bf16, p):
    x = x_nhwc_bf16.astype(jnp.float32)

    def conv1x1(v, w, b):
        y = jnp.einsum('nhwc,co->nhwo', v, w.astype(jnp.float32)) + b
        return jnp.maximum(y, 0.0)

    def conv3x3(v, w, b):
        cin = w.shape[0] // 9
        w4 = w.reshape(3, 3, cin, -1).astype(jnp.float32)
        y = jax.lax.conv_general_dilated(
            v, w4, window_strides=(1, 1), padding='SAME',
            dimension_numbers=('NHWC', 'HWIO', 'NHWC')) + b
        return jnp.maximum(y, 0.0)

    def q(v):  # kernel stores branch intermediates as bf16
        return v.astype(jnp.bfloat16).astype(jnp.float32)

    y1 = conv1x1(x, p['w1'], p['b1'])
    y2 = conv3x3(q(conv1x1(x, p['w2r'], p['b2r'])), p['w2'], p['b2'])
    t = q(conv1x1(x, p['w3r'], p['b3r']))
    t = q(conv3x3(t, p['w3a'], p['b3a']))
    y3 = conv3x3(t, p['w3b'], p['b3b'])
    pooled = jax.lax.reduce_window(x, -jnp.inf, jax.lax.max,
                                   (1, 3, 3, 1), (1, 1, 1, 1), 'SAME')
    y4 = conv1x1(q(pooled), p['wp'], p['bp'])
    return jnp.concatenate([y1, y2, y3, y4], axis=-1)


# ----------------------------------------------------------------------------
if __name__ == "__main__":
    key = jax.random.PRNGKey(0)
    kp, kx = jax.random.split(key)

    # Inception(in_planes=16, n1x1=32, n3x3red=16, n3x3=48, n5x5red=8, n5x5=16,
    #           pool_planes=32) on a (2, 16, 16, 16) NCHW input -> 128 out channels.
    N, Cin, H, W = 2, 16, 16, 16
    cfg = dict(in_planes=Cin, n1=32, n3r=16, n3=48, n5r=8, n5=16, pp=32)
    params = init_inception(kp, **cfg)

    x_nchw = jax.random.normal(kx, (N, Cin, H, W), jnp.float32)

    @jax.jit
    def forward(p, x):
        xh = jnp.transpose(x, (0, 2, 3, 1)).astype(jnp.bfloat16)     # NCHW -> NHWC
        y = inception_block(xh, p)
        return jnp.transpose(y, (0, 3, 1, 2)).astype(jnp.float32)    # NCHW, like torch

    @jax.jit
    def forward_ref(p, x):
        xh = jnp.transpose(x, (0, 2, 3, 1)).astype(jnp.bfloat16)
        y = reference_inception(xh, p)
        return jnp.transpose(y, (0, 3, 1, 2))

    out = jax.block_until_ready(forward(params, x_nchw))
    ref = jax.block_until_ready(forward_ref(params, x_nchw))

    ctot = cfg['n1'] + cfg['n3'] + cfg['n5'] + cfg['pp']
    assert out.shape == (N, ctot, H, W), out.shape
    assert bool(jnp.isfinite(out).all())
    err = float(jnp.max(jnp.abs(out - ref)))
    assert err < 1e-1, f"max abs diff vs reference: {err}"
    print("KERNEL_OK")
</pallas_src>

<mosaic_0001>
module attributes {stable_mosaic.version = 11 : i64} {
  func.func @_inception_kernel(%arg0: i32, %arg1: memref<1x456x16xbf16, #tpu.memory_space<vmem>>, %arg2: memref<456x1xf32, #tpu.memory_space<vmem>>, %arg3: memref<16x56xbf16, #tpu.memory_space<vmem>>, %arg4: memref<1x56xf32, #tpu.memory_space<vmem>>, %arg5: memref<16x32xbf16, #tpu.memory_space<vmem>>, %arg6: memref<1x32xf32, #tpu.memory_space<vmem>>, %arg7: memref<144x48xbf16, #tpu.memory_space<vmem>>, %arg8: memref<1x48xf32, #tpu.memory_space<vmem>>, %arg9: memref<72x16xbf16, #tpu.memory_space<vmem>>, %arg10: memref<1x16xf32, #tpu.memory_space<vmem>>, %arg11: memref<144x16xbf16, #tpu.memory_space<vmem>>, %arg12: memref<1x16xf32, #tpu.memory_space<vmem>>, %arg13: memref<1x384x128xbf16, #tpu.memory_space<vmem>>, %arg14: memref<448x16xbf16, #tpu.memory_space<vmem>>, %arg15: memref<448x8xbf16, #tpu.memory_space<vmem>>, %arg16: memref<448x16xbf16, #tpu.memory_space<vmem>>) attributes {dimension_semantics = [#tpu.dimension_semantics<parallel>], iteration_bounds = array<i64: 2>, scalar_prefetch = 0 : i64, scratch_operands = 3 : i64, tpu.core_type = #tpu.core_type<tc>, window_params = [{transform_indices = @transform_0, window_bounds = array<i64: 1, 456, 16>}, {pipeline_mode = #tpu.pipeline_mode<synchronous>, transform_indices = @transform_1, window_bounds = array<i64: 456, 1>}, {pipeline_mode = #tpu.pipeline_mode<synchronous>, transform_indices = @transform_2, window_bounds = array<i64: 16, 56>}, {pipeline_mode = #tpu.pipeline_mode<synchronous>, transform_indices = @transform_3, window_bounds = array<i64: 1, 56>}, {pipeline_mode = #tpu.pipeline_mode<synchronous>, transform_indices = @transform_4, window_bounds = array<i64: 16, 32>}, {pipeline_mode = #tpu.pipeline_mode<synchronous>, transform_indices = @transform_5, window_bounds = array<i64: 1, 32>}, {pipeline_mode = #tpu.pipeline_mode<synchronous>, transform_indices = @transform_6, window_bounds = array<i64: 144, 48>}, {pipeline_mode = #tpu.pipeline_mode<synchronous>, transform_indices = @transform_7, window_bounds = array<i64: 1, 48>}, {pipeline_mode = #tpu.pipeline_mode<synchronous>, transform_indices = @transform_8, window_bounds = array<i64: 72, 16>}, {pipeline_mode = #tpu.pipeline_mode<synchronous>, transform_indices = @transform_9, window_bounds = array<i64: 1, 16>}, {pipeline_mode = #tpu.pipeline_mode<synchronous>, transform_indices = @transform_10, window_bounds = array<i64: 144, 16>}, {pipeline_mode = #tpu.pipeline_mode<synchronous>, transform_indices = @transform_11, window_bounds = array<i64: 1, 16>}, {transform_indices = @transform_12, window_bounds = array<i64: 1, 384, 128>}]} {
    %c0 = arith.constant 0 : index
    %c0_0 = arith.constant 0 : index
    %c0_1 = arith.constant 0 : index
    %0 = vector.load %arg1[%c0, %c0_0, %c0_1] : memref<1x456x16xbf16, #tpu.memory_space<vmem>>, vector<1x456x16xbf16>
    %1 = vector.shape_cast %0 : vector<1x456x16xbf16> to vector<456x16xbf16>
    %c0_2 = arith.constant 0 : index
    %c0_3 = arith.constant 0 : index
    %2 = vector.load %arg2[%c0_2, %c0_3] : memref<456x1xf32, #tpu.memory_space<vmem>>, vector<456x1xf32>
    %3 = vector.extract_strided_slice %2 {offsets = [25, 0], sizes = [384, 1], strides = [1, 1]} : vector<456x1xf32> to vector<384x1xf32>
    %4 = vector.extract_strided_slice %1 {offsets = [25, 0], sizes = [384, 16], strides = [1, 1]} : vector<456x16xbf16> to vector<384x16xbf16>
    %c0_4 = arith.constant 0 : index
    %c0_5 = arith.constant 0 : index
    %5 = vector.load %arg3[%c0_4, %c0_5] : memref<16x56xbf16, #tpu.memory_space<vmem>>, vector<16x56xbf16>
    %cst = arith.constant dense<0.000000e+00> : vector<384x56xf32>
    %6 = tpu.matmul %4, %5, %cst {dimension_numbers = #tpu.dot_dimension_numbers<[1], [0], [0], [1], [0, 0, 1, 1], [], []>} : vector<384x16xbf16>, vector<16x56xbf16>, vector<384x56xf32> -> vector<384x56xf32>
    %c0_6 = arith.constant 0 : index
    %c0_7 = arith.constant 0 : index
    %7 = vector.load %arg4[%c0_6, %c0_7] : memref<1x56xf32, #tpu.memory_space<vmem>>, vector<1x56xf32>
    %8 = vector.broadcast %7 : vector<1x56xf32> to vector<384x56xf32>
    %9 = arith.addf %6, %8 : vector<384x56xf32>
    %cst_8 = arith.constant 0.000000e+00 : f32
    %10 = vector.broadcast %cst_8 : f32 to vector<384x56xf32>
    %11 = arith.maximumf %9, %10 : vector<384x56xf32>
    %12 = vector.extract_strided_slice %11 {offsets = [0, 0], sizes = [384, 32], strides = [1, 1]} : vector<384x56xf32> to vector<384x32xf32>
    %13 = vector.extract_strided_slice %11 {offsets = [0, 32], sizes = [384, 16], strides = [1, 1]} : vector<384x56xf32> to vector<384x16xf32>
    %14 = vector.broadcast %3 : vector<384x1xf32> to vector<384x16xf32>
    %15 = arith.mulf %13, %14 : vector<384x16xf32>
    %16 = vector.extract_strided_slice %11 {offsets = [0, 48], sizes = [384, 8], strides = [1, 1]} : vector<384x56xf32> to vector<384x8xf32>
    %17 = vector.broadcast %3 : vector<384x1xf32> to vector<384x8xf32>
    %18 = arith.mulf %16, %17 : vector<384x8xf32>
    %cst_9 = arith.constant 0.000000e+00 : bf16
    %19 = vector.broadcast %cst_9 : bf16 to vector<448x16xbf16>
    %c0_10 = arith.constant 0 : index
    %c0_11 = arith.constant 0 : index
    %20 = vector.load %arg14[%c0_10, %c0_11] : memref<448x16xbf16, #tpu.memory_space<vmem>>, vector<448x16xbf16>
    tpu.vector_store %arg14[%c0_10, %c0_11], %19 {strides = array<i32>} : memref<448x16xbf16, #tpu.memory_space<vmem>>, vector<448x16xbf16>,
    %cst_12 = arith.constant 0.000000e+00 : bf16
    %21 = vector.broadcast %cst_12 : bf16 to vector<448x8xbf16>
    %c0_13 = arith.constant 0 : index
    %c0_14 = arith.constant 0 : index
    %22 = vector.load %arg15[%c0_13, %c0_14] : memref<448x8xbf16, #tpu.memory_space<vmem>>, vector<448x8xbf16>
    tpu.vector_store %arg15[%c0_13, %c0_14], %21 {strides = array<i32>} : memref<448x8xbf16, #tpu.memory_space<vmem>>, vector<448x8xbf16>,
    %cst_15 = arith.constant 0.000000e+00 : bf16
    %23 = vector.broadcast %cst_15 : bf16 to vector<448x16xbf16>
    %c0_16 = arith.constant 0 : index
    %c0_17 = arith.constant 0 : index
    %24 = vector.load %arg16[%c0_16, %c0_17] : memref<448x16xbf16, #tpu.memory_space<vmem>>, vector<448x16xbf16>
    tpu.vector_store %arg16[%c0_16, %c0_17], %23 {strides = array<i32>} : memref<448x16xbf16, #tpu.memory_space<vmem>>, vector<448x16xbf16>,
    %25 = arith.truncf %15 : vector<384x16xf32> to vector<384x16xbf16>
    %c32 = arith.constant 32 : index
    %c0_18 = arith.constant 0 : index
    %26 = vector.load %arg14[%c32, %c0_18] : memref<448x16xbf16, #tpu.memory_space<vmem>>, vector<384x16xbf16>
    tpu.vector_store %arg14[%c32, %c0_18], %25 {strides = array<i32>} : memref<448x16xbf16, #tpu.memory_space<vmem>>, vector<384x16xbf16>,
    %27 = arith.truncf %18 : vector<384x8xf32> to vector<384x8xbf16>
    %c32_19 = arith.constant 32 : index
    %c0_20 = arith.constant 0 : index
    %28 = vector.load %arg15[%c32_19, %c0_20] : memref<448x8xbf16, #tpu.memory_space<vmem>>, vector<384x8xbf16>
    tpu.vector_store %arg15[%c32_19, %c0_20], %27 {strides = array<i32>} : memref<448x8xbf16, #tpu.memory_space<vmem>>, vector<384x8xbf16>,
    %c7 = arith.constant 7 : index
    %c0_21 = arith.constant 0 : index
    %29 = vector.load %arg14[%c7, %c0_21] : memref<448x16xbf16, #tpu.memory_space<vmem>>, vector<384x16xbf16>
    %c8 = arith.constant 8 : index
    %c0_22 = arith.constant 0 : index
    %30 = vector.load %arg14[%c8, %c0_22] : memref<448x16xbf16, #tpu.memory_space<vmem>>, vector<384x16xbf16>
    %c9 = arith.constant 9 : index
    %c0_23 = arith.constant 0 : index
    %31 = vector.load %arg14[%c9, %c0_23] : memref<448x16xbf16, #tpu.memory_space<vmem>>, vector<384x16xbf16>
    %c31 = arith.constant 31 : index
    %c0_24 = arith.constant 0 : index
    %32 = vector.load %arg14[%c31, %c0_24] : memref<448x16xbf16, #tpu.memory_space<vmem>>, vector<384x16xbf16>
    %c32_25 = arith.constant 32 : index
    %c0_26 = arith.constant 0 : index
    %33 = vector.load %arg14[%c32_25, %c0_26] : memref<448x16xbf16, #tpu.memory_space<vmem>>, vector<384x16xbf16>
    %c33 = arith.constant 33 : index
    %c0_27 = arith.constant 0 : index
    %34 = vector.load %arg14[%c33, %c0_27] : memref<448x16xbf16, #tpu.memory_space<vmem>>, vector<384x16xbf16>
    %c55 = arith.constant 55 : index
    %c0_28 = arith.constant 0 : index
    %35 = vector.load %arg14[%c55, %c0_28] : memref<448x16xbf16, #tpu.memory_space<vmem>>, vector<384x16xbf16>
    %c56 = arith.constant 56 : index
    %c0_29 = arith.constant 0 : index
    %36 = vector.load %arg14[%c56, %c0_29] : memref<448x16xbf16, #tpu.memory_space<vmem>>, vector<384x16xbf16>
    %c57 = arith.constant 57 : index
    %c0_30 = arith.constant 0 : index
    %37 = vector.load %arg14[%c57, %c0_30] : memref<448x16xbf16, #tpu.memory_space<vmem>>, vector<384x16xbf16>
    %38 = tpu.concatenate %29, %30, %31, %32, %33, %34, %35, %36, %37 in 1 : vector<384x16xbf16>, vector<384x16xbf16>, vector<384x16xbf16>, vector<384x16xbf16>, vector<384x16xbf16>, vector<384x16xbf16>, vector<384x16xbf16>, vector<384x16xbf16>, vector<384x16xbf16> -> vector<384x144xbf16>
    %c0_31 = arith.constant 0 : index
    %c0_32 = arith.constant 0 : index
    %39 = vector.load %arg7[%c0_31, %c0_32] : memref<144x48xbf16, #tpu.memory_space<vmem>>, vector<144x48xbf16>
    %cst_33 = arith.constant dense<0.000000e+00> : vector<384x48xf32>
    %40 = tpu.matmul %38, %39, %cst_33 {dimension_numbers = #tpu.dot_dimension_numbers<[1], [0], [0], [1], [0, 0, 1, 1], [], []>} : vector<384x144xbf16>, vector<144x48xbf16>, vector<384x48xf32> -> vector<384x48xf32>
    %c0_34 = arith.constant 0 : index
    %c0_35 = arith.constant 0 : index
    %41 = vector.load %arg8[%c0_34, %c0_35] : memref<1x48xf32, #tpu.memory_space<vmem>>, vector<1x48xf32>
    %42 = vector.broadcast %41 : vector<1x48xf32> to vector<384x48xf32>
    %43 = arith.addf %40, %42 : vector<384x48xf32>
    %cst_36 = arith.constant 0.000000e+00 : f32
    %44 = vector.broadcast %cst_36 : f32 to vector<384x48xf32>
    %45 = arith.maximumf %43, %44 : vector<384x48xf32>
    %c7_37 = arith.constant 7 : index
    %c0_38 = arith.constant 0 : index
    %46 = vector.load %arg15[%c7_37, %c0_38] : memref<448x8xbf16, #tpu.memory_space<vmem>>, vector<384x8xbf16>
    %c8_39 = arith.constant 8 : index
    %c0_40 = arith.constant 0 : index
    %47 = vector.load %arg15[%c8_39, %c0_40] : memref<448x8xbf16, #tpu.memory_space<vmem>>, vector<384x8xbf16>
    %c9_41 = arith.constant 9 : index
    %c0_42 = arith.constant 0 : index
    %48 = vector.load %arg15[%c9_41, %c0_42] : memref<448x8xbf16, #tpu.memory_space<vmem>>, vector<384x8xbf16>
    %c31_43 = arith.constant 31 : index
    %c0_44 = arith.constant 0 : index
    %49 = vector.load %arg15[%c31_43, %c0_44] : memref<448x8xbf16, #tpu.memory_space<vmem>>, vector<384x8xbf16>
    %c32_45 = arith.constant 32 : index
    %c0_46 = arith.constant 0 : index
    %50 = vector.load %arg15[%c32_45, %c0_46] : memref<448x8xbf16, #tpu.memory_space<vmem>>, vector<384x8xbf16>
    %c33_47 = arith.constant 33 : index
    %c0_48 = arith.constant 0 : index
    %51 = vector.load %arg15[%c33_47, %c0_48] : memref<448x8xbf16, #tpu.memory_space<vmem>>, vector<384x8xbf16>
    %c55_49 = arith.constant 55 : index
    %c0_50 = arith.constant 0 : index
    %52 = vector.load %arg15[%c55_49, %c0_50] : memref<448x8xbf16, #tpu.memory_space<vmem>>, vector<384x8xbf16>
    %c56_51 = arith.constant 56 : index
    %c0_52 = arith.constant 0 : index
    %53 = vector.load %arg15[%c56_51, %c0_52] : memref<448x8xbf16, #tpu.memory_space<vmem>>, vector<384x8xbf16>
    %c57_53 = arith.constant 57 : index
    %c0_54 = arith.constant 0 : index
    %54 = vector.load %arg15[%c57_53, %c0_54] : memref<448x8xbf16, #tpu.memory_space<vmem>>, vector<384x8xbf16>
    %55 = tpu.concatenate %46, %47, %48, %49, %50, %51, %52, %53, %54 in 1 : vector<384x8xbf16>, vector<384x8xbf16>, vector<384x8xbf16>, vector<384x8xbf16>, vector<384x8xbf16>, vector<384x8xbf16>, vector<384x8xbf16>, vector<384x8xbf16>, vector<384x8xbf16> -> vector<384x72xbf16>
    %c0_55 = arith.constant 0 : index
    %c0_56 = arith.constant 0 : index
    %56 = vector.load %arg9[%c0_55, %c0_56] : memref<72x16xbf16, #tpu.memory_space<vmem>>, vector<72x16xbf16>
    %cst_57 = arith.constant dense<0.000000e+00> : vector<384x16xf32>
    %57 = tpu.matmul %55, %56, %cst_57 {dimension_numbers = #tpu.dot_dimension_numbers<[1], [0], [0], [1], [0, 0, 1, 1], [], []>} : vector<384x72xbf16>, vector<72x16xbf16>, vector<384x16xf32> -> vector<384x16xf32>
    %c0_58 = arith.constant 0 : index
    %c0_59 = arith.constant 0 : index
    %58 = vector.load %arg10[%c0_58, %c0_59] : memref<1x16xf32, #tpu.memory_space<vmem>>, vector<1x16xf32>
    %59 = vector.broadcast %58 : vector<1x16xf32> to vector<384x16xf32>
    %60 = arith.addf %57, %59 : vector<384x16xf32>
    %cst_60 = arith.constant 0.000000e+00 : f32
    %61 = vector.broadcast %cst_60 : f32 to vector<384x16xf32>
    %62 = arith.maximumf %60, %61 : vector<384x16xf32>
    %63 = vector.broadcast %3 : vector<384x1xf32> to vector<384x16xf32>
    %64 = arith.mulf %62, %63 : vector<384x16xf32>
    %65 = arith.truncf %64 : vector<384x16xf32> to vector<384x16xbf16>
    %c32_61 = arith.constant 32 : index
    %c0_62 = arith.constant 0 : index
    %66 = vector.load %arg16[%c32_61, %c0_62] : memref<448x16xbf16, #tpu.memory_space<vmem>>, vector<384x16xbf16>
    tpu.vector_store %arg16[%c32_61, %c0_62], %65 {strides = array<i32>} : memref<448x16xbf16, #tpu.memory_space<vmem>>, vector<384x16xbf16>,
    %c7_63 = arith.constant 7 : index
    %c0_64 = arith.constant 0 : index
    %67 = vector.load %arg16[%c7_63, %c0_64] : memref<448x16xbf16, #tpu.memory_space<vmem>>, vector<384x16xbf16>
    %c8_65 = arith.constant 8 : index
    %c0_66 = arith.constant 0 : index
    %68 = vector.load %arg16[%c8_65, %c0_66] : memref<448x16xbf16, #tpu.memory_space<vmem>>, vector<384x16xbf16>
    %c9_67 = arith.constant 9 : index
    %c0_68 = arith.constant 0 : index
    %69 = vector.load %arg16[%c9_67, %c0_68] : memref<448x16xbf16, #tpu.memory_space<vmem>>, vector<384x16xbf16>
    %c31_69 = arith.constant 31 : index
    %c0_70 = arith.constant 0 : index
    %70 = vector.load %arg16[%c31_69, %c0_70] : memref<448x16xbf16, #tpu.memory_space<vmem>>, vector<384x16xbf16>
    %c32_71 = arith.constant 32 : index
    %c0_72 = arith.constant 0 : index
    %71 = vector.load %arg16[%c32_71, %c0_72] : memref<448x16xbf16, #tpu.memory_space<vmem>>, vector<384x16xbf16>
    %c33_73 = arith.constant 33 : index
    %c0_74 = arith.constant 0 : index
    %72 = vector.load %arg16[%c33_73, %c0_74] : memref<448x16xbf16, #tpu.memory_space<vmem>>, vector<384x16xbf16>
    %c55_75 = arith.constant 55 : index
    %c0_76 = arith.constant 0 : index
    %73 = vector.load %arg16[%c55_75, %c0_76] : memref<448x16xbf16, #tpu.memory_space<vmem>>, vector<384x16xbf16>
    %c56_77 = arith.constant 56 : index
    %c0_78 = arith.constant 0 : index
    %74 = vector.load %arg16[%c56_77, %c0_78] : memref<448x16xbf16, #tpu.memory_space<vmem>>, vector<384x16xbf16>
    %c57_79 = arith.constant 57 : index
    %c0_80 = arith.constant 0 : index
    %75 = vector.load %arg16[%c57_79, %c0_80] : memref<448x16xbf16, #tpu.memory_space<vmem>>, vector<384x16xbf16>
    %76 = tpu.concatenate %67, %68, %69, %70, %71, %72, %73, %74, %75 in 1 : vector<384x16xbf16>, vector<384x16xbf16>, vector<384x16xbf16>, vector<384x16xbf16>, vector<384x16xbf16>, vector<384x16xbf16>, vector<384x16xbf16>, vector<384x16xbf16>, vector<384x16xbf16> -> vector<384x144xbf16>
    %c0_81 = arith.constant 0 : index
    %c0_82 = arith.constant 0 : index
    %77 = vector.load %arg11[%c0_81, %c0_82] : memref<144x16xbf16, #tpu.memory_space<vmem>>, vector<144x16xbf16>
    %cst_83 = arith.constant dense<0.000000e+00> : vector<384x16xf32>
    %78 = tpu.matmul %76, %77, %cst_83 {dimension_numbers = #tpu.dot_dimension_numbers<[1], [0], [0], [1], [0, 0, 1, 1], [], []>} : vector<384x144xbf16>, vector<144x16xbf16>, vector<384x16xf32> -> vector<384x16xf32>
    %c0_84 = arith.constant 0 : index
    %c0_85 = arith.constant 0 : index
    %79 = vector.load %arg12[%c0_84, %c0_85] : memref<1x16xf32, #tpu.memory_space<vmem>>, vector<1x16xf32>
    %80 = vector.broadcast %79 : vector<1x16xf32> to vector<384x16xf32>
    %81 = arith.addf %78, %80 : vector<384x16xf32>
    %cst_86 = arith.constant 0.000000e+00 : f32
    %82 = vector.broadcast %cst_86 : f32 to vector<384x16xf32>
    %83 = arith.maximumf %81, %82 : vector<384x16xf32>
    %cst_87 = arith.constant 1.000000e+00 : f32
    %84 = vector.broadcast %cst_87 : f32 to vector<456x1xf32>
    %85 = arith.subf %2, %84 : vector<456x1xf32>
    %cst_88 = arith.constant 1.000000e+30 : f32
    %86 = vector.broadcast %cst_88 : f32 to vector<456x1xf32>
    %87 = arith.mulf %85, %86 : vector<456x1xf32>
    %88 = arith.truncf %87 : vector<456x1xf32> to vector<456x1xbf16>
    %89 = vector.broadcast %88 : vector<456x1xbf16> to vector<456x16xbf16>
    %90 = arith.addf %1, %89 : vector<456x16xbf16>
    %91 = vector.extract_strided_slice %90 {offsets = [0, 0], sizes = [432, 16], strides = [1, 1]} : vector<456x16xbf16> to vector<432x16xbf16>
    %92 = vector.extract_strided_slice %90 {offsets = [1, 0], sizes = [432, 16], strides = [1, 1]} : vector<456x16xbf16> to vector<432x16xbf16>
    %93 = arith.maximumf %91, %92 : vector<432x16xbf16>
    %94 = vector.extract_strided_slice %90 {offsets = [2, 0], sizes = [432, 16], strides = [1, 1]} : vector<456x16xbf16> to vector<432x16xbf16>
    %95 = arith.maximumf %93, %94 : vector<432x16xbf16>
    %96 = vector.extract_strided_slice %95 {offsets = [0, 0], sizes = [384, 16], strides = [1, 1]} : vector<432x16xbf16> to vector<384x16xbf16>
    %97 = vector.extract_strided_slice %95 {offsets = [24, 0], sizes = [384, 16], strides = [1, 1]} : vector<432x16xbf16> to vector<384x16xbf16>
    %98 = arith.maximumf %96, %97 : vector<384x16xbf16>
    %99 = vector.extract_strided_slice %95 {offsets = [48, 0], sizes = [384, 16], strides = [1, 1]} : vector<432x16xbf16> to vector<384x16xbf16>
    %100 = arith.maximumf %98, %99 : vector<384x16xbf16>
    %101 = arith.extf %100 : vector<384x16xbf16> to vector<384x16xf32>
    %102 = vector.broadcast %3 : vector<384x1xf32> to vector<384x16xf32>
    %103 = arith.mulf %101, %102 : vector<384x16xf32>
    %104 = arith.truncf %103 : vector<384x16xf32> to vector<384x16xbf16>
    %c0_89 = arith.constant 0 : index
    %c0_90 = arith.constant 0 : index
    %105 = vector.load %arg5[%c0_89, %c0_90] : memref<16x32xbf16, #tpu.memory_space<vmem>>, vector<16x32xbf16>
    %cst_91 = arith.constant dense<0.000000e+00> : vector<384x32xf32>
    %106 = tpu.matmul %104, %105, %cst_91 {dimension_numbers = #tpu.dot_dimension_numbers<[1], [0], [0], [1], [0, 0, 1, 1], [], []>} : vector<384x16xbf16>, vector<16x32xbf16>, vector<384x32xf32> -> vector<384x32xf32>
    %c0_92 = arith.constant 0 : index
    %c0_93 = arith.constant 0 : index
    %107 = vector.load %arg6[%c0_92, %c0_93] : memref<1x32xf32, #tpu.memory_space<vmem>>, vector<1x32xf32>
    %108 = vector.broadcast %107 : vector<1x32xf32> to vector<384x32xf32>
    %109 = arith.addf %106, %108 : vector<384x32xf32>
    %cst_94 = arith.constant 0.000000e+00 : f32
    %110 = vector.broadcast %cst_94 : f32 to vector<384x32xf32>
    %111 = arith.maximumf %109, %110 : vector<384x32xf32>
    %112 = tpu.concatenate %12, %45, %83, %111 in 1 : vector<384x32xf32>, vector<384x48xf32>, vector<384x16xf32>, vector<384x32xf32> -> vector<384x128xf32>
    %113 = arith.truncf %112 : vector<384x128xf32> to vector<384x128xbf16>
    %c0_95 = arith.constant 0 : index
    %c0_96 = arith.constant 0 : index
    %c0_97 = arith.constant 0 : index
    %114 = vector.load %arg13[%c0_95, %c0_96, %c0_97] : memref<1x384x128xbf16, #tpu.memory_space<vmem>>, vector<1x384x128xbf16>
    %115 = vector.shape_cast %114 : vector<1x384x128xbf16> to vector<384x128xbf16>
    %116 = vector.shape_cast %113 : vector<384x128xbf16> to vector<1x384x128xbf16>
    tpu.vector_store %arg13[%c0_95, %c0_96, %c0_97], %116 {strides = array<i32>} : memref<1x384x128xbf16, #tpu.memory_space<vmem>>, vector<1x384x128xbf16>,
    return
  }
  func.func @transform_0(%arg0: i32) -> (i32, i32, i32) {
    %c0_i32 = arith.constant 0 : i32
    %c0_i32_0 = arith.constant 0 : i32
    %c0_i32_1 = arith.constant 0 : i32
    return %arg0, %c0_i32, %c0_i32_0 : i32, i32, i32
  }
  func.func @transform_1(%arg0: i32) -> (i32, i32) {
    %c0_i32 = arith.constant 0 : i32
    %c0_i32_0 = arith.constant 0 : i32
    %c0_i32_1 = arith.constant 0 : i32
    return %c0_i32, %c0_i32_0 : i32, i32
  }
  func.func @transform_2(%arg0: i32) -> (i32, i32) {
    %c0_i32 = arith.constant 0 : i32
    %c0_i32_0 = arith.constant 0 : i32
    %c0_i32_1 = arith.constant 0 : i32
    return %c0_i32, %c0_i32_0 : i32, i32
  }
  func.func @transform_3(%arg0: i32) -> (i32, i32) {
    %c0_i32 = arith.constant 0 : i32
    %c0_i32_0 = arith.constant 0 : i32
    %c0_i32_1 = arith.constant 0 : i32
    return %c0_i32, %c0_i32_0 : i32, i32
  }
  func.func @transform_4(%arg0: i32) -> (i32, i32) {
    %c0_i32 = arith.constant 0 : i32
    %c0_i32_0 = arith.constant 0 : i32
    %c0_i32_1 = arith.constant 0 : i32
    return %c0_i32, %c0_i32_0 : i32, i32
  }
  func.func @transform_5(%arg0: i32) -> (i32, i32) {
    %c0_i32 = arith.constant 0 : i32
    %c0_i32_0 = arith.constant 0 : i32
    %c0_i32_1 = arith.constant 0 : i32
    return %c0_i32, %c0_i32_0 : i32, i32
  }
  func.func @transform_6(%arg0: i32) -> (i32, i32) {
    %c0_i32 = arith.constant 0 : i32
    %c0_i32_0 = arith.constant 0 : i32
    %c0_i32_1 = arith.constant 0 : i32
    return %c0_i32, %c0_i32_0 : i32, i32
  }
  func.func @transform_7(%arg0: i32) -> (i32, i32) {
    %c0_i32 = arith.constant 0 : i32
    %c0_i32_0 = arith.constant 0 : i32
    %c0_i32_1 = arith.constant 0 : i32
    return %c0_i32, %c0_i32_0 : i32, i32
  }
  func.func @transform_8(%arg0: i32) -> (i32, i32) {
    %c0_i32 = arith.constant 0 : i32
    %c0_i32_0 = arith.constant 0 : i32
    %c0_i32_1 = arith.constant 0 : i32
    return %c0_i32, %c0_i32_0 : i32, i32
  }
  func.func @transform_9(%arg0: i32) -> (i32, i32) {
    %c0_i32 = arith.constant 0 : i32
    %c0_i32_0 = arith.constant 0 : i32
    %c0_i32_1 = arith.constant 0 : i32
    return %c0_i32, %c0_i32_0 : i32, i32
  }
  func.func @transform_10(%arg0: i32) -> (i32, i32) {
    %c0_i32 = arith.constant 0 : i32
    %c0_i32_0 = arith.constant 0 : i32
    %c0_i32_1 = arith.constant 0 : i32
    return %c0_i32, %c0_i32_0 : i32, i32
  }
  func.func @transform_11(%arg0: i32) -> (i32, i32) {
    %c0_i32 = arith.constant 0 : i32
    %c0_i32_0 = arith.constant 0 : i32
    %c0_i32_1 = arith.constant 0 : i32
    return %c0_i32, %c0_i32_0 : i32, i32
  }
  func.func @transform_12(%arg0: i32) -> (i32, i32, i32) {
    %c0_i32 = arith.constant 0 : i32
    %c0_i32_0 = arith.constant 0 : i32
    %c0_i32_1 = arith.constant 0 : i32
    return %arg0, %c0_i32, %c0_i32_0 : i32, i32, i32
  }
}

</mosaic_0001>

<llo_original>
// kernel: forward.1
$region0: #{forward.1}
  #allocation0 [shape = 'u32[]', space=smem, size = 0x4, offset = 0x4, fixed_abs, tag = 'smem constant byte address 0x4 - core index']
  #allocation1 [shape = 'u32[72,128]{1,0:T(1,128)}', space=vmem, size = 0x9000, scoped, tag = 'internal scratch']
  #allocation2 [shape = 'bf16[448,16]{1,0:T(8,128)(2,1)}', space=vmem, size = 0x1c000, scoped, tag = 'scratch operand']
  #allocation3 [shape = 'bf16[448,8]{1,0:T(8,128)(2,1)}', space=vmem, size = 0x1c000, scoped, tag = 'scratch operand']
  #allocation4 [shape = 'bf16[448,16]{1,0:T(8,128)(2,1)}', space=vmem, size = 0x1c000, scoped, tag = 'scratch operand']
  %s0 = inlined_call_operand.vmem [shape: bf16[2,456,16], index: 0, kind: input, shape index: {}]
  %s1 = inlined_call_operand.vmem [shape: f32[456,1], index: 1, kind: input, shape index: {}]
  %s2 = inlined_call_operand.vmem [shape: bf16[16,56], index: 2, kind: input, shape index: {}]
  %s3 = inlined_call_operand.vmem [shape: f32[1,56], index: 3, kind: input, shape index: {}]
  %s4 = inlined_call_operand.vmem [shape: bf16[16,32], index: 4, kind: input, shape index: {}]
  %s5 = inlined_call_operand.vmem [shape: f32[1,32], index: 5, kind: input, shape index: {}]
  %s6 = inlined_call_operand.vmem [shape: bf16[144,48], index: 6, kind: input, shape index: {}]
  %s7 = inlined_call_operand.vmem [shape: f32[1,48], index: 7, kind: input, shape index: {}]
  %s8 = inlined_call_operand.vmem [shape: bf16[72,16], index: 8, kind: input, shape index: {}]
  %s9 = inlined_call_operand.vmem [shape: f32[1,16], index: 9, kind: input, shape index: {}]
  %s10 = inlined_call_operand.vmem [shape: bf16[144,16], index: 10, kind: input, shape index: {}]
  %s11 = inlined_call_operand.vmem [shape: f32[1,16], index: 11, kind: input, shape index: {}]
  %s12 = inlined_call_operand.vmem [shape: bf16[2,384,128], index: 12, kind: output, shape index: {}]
  %s13 = sld [smem:[#allocation0]]
  $region81: #{forward.1} parent=0
    _
  %s15 = ssub.s32 1, %s13
  %s16 = scalar_select 0, %s15, %s13
  loop: start=0, step=1, limit=4
  $region2: #{forward.1} parent=0 // loop_pre_header
    _
  $region3: #{forward.1} parent=0 // loop_header
    %s18 = sphi 0, %s22
    %p19 = scmp.ge.s32.totalorder %s18, 4
    %s28 = sphi 0, %s30
    %s31 = sphi 0, %s28
    %s32 = sphi 0, %s31
    %s48 = sphi 0, %s32
    %s52 = sphi 0, %s52
    %s54 = sphi 0, %s52
    %s55 = sphi 0, %s54
    %s69 = sphi 0, %s55
    %s73 = sphi 0, %s73
    %s75 = sphi 0, %s73
    %s76 = sphi 0, %s75
    %s90 = sphi 0, %s76
    %s94 = sphi 0, %s94
    %s96 = sphi 0, %s94
    %s97 = sphi 0, %s96
    %s111 = sphi 0, %s97
    %s115 = sphi 0, %s115
    %s117 = sphi 0, %s115
    %s118 = sphi 0, %s117
    %s132 = sphi 0, %s118
    %s136 = sphi 0, %s136
    %s138 = sphi 0, %s136
    %s139 = sphi 0, %s138
    %s153 = sphi 0, %s139
    %s157 = sphi 0, %s157
    %s159 = sphi 0, %s157
    %s160 = sphi 0, %s159
    %s174 = sphi 0, %s160
    %s178 = sphi 0, %s178
    %s180 = sphi 0, %s178
    %s181 = sphi 0, %s180
    %s195 = sphi 0, %s181
    %s199 = sphi 0, %s199
    %s201 = sphi 0, %s199
    %s202 = sphi 0, %s201
    %s216 = sphi 0, %s202
    %s220 = sphi 0, %s220
    %s222 = sphi 0, %s220
    %s223 = sphi 0, %s222
    %s237 = sphi 0, %s223
    %s241 = sphi 0, %s241
    %s243 = sphi 0, %s241
    %s244 = sphi 0, %s243
    %s258 = sphi 0, %s244
    %s262 = sphi 0, %s262
    %s264 = sphi 0, %s262
    %s265 = sphi 0, %s264
    %s279 = sphi 0, %s265
    %s285 = sphi 0, %s287
    %s288 = sphi 0, %s285
    %s289 = sphi 0, %s288
    %s305 = sphi 0, %s289
  $region4: #{forward.1} parent=0 // loop_header_branch
    %21 = sbr.rel (%p19) target = $region8
  $region5: #{forward.1} parent=0 // loop_body
    %s23 = ssub.s32 %s18, 1
    %s24 = ssub.s32 %s18, 2
    %s25 = sadd.s32 %s18, 1
    %s26 = ssub.s32 %s18, %s25
    %p27 = scmp.eq.s32.totalorder %s26, 0
    %s29 = sadd.s32 %s28, 1
    %s30 = scalar_select %p27, %s28, %s29
    %p33 = pneg %p27
    %p34 = scmp.eq.s32.totalorder %s18, 1
    %p35 = por %p33, %p34
    %p36 = scmp.ne.s32.totalorder %s28, %s31
    %p37 = scmp.eq.s32.totalorder %s18, 0
    %p38 = por %p36, %p37
    %p39 = scmp.ne.s32.totalorder %s28, %s31
    %p40 = scmp.eq.s32.totalorder %s23, 1
    %p41 = por %p39, %p40
    %p42 = scmp.ne.s32.totalorder %s31, %s32
    %p43 = scmp.eq.s32.totalorder %s23, 0
    %p44 = por %p42, %p43
    %p45 = scmp.ne.s32.totalorder %s31, %s32
    %p46 = scmp.eq.s32.totalorder %s24, 1
    %p47 = por %p45, %p46
    %p49 = scmp.ne.s32.totalorder %s32, %s48
    %p50 = scmp.eq.s32.totalorder %s24, 0
    %p51 = por %p49, %p50
    %s53 = sadd.s32 %s52, 1
    %p56 = scmp.eq.s32.totalorder %s18, 1
    %p57 = scmp.ne.s32.totalorder %s52, %s54
    %p58 = scmp.eq.s32.totalorder %s18, 0
    %p59 = por %p57, %p58
    %p60 = scmp.ne.s32.totalorder %s52, %s54
    %p61 = scmp.eq.s32.totalorder %s23, 1
    %p62 = por %p60, %p61
    %p63 = scmp.ne.s32.totalorder %s54, %s55
    %p64 = scmp.eq.s32.totalorder %s23, 0
    %p65 = por %p63, %p64
    %p66 = scmp.ne.s32.totalorder %s54, %s55
    %p67 = scmp.eq.s32.totalorder %s24, 1
    %p68 = por %p66, %p67
    %p70 = scmp.ne.s32.totalorder %s55, %s69
    %p71 = scmp.eq.s32.totalorder %s24, 0
    %p72 = por %p70, %p71
    %s74 = sadd.s32 %s73, 1
    %p77 = scmp.eq.s32.totalorder %s18, 1
    %p78 = scmp.ne.s32.totalorder %s73, %s75
    %p79 = scmp.eq.s32.totalorder %s18, 0
    %p80 = por %p78, %p79
    %p81 = scmp.ne.s32.totalorder %s73, %s75
    %p82 = scmp.eq.s32.totalorder %s23, 1
    %p83 = por %p81, %p82
    %p84 = scmp.ne.s32.totalorder %s75, %s76
    %p85 = scmp.eq.s32.totalorder %s23, 0
    %p86 = por %p84, %p85
    %p87 = scmp.ne.s32.totalorder %s75, %s76
    %p88 = scmp.eq.s32.totalorder %s24, 1
    %p89 = por %p87, %p88
    %p91 = scmp.ne.s32.totalorder %s76, %s90
    %p92 = scmp.eq.s32.totalorder %s24, 0
    %p93 = por %p91, %p92
    %s95 = sadd.s32 %s94, 1
    %p98 = scmp.eq.s32.totalorder %s18, 1
    %p99 = scmp.ne.s32.totalorder %s94, %s96
    %p100 = scmp.eq.s32.totalorder %s18, 0
    %p101 = por %p99, %p100
    %p102 = scmp.ne.s32.totalorder %s94, %s96
    %p103 = scmp.eq.s32.totalorder %s23, 1
    %p104 = por %p102, %p103
    %p105 = scmp.ne.s32.totalorder %s96, %s97
    %p106 = scmp.eq.s32.totalorder %s23, 0
    %p107 = por %p105, %p106
    %p108 = scmp.ne.s32.totalorder %s96, %s97
    %p109 = scmp.eq.s32.totalorder %s24, 1
    %p110 = por %p108, %p109
    %p112 = scmp.ne.s32.totalorder %s97, %s111
    %p113 = scmp.eq.s32.totalorder %s24, 0
    %p114 = por %p112, %p113
    %s116 = sadd.s32 %s115, 1
    %p119 = scmp.eq.s32.totalorder %s18, 1
    %p120 = scmp.ne.s32.totalorder %s115, %s117
    %p121 = scmp.eq.s32.totalorder %s18, 0
    %p122 = por %p120, %p121
    %p123 = scmp.ne.s32.totalorder %s115, %s117
    %p124 = scmp.eq.s32.totalorder %s23, 1
    %p125 = por %p123, %p124
    %p126 = scmp.ne.s32.totalorder %s117, %s118
    %p127 = scmp.eq.s32.totalorder %s23, 0
    %p128 = por %p126, %p127
    %p129 = scmp.ne.s32.totalorder %s117, %s118
    %p130 = scmp.eq.s32.totalorder %s24, 1
    %p131 = por %p129, %p130
    %p133 = scmp.ne.s32.totalorder %s118, %s132
    %p134 = scmp.eq.s32.totalorder %s24, 0
    %p135 = por %p133, %p134
    %s137 = sadd.s32 %s136, 1
    %p140 = scmp.eq.s32.totalorder %s18, 1
    %p141 = scmp.ne.s32.totalorder %s136, %s138
    %p142 = scmp.eq.s32.totalorder %s18, 0
    %p143 = por %p141, %p142
    %p144 = scmp.ne.s32.totalorder %s136, %s138
    %p145 = scmp.eq.s32.totalorder %s23, 1
    %p146 = por %p144, %p145
    %p147 = scmp.ne.s32.totalorder %s138, %s139
    %p148 = scmp.eq.s32.totalorder %s23, 0
    %p149 = por %p147, %p148
    %p150 = scmp.ne.s32.totalorder %s138, %s139
    %p151 = scmp.eq.s32.totalorder %s24, 1
    %p152 = por %p150, %p151
    %p154 = scmp.ne.s32.totalorder %s139, %s153
    %p155 = scmp.eq.s32.totalorder %s24, 0
    %p156 = por %p154, %p155
    %s158 = sadd.s32 %s157, 1
    %p161 = scmp.eq.s32.totalorder %s18, 1
    %p162 = scmp.ne.s32.totalorder %s157, %s159
    %p163 = scmp.eq.s32.totalorder %s18, 0
    %p164 = por %p162, %p163
    %p165 = scmp.ne.s32.totalorder %s157, %s159
    %p166 = scmp.eq.s32.totalorder %s23, 1
    %p167 = por %p165, %p166
    %p168 = scmp.ne.s32.totalorder %s159, %s160
    %p169 = scmp.eq.s32.totalorder %s23, 0
    %p170 = por %p168, %p169
    %p171 = scmp.ne.s32.totalorder %s159, %s160
    %p172 = scmp.eq.s32.totalorder %s24, 1
    %p173 = por %p171, %p172
    %p175 = scmp.ne.s32.totalorder %s160, %s174
    %p176 = scmp.eq.s32.totalorder %s24, 0
    %p177 = por %p175, %p176
    %s179 = sadd.s32 %s178, 1
    %p182 = scmp.eq.s32.totalorder %s18, 1
    %p183 = scmp.ne.s32.totalorder %s178, %s180
    %p184 = scmp.eq.s32.totalorder %s18, 0
    %p185 = por %p183, %p184
    %p186 = scmp.ne.s32.totalorder %s178, %s180
    %p187 = scmp.eq.s32.totalorder %s23, 1
    %p188 = por %p186, %p187
    %p189 = scmp.ne.s32.totalorder %s180, %s181
    %p190 = scmp.eq.s32.totalorder %s23, 0
    %p191 = por %p189, %p190
    %p192 = scmp.ne.s32.totalorder %s180, %s181
    %p193 = scmp.eq.s32.totalorder %s24, 1
    %p194 = por %p192, %p193
    %p196 = scmp.ne.s32.totalorder %s181, %s195
    %p197 = scmp.eq.s32.totalorder %s24, 0
    %p198 = por %p196, %p197
    %s200 = sadd.s32 %s199, 1
    %p203 = scmp.eq.s32.totalorder %s18, 1
    %p204 = scmp.ne.s32.totalorder %s199, %s201
    %p205 = scmp.eq.s32.totalorder %s18, 0
    %p206 = por %p204, %p205
    %p207 = scmp.ne.s32.totalorder %s199, %s201
    %p208 = scmp.eq.s32.totalorder %s23, 1
    %p209 = por %p207, %p208
    %p210 = scmp.ne.s32.totalorder %s201, %s202
    %p211 = scmp.eq.s32.totalorder %s23, 0
    %p212 = por %p210, %p211
    %p213 = scmp.ne.s32.totalorder %s201, %s202
    %p214 = scmp.eq.s32.totalorder %s24, 1
    %p215 = por %p213, %p214
    %p217 = scmp.ne.s32.totalorder %s202, %s216
    %p218 = scmp.eq.s32.totalorder %s24, 0
    %p219 = por %p217, %p218
    %s221 = sadd.s32 %s220, 1
    %p224 = scmp.eq.s32.totalorder %s18, 1
    %p225 = scmp.ne.s32.totalorder %s220, %s222
    %p226 = scmp.eq.s32.totalorder %s18, 0
    %p227 = por %p225, %p226
    %p228 = scmp.ne.s32.totalorder %s220, %s222
    %p229 = scmp.eq.s32.totalorder %s23, 1
    %p230 = por %p228, %p229
    %p231 = scmp.ne.s32.totalorder %s222, %s223
    %p232 = scmp.eq.s32.totalorder %s23, 0
    %p233 = por %p231, %p232
    %p234 = scmp.ne.s32.totalorder %s222, %s223
    %p235 = scmp.eq.s32.totalorder %s24, 1
    %p236 = por %p234, %p235
    %p238 = scmp.ne.s32.totalorder %s223, %s237
    %p239 = scmp.eq.s32.totalorder %s24, 0
    %p240 = por %p238, %p239
    %s242 = sadd.s32 %s241, 1
    %p245 = scmp.eq.s32.totalorder %s18, 1
    %p246 = scmp.ne.s32.totalorder %s241, %s243
    %p247 = scmp.eq.s32.totalorder %s18, 0
    %p248 = por %p246, %p247
    %p249 = scmp.ne.s32.totalorder %s241, %s243
    %p250 = scmp.eq.s32.totalorder %s23, 1
    %p251 = por %p249, %p250
    %p252 = scmp.ne.s32.totalorder %s243, %s244
    %p253 = scmp.eq.s32.totalorder %s23, 0
    %p254 = por %p252, %p253
    %p255 = scmp.ne.s32.totalorder %s243, %s244
    %p256 = scmp.eq.s32.totalorder %s24, 1
    %p257 = por %p255, %p256
    %p259 = scmp.ne.s32.totalorder %s244, %s258
    %p260 = scmp.eq.s32.totalorder %s24, 0
    %p261 = por %p259, %p260
    %s263 = sadd.s32 %s262, 1
    %p266 = scmp.eq.s32.totalorder %s18, 1
    %p267 = scmp.ne.s32.totalorder %s262, %s264
    %p268 = scmp.eq.s32.totalorder %s18, 0
    %p269 = por %p267, %p268
    %p270 = scmp.ne.s32.totalorder %s262, %s264
    %p271 = scmp.eq.s32.totalorder %s23, 1
    %p272 = por %p270, %p271
    %p273 = scmp.ne.s32.totalorder %s264, %s265
    %p274 = scmp.eq.s32.totalorder %s23, 0
    %p275 = por %p273, %p274
    %p276 = scmp.ne.s32.totalorder %s264, %s265
    %p277 = scmp.eq.s32.totalorder %s24, 1
    %p278 = por %p276, %p277
    %p280 = scmp.ne.s32.totalorder %s265, %s279
    %p281 = scmp.eq.s32.totalorder %s24, 0
    %p282 = por %p280, %p281
    %s283 = ssub.s32 %s18, %s25
    %p284 = scmp.eq.s32.totalorder %s283, 0
    %s286 = sadd.s32 %s285, 1
    %s287 = scalar_select %p284, %s285, %s286
    %p290 = pneg %p284
    %p291 = scmp.eq.s32.totalorder %s18, 1
    %p292 = por %p290, %p291
    %p293 = scmp.ne.s32.totalorder %s285, %s288
    %p294 = scmp.eq.s32.totalorder %s18, 0
    %p295 = por %p293, %p294
    %p296 = scmp.ne.s32.totalorder %s285, %s288
    %p297 = scmp.eq.s32.totalorder %s23, 1
    %p298 = por %p296, %p297
    %p299 = scmp.ne.s32.totalorder %s288, %s289
    %p300 = scmp.eq.s32.totalorder %s23, 0
    %p301 = por %p299, %p300
    %p302 = scmp.ne.s32.totalorder %s288, %s289
    %p303 = scmp.eq.s32.totalorder %s24, 1
    %p304 = por %p302, %p303
    %p306 = scmp.ne.s32.totalorder %s289, %s305
    %p307 = scmp.eq.s32.totalorder %s24, 0
    %p308 = por %p306, %p307
    %p309 = scmp.le.s32.totalorder 1, %s18
    %p310 = scmp.lt.s32.totalorder %s18, 3
    %p311 = pnand %p309, %p310
    %p312 = pneg %p311
    // Predicated region
    $region9: #{forward.1} parent=5 // pred_check
      _
    $region10: #{forward.1} parent=5 // pred_check_branch
      %314 = sbr.rel (%p311) target = $region12
    $region11: #{forward.1} parent=5 // pred_region
      %s315 = ssub.s32 %s18, 1
      // Predicated region
      $region13: #{forward.1} parent=11 // pred_check
        %p316 = pneg %p65
      $region14: #{forward.1} parent=11 // pred_check_branch
        %318 = sbr.rel (%p316) target = $region16
      $region15: #{forward.1} parent=11 // pred_region
        _
      $region16: #{forward.1} parent=11 // pred_fallthru
        _
      // Predicated region
      $region17: #{forward.1} parent=11 // pred_check
        %p319 = pneg %p86
      $region18: #{forward.1} parent=11 // pred_check_branch
        %321 = sbr.rel (%p319) target = $region20
      $region19: #{forward.1} parent=11 // pred_region
        _
      $region20: #{forward.1} parent=11 // pred_fallthru
        _
      // Predicated region
      $region21: #{forward.1} parent=11 // pred_check
        %p322 = pneg %p107
      $region22: #{forward.1} parent=11 // pred_check_branch
        %324 = sbr.rel (%p322) target = $region24
      $region23: #{forward.1} parent=11 // pred_region
        _
      $region24: #{forward.1} parent=11 // pred_fallthru
        _
      // Predicated region
      $region25: #{forward.1} parent=11 // pred_check
        %p325 = pneg %p128
      $region26: #{forward.1} parent=11 // pred_check_branch
        %327 = sbr.rel (%p325) target = $region28
      $region27: #{forward.1} parent=11 // pred_region
        _
      $region28: #{forward.1} parent=11 // pred_fallthru
        _
      // Predicated region
      $region29: #{forward.1} parent=11 // pred_check
        %p328 = pneg %p149
      $region30: #{forward.1} parent=11 // pred_check_branch
        %330 = sbr.rel (%p328) target = $region32
      $region31: #{forward.1} parent=11 // pred_region
        _
      $region32: #{forward.1} parent=11 // pred_fallthru
        _
      // Predicated region
      $region33: #{forward.1} parent=11 // pred_check
        %p331 = pneg %p170
      $region34: #{forward.1} parent=11 // pred_check_branch
        %333 = sbr.rel (%p331) target = $region36
      $region35: #{forward.1} parent=11 // pred_region
        _
      $region36: #{forward.1} parent=11 // pred_fallthru
        _
      // Predicated region
      $region37: #{forward.1} parent=11 // pred_check
        %p334 = pneg %p191
      $region38: #{forward.1} parent=11 // pred_check_branch
        %336 = sbr.rel (%p334) target = $region40
      $region39: #{forward.1} parent=11 // pred_region
        _
      $region40: #{forward.1} parent=11 // pred_fallthru
        _
      // Predicated region
      $region41: #{forward.1} parent=11 // pred_check
        %p337 = pneg %p212
      $region42: #{forward.1} parent=11 // pred_check_branch
        %339 = sbr.rel (%p337) target = $region44
      $region43: #{forward.1} parent=11 // pred_region
        _
      $region44: #{forward.1} parent=11 // pred_fallthru
        _
      // Predicated region
      $region45: #{forward.1} parent=11 // pred_check
        %p340 = pneg %p233
      $region46: #{forward.1} parent=11 // pred_check_branch
        %342 = sbr.rel (%p340) target = $region48
      $region47: #{forward.1} parent=11 // pred_region
        _
      $region48: #{forward.1} parent=11 // pred_fallthru
        _
      // Predicated region
      $region49: #{forward.1} parent=11 // pred_check
        %p343 = pneg %p254
      $region50: #{forward.1} parent=11 // pred_check_branch
        %345 = sbr.rel (%p343) target = $region52
      $region51: #{forward.1} parent=11 // pred_region
        _
      $region52: #{forward.1} parent=11 // pred_fallthru
        _
      // Predicated region
      $region53: #{forward.1} parent=11 // pred_check
        %p346 = pneg %p275
      $region54: #{forward.1} parent=11 // pred_check_branch
        %348 = sbr.rel (%p346) target = $region56
      $region55: #{forward.1} parent=11 // pred_region
        _
      $region56: #{forward.1} parent=11 // pred_fallthru
        _
    $region12: #{forward.1} parent=5 // pred_fallthru
      _
    %p349 = scmp.lt.s32.totalorder %s18, 2
    // Predicated region
    $region57: #{forward.1} parent=5 // pred_check
      %p350 = pneg %p349
    $region58: #{forward.1} parent=5 // pred_check_branch
      %352 = sbr.rel (%p350) target = $region60
    $region59: #{forward.1} parent=5 // pred_region
      // Predicated region
      $region61: #{forward.1} parent=59 // pred_check
        %p353 = pneg %p38
      $region62: #{forward.1} parent=59 // pred_check_branch
        %355 = sbr.rel (%p353) target = $region64
      $region63: #{forward.1} parent=59 // pred_region
        %p356 = scmp.lt.s32.totalorder %s18, 1
        %s357 = scalar_select %p356, %s18, 1
        %s358 = smul.addr %s357, 57
        %s359 = smul.addr %s358, 4
        %s360 = scalar_lea.vmem %s0, %s359
      $region64: #{forward.1} parent=59 // pred_fallthru
        _
    $region60: #{forward.1} parent=5 // pred_fallthru
      _
    %p361 = scmp.le.s32.totalorder 1, %s18
    %p362 = scmp.lt.s32.totalorder %s18, 3
    %p363 = pnand %p361, %p362
    %p364 = pneg %p363
    // Predicated region
    $region65: #{forward.1} parent=5 // pred_check
      _
    $region66: #{forward.1} parent=5 // pred_check_branch
      %366 = sbr.rel (%p363) target = $region68
    $region67: #{forward.1} parent=5 // pred_region
      %s367 = ssub.s32 %s18, 1
      %p368 = scmp.lt.s32.totalorder %s23, 1
      %s369 = scalar_select %p368, %s23, 1
      %s370 = smul.addr %s369, 57
      %s371 = smul.addr %s370, 4
      %s372 = scalar_lea.vmem %s0, %s371
      %p373 = pneg %p44
      %p374 = pneg %p41
      %p375 = pneg %p65
      %p376 = pneg %p62
      %p377 = pneg %p86
      %p378 = pneg %p83
      %p379 = pneg %p107
      %p380 = pneg %p104
      %p381 = pneg %p128
      %p382 = pneg %p125
      %p383 = pneg %p149
      %p384 = pneg %p146
      %p385 = pneg %p170
      %p386 = pneg %p167
      %p387 = pneg %p191
      %p388 = pneg %p188
      %p389 = pneg %p212
      %p390 = pneg %p209
      %p391 = pneg %p233
      %p392 = pneg %p230
      %p393 = pneg %p254
      %p394 = pneg %p251
      %p395 = pneg %p275
      %p396 = pneg %p272
      %p397 = pneg %p301
      %p398 = pneg %p298
      %p399 = scmp.lt.s32.totalorder %s23, 1
      %s400 = scalar_select %p399, %s23, 1
      %s401 = smul.addr %s400, 48
      %s402 = smul.addr %s401, 4
      %s403 = scalar_lea.vmem %s12, %s402
      %p404 = scmp.lt.s32.totalorder %s23, 1
      %s405 = scalar_select %p404, %s23, 1
      %s406 = smul.addr %s405, 57
      %s407 = smul.addr %s406, 4
      %s408 = scalar_lea.vmem %s0, %s407
      %p409 = scmp.lt.s32.totalorder %s23, 1
      %s410 = scalar_select %p409, %s23, 1
      %s411 = smul.addr %s410, 48
      %s412 = smul.addr %s411, 4
      %s413 = scalar_lea.vmem %s12, %s412
      %v415 = vld [vmem:[%s408] sm:$0xf]
      %v416 = vld [vmem:[%s408 + $0x4] sm:$0xf]
      %v417 = vld [vmem:[%s408 + $0x8] sm:$0xf]
      %v418 = vld [vmem:[%s408 + $0xc] sm:$0xf]
      %v419 = vld [vmem:[%s408 + $0x10] sm:$0xf]
      %v420 = vld [vmem:[%s408 + $0x14] sm:$0xf]
      %v421 = vld [vmem:[%s408 + $0x18] sm:$0xf]
      %v422 = vld [vmem:[%s408 + $0x1c] sm:$0xf]
      %v423 = vld [vmem:[%s408 + $0x20] sm:$0xf]
      %v424 = vld [vmem:[%s408 + $0x24] sm:$0xf]
      %v425 = vld [vmem:[%s408 + $0x28] sm:$0xf]
      %v426 = vld [vmem:[%s408 + $0x2c] sm:$0xf]
      %v427 = vld [vmem:[%s408 + $0x30] sm:$0xf]
      %v428 = vld [vmem:[%s408 + $0x34] sm:$0xf]
      %v429 = vld [vmem:[%s408 + $0x38] sm:$0xf]
      %v430 = vld [vmem:[%s408 + $0x3c] sm:$0xf]
      %v431 = vld [vmem:[%s408 + $0x40] sm:$0xf]
      %v432 = vld [vmem:[%s408 + $0x44] sm:$0xf]
      %v433 = vld [vmem:[%s408 + $0x48] sm:$0xf]
      %v434 = vld [vmem:[%s408 + $0x4c] sm:$0xf]
      %v435 = vld [vmem:[%s408 + $0x50] sm:$0xf]
      %v436 = vld [vmem:[%s408 + $0x54] sm:$0xf]
      %v437 = vld [vmem:[%s408 + $0x58] sm:$0xf]
      %v438 = vld [vmem:[%s408 + $0x5c] sm:$0xf]
      %v439 = vld [vmem:[%s408 + $0x60] sm:$0xf]
      %v440 = vld [vmem:[%s408 + $0x64] sm:$0xf]
      %v441 = vld [vmem:[%s408 + $0x68] sm:$0xf]
      %v442 = vld [vmem:[%s408 + $0x6c] sm:$0xf]
      %v443 = vld [vmem:[%s408 + $0x70] sm:$0xf]
      %v444 = vld [vmem:[%s408 + $0x74] sm:$0xf]
      %v445 = vld [vmem:[%s408 + $0x78] sm:$0xf]
      %v446 = vld [vmem:[%s408 + $0x7c] sm:$0xf]
      %v447 = vld [vmem:[%s408 + $0x80] sm:$0xf]
      %v448 = vld [vmem:[%s408 + $0x84] sm:$0xf]
      %v449 = vld [vmem:[%s408 + $0x88] sm:$0xf]
      %v450 = vld [vmem:[%s408 + $0x8c] sm:$0xf]
      %v451 = vld [vmem:[%s408 + $0x90] sm:$0xf]
      %v452 = vld [vmem:[%s408 + $0x94] sm:$0xf]
      %v453 = vld [vmem:[%s408 + $0x98] sm:$0xf]
      %v454 = vld [vmem:[%s408 + $0x9c] sm:$0xf]
      %v455 = vld [vmem:[%s408 + $0xa0] sm:$0xf]
      %v456 = vld [vmem:[%s408 + $0xa4] sm:$0xf]
      %v457 = vld [vmem:[%s408 + $0xa8] sm:$0xf]
      %v458 = vld [vmem:[%s408 + $0xac] sm:$0xf]
      %v459 = vld [vmem:[%s408 + $0xb0] sm:$0xf]
      %v460 = vld [vmem:[%s408 + $0xb4] sm:$0xf]
      %v461 = vld [vmem:[%s408 + $0xb8] sm:$0xf]
      %v462 = vld [vmem:[%s408 + $0xbc] sm:$0xf]
      %v463 = vld [vmem:[%s408 + $0xc0] sm:$0xf]
      %v464 = vld [vmem:[%s408 + $0xc4] sm:$0xf]
      %v465 = vld [vmem:[%s408 + $0xc8] sm:$0xf]
      %v466 = vld [vmem:[%s408 + $0xcc] sm:$0xf]
      %v467 = vld [vmem:[%s408 + $0xd0] sm:$0xf]
      %v468 = vld [vmem:[%s408 + $0xd4] sm:$0xf]
      %v469 = vld [vmem:[%s408 + $0xd8] sm:$0xf]
      %v470 = vld [vmem:[%s1] sm:$0xff]
      %v471 = vld [vmem:[%s1 + $0x8] sm:$0xff]
      %v472 = vld [vmem:[%s1 + $0x10] sm:$0xff]
      %v473 = vld [vmem:[%s1 + $0x18] sm:$0xff]
      %v474 = vld [vmem:[%s1 + $0x20] sm:$0xff]
      %v475 = vld [vmem:[%s1 + $0x28] sm:$0xff]
      %v476 = vld [vmem:[%s1 + $0x30] sm:$0xff]
      %v477 = vld [vmem:[%s1 + $0x38] sm:$0xff]
      %v478 = vld [vmem:[%s1 + $0x40] sm:$0xff]
      %v479 = vld [vmem:[%s1 + $0x48] sm:$0xff]
      %v480 = vld [vmem:[%s1 + $0x50] sm:$0xff]
      %v481 = vld [vmem:[%s1 + $0x58] sm:$0xff]
      %v482 = vld [vmem:[%s1 + $0x60] sm:$0xff]
      %v483 = vld [vmem:[%s1 + $0x68] sm:$0xff]
      %v484 = vld [vmem:[%s1 + $0x70] sm:$0xff]
      %v485 = vld [vmem:[%s1 + $0x78] sm:$0xff]
      %v486 = vld [vmem:[%s1 + $0x80] sm:$0xff]
      %v487 = vld [vmem:[%s1 + $0x88] sm:$0xff]
      %v488 = vld [vmem:[%s1 + $0x90] sm:$0xff]
      %v489 = vld [vmem:[%s1 + $0x98] sm:$0xff]
      %v490 = vld [vmem:[%s1 + $0xa0] sm:$0xff]
      %v491 = vld [vmem:[%s1 + $0xa8] sm:$0xff]
      %v492 = vld [vmem:[%s1 + $0xb0] sm:$0xff]
      %v493 = vld [vmem:[%s1 + $0xb8] sm:$0xff]
      %v494 = vld [vmem:[%s1 + $0xc0] sm:$0xff]
      %v495 = vld [vmem:[%s1 + $0xc8] sm:$0xff]
      %v496 = vld [vmem:[%s1 + $0xd0] sm:$0xff]
      %v497 = vld [vmem:[%s1 + $0xd8] sm:$0xff]
      %v498 = vld [vmem:[%s1 + $0xe0] sm:$0xff]
      %v499 = vld [vmem:[%s1 + $0xe8] sm:$0xff]
      %v500 = vld [vmem:[%s1 + $0xf0] sm:$0xff]
      %v501 = vld [vmem:[%s1 + $0xf8] sm:$0xff]
      %v502 = vld [vmem:[%s1 + $0x100] sm:$0xff]
      %v503 = vld [vmem:[%s1 + $0x108] sm:$0xff]
      %v504 = vld [vmem:[%s1 + $0x110] sm:$0xff]
      %v505 = vld [vmem:[%s1 + $0x118] sm:$0xff]
      %v506 = vld [vmem:[%s1 + $0x120] sm:$0xff]
      %v507 = vld [vmem:[%s1 + $0x128] sm:$0xff]
      %v508 = vld [vmem:[%s1 + $0x130] sm:$0xff]
      %v509 = vld [vmem:[%s1 + $0x138] sm:$0xff]
      %v510 = vld [vmem:[%s1 + $0x140] sm:$0xff]
      %v511 = vld [vmem:[%s1 + $0x148] sm:$0xff]
      %v512 = vld [vmem:[%s1 + $0x150] sm:$0xff]
      %v513 = vld [vmem:[%s1 + $0x158] sm:$0xff]
      %v514 = vld [vmem:[%s1 + $0x160] sm:$0xff]
      %v515 = vld [vmem:[%s1 + $0x168] sm:$0xff]
      %v516 = vld [vmem:[%s1 + $0x170] sm:$0xff]
      %v517 = vld [vmem:[%s1 + $0x178] sm:$0xff]
      %v518 = vld [vmem:[%s1 + $0x180] sm:$0xff]
      %v519 = vld [vmem:[%s1 + $0x188] sm:$0xff]
      %v520 = vld [vmem:[%s1 + $0x190] sm:$0xff]
      %v521 = vld [vmem:[%s1 + $0x198] sm:$0xff]
      %v522 = vld [vmem:[%s1 + $0x1a0] sm:$0xff]
      %v523 = vld [vmem:[%s1 + $0x1a8] sm:$0xff]
      %v524 = vld [vmem:[%s1 + $0x1b0] sm:$0xff]
      %v525 = vld [vmem:[%s2] sm:$0xf]
      %v526 = vld [vmem:[%s2 + $0x4] sm:$0xf]
      %v527 = vld [vmem:[%s3] sm:$0x1]
      %v529 = vperm.slane %v527, 0
      %v580 = vunpack.c.l.b16 %v418
      %v581 = vunpack.c.l.b16 %v419
      %v582 = vunpack.c.l.b16 %v420
      %v583 = vunpack.c.l.b16 %v421
      %v584 = vunpack.c.l.b16 %v422
      %v585 = vunpack.c.l.b16 %v423
      %v586 = vunpack.c.l.b16 %v424
      %v587 = vunpack.c.l.b16 %v425
      %v588 = vunpack.c.l.b16 %v426
      %v589 = vunpack.c.l.b16 %v427
      %v590 = vunpack.c.l.b16 %v428
      %v591 = vunpack.c.l.b16 %v429
      %v592 = vunpack.c.l.b16 %v430
      %v593 = vunpack.c.l.b16 %v431
      %v594 = vunpack.c.l.b16 %v432
      %v595 = vunpack.c.l.b16 %v433
      %v596 = vunpack.c.l.b16 %v434
      %v597 = vunpack.c.l.b16 %v435
      %v598 = vunpack.c.l.b16 %v436
      %v599 = vunpack.c.l.b16 %v437
      %v600 = vunpack.c.l.b16 %v438
      %v601 = vunpack.c.l.b16 %v439
      %v602 = vunpack.c.l.b16 %v440
      %v603 = vunpack.c.l.b16 %v441
      %v604 = vunpack.c.l.b16 %v442
      %v605 = vunpack.c.l.b16 %v443
      %v606 = vunpack.c.l.b16 %v444
      %v607 = vunpack.c.l.b16 %v445
      %v608 = vunpack.c.l.b16 %v446
      %v609 = vunpack.c.l.b16 %v447
      %v610 = vunpack.c.l.b16 %v448
      %v611 = vunpack.c.l.b16 %v449
      %v612 = vunpack.c.l.b16 %v450
      %v613 = vunpack.c.l.b16 %v451
      %v614 = vunpack.c.l.b16 %v452
      %v615 = vunpack.c.l.b16 %v453
      %v616 = vunpack.c.l.b16 %v454
      %v617 = vunpack.c.l.b16 %v455
      %v618 = vunpack.c.l.b16 %v456
      %v619 = vunpack.c.l.b16 %v457
      %v620 = vunpack.c.l.b16 %v458
      %v621 = vunpack.c.l.b16 %v459
      %v622 = vunpack.c.l.b16 %v460
      %v623 = vunpack.c.l.b16 %v461
      %v624 = vunpack.c.l.b16 %v462
      %v625 = vunpack.c.l.b16 %v463
      %v626 = vunpack.c.l.b16 %v464
      %v627 = vunpack.c.l.b16 %v465
      %v628 = vunpack.c.l.b16 %v466
      %v629 = vpack.c.b16 %v581, %v580
      %v630 = vpack.c.b16 %v583, %v582
      %v631 = vpack.c.b16 %v585, %v584
      %v632 = vpack.c.b16 %v587, %v586
      %v633 = vpack.c.b16 %v589, %v588
      %v634 = vpack.c.b16 %v591, %v590
      %v635 = vpack.c.b16 %v593, %v592
      %v636 = vpack.c.b16 %v595, %v594
      %v637 = vpack.c.b16 %v597, %v596
      %v638 = vpack.c.b16 %v599, %v598
      %v639 = vpack.c.b16 %v601, %v600
      %v640 = vpack.c.b16 %v603, %v602
      %v641 = vpack.c.b16 %v605, %v604
      %v642 = vpack.c.b16 %v607, %v606
      %v643 = vpack.c.b16 %v609, %v608
      %v644 = vpack.c.b16 %v611, %v610
      %v645 = vpack.c.b16 %v613, %v612
      %v646 = vpack.c.b16 %v615, %v614
      %v647 = vpack.c.b16 %v617, %v616
      %v648 = vpack.c.b16 %v619, %v618
      %v649 = vpack.c.b16 %v621, %v620
      %v650 = vpack.c.b16 %v623, %v622
      %v651 = vpack.c.b16 %v625, %v624
      %v652 = vpack.c.b16 %v627, %v626
      %v653 = vpack.c.b16 %v628, %v628
      %vm654 = vsmask.f32 7424
      %v656 = vshrl.u32 %v629, 16
      %v658 = vshll.u32 %v629, 16
      %v660 = vrot.slane %v658, 1
      %v661 = vor.u32 %v656, %v660
      %v663 = vshll.u32 %v630, 16
      %v665 = vrot.slane %v663, 1
      %v666 = vsel %vm654, %v661, %v665
      %v667 = vshrl.u32 %v630, 16
      %v669 = vor.u32 %v667, %v665
      %v671 = vshll.u32 %v631, 16
      %v673 = vrot.slane %v671, 1
      %v674 = vsel %vm654, %v669, %v673
      %v675 = vshrl.u32 %v631, 16
      %v677 = vor.u32 %v675, %v673
      %v679 = vshll.u32 %v632, 16
      %v681 = vrot.slane %v679, 1
      %v682 = vsel %vm654, %v677, %v681
      %v683 = vshrl.u32 %v632, 16
      %v685 = vor.u32 %v683, %v681
      %v687 = vshll.u32 %v633, 16
      %v689 = vrot.slane %v687, 1
      %v690 = vsel %vm654, %v685, %v689
      %v691 = vshrl.u32 %v633, 16
      %v693 = vor.u32 %v691, %v689
      %v695 = vshll.u32 %v634, 16
      %v697 = vrot.slane %v695, 1
      %v698 = vsel %vm654, %v693, %v697
      %v699 = vshrl.u32 %v634, 16
      %v701 = vor.u32 %v699, %v697
      %v703 = vshll.u32 %v635, 16
      %v705 = vrot.slane %v703, 1
      %v706 = vsel %vm654, %v701, %v705
      %v707 = vshrl.u32 %v635, 16
      %v709 = vor.u32 %v707, %v705
      %v711 = vshll.u32 %v636, 16
      %v713 = vrot.slane %v711, 1
      %v714 = vsel %vm654, %v709, %v713
      %v715 = vshrl.u32 %v636, 16
      %v717 = vor.u32 %v715, %v713
      %v719 = vshll.u32 %v637, 16
      %v721 = vrot.slane %v719, 1
      %v722 = vsel %vm654, %v717, %v721
      %v723 = vshrl.u32 %v637, 16
      %v725 = vor.u32 %v723, %v721
      %v727 = vshll.u32 %v638, 16
      %v729 = vrot.slane %v727, 1
      %v730 = vsel %vm654, %v725, %v729
      %v731 = vshrl.u32 %v638, 16
      %v733 = vor.u32 %v731, %v729
      %v735 = vshll.u32 %v639, 16
      %v737 = vrot.slane %v735, 1
      %v738 = vsel %vm654, %v733, %v737
      %v739 = vshrl.u32 %v639, 16
      %v741 = vor.u32 %v739, %v737
      %v743 = vshll.u32 %v640, 16
      %v745 = vrot.slane %v743, 1
      %v746 = vsel %vm654, %v741, %v745
      %v747 = vshrl.u32 %v640, 16
      %v749 = vor.u32 %v747, %v745
      %v751 = vshll.u32 %v641, 16
      %v753 = vrot.slane %v751, 1
      %v754 = vsel %vm654, %v749, %v753
      %v755 = vshrl.u32 %v641, 16
      %v757 = vor.u32 %v755, %v753
      %v759 = vshll.u32 %v642, 16
      %v761 = vrot.slane %v759, 1
      %v762 = vsel %vm654, %v757, %v761
      %v763 = vshrl.u32 %v642, 16
      %v765 = vor.u32 %v763, %v761
      %v767 = vshll.u32 %v643, 16
      %v769 = vrot.slane %v767, 1
      %v770 = vsel %vm654, %v765, %v769
      %v771 = vshrl.u32 %v643, 16
      %v773 = vor.u32 %v771, %v769
      %v775 = vshll.u32 %v644, 16
      %v777 = vrot.slane %v775, 1
      %v778 = vsel %vm654, %v773, %v777
      %v779 = vshrl.u32 %v644, 16
      %v781 = vor.u32 %v779, %v777
      %v783 = vshll.u32 %v645, 16
      %v785 = vrot.slane %v783, 1
      %v786 = vsel %vm654, %v781, %v785
      %v787 = vshrl.u32 %v645, 16
      %v789 = vor.u32 %v787, %v785
      %v791 = vshll.u32 %v646, 16
      %v793 = vrot.slane %v791, 1
      %v794 = vsel %vm654, %v789, %v793
      %v795 = vshrl.u32 %v646, 16
      %v797 = vor.u32 %v795, %v793
      %v799 = vshll.u32 %v647, 16
      %v801 = vrot.slane %v799, 1
      %v802 = vsel %vm654, %v797, %v801
      %v803 = vshrl.u32 %v647, 16
      %v805 = vor.u32 %v803, %v801
      %v807 = vshll.u32 %v648, 16
      %v809 = vrot.slane %v807, 1
      %v810 = vsel %vm654, %v805, %v809
      %v811 = vshrl.u32 %v648, 16
      %v813 = vor.u32 %v811, %v809
      %v815 = vshll.u32 %v649, 16
      %v817 = vrot.slane %v815, 1
      %v818 = vsel %vm654, %v813, %v817
      %v819 = vshrl.u32 %v649, 16
      %v821 = vor.u32 %v819, %v817
      %v823 = vshll.u32 %v650, 16
      %v825 = vrot.slane %v823, 1
      %v826 = vsel %vm654, %v821, %v825
      %v827 = vshrl.u32 %v650, 16
      %v829 = vor.u32 %v827, %v825
      %v831 = vshll.u32 %v651, 16
      %v833 = vrot.slane %v831, 1
      %v834 = vsel %vm654, %v829, %v833
      %v835 = vshrl.u32 %v651, 16
      %v837 = vor.u32 %v835, %v833
      %v839 = vshll.u32 %v652, 16
      %v841 = vrot.slane %v839, 1
      %v842 = vsel %vm654, %v837, %v841
      %v843 = vshrl.u32 %v652, 16
      %v845 = vor.u32 %v843, %v841
      %v847 = vshll.u32 %v653, 16
      %v849 = vrot.slane %v847, 1
      %v850 = vsel %vm654, %v845, %v849
      %v853 = vunpack.c.l.b16 %v525
      %v854 = vunpack.c.l.b16 %v526
      %v855 = vpack.c.b16 %v854, %v853
      %vm857 = vcmask 130048
      %v859 = vsel %vm857, %v666, 0
      %v862 = vsel %vm857, %v674, 0
      %v865 = vsel %vm857, %v682, 0
      %v868 = vsel %vm857, %v690, 0
      %v871 = vsel %vm857, %v698, 0
      %v874 = vsel %vm857, %v706, 0
      %v877 = vsel %vm857, %v714, 0
      %v880 = vsel %vm857, %v722, 0
      %v883 = vsel %vm857, %v730, 0
      %v886 = vsel %vm857, %v738, 0
      %v889 = vsel %vm857, %v746, 0
      %v892 = vsel %vm857, %v754, 0
      %v895 = vsel %vm857, %v762, 0
      %v898 = vsel %vm857, %v770, 0
      %v901 = vsel %vm857, %v778, 0
      %v904 = vsel %vm857, %v786, 0
      %v907 = vsel %vm857, %v794, 0
      %v910 = vsel %vm857, %v802, 0
      %v913 = vsel %vm857, %v810, 0
      %v916 = vsel %vm857, %v818, 0
      %v919 = vsel %vm857, %v826, 0
      %v922 = vsel %vm857, %v834, 0
      %v925 = vsel %vm857, %v842, 0
      %v928 = vsel %vm857, %v850, 0
      %930 = vmatpush.bf16.msra.mxu0 0
      %931 = vmatpush.bf16.msra.mxu0 0
      %932 = vmatpush.bf16.msra.mxu0 0
      %933 = vmatpush.bf16.msra.mxu0 0
      %934 = vmatpush.bf16.msra.mxu0 0
      %935 = vmatpush.bf16.msra.mxu0 0
      %936 = vmatpush.bf16.msra.mxu0 0
      %937 = vmatpush.bf16.msra.mxu0 %v855
      %938 = vmatmul.bf16.gmra.mxu0 %v859
      %v939 = vpop.f32.mrf.mxu0
      %v940 = vadd.f32 %v529, %v939
      %v941 = vpop.f32.mrf.mxu0
      %v942 = vadd.f32 %v529, %v941
      %943 = vmatmul.bf16.gmra.mxu0 %v862
      %v944 = vpop.f32.mrf.mxu0
      %v945 = vadd.f32 %v529, %v944
      %v946 = vpop.f32.mrf.mxu0
      %v947 = vadd.f32 %v529, %v946
      %948 = vmatmul.bf16.gmra.mxu0 %v865
      %v949 = vpop.f32.mrf.mxu0
      %v950 = vadd.f32 %v529, %v949
      %v951 = vpop.f32.mrf.mxu0
      %v952 = vadd.f32 %v529, %v951
      %953 = vmatmul.bf16.gmra.mxu0 %v868
      %v954 = vpop.f32.mrf.mxu0
      %v955 = vadd.f32 %v529, %v954
      %v956 = vpop.f32.mrf.mxu0
      %v957 = vadd.f32 %v529, %v956
      %958 = vmatmul.bf16.gmra.mxu0 %v871
      %v959 = vpop.f32.mrf.mxu0
      %v960 = vadd.f32 %v529, %v959
      %v961 = vpop.f32.mrf.mxu0
      %v962 = vadd.f32 %v529, %v961
      %963 = vmatmul.bf16.gmra.mxu0 %v874
      %v964 = vpop.f32.mrf.mxu0
      %v965 = vadd.f32 %v529, %v964
      %v966 = vpop.f32.mrf.mxu0
      %v967 = vadd.f32 %v529, %v966
      %968 = vmatmul.bf16.gmra.mxu0 %v877
      %v969 = vpop.f32.mrf.mxu0
      %v970 = vadd.f32 %v529, %v969
      %v971 = vpop.f32.mrf.mxu0
      %v972 = vadd.f32 %v529, %v971
      %973 = vmatmul.bf16.gmra.mxu0 %v880
      %v974 = vpop.f32.mrf.mxu0
      %v975 = vadd.f32 %v529, %v974
      %v976 = vpop.f32.mrf.mxu0
      %v977 = vadd.f32 %v529, %v976
      %978 = vmatmul.bf16.gmra.mxu0 %v883
      %v979 = vpop.f32.mrf.mxu0
      %v980 = vadd.f32 %v529, %v979
      %v981 = vpop.f32.mrf.mxu0
      %v982 = vadd.f32 %v529, %v981
      %983 = vmatmul.bf16.gmra.mxu0 %v886
      %v984 = vpop.f32.mrf.mxu0
      %v985 = vadd.f32 %v529, %v984
      %v986 = vpop.f32.mrf.mxu0
      %v987 = vadd.f32 %v529, %v986
      %988 = vmatmul.bf16.gmra.mxu0 %v889
      %v989 = vpop.f32.mrf.mxu0
      %v990 = vadd.f32 %v529, %v989
      %v991 = vpop.f32.mrf.mxu0
      %v992 = vadd.f32 %v529, %v991
      %993 = vmatmul.bf16.gmra.mxu0 %v892
      %v994 = vpop.f32.mrf.mxu0
      %v995 = vadd.f32 %v529, %v994
      %v996 = vpop.f32.mrf.mxu0
      %v997 = vadd.f32 %v529, %v996
      %998 = vmatmul.bf16.gmra.mxu0 %v895
      %v999 = vpop.f32.mrf.mxu0
      %v1000 = vadd.f32 %v529, %v999
      %v1001 = vpop.f32.mrf.mxu0
      %v1002 = vadd.f32 %v529, %v1001
      %1003 = vmatmul.bf16.gmra.mxu0 %v898
      %v1004 = vpop.f32.mrf.mxu0
      %v1005 = vadd.f32 %v529, %v1004
      %v1006 = vpop.f32.mrf.mxu0
      %v1007 = vadd.f32 %v529, %v1006
      %1008 = vmatmul.bf16.gmra.mxu0 %v901
      %v1009 = vpop.f32.mrf.mxu0
      %v1010 = vadd.f32 %v529, %v1009
      %v1011 = vpop.f32.mrf.mxu0
      %v1012 = vadd.f32 %v529, %v1011
      %1013 = vmatmul.bf16.gmra.mxu0 %v904
      %v1014 = vpop.f32.mrf.mxu0
      %v1015 = vadd.f32 %v529, %v1014
      %v1016 = vpop.f32.mrf.mxu0
      %v1017 = vadd.f32 %v529, %v1016
      %1018 = vmatmul.bf16.gmra.mxu0 %v907
      %v1019 = vpop.f32.mrf.mxu0
      %v1020 = vadd.f32 %v529, %v1019
      %v1021 = vpop.f32.mrf.mxu0
      %v1022 = vadd.f32 %v529, %v1021
      %1023 = vmatmul.bf16.gmra.mxu0 %v910
      %v1024 = vpop.f32.mrf.mxu0
      %v1025 = vadd.f32 %v529, %v1024
      %v1026 = vpop.f32.mrf.mxu0
      %v1027 = vadd.f32 %v529, %v1026
      %1028 = vmatmul.bf16.gmra.mxu0 %v913
      %v1029 = vpop.f32.mrf.mxu0
      %v1030 = vadd.f32 %v529, %v1029
      %v1031 = vpop.f32.mrf.mxu0
      %v1032 = vadd.f32 %v529, %v1031
      %1033 = vmatmul.bf16.gmra.mxu0 %v916
      %v1034 = vpop.f32.mrf.mxu0
      %v1035 = vadd.f32 %v529, %v1034
      %v1036 = vpop.f32.mrf.mxu0
      %v1037 = vadd.f32 %v529, %v1036
      %1038 = vmatmul.bf16.gmra.mxu0 %v919
      %v1039 = vpop.f32.mrf.mxu0
      %v1040 = vadd.f32 %v529, %v1039
      %v1041 = vpop.f32.mrf.mxu0
      %v1042 = vadd.f32 %v529, %v1041
      %1043 = vmatmul.bf16.gmra.mxu0 %v922
      %v1044 = vpop.f32.mrf.mxu0
      %v1045 = vadd.f32 %v529, %v1044
      %v1046 = vpop.f32.mrf.mxu0
      %v1047 = vadd.f32 %v529, %v1046
      %1048 = vmatmul.bf16.gmra.mxu0 %v925
      %v1049 = vpop.f32.mrf.mxu0
      %v1050 = vadd.f32 %v529, %v1049
      %v1051 = vpop.f32.mrf.mxu0
      %v1052 = vadd.f32 %v529, %v1051
      %1053 = vmatmul.bf16.gmra.mxu0 %v928
      %v1054 = vpop.f32.mrf.mxu0
      %v1055 = vadd.f32 %v529, %v1054
      %v1056 = vpop.f32.mrf.mxu0
      %v1057 = vadd.f32 %v529, %v1056
      %1058 = vdwg.mxu0
      %v1059 = vmax.f32 %v940, 0.0
      %v1060 = vmax.f32 %v942, 0.0
      %v1061 = vmax.f32 %v945, 0.0
      %v1062 = vmax.f32 %v947, 0.0
      %v1063 = vmax.f32 %v950, 0.0
      %v1064 = vmax.f32 %v952, 0.0
      %v1065 = vmax.f32 %v955, 0.0
      %v1066 = vmax.f32 %v957, 0.0
      %v1067 = vmax.f32 %v960, 0.0
      %v1068 = vmax.f32 %v962, 0.0
      %v1069 = vmax.f32 %v965, 0.0
      %v1070 = vmax.f32 %v967, 0.0
      %v1071 = vmax.f32 %v970, 0.0
      %v1072 = vmax.f32 %v972, 0.0
      %v1073 = vmax.f32 %v975, 0.0
      %v1074 = vmax.f32 %v977, 0.0
      %v1075 = vmax.f32 %v980, 0.0
      %v1076 = vmax.f32 %v982, 0.0
      %v1077 = vmax.f32 %v985, 0.0
      %v1078 = vmax.f32 %v987, 0.0
      %v1079 = vmax.f32 %v990, 0.0
      %v1080 = vmax.f32 %v992, 0.0
      %v1081 = vmax.f32 %v995, 0.0
      %v1082 = vmax.f32 %v997, 0.0
      %v1083 = vmax.f32 %v1000, 0.0
      %v1084 = vmax.f32 %v1002, 0.0
      %v1085 = vmax.f32 %v1005, 0.0
      %v1086 = vmax.f32 %v1007, 0.0
      %v1087 = vmax.f32 %v1010, 0.0
      %v1088 = vmax.f32 %v1012, 0.0
      %v1089 = vmax.f32 %v1015, 0.0
      %v1090 = vmax.f32 %v1017, 0.0
      %v1091 = vmax.f32 %v1020, 0.0
      %v1092 = vmax.f32 %v1022, 0.0
      %v1093 = vmax.f32 %v1025, 0.0
      %v1094 = vmax.f32 %v1027, 0.0
      %v1095 = vmax.f32 %v1030, 0.0
      %v1096 = vmax.f32 %v1032, 0.0
      %v1097 = vmax.f32 %v1035, 0.0
      %v1098 = vmax.f32 %v1037, 0.0
      %v1099 = vmax.f32 %v1040, 0.0
      %v1100 = vmax.f32 %v1042, 0.0
      %v1101 = vmax.f32 %v1045, 0.0
      %v1102 = vmax.f32 %v1047, 0.0
      %v1103 = vmax.f32 %v1050, 0.0
      %v1104 = vmax.f32 %v1052, 0.0
      %v1105 = vmax.f32 %v1055, 0.0
      %v1106 = vmax.f32 %v1057, 0.0
      %1108 = vset.pattern.permute.xlu0 0
      %1109 = vperm.xlu0 %1108, %v473
      %v1110 = vpop.permute.xlu0 %1109
      %1112 = vset.pattern.permute.xlu0 0
      %1113 = vperm.xlu0 %1112, %v474
      %v1114 = vpop.permute.xlu0 %1113
      %1116 = vset.pattern.permute.xlu0 0
      %1117 = vperm.xlu0 %1116, %v475
      %v1118 = vpop.permute.xlu0 %1117
      %1120 = vset.pattern.permute.xlu0 0
      %1121 = vperm.xlu0 %1120, %v476
      %v1122 = vpop.permute.xlu0 %1121
      %1124 = vset.pattern.permute.xlu0 0
      %1125 = vperm.xlu0 %1124, %v477
      %v1126 = vpop.permute.xlu0 %1125
      %1128 = vset.pattern.permute.xlu0 0
      %1129 = vperm.xlu0 %1128, %v478
      %v1130 = vpop.permute.xlu0 %1129
      %1132 = vset.pattern.permute.xlu0 0
      %1133 = vperm.xlu0 %1132, %v479
      %v1134 = vpop.permute.xlu0 %1133
      %1136 = vset.pattern.permute.xlu0 0
      %1137 = vperm.xlu0 %1136, %v480
      %v1138 = vpop.permute.xlu0 %1137
      %1140 = vset.pattern.permute.xlu0 0
      %1141 = vperm.xlu0 %1140, %v481
      %v1142 = vpop.permute.xlu0 %1141
      %1144 = vset.pattern.permute.xlu0 0
      %1145 = vperm.xlu0 %1144, %v482
      %v1146 = vpop.permute.xlu0 %1145
      %1148 = vset.pattern.permute.xlu0 0
      %1149 = vperm.xlu0 %1148, %v483
      %v1150 = vpop.permute.xlu0 %1149
      %1152 = vset.pattern.permute.xlu0 0
      %1153 = vperm.xlu0 %1152, %v484
      %v1154 = vpop.permute.xlu0 %1153
      %1156 = vset.pattern.permute.xlu0 0
      %1157 = vperm.xlu0 %1156, %v485
      %v1158 = vpop.permute.xlu0 %1157
      %1160 = vset.pattern.permute.xlu0 0
      %1161 = vperm.xlu0 %1160, %v486
      %v1162 = vpop.permute.xlu0 %1161
      %1164 = vset.pattern.permute.xlu0 0
      %1165 = vperm.xlu0 %1164, %v487
      %v1166 = vpop.permute.xlu0 %1165
      %1168 = vset.pattern.permute.xlu0 0
      %1169 = vperm.xlu0 %1168, %v488
      %v1170 = vpop.permute.xlu0 %1169
      %1172 = vset.pattern.permute.xlu0 0
      %1173 = vperm.xlu0 %1172, %v489
      %v1174 = vpop.permute.xlu0 %1173
      %1176 = vset.pattern.permute.xlu0 0
      %1177 = vperm.xlu0 %1176, %v490
      %v1178 = vpop.permute.xlu0 %1177
      %1180 = vset.pattern.permute.xlu0 0
      %1181 = vperm.xlu0 %1180, %v491
      %v1182 = vpop.permute.xlu0 %1181
      %1184 = vset.pattern.permute.xlu0 0
      %1185 = vperm.xlu0 %1184, %v492
      %v1186 = vpop.permute.xlu0 %1185
      %1188 = vset.pattern.permute.xlu0 0
      %1189 = vperm.xlu0 %1188, %v493
      %v1190 = vpop.permute.xlu0 %1189
      %1192 = vset.pattern.permute.xlu0 0
      %1193 = vperm.xlu0 %1192, %v494
      %v1194 = vpop.permute.xlu0 %1193
      %1196 = vset.pattern.permute.xlu0 0
      %1197 = vperm.xlu0 %1196, %v495
      %v1198 = vpop.permute.xlu0 %1197
      %1200 = vset.pattern.permute.xlu0 0
      %1201 = vperm.xlu0 %1200, %v496
      %v1202 = vpop.permute.xlu0 %1201
      %1204 = vset.pattern.permute.xlu0 0
      %1205 = vperm.xlu0 %1204, %v497
      %v1206 = vpop.permute.xlu0 %1205
      %1208 = vset.pattern.permute.xlu0 0
      %1209 = vperm.xlu0 %1208, %v498
      %v1210 = vpop.permute.xlu0 %1209
      %1212 = vset.pattern.permute.xlu0 0
      %1213 = vperm.xlu0 %1212, %v499
      %v1214 = vpop.permute.xlu0 %1213
      %1216 = vset.pattern.permute.xlu0 0
      %1217 = vperm.xlu0 %1216, %v500
      %v1218 = vpop.permute.xlu0 %1217
      %1220 = vset.pattern.permute.xlu0 0
      %1221 = vperm.xlu0 %1220, %v501
      %v1222 = vpop.permute.xlu0 %1221
      %1224 = vset.pattern.permute.xlu0 0
      %1225 = vperm.xlu0 %1224, %v502
      %v1226 = vpop.permute.xlu0 %1225
      %1228 = vset.pattern.permute.xlu0 0
      %1229 = vperm.xlu0 %1228, %v503
      %v1230 = vpop.permute.xlu0 %1229
      %1232 = vset.pattern.permute.xlu0 0
      %1233 = vperm.xlu0 %1232, %v504
      %v1234 = vpop.permute.xlu0 %1233
      %1236 = vset.pattern.permute.xlu0 0
      %1237 = vperm.xlu0 %1236, %v505
      %v1238 = vpop.permute.xlu0 %1237
      %1240 = vset.pattern.permute.xlu0 0
      %1241 = vperm.xlu0 %1240, %v506
      %v1242 = vpop.permute.xlu0 %1241
      %1244 = vset.pattern.permute.xlu0 0
      %1245 = vperm.xlu0 %1244, %v507
      %v1246 = vpop.permute.xlu0 %1245
      %1248 = vset.pattern.permute.xlu0 0
      %1249 = vperm.xlu0 %1248, %v508
      %v1250 = vpop.permute.xlu0 %1249
      %1252 = vset.pattern.permute.xlu0 0
      %1253 = vperm.xlu0 %1252, %v509
      %v1254 = vpop.permute.xlu0 %1253
      %1256 = vset.pattern.permute.xlu0 0
      %1257 = vperm.xlu0 %1256, %v510
      %v1258 = vpop.permute.xlu0 %1257
      %1260 = vset.pattern.permute.xlu0 0
      %1261 = vperm.xlu0 %1260, %v511
      %v1262 = vpop.permute.xlu0 %1261
      %1264 = vset.pattern.permute.xlu0 0
      %1265 = vperm.xlu0 %1264, %v512
      %v1266 = vpop.permute.xlu0 %1265
      %1268 = vset.pattern.permute.xlu0 0
      %1269 = vperm.xlu0 %1268, %v513
      %v1270 = vpop.permute.xlu0 %1269
      %1272 = vset.pattern.permute.xlu0 0
      %1273 = vperm.xlu0 %1272, %v514
      %v1274 = vpop.permute.xlu0 %1273
      %1276 = vset.pattern.permute.xlu0 0
      %1277 = vperm.xlu0 %1276, %v515
      %v1278 = vpop.permute.xlu0 %1277
      %1280 = vset.pattern.permute.xlu0 0
      %1281 = vperm.xlu0 %1280, %v516
      %v1282 = vpop.permute.xlu0 %1281
      %1284 = vset.pattern.permute.xlu0 0
      %1285 = vperm.xlu0 %1284, %v517
      %v1286 = vpop.permute.xlu0 %1285
      %1288 = vset.pattern.permute.xlu0 0
      %1289 = vperm.xlu0 %1288, %v518
      %v1290 = vpop.permute.xlu0 %1289
      %1292 = vset.pattern.permute.xlu0 0
      %1293 = vperm.xlu0 %1292, %v519
      %v1294 = vpop.permute.xlu0 %1293
      %1296 = vset.pattern.permute.xlu0 0
      %1297 = vperm.xlu0 %1296, %v520
      %v1298 = vpop.permute.xlu0 %1297
      %1300 = vset.pattern.permute.xlu0 0
      %1301 = vperm.xlu0 %1300, %v521
      %v1302 = vpop.permute.xlu0 %1301
      %vm1303 = vcmask 1046528
      %v1304 = vrot.slane %v1110, 1
      %v1305 = vrot.slane %v1114, 1
      %v1306 = vsel %vm1303, %v1304, %v1305
      %v1307 = vrot.slane %v1118, 1
      %v1308 = vsel %vm1303, %v1305, %v1307
      %v1309 = vrot.slane %v1122, 1
      %v1310 = vsel %vm1303, %v1307, %v1309
      %v1311 = vrot.slane %v1126, 1
      %v1312 = vsel %vm1303, %v1309, %v1311
      %v1313 = vrot.slane %v1130, 1
      %v1314 = vsel %vm1303, %v1311, %v1313
      %v1315 = vrot.slane %v1134, 1
      %v1316 = vsel %vm1303, %v1313, %v1315
      %v1317 = vrot.slane %v1138, 1
      %v1318 = vsel %vm1303, %v1315, %v1317
      %v1319 = vrot.slane %v1142, 1
      %v1320 = vsel %vm1303, %v1317, %v1319
      %v1321 = vrot.slane %v1146, 1
      %v1322 = vsel %vm1303, %v1319, %v1321
      %v1323 = vrot.slane %v1150, 1
      %v1324 = vsel %vm1303, %v1321, %v1323
      %v1325 = vrot.slane %v1154, 1
      %v1326 = vsel %vm1303, %v1323, %v1325
      %v1327 = vrot.slane %v1158, 1
      %v1328 = vsel %vm1303, %v1325, %v1327
      %v1329 = vrot.slane %v1162, 1
      %v1330 = vsel %vm1303, %v1327, %v1329
      %v1331 = vrot.slane %v1166, 1
      %v1332 = vsel %vm1303, %v1329, %v1331
      %v1333 = vrot.slane %v1170, 1
      %v1334 = vsel %vm1303, %v1331, %v1333
      %v1335 = vrot.slane %v1174, 1
      %v1336 = vsel %vm1303, %v1333, %v1335
      %v1337 = vrot.slane %v1178, 1
      %v1338 = vsel %vm1303, %v1335, %v1337
      %v1339 = vrot.slane %v1182, 1
      %v1340 = vsel %vm1303, %v1337, %v1339
      %v1341 = vrot.slane %v1186, 1
      %v1342 = vsel %vm1303, %v1339, %v1341
      %v1343 = vrot.slane %v1190, 1
      %v1344 = vsel %vm1303, %v1341, %v1343
      %v1345 = vrot.slane %v1194, 1
      %v1346 = vsel %vm1303, %v1343, %v1345
      %v1347 = vrot.slane %v1198, 1
      %v1348 = vsel %vm1303, %v1345, %v1347
      %v1349 = vrot.slane %v1202, 1
      %v1350 = vsel %vm1303, %v1347, %v1349
      %v1351 = vrot.slane %v1206, 1
      %v1352 = vsel %vm1303, %v1349, %v1351
      %v1353 = vrot.slane %v1210, 1
      %v1354 = vsel %vm1303, %v1351, %v1353
      %v1355 = vrot.slane %v1214, 1
      %v1356 = vsel %vm1303, %v1353, %v1355
      %v1357 = vrot.slane %v1218, 1
      %v1358 = vsel %vm1303, %v1355, %v1357
      %v1359 = vrot.slane %v1222, 1
      %v1360 = vsel %vm1303, %v1357, %v1359
      %v1361 = vrot.slane %v1226, 1
      %v1362 = vsel %vm1303, %v1359, %v1361
      %v1363 = vrot.slane %v1230, 1
      %v1364 = vsel %vm1303, %v1361, %v1363
      %v1365 = vrot.slane %v1234, 1
      %v1366 = vsel %vm1303, %v1363, %v1365
      %v1367 = vrot.slane %v1238, 1
      %v1368 = vsel %vm1303, %v1365, %v1367
      %v1369 = vrot.slane %v1242, 1
      %v1370 = vsel %vm1303, %v1367, %v1369
      %v1371 = vrot.slane %v1246, 1
      %v1372 = vsel %vm1303, %v1369, %v1371
      %v1373 = vrot.slane %v1250, 1
      %v1374 = vsel %vm1303, %v1371, %v1373
      %v1375 = vrot.slane %v1254, 1
      %v1376 = vsel %vm1303, %v1373, %v1375
      %v1377 = vrot.slane %v1258, 1
      %v1378 = vsel %vm1303, %v1375, %v1377
      %v1379 = vrot.slane %v1262, 1
      %v1380 = vsel %vm1303, %v1377, %v1379
      %v1381 = vrot.slane %v1266, 1
      %v1382 = vsel %vm1303, %v1379, %v1381
      %v1383 = vrot.slane %v1270, 1
      %v1384 = vsel %vm1303, %v1381, %v1383
      %v1385 = vrot.slane %v1274, 1
      %v1386 = vsel %vm1303, %v1383, %v1385
      %v1387 = vrot.slane %v1278, 1
      %v1388 = vsel %vm1303, %v1385, %v1387
      %v1389 = vrot.slane %v1282, 1
      %v1390 = vsel %vm1303, %v1387, %v1389
      %v1391 = vrot.slane %v1286, 1
      %v1392 = vsel %vm1303, %v1389, %v1391
      %v1393 = vrot.slane %v1290, 1
      %v1394 = vsel %vm1303, %v1391, %v1393
      %v1395 = vrot.slane %v1294, 1
      %v1396 = vsel %vm1303, %v1393, %v1395
      %v1397 = vrot.slane %v1298, 1
      %v1398 = vsel %vm1303, %v1395, %v1397
      %v1399 = vrot.slane %v1302, 1
      %v1400 = vsel %vm1303, %v1397, %v1399
      %v1449 = vmul.f32 %v1059, %v1306
      %v1450 = vmul.f32 %v1060, %v1308
      %v1451 = vmul.f32 %v1061, %v1310
      %v1452 = vmul.f32 %v1062, %v1312
      %v1453 = vmul.f32 %v1063, %v1314
      %v1454 = vmul.f32 %v1064, %v1316
      %v1455 = vmul.f32 %v1065, %v1318
      %v1456 = vmul.f32 %v1066, %v1320
      %v1457 = vmul.f32 %v1067, %v1322
      %v1458 = vmul.f32 %v1068, %v1324
      %v1459 = vmul.f32 %v1069, %v1326
      %v1460 = vmul.f32 %v1070, %v1328
      %v1461 = vmul.f32 %v1071, %v1330
      %v1462 = vmul.f32 %v1072, %v1332
      %v1463 = vmul.f32 %v1073, %v1334
      %v1464 = vmul.f32 %v1074, %v1336
      %v1465 = vmul.f32 %v1075, %v1338
      %v1466 = vmul.f32 %v1076, %v1340
      %v1467 = vmul.f32 %v1077, %v1342
      %v1468 = vmul.f32 %v1078, %v1344
      %v1469 = vmul.f32 %v1079, %v1346
      %v1470 = vmul.f32 %v1080, %v1348
      %v1471 = vmul.f32 %v1081, %v1350
      %v1472 = vmul.f32 %v1082, %v1352
      %v1473 = vmul.f32 %v1083, %v1354
      %v1474 = vmul.f32 %v1084, %v1356
      %v1475 = vmul.f32 %v1085, %v1358
      %v1476 = vmul.f32 %v1086, %v1360
      %v1477 = vmul.f32 %v1087, %v1362
      %v1478 = vmul.f32 %v1088, %v1364
      %v1479 = vmul.f32 %v1089, %v1366
      %v1480 = vmul.f32 %v1090, %v1368
      %v1481 = vmul.f32 %v1091, %v1370
      %v1482 = vmul.f32 %v1092, %v1372
      %v1483 = vmul.f32 %v1093, %v1374
      %v1484 = vmul.f32 %v1094, %v1376
      %v1485 = vmul.f32 %v1095, %v1378
      %v1486 = vmul.f32 %v1096, %v1380
      %v1487 = vmul.f32 %v1097, %v1382
      %v1488 = vmul.f32 %v1098, %v1384
      %v1489 = vmul.f32 %v1099, %v1386
      %v1490 = vmul.f32 %v1100, %v1388
      %v1491 = vmul.f32 %v1101, %v1390
      %v1492 = vmul.f32 %v1102, %v1392
      %v1493 = vmul.f32 %v1103, %v1394
      %v1494 = vmul.f32 %v1104, %v1396
      %v1495 = vmul.f32 %v1105, %v1398
      %v1496 = vmul.f32 %v1106, %v1400
      %vm1497 = vcmask 125952
      %1498 = vst.msk [vmem:[#allocation2] sm:$0xf] %vm1497, 0
      %1499 = vst.msk [vmem:[#allocation2 + $0x4] sm:$0xf] %vm1497, 0
      %1500 = vst.msk [vmem:[#allocation2 + $0x8] sm:$0xf] %vm1497, 0
      %1501 = vst.msk [vmem:[#allocation2 + $0xc] sm:$0xf] %vm1497, 0
      %1502 = vst.msk [vmem:[#allocation2 + $0x10] sm:$0xf] %vm1497, 0
      %1503 = vst.msk [vmem:[#allocation2 + $0x14] sm:$0xf] %vm1497, 0
      %1504 = vst.msk [vmem:[#allocation2 + $0x18] sm:$0xf] %vm1497, 0
      %1505 = vst.msk [vmem:[#allocation2 + $0x1c] sm:$0xf] %vm1497, 0
      %1506 = vst.msk [vmem:[#allocation2 + $0x20] sm:$0xf] %vm1497, 0
      %1507 = vst.msk [vmem:[#allocation2 + $0x24] sm:$0xf] %vm1497, 0
      %1508 = vst.msk [vmem:[#allocation2 + $0x28] sm:$0xf] %vm1497, 0
      %1509 = vst.msk [vmem:[#allocation2 + $0x2c] sm:$0xf] %vm1497, 0
      %1510 = vst.msk [vmem:[#allocation2 + $0x30] sm:$0xf] %vm1497, 0
      %1511 = vst.msk [vmem:[#allocation2 + $0x34] sm:$0xf] %vm1497, 0
      %1512 = vst.msk [vmem:[#allocation2 + $0x38] sm:$0xf] %vm1497, 0
      %1513 = vst.msk [vmem:[#allocation2 + $0x3c] sm:$0xf] %vm1497, 0
      %1514 = vst.msk [vmem:[#allocation2 + $0x40] sm:$0xf] %vm1497, 0
      %1515 = vst.msk [vmem:[#allocation2 + $0x44] sm:$0xf] %vm1497, 0
      %1516 = vst.msk [vmem:[#allocation2 + $0x48] sm:$0xf] %vm1497, 0
      %1517 = vst.msk [vmem:[#allocation2 + $0x4c] sm:$0xf] %vm1497, 0
      %1518 = vst.msk [vmem:[#allocation2 + $0x50] sm:$0xf] %vm1497, 0
      %1519 = vst.msk [vmem:[#allocation2 + $0x54] sm:$0xf] %vm1497, 0
      %1520 = vst.msk [vmem:[#allocation2 + $0x58] sm:$0xf] %vm1497, 0
      %1521 = vst.msk [vmem:[#allocation2 + $0x5c] sm:$0xf] %vm1497, 0
      %1522 = vst.msk [vmem:[#allocation2 + $0x60] sm:$0xf] %vm1497, 0
      %1523 = vst.msk [vmem:[#allocation2 + $0x64] sm:$0xf] %vm1497, 0
      %1524 = vst.msk [vmem:[#allocation2 + $0x68] sm:$0xf] %vm1497, 0
      %1525 = vst.msk [vmem:[#allocation2 + $0x6c] sm:$0xf] %vm1497, 0
      %1526 = vst.msk [vmem:[#allocation2 + $0x70] sm:$0xf] %vm1497, 0
      %1527 = vst.msk [vmem:[#allocation2 + $0x74] sm:$0xf] %vm1497, 0
      %1528 = vst.msk [vmem:[#allocation2 + $0x78] sm:$0xf] %vm1497, 0
      %1529 = vst.msk [vmem:[#allocation2 + $0x7c] sm:$0xf] %vm1497, 0
      %1530 = vst.msk [vmem:[#allocation2 + $0x80] sm:$0xf] %vm1497, 0
      %1531 = vst.msk [vmem:[#allocation2 + $0x84] sm:$0xf] %vm1497, 0
      %1532 = vst.msk [vmem:[#allocation2 + $0x88] sm:$0xf] %vm1497, 0
      %1533 = vst.msk [vmem:[#allocation2 + $0x8c] sm:$0xf] %vm1497, 0
      %1534 = vst.msk [vmem:[#allocation2 + $0x90] sm:$0xf] %vm1497, 0
      %1535 = vst.msk [vmem:[#allocation2 + $0x94] sm:$0xf] %vm1497, 0
      %1536 = vst.msk [vmem:[#allocation2 + $0x98] sm:$0xf] %vm1497, 0
      %1537 = vst.msk [vmem:[#allocation2 + $0x9c] sm:$0xf] %vm1497, 0
      %1538 = vst.msk [vmem:[#allocation2 + $0xa0] sm:$0xf] %vm1497, 0
      %1539 = vst.msk [vmem:[#allocation2 + $0xa4] sm:$0xf] %vm1497, 0
      %1540 = vst.msk [vmem:[#allocation2 + $0xa8] sm:$0xf] %vm1497, 0
      %1541 = vst.msk [vmem:[#allocation2 + $0xac] sm:$0xf] %vm1497, 0
      %1542 = vst.msk [vmem:[#allocation2 + $0xb0] sm:$0xf] %vm1497, 0
      %1543 = vst.msk [vmem:[#allocation2 + $0xb4] sm:$0xf] %vm1497, 0
      %1544 = vst.msk [vmem:[#allocation2 + $0xb8] sm:$0xf] %vm1497, 0
      %1545 = vst.msk [vmem:[#allocation2 + $0xbc] sm:$0xf] %vm1497, 0
      %1546 = vst.msk [vmem:[#allocation2 + $0xc0] sm:$0xf] %vm1497, 0
      %1547 = vst.msk [vmem:[#allocation2 + $0xc4] sm:$0xf] %vm1497, 0
      %1548 = vst.msk [vmem:[#allocation2 + $0xc8] sm:$0xf] %vm1497, 0
      %1549 = vst.msk [vmem:[#allocation2 + $0xcc] sm:$0xf] %vm1497, 0
      %1550 = vst.msk [vmem:[#allocation2 + $0xd0] sm:$0xf] %vm1497, 0
      %1551 = vst.msk [vmem:[#allocation2 + $0xd4] sm:$0xf] %vm1497, 0
      %1552 = vst.msk [vmem:[#allocation2 + $0xd8] sm:$0xf] %vm1497, 0
      %1553 = vst.msk [vmem:[#allocation2 + $0xdc] sm:$0xf] %vm1497, 0
      %vm1554 = vcmask 60416
      %1555 = vst.msk [vmem:[#allocation3] sm:$0xf] %vm1554, 0
      %1556 = vst.msk [vmem:[#allocation3 + $0x4] sm:$0xf] %vm1554, 0
      %1557 = vst.msk [vmem:[#allocation3 + $0x8] sm:$0xf] %vm1554, 0
      %1558 = vst.msk [vmem:[#allocation3 + $0xc] sm:$0xf] %vm1554, 0
      %1559 = vst.msk [vmem:[#allocation3 + $0x10] sm:$0xf] %vm1554, 0
      %1560 = vst.msk [vmem:[#allocation3 + $0x14] sm:$0xf] %vm1554, 0
      %1561 = vst.msk [vmem:[#allocation3 + $0x18] sm:$0xf] %vm1554, 0
      %1562 = vst.msk [vmem:[#allocation3 + $0x1c] sm:$0xf] %vm1554, 0
      %1563 = vst.msk [vmem:[#allocation3 + $0x20] sm:$0xf] %vm1554, 0
      %1564 = vst.msk [vmem:[#allocation3 + $0x24] sm:$0xf] %vm1554, 0
      %1565 = vst.msk [vmem:[#allocation3 + $0x28] sm:$0xf] %vm1554, 0
      %1566 = vst.msk [vmem:[#allocation3 + $0x2c] sm:$0xf] %vm1554, 0
      %1567 = vst.msk [vmem:[#allocation3 + $0x30] sm:$0xf] %vm1554, 0
      %1568 = vst.msk [vmem:[#allocation3 + $0x34] sm:$0xf] %vm1554, 0
      %1569 = vst.msk [vmem:[#allocation3 + $0x38] sm:$0xf] %vm1554, 0
      %1570 = vst.msk [vmem:[#allocation3 + $0x3c] sm:$0xf] %vm1554, 0
      %1571 = vst.msk [vmem:[#allocation3 + $0x40] sm:$0xf] %vm1554, 0
      %1572 = vst.msk [vmem:[#allocation3 + $0x44] sm:$0xf] %vm1554, 0
      %1573 = vst.msk [vmem:[#allocation3 + $0x48] sm:$0xf] %vm1554, 0
      %1574 = vst.msk [vmem:[#allocation3 + $0x4c] sm:$0xf] %vm1554, 0
      %1575 = vst.msk [vmem:[#allocation3 + $0x50] sm:$0xf] %vm1554, 0
      %1576 = vst.msk [vmem:[#allocation3 + $0x54] sm:$0xf] %vm1554, 0
      %1577 = vst.msk [vmem:[#allocation3 + $0x58] sm:$0xf] %vm1554, 0
      %1578 = vst.msk [vmem:[#allocation3 + $0x5c] sm:$0xf] %vm1554, 0
      %1579 = vst.msk [vmem:[#allocation3 + $0x60] sm:$0xf] %vm1554, 0
      %1580 = vst.msk [vmem:[#allocation3 + $0x64] sm:$0xf] %vm1554, 0
      %1581 = vst.msk [vmem:[#allocation3 + $0x68] sm:$0xf] %vm1554, 0
      %1582 = vst.msk [vmem:[#allocation3 + $0x6c] sm:$0xf] %vm1554, 0
      %1583 = vst.msk [vmem:[#allocation3 + $0x70] sm:$0xf] %vm1554, 0
      %1584 = vst.msk [vmem:[#allocation3 + $0x74] sm:$0xf] %vm1554, 0
      %1585 = vst.msk [vmem:[#allocation3 + $0x78] sm:$0xf] %vm1554, 0
      %1586 = vst.msk [vmem:[#allocation3 + $0x7c] sm:$0xf] %vm1554, 0
      %1587 = vst.msk [vmem:[#allocation3 + $0x80] sm:$0xf] %vm1554, 0
      %1588 = vst.msk [vmem:[#allocation3 + $0x84] sm:$0xf] %vm1554, 0
      %1589 = vst.msk [vmem:[#allocation3 + $0x88] sm:$0xf] %vm1554, 0
      %1590 = vst.msk [vmem:[#allocation3 + $0x8c] sm:$0xf] %vm1554, 0
      %1591 = vst.msk [vmem:[#allocation3 + $0x90] sm:$0xf] %vm1554, 0
      %1592 = vst.msk [vmem:[#allocation3 + $0x94] sm:$0xf] %vm1554, 0
      %1593 = vst.msk [vmem:[#allocation3 + $0x98] sm:$0xf] %vm1554, 0
      %1594 = vst.msk [vmem:[#allocation3 + $0x9c] sm:$0xf] %vm1554, 0
      %1595 = vst.msk [vmem:[#allocation3 + $0xa0] sm:$0xf] %vm1554, 0
      %1596 = vst.msk [vmem:[#allocation3 + $0xa4] sm:$0xf] %vm1554, 0
      %1597 = vst.msk [vmem:[#allocation3 + $0xa8] sm:$0xf] %vm1554, 0
      %1598 = vst.msk [vmem:[#allocation3 + $0xac] sm:$0xf] %vm1554, 0
      %1599 = vst.msk [vmem:[#allocation3 + $0xb0] sm:$0xf] %vm1554, 0
      %1600 = vst.msk [vmem:[#allocation3 + $0xb4] sm:$0xf] %vm1554, 0
      %1601 = vst.msk [vmem:[#allocation3 + $0xb8] sm:$0xf] %vm1554, 0
      %1602 = vst.msk [vmem:[#allocation3 + $0xbc] sm:$0xf] %vm1554, 0
      %1603 = vst.msk [vmem:[#allocation3 + $0xc0] sm:$0xf] %vm1554, 0
      %1604 = vst.msk [vmem:[#allocation3 + $0xc4] sm:$0xf] %vm1554, 0
      %1605 = vst.msk [vmem:[#allocation3 + $0xc8] sm:$0xf] %vm1554, 0
      %1606 = vst.msk [vmem:[#allocation3 + $0xcc] sm:$0xf] %vm1554, 0
      %1607 = vst.msk [vmem:[#allocation3 + $0xd0] sm:$0xf] %vm1554, 0
      %1608 = vst.msk [vmem:[#allocation3 + $0xd4] sm:$0xf] %vm1554, 0
      %1609 = vst.msk [vmem:[#allocation3 + $0xd8] sm:$0xf] %vm1554, 0
      %1610 = vst.msk [vmem:[#allocation3 + $0xdc] sm:$0xf] %vm1554, 0
      %1611 = vst.msk [vmem:[#allocation4] sm:$0xf] %vm1497, 0
      %1612 = vst.msk [vmem:[#allocation4 + $0x4] sm:$0xf] %vm1497, 0
      %1613 = vst.msk [vmem:[#allocation4 + $0x8] sm:$0xf] %vm1497, 0
      %1614 = vst.msk [vmem:[#allocation4 + $0xc] sm:$0xf] %vm1497, 0
      %1615 = vst.msk [vmem:[#allocation4 + $0x10] sm:$0xf] %vm1497, 0
      %1616 = vst.msk [vmem:[#allocation4 + $0x14] sm:$0xf] %vm1497, 0
      %1617 = vst.msk [vmem:[#allocation4 + $0x18] sm:$0xf] %vm1497, 0
      %1618 = vst.msk [vmem:[#allocation4 + $0x1c] sm:$0xf] %vm1497, 0
      %1619 = vst.msk [vmem:[#allocation4 + $0x20] sm:$0xf] %vm1497, 0
      %1620 = vst.msk [vmem:[#allocation4 + $0x24] sm:$0xf] %vm1497, 0
      %1621 = vst.msk [vmem:[#allocation4 + $0x28] sm:$0xf] %vm1497, 0
      %1622 = vst.msk [vmem:[#allocation4 + $0x2c] sm:$0xf] %vm1497, 0
      %1623 = vst.msk [vmem:[#allocation4 + $0x30] sm:$0xf] %vm1497, 0
      %1624 = vst.msk [vmem:[#allocation4 + $0x34] sm:$0xf] %vm1497, 0
      %1625 = vst.msk [vmem:[#allocation4 + $0x38] sm:$0xf] %vm1497, 0
      %1626 = vst.msk [vmem:[#allocation4 + $0x3c] sm:$0xf] %vm1497, 0
      %1627 = vst.msk [vmem:[#allocation4 + $0x40] sm:$0xf] %vm1497, 0
      %1628 = vst.msk [vmem:[#allocation4 + $0x44] sm:$0xf] %vm1497, 0
      %1629 = vst.msk [vmem:[#allocation4 + $0x48] sm:$0xf] %vm1497, 0
      %1630 = vst.msk [vmem:[#allocation4 + $0x4c] sm:$0xf] %vm1497, 0
      %1631 = vst.msk [vmem:[#allocation4 + $0x50] sm:$0xf] %vm1497, 0
      %1632 = vst.msk [vmem:[#allocation4 + $0x54] sm:$0xf] %vm1497, 0
      %1633 = vst.msk [vmem:[#allocation4 + $0x58] sm:$0xf] %vm1497, 0
      %1634 = vst.msk [vmem:[#allocation4 + $0x5c] sm:$0xf] %vm1497, 0
      %1635 = vst.msk [vmem:[#allocation4 + $0x60] sm:$0xf] %vm1497, 0
      %1636 = vst.msk [vmem:[#allocation4 + $0x64] sm:$0xf] %vm1497, 0
      %1637 = vst.msk [vmem:[#allocation4 + $0x68] sm:$0xf] %vm1497, 0
      %1638 = vst.msk [vmem:[#allocation4 + $0x6c] sm:$0xf] %vm1497, 0
      %1639 = vst.msk [vmem:[#allocation4 + $0x70] sm:$0xf] %vm1497, 0
      %1640 = vst.msk [vmem:[#allocation4 + $0x74] sm:$0xf] %vm1497, 0
      %1641 = vst.msk [vmem:[#allocation4 + $0x78] sm:$0xf] %vm1497, 0
      %1642 = vst.msk [vmem:[#allocation4 + $0x7c] sm:$0xf] %vm1497, 0
      %1643 = vst.msk [vmem:[#allocation4 + $0x80] sm:$0xf] %vm1497, 0
      %1644 = vst.msk [vmem:[#allocation4 + $0x84] sm:$0xf] %vm1497, 0
      %1645 = vst.msk [vmem:[#allocation4 + $0x88] sm:$0xf] %vm1497, 0
      %1646 = vst.msk [vmem:[#allocation4 + $0x8c] sm:$0xf] %vm1497, 0
      %1647 = vst.msk [vmem:[#allocation4 + $0x90] sm:$0xf] %vm1497, 0
      %1648 = vst.msk [vmem:[#allocation4 + $0x94] sm:$0xf] %vm1497, 0
      %1649 = vst.msk [vmem:[#allocation4 + $0x98] sm:$0xf] %vm1497, 0
      %1650 = vst.msk [vmem:[#allocation4 + $0x9c] sm:$0xf] %vm1497, 0
      %1651 = vst.msk [vmem:[#allocation4 + $0xa0] sm:$0xf] %vm1497, 0
      %1652 = vst.msk [vmem:[#allocation4 + $0xa4] sm:$0xf] %vm1497, 0
      %1653 = vst.msk [vmem:[#allocation4 + $0xa8] sm:$0xf] %vm1497, 0
      %1654 = vst.msk [vmem:[#allocation4 + $0xac] sm:$0xf] %vm1497, 0
      %1655 = vst.msk [vmem:[#allocation4 + $0xb0] sm:$0xf] %vm1497, 0
      %1656 = vst.msk [vmem:[#allocation4 + $0xb4] sm:$0xf] %vm1497, 0
      %1657 = vst.msk [vmem:[#allocation4 + $0xb8] sm:$0xf] %vm1497, 0
      %1658 = vst.msk [vmem:[#allocation4 + $0xbc] sm:$0xf] %vm1497, 0
      %1659 = vst.msk [vmem:[#allocation4 + $0xc0] sm:$0xf] %vm1497, 0
      %1660 = vst.msk [vmem:[#allocation4 + $0xc4] sm:$0xf] %vm1497, 0
      %1661 = vst.msk [vmem:[#allocation4 + $0xc8] sm:$0xf] %vm1497, 0
      %1662 = vst.msk [vmem:[#allocation4 + $0xcc] sm:$0xf] %vm1497, 0
      %1663 = vst.msk [vmem:[#allocation4 + $0xd0] sm:$0xf] %vm1497, 0
      %1664 = vst.msk [vmem:[#allocation4 + $0xd4] sm:$0xf] %vm1497, 0
      %1665 = vst.msk [vmem:[#allocation4 + $0xd8] sm:$0xf] %vm1497, 0
      %1666 = vst.msk [vmem:[#allocation4 + $0xdc] sm:$0xf] %vm1497, 0
      %v1667 = vpack.c.bf16 %v1449, %v1449
      %v1668 = vpack.c.bf16 %v1450, %v1450
      %v1669 = vpack.c.bf16 %v1451, %v1451
      %v1670 = vpack.c.bf16 %v1452, %v1452
      %v1671 = vpack.c.bf16 %v1453, %v1453
      %v1672 = vpack.c.bf16 %v1454, %v1454
      %v1673 = vpack.c.bf16 %v1455, %v1455
      %v1674 = vpack.c.bf16 %v1456, %v1456
      %v1675 = vpack.c.bf16 %v1457, %v1457
      %v1676 = vpack.c.bf16 %v1458, %v1458
      %v1677 = vpack.c.bf16 %v1459, %v1459
      %v1678 = vpack.c.bf16 %v1460, %v1460
      %v1679 = vpack.c.bf16 %v1461, %v1461
      %v1680 = vpack.c.bf16 %v1462, %v1462
      %v1681 = vpack.c.bf16 %v1463, %v1463
      %v1682 = vpack.c.bf16 %v1464, %v1464
      %v1683 = vpack.c.bf16 %v1465, %v1465
      %v1684 = vpack.c.bf16 %v1466, %v1466
      %v1685 = vpack.c.bf16 %v1467, %v1467
      %v1686 = vpack.c.bf16 %v1468, %v1468
      %v1687 = vpack.c.bf16 %v1469, %v1469
      %v1688 = vpack.c.bf16 %v1470, %v1470
      %v1689 = vpack.c.bf16 %v1471, %v1471
      %v1690 = vpack.c.bf16 %v1472, %v1472
      %v1691 = vpack.c.bf16 %v1473, %v1473
      %v1692 = vpack.c.bf16 %v1474, %v1474
      %v1693 = vpack.c.bf16 %v1475, %v1475
      %v1694 = vpack.c.bf16 %v1476, %v1476
      %v1695 = vpack.c.bf16 %v1477, %v1477
      %v1696 = vpack.c.bf16 %v1478, %v1478
      %v1697 = vpack.c.bf16 %v1479, %v1479
      %v1698 = vpack.c.bf16 %v1480, %v1480
      %v1699 = vpack.c.bf16 %v1481, %v1481
      %v1700 = vpack.c.bf16 %v1482, %v1482
      %v1701 = vpack.c.bf16 %v1483, %v1483
      %v1702 = vpack.c.bf16 %v1484, %v1484
      %v1703 = vpack.c.bf16 %v1485, %v1485
      %v1704 = vpack.c.bf16 %v1486, %v1486
      %v1705 = vpack.c.bf16 %v1487, %v1487
      %v1706 = vpack.c.bf16 %v1488, %v1488
      %v1707 = vpack.c.bf16 %v1489, %v1489
      %v1708 = vpack.c.bf16 %v1490, %v1490
      %v1709 = vpack.c.bf16 %v1491, %v1491
      %v1710 = vpack.c.bf16 %v1492, %v1492
      %v1711 = vpack.c.bf16 %v1493, %v1493
      %v1712 = vpack.c.bf16 %v1494, %v1494
      %v1713 = vpack.c.bf16 %v1495, %v1495
      %v1714 = vpack.c.bf16 %v1496, %v1496
      %1763 = vrot.lane.b32.xlu0 %v1667, 96
      %v1764 = vpop.permute.xlu0 %1763
      %1765 = vrot.lane.b32.xlu0 %v1668, 96
      %v1766 = vpop.permute.xlu0 %1765
      %1767 = vrot.lane.b32.xlu0 %v1669, 96
      %v1768 = vpop.permute.xlu0 %1767
      %1769 = vrot.lane.b32.xlu0 %v1670, 96
      %v1770 = vpop.permute.xlu0 %1769
      %1771 = vrot.lane.b32.xlu0 %v1671, 96
      %v1772 = vpop.permute.xlu0 %1771
      %1773 = vrot.lane.b32.xlu0 %v1672, 96
      %v1774 = vpop.permute.xlu0 %1773
      %1775 = vrot.lane.b32.xlu0 %v1673, 96
      %v1776 = vpop.permute.xlu0 %1775
      %1777 = vrot.lane.b32.xlu0 %v1674, 96
      %v1778 = vpop.permute.xlu0 %1777
      %1779 = vrot.lane.b32.xlu0 %v1675, 96
      %v1780 = vpop.permute.xlu0 %1779
      %1781 = vrot.lane.b32.xlu0 %v1676, 96
      %v1782 = vpop.permute.xlu0 %1781
      %1783 = vrot.lane.b32.xlu0 %v1677, 96
      %v1784 = vpop.permute.xlu0 %1783
      %1785 = vrot.lane.b32.xlu0 %v1678, 96
      %v1786 = vpop.permute.xlu0 %1785
      %1787 = vrot.lane.b32.xlu0 %v1679, 96
      %v1788 = vpop.permute.xlu0 %1787
      %1789 = vrot.lane.b32.xlu0 %v1680, 96
      %v1790 = vpop.permute.xlu0 %1789
      %1791 = vrot.lane.b32.xlu0 %v1681, 96
      %v1792 = vpop.permute.xlu0 %1791
      %1793 = vrot.lane.b32.xlu0 %v1682, 96
      %v1794 = vpop.permute.xlu0 %1793
      %1795 = vrot.lane.b32.xlu0 %v1683, 96
      %v1796 = vpop.permute.xlu0 %1795
      %1797 = vrot.lane.b32.xlu0 %v1684, 96
      %v1798 = vpop.permute.xlu0 %1797
      %1799 = vrot.lane.b32.xlu0 %v1685, 96
      %v1800 = vpop.permute.xlu0 %1799
      %1801 = vrot.lane.b32.xlu0 %v1686, 96
      %v1802 = vpop.permute.xlu0 %1801
      %1803 = vrot.lane.b32.xlu0 %v1687, 96
      %v1804 = vpop.permute.xlu0 %1803
      %1805 = vrot.lane.b32.xlu0 %v1688, 96
      %v1806 = vpop.permute.xlu0 %1805
      %1807 = vrot.lane.b32.xlu0 %v1689, 96
      %v1808 = vpop.permute.xlu0 %1807
      %1809 = vrot.lane.b32.xlu0 %v1690, 96
      %v1810 = vpop.permute.xlu0 %1809
      %1811 = vrot.lane.b32.xlu0 %v1691, 96
      %v1812 = vpop.permute.xlu0 %1811
      %1813 = vrot.lane.b32.xlu0 %v1692, 96
      %v1814 = vpop.permute.xlu0 %1813
      %1815 = vrot.lane.b32.xlu0 %v1693, 96
      %v1816 = vpop.permute.xlu0 %1815
      %1817 = vrot.lane.b32.xlu0 %v1694, 96
      %v1818 = vpop.permute.xlu0 %1817
      %1819 = vrot.lane.b32.xlu0 %v1695, 96
      %v1820 = vpop.permute.xlu0 %1819
      %1821 = vrot.lane.b32.xlu0 %v1696, 96
      %v1822 = vpop.permute.xlu0 %1821
      %1823 = vrot.lane.b32.xlu0 %v1697, 96
      %v1824 = vpop.permute.xlu0 %1823
      %1825 = vrot.lane.b32.xlu0 %v1698, 96
      %v1826 = vpop.permute.xlu0 %1825
      %1827 = vrot.lane.b32.xlu0 %v1699, 96
      %v1828 = vpop.permute.xlu0 %1827
      %1829 = vrot.lane.b32.xlu0 %v1700, 96
      %v1830 = vpop.permute.xlu0 %1829
      %1831 = vrot.lane.b32.xlu0 %v1701, 96
      %v1832 = vpop.permute.xlu0 %1831
      %1833 = vrot.lane.b32.xlu0 %v1702, 96
      %v1834 = vpop.permute.xlu0 %1833
      %1835 = vrot.lane.b32.xlu0 %v1703, 96
      %v1836 = vpop.permute.xlu0 %1835
      %1837 = vrot.lane.b32.xlu0 %v1704, 96
      %v1838 = vpop.permute.xlu0 %1837
      %1839 = vrot.lane.b32.xlu0 %v1705, 96
      %v1840 = vpop.permute.xlu0 %1839
      %1841 = vrot.lane.b32.xlu0 %v1706, 96
      %v1842 = vpop.permute.xlu0 %1841
      %1843 = vrot.lane.b32.xlu0 %v1707, 96
      %v1844 = vpop.permute.xlu0 %1843
      %1845 = vrot.lane.b32.xlu0 %v1708, 96
      %v1846 = vpop.permute.xlu0 %1845
      %1847 = vrot.lane.b32.xlu0 %v1709, 96
      %v1848 = vpop.permute.xlu0 %1847
      %1849 = vrot.lane.b32.xlu0 %v1710, 96
      %v1850 = vpop.permute.xlu0 %1849
      %1851 = vrot.lane.b32.xlu0 %v1711, 96
      %v1852 = vpop.permute.xlu0 %1851
      %1853 = vrot.lane.b32.xlu0 %v1712, 96
      %v1854 = vpop.permute.xlu0 %1853
      %1855 = vrot.lane.b32.xlu0 %v1713, 96
      %v1856 = vpop.permute.xlu0 %1855
      %1857 = vrot.lane.b32.xlu0 %v1714, 96
      %v1858 = vpop.permute.xlu0 %1857
      %1907 = vst.msk [vmem:[#allocation2 + $0x10] sm:$0xf] %vm1497, %v1764
      %1908 = vst.msk [vmem:[#allocation2 + $0x14] sm:$0xf] %vm1497, %v1766
      %1909 = vst.msk [vmem:[#allocation2 + $0x18] sm:$0xf] %vm1497, %v1768
      %1910 = vst.msk [vmem:[#allocation2 + $0x1c] sm:$0xf] %vm1497, %v1770
      %1911 = vst.msk [vmem:[#allocation2 + $0x20] sm:$0xf] %vm1497, %v1772
      %1912 = vst.msk [vmem:[#allocation2 + $0x24] sm:$0xf] %vm1497, %v1774
      %1913 = vst.msk [vmem:[#allocation2 + $0x28] sm:$0xf] %vm1497, %v1776
      %1914 = vst.msk [vmem:[#allocation2 + $0x2c] sm:$0xf] %vm1497, %v1778
      %1915 = vst.msk [vmem:[#allocation2 + $0x30] sm:$0xf] %vm1497, %v1780
      %1916 = vst.msk [vmem:[#allocation2 + $0x34] sm:$0xf] %vm1497, %v1782
      %1917 = vst.msk [vmem:[#allocation2 + $0x38] sm:$0xf] %vm1497, %v1784
      %1918 = vst.msk [vmem:[#allocation2 + $0x3c] sm:$0xf] %vm1497, %v1786
      %1919 = vst.msk [vmem:[#allocation2 + $0x40] sm:$0xf] %vm1497, %v1788
      %1920 = vst.msk [vmem:[#allocation2 + $0x44] sm:$0xf] %vm1497, %v1790
      %1921 = vst.msk [vmem:[#allocation2 + $0x48] sm:$0xf] %vm1497, %v1792
      %1922 = vst.msk [vmem:[#allocation2 + $0x4c] sm:$0xf] %vm1497, %v1794
      %1923 = vst.msk [vmem:[#allocation2 + $0x50] sm:$0xf] %vm1497, %v1796
      %1924 = vst.msk [vmem:[#allocation2 + $0x54] sm:$0xf] %vm1497, %v1798
      %1925 = vst.msk [vmem:[#allocation2 + $0x58] sm:$0xf] %vm1497, %v1800
      %1926 = vst.msk [vmem:[#allocation2 + $0x5c] sm:$0xf] %vm1497, %v1802
      %1927 = vst.msk [vmem:[#allocation2 + $0x60] sm:$0xf] %vm1497, %v1804
      %1928 = vst.msk [vmem:[#allocation2 + $0x64] sm:$0xf] %vm1497, %v1806
      %1929 = vst.msk [vmem:[#allocation2 + $0x68] sm:$0xf] %vm1497, %v1808
      %1930 = vst.msk [vmem:[#allocation2 + $0x6c] sm:$0xf] %vm1497, %v1810
      %1931 = vst.msk [vmem:[#allocation2 + $0x70] sm:$0xf] %vm1497, %v1812
      %1932 = vst.msk [vmem:[#allocation2 + $0x74] sm:$0xf] %vm1497, %v1814
      %1933 = vst.msk [vmem:[#allocation2 + $0x78] sm:$0xf] %vm1497, %v1816
      %1934 = vst.msk [vmem:[#allocation2 + $0x7c] sm:$0xf] %vm1497, %v1818
      %1935 = vst.msk [vmem:[#allocation2 + $0x80] sm:$0xf] %vm1497, %v1820
      %1936 = vst.msk [vmem:[#allocation2 + $0x84] sm:$0xf] %vm1497, %v1822
      %1937 = vst.msk [vmem:[#allocation2 + $0x88] sm:$0xf] %vm1497, %v1824
      %1938 = vst.msk [vmem:[#allocation2 + $0x8c] sm:$0xf] %vm1497, %v1826
      %1939 = vst.msk [vmem:[#allocation2 + $0x90] sm:$0xf] %vm1497, %v1828
      %1940 = vst.msk [vmem:[#allocation2 + $0x94] sm:$0xf] %vm1497, %v1830
      %1941 = vst.msk [vmem:[#allocation2 + $0x98] sm:$0xf] %vm1497, %v1832
      %1942 = vst.msk [vmem:[#allocation2 + $0x9c] sm:$0xf] %vm1497, %v1834
      %1943 = vst.msk [vmem:[#allocation2 + $0xa0] sm:$0xf] %vm1497, %v1836
      %1944 = vst.msk [vmem:[#allocation2 + $0xa4] sm:$0xf] %vm1497, %v1838
      %1945 = vst.msk [vmem:[#allocation2 + $0xa8] sm:$0xf] %vm1497, %v1840
      %1946 = vst.msk [vmem:[#allocation2 + $0xac] sm:$0xf] %vm1497, %v1842
      %1947 = vst.msk [vmem:[#allocation2 + $0xb0] sm:$0xf] %vm1497, %v1844
      %1948 = vst.msk [vmem:[#allocation2 + $0xb4] sm:$0xf] %vm1497, %v1846
      %1949 = vst.msk [vmem:[#allocation2 + $0xb8] sm:$0xf] %vm1497, %v1848
      %1950 = vst.msk [vmem:[#allocation2 + $0xbc] sm:$0xf] %vm1497, %v1850
      %1951 = vst.msk [vmem:[#allocation2 + $0xc0] sm:$0xf] %vm1497, %v1852
      %1952 = vst.msk [vmem:[#allocation2 + $0xc4] sm:$0xf] %vm1497, %v1854
      %1953 = vst.msk [vmem:[#allocation2 + $0xc8] sm:$0xf] %vm1497, %v1856
      %1954 = vst.msk [vmem:[#allocation2 + $0xcc] sm:$0xf] %vm1497, %v1858
      %1955 = vrot.lane.b32.xlu0 %v1667, 80
      %v1956 = vpop.permute.xlu0 %1955
      %1957 = vrot.lane.b32.xlu0 %v1668, 80
      %v1958 = vpop.permute.xlu0 %1957
      %1959 = vrot.lane.b32.xlu0 %v1669, 80
      %v1960 = vpop.permute.xlu0 %1959
      %1961 = vrot.lane.b32.xlu0 %v1670, 80
      %v1962 = vpop.permute.xlu0 %1961
      %1963 = vrot.lane.b32.xlu0 %v1671, 80
      %v1964 = vpop.permute.xlu0 %1963
      %1965 = vrot.lane.b32.xlu0 %v1672, 80
      %v1966 = vpop.permute.xlu0 %1965
      %1967 = vrot.lane.b32.xlu0 %v1673, 80
      %v1968 = vpop.permute.xlu0 %1967
      %1969 = vrot.lane.b32.xlu0 %v1674, 80
      %v1970 = vpop.permute.xlu0 %1969
      %1971 = vrot.lane.b32.xlu0 %v1675, 80
      %v1972 = vpop.permute.xlu0 %1971
      %1973 = vrot.lane.b32.xlu0 %v1676, 80
      %v1974 = vpop.permute.xlu0 %1973
      %1975 = vrot.lane.b32.xlu0 %v1677, 80
      %v1976 = vpop.permute.xlu0 %1975
      %1977 = vrot.lane.b32.xlu0 %v1678, 80
      %v1978 = vpop.permute.xlu0 %1977
      %1979 = vrot.lane.b32.xlu0 %v1679, 80
      %v1980 = vpop.permute.xlu0 %1979
      %1981 = vrot.lane.b32.xlu0 %v1680, 80
      %v1982 = vpop.permute.xlu0 %1981
      %1983 = vrot.lane.b32.xlu0 %v1681, 80
      %v1984 = vpop.permute.xlu0 %1983
      %1985 = vrot.lane.b32.xlu0 %v1682, 80
      %v1986 = vpop.permute.xlu0 %1985
      %1987 = vrot.lane.b32.xlu0 %v1683, 80
      %v1988 = vpop.permute.xlu0 %1987
      %1989 = vrot.lane.b32.xlu0 %v1684, 80
      %v1990 = vpop.permute.xlu0 %1989
      %1991 = vrot.lane.b32.xlu0 %v1685, 80
      %v1992 = vpop.permute.xlu0 %1991
      %1993 = vrot.lane.b32.xlu0 %v1686, 80
      %v1994 = vpop.permute.xlu0 %1993
      %1995 = vrot.lane.b32.xlu0 %v1687, 80
      %v1996 = vpop.permute.xlu0 %1995
      %1997 = vrot.lane.b32.xlu0 %v1688, 80
      %v1998 = vpop.permute.xlu0 %1997
      %1999 = vrot.lane.b32.xlu0 %v1689, 80
      %v2000 = vpop.permute.xlu0 %1999
      %2001 = vrot.lane.b32.xlu0 %v1690, 80
      %v2002 = vpop.permute.xlu0 %2001
      %2003 = vrot.lane.b32.xlu0 %v1691, 80
      %v2004 = vpop.permute.xlu0 %2003
      %2005 = vrot.lane.b32.xlu0 %v1692, 80
      %v2006 = vpop.permute.xlu0 %2005
      %2007 = vrot.lane.b32.xlu0 %v1693, 80
      %v2008 = vpop.permute.xlu0 %2007
      %2009 = vrot.lane.b32.xlu0 %v1694, 80
      %v2010 = vpop.permute.xlu0 %2009
      %2011 = vrot.lane.b32.xlu0 %v1695, 80
      %v2012 = vpop.permute.xlu0 %2011
      %2013 = vrot.lane.b32.xlu0 %v1696, 80
      %v2014 = vpop.permute.xlu0 %2013
      %2015 = vrot.lane.b32.xlu0 %v1697, 80
      %v2016 = vpop.permute.xlu0 %2015
      %2017 = vrot.lane.b32.xlu0 %v1698, 80
      %v2018 = vpop.permute.xlu0 %2017
      %2019 = vrot.lane.b32.xlu0 %v1699, 80
      %v2020 = vpop.permute.xlu0 %2019
      %2021 = vrot.lane.b32.xlu0 %v1700, 80
      %v2022 = vpop.permute.xlu0 %2021
      %2023 = vrot.lane.b32.xlu0 %v1701, 80
      %v2024 = vpop.permute.xlu0 %2023
      %2025 = vrot.lane.b32.xlu0 %v1702, 80
      %v2026 = vpop.permute.xlu0 %2025
      %2027 = vrot.lane.b32.xlu0 %v1703, 80
      %v2028 = vpop.permute.xlu0 %2027
      %2029 = vrot.lane.b32.xlu0 %v1704, 80
      %v2030 = vpop.permute.xlu0 %2029
      %2031 = vrot.lane.b32.xlu0 %v1705, 80
      %v2032 = vpop.permute.xlu0 %2031
      %2033 = vrot.lane.b32.xlu0 %v1706, 80
      %v2034 = vpop.permute.xlu0 %2033
      %2035 = vrot.lane.b32.xlu0 %v1707, 80
      %v2036 = vpop.permute.xlu0 %2035
      %2037 = vrot.lane.b32.xlu0 %v1708, 80
      %v2038 = vpop.permute.xlu0 %2037
      %2039 = vrot.lane.b32.xlu0 %v1709, 80
      %v2040 = vpop.permute.xlu0 %2039
      %2041 = vrot.lane.b32.xlu0 %v1710, 80
      %v2042 = vpop.permute.xlu0 %2041
      %2043 = vrot.lane.b32.xlu0 %v1711, 80
      %v2044 = vpop.permute.xlu0 %2043
      %2045 = vrot.lane.b32.xlu0 %v1712, 80
      %v2046 = vpop.permute.xlu0 %2045
      %2047 = vrot.lane.b32.xlu0 %v1713, 80
      %v2048 = vpop.permute.xlu0 %2047
      %2049 = vrot.lane.b32.xlu0 %v1714, 80
      %v2050 = vpop.permute.xlu0 %2049
      %2099 = vst.msk [vmem:[#allocation3 + $0x10] sm:$0xf] %vm1554, %v1956
      %2100 = vst.msk [vmem:[#allocation3 + $0x14] sm:$0xf] %vm1554, %v1958
      %2101 = vst.msk [vmem:[#allocation3 + $0x18] sm:$0xf] %vm1554, %v1960
      %2102 = vst.msk [vmem:[#allocation3 + $0x1c] sm:$0xf] %vm1554, %v1962
      %2103 = vst.msk [vmem:[#allocation3 + $0x20] sm:$0xf] %vm1554, %v1964
      %2104 = vst.msk [vmem:[#allocation3 + $0x24] sm:$0xf] %vm1554, %v1966
      %2105 = vst.msk [vmem:[#allocation3 + $0x28] sm:$0xf] %vm1554, %v1968
      %2106 = vst.msk [vmem:[#allocation3 + $0x2c] sm:$0xf] %vm1554, %v1970
      %2107 = vst.msk [vmem:[#allocation3 + $0x30] sm:$0xf] %vm1554, %v1972
      %2108 = vst.msk [vmem:[#allocation3 + $0x34] sm:$0xf] %vm1554, %v1974
      %2109 = vst.msk [vmem:[#allocation3 + $0x38] sm:$0xf] %vm1554, %v1976
      %2110 = vst.msk [vmem:[#allocation3 + $0x3c] sm:$0xf] %vm1554, %v1978
      %2111 = vst.msk [vmem:[#allocation3 + $0x40] sm:$0xf] %vm1554, %v1980
      %2112 = vst.msk [vmem:[#allocation3 + $0x44] sm:$0xf] %vm1554, %v1982
      %2113 = vst.msk [vmem:[#allocation3 + $0x48] sm:$0xf] %vm1554, %v1984
      %2114 = vst.msk [vmem:[#allocation3 + $0x4c] sm:$0xf] %vm1554, %v1986
      %2115 = vst.msk [vmem:[#allocation3 + $0x50] sm:$0xf] %vm1554, %v1988
      %2116 = vst.msk [vmem:[#allocation3 + $0x54] sm:$0xf] %vm1554, %v1990
      %2117 = vst.msk [vmem:[#allocation3 + $0x58] sm:$0xf] %vm1554, %v1992
      %2118 = vst.msk [vmem:[#allocation3 + $0x5c] sm:$0xf] %vm1554, %v1994
      %2119 = vst.msk [vmem:[#allocation3 + $0x60] sm:$0xf] %vm1554, %v1996
      %2120 = vst.msk [vmem:[#allocation3 + $0x64] sm:$0xf] %vm1554, %v1998
      %2121 = vst.msk [vmem:[#allocation3 + $0x68] sm:$0xf] %vm1554, %v2000
      %2122 = vst.msk [vmem:[#allocation3 + $0x6c] sm:$0xf] %vm1554, %v2002
      %2123 = vst.msk [vmem:[#allocation3 + $0x70] sm:$0xf] %vm1554, %v2004
      %2124 = vst.msk [vmem:[#allocation3 + $0x74] sm:$0xf] %vm1554, %v2006
      %2125 = vst.msk [vmem:[#allocation3 + $0x78] sm:$0xf] %vm1554, %v2008
      %2126 = vst.msk [vmem:[#allocation3 + $0x7c] sm:$0xf] %vm1554, %v2010
      %2127 = vst.msk [vmem:[#allocation3 + $0x80] sm:$0xf] %vm1554, %v2012
      %2128 = vst.msk [vmem:[#allocation3 + $0x84] sm:$0xf] %vm1554, %v2014
      %2129 = vst.msk [vmem:[#allocation3 + $0x88] sm:$0xf] %vm1554, %v2016
      %2130 = vst.msk [vmem:[#allocation3 + $0x8c] sm:$0xf] %vm1554, %v2018
      %2131 = vst.msk [vmem:[#allocation3 + $0x90] sm:$0xf] %vm1554, %v2020
      %2132 = vst.msk [vmem:[#allocation3 + $0x94] sm:$0xf] %vm1554, %v2022
      %2133 = vst.msk [vmem:[#allocation3 + $0x98] sm:$0xf] %vm1554, %v2024
      %2134 = vst.msk [vmem:[#allocation3 + $0x9c] sm:$0xf] %vm1554, %v2026
      %2135 = vst.msk [vmem:[#allocation3 + $0xa0] sm:$0xf] %vm1554, %v2028
      %2136 = vst.msk [vmem:[#allocation3 + $0xa4] sm:$0xf] %vm1554, %v2030
      %2137 = vst.msk [vmem:[#allocation3 + $0xa8] sm:$0xf] %vm1554, %v2032
      %2138 = vst.msk [vmem:[#allocation3 + $0xac] sm:$0xf] %vm1554, %v2034
      %2139 = vst.msk [vmem:[#allocation3 + $0xb0] sm:$0xf] %vm1554, %v2036
      %2140 = vst.msk [vmem:[#allocation3 + $0xb4] sm:$0xf] %vm1554, %v2038
      %2141 = vst.msk [vmem:[#allocation3 + $0xb8] sm:$0xf] %vm1554, %v2040
      %2142 = vst.msk [vmem:[#allocation3 + $0xbc] sm:$0xf] %vm1554, %v2042
      %2143 = vst.msk [vmem:[#allocation3 + $0xc0] sm:$0xf] %vm1554, %v2044
      %2144 = vst.msk [vmem:[#allocation3 + $0xc4] sm:$0xf] %vm1554, %v2046
      %2145 = vst.msk [vmem:[#allocation3 + $0xc8] sm:$0xf] %vm1554, %v2048
      %2146 = vst.msk [vmem:[#allocation3 + $0xcc] sm:$0xf] %vm1554, %v2050
      %v2147 = vld [vmem:[#allocation2] sm:$0x8]
      %v2148 = vld [vmem:[#allocation2 + $0x4] sm:$0xf]
      %v2149 = vld [vmem:[#allocation2 + $0x8] sm:$0xf]
      %v2150 = vld [vmem:[#allocation2 + $0xc] sm:$0xf]
      %v2151 = vld [vmem:[#allocation2 + $0x10] sm:$0xf]
      %v2152 = vld [vmem:[#allocation2 + $0x14] sm:$0xf]
      %v2153 = vld [vmem:[#allocation2 + $0x18] sm:$0xf]
      %v2154 = vld [vmem:[#allocation2 + $0x1c] sm:$0xf]
      %v2155 = vld [vmem:[#allocation2 + $0x20] sm:$0xf]
      %v2156 = vld [vmem:[#allocation2 + $0x24] sm:$0xf]
      %v2157 = vld [vmem:[#allocation2 + $0x28] sm:$0xf]
      %v2158 = vld [vmem:[#allocation2 + $0x2c] sm:$0xf]
      %v2159 = vld [vmem:[#allocation2 + $0x30] sm:$0xf]
      %v2160 = vld [vmem:[#allocation2 + $0x34] sm:$0xf]
      %v2161 = vld [vmem:[#allocation2 + $0x38] sm:$0xf]
      %v2162 = vld [vmem:[#allocation2 + $0x3c] sm:$0xf]
      %v2163 = vld [vmem:[#allocation2 + $0x40] sm:$0xf]
      %v2164 = vld [vmem:[#allocation2 + $0x44] sm:$0xf]
      %v2165 = vld [vmem:[#allocation2 + $0x48] sm:$0xf]
      %v2166 = vld [vmem:[#allocation2 + $0x4c] sm:$0xf]
      %v2167 = vld [vmem:[#allocation2 + $0x50] sm:$0xf]
      %v2168 = vld [vmem:[#allocation2 + $0x54] sm:$0xf]
      %v2169 = vld [vmem:[#allocation2 + $0x58] sm:$0xf]
      %v2170 = vld [vmem:[#allocation2 + $0x5c] sm:$0xf]
      %v2171 = vld [vmem:[#allocation2 + $0x60] sm:$0xf]
      %v2172 = vld [vmem:[#allocation2 + $0x64] sm:$0xf]
      %v2173 = vld [vmem:[#allocation2 + $0x68] sm:$0xf]
      %v2174 = vld [vmem:[#allocation2 + $0x6c] sm:$0xf]
      %v2175 = vld [vmem:[#allocation2 + $0x70] sm:$0xf]
      %v2176 = vld [vmem:[#allocation2 + $0x74] sm:$0xf]
      %v2177 = vld [vmem:[#allocation2 + $0x78] sm:$0xf]
      %v2178 = vld [vmem:[#allocation2 + $0x7c] sm:$0xf]
      %v2179 = vld [vmem:[#allocation2 + $0x80] sm:$0xf]
      %v2180 = vld [vmem:[#allocation2 + $0x84] sm:$0xf]
      %v2181 = vld [vmem:[#allocation2 + $0x88] sm:$0xf]
      %v2182 = vld [vmem:[#allocation2 + $0x8c] sm:$0xf]
      %v2183 = vld [vmem:[#allocation2 + $0x90] sm:$0xf]
      %v2184 = vld [vmem:[#allocation2 + $0x94] sm:$0xf]
      %v2185 = vld [vmem:[#allocation2 + $0x98] sm:$0xf]
      %v2186 = vld [vmem:[#allocation2 + $0x9c] sm:$0xf]
      %v2187 = vld [vmem:[#allocation2 + $0xa0] sm:$0xf]
      %v2188 = vld [vmem:[#allocation2 + $0xa4] sm:$0xf]
      %v2189 = vld [vmem:[#allocation2 + $0xa8] sm:$0xf]
      %v2190 = vld [vmem:[#allocation2 + $0xac] sm:$0xf]
      %v2191 = vld [vmem:[#allocation2 + $0xb0] sm:$0xf]
      %v2192 = vld [vmem:[#allocation2 + $0xb4] sm:$0xf]
      %v2193 = vld [vmem:[#allocation2 + $0xb8] sm:$0xf]
      %v2194 = vld [vmem:[#allocation2 + $0xbc] sm:$0xf]
      %v2195 = vld [vmem:[#allocation2 + $0xc0] sm:$0xf]
      %v2196 = vld [vmem:[#allocation2 + $0xc4] sm:$0x1]
      %v2197 = vld [vmem:[#allocation2 + $0xc] sm:$0x8]
      %v2198 = vld [vmem:[#allocation2 + $0xc4] sm:$0xf]
      %v2199 = vld [vmem:[#allocation2 + $0xc8] sm:$0xf]
      %v2200 = vld [vmem:[#allocation2 + $0xcc] sm:$0xf]
      %v2201 = vld [vmem:[#allocation2 + $0xd0] sm:$0x1]
      %v2202 = vld [vmem:[#allocation2 + $0x18] sm:$0x8]
      %v2203 = vld [vmem:[#allocation2 + $0xd0] sm:$0xf]
      %v2204 = vld [vmem:[#allocation2 + $0xd4] sm:$0xf]
      %v2205 = vld [vmem:[#allocation2 + $0xd8] sm:$0xf]
      %v2206 = vld [vmem:[#allocation2 + $0xdc] sm:$0x1]
      %v2256 = vunpack.c.l.b16 %v2147
      %v2257 = vunpack.c.l.b16 %v2148
      %v2258 = vunpack.c.l.b16 %v2149
      %v2259 = vunpack.c.l.b16 %v2150
      %v2260 = vunpack.c.l.b16 %v2151
      %v2261 = vunpack.c.l.b16 %v2152
      %v2262 = vunpack.c.l.b16 %v2153
      %v2263 = vunpack.c.l.b16 %v2154
      %v2264 = vunpack.c.l.b16 %v2155
      %v2265 = vunpack.c.l.b16 %v2156
      %v2266 = vunpack.c.l.b16 %v2157
      %v2267 = vunpack.c.l.b16 %v2158
      %v2268 = vunpack.c.l.b16 %v2159
      %v2269 = vunpack.c.l.b16 %v2160
      %v2270 = vunpack.c.l.b16 %v2161
      %v2271 = vunpack.c.l.b16 %v2162
      %v2272 = vunpack.c.l.b16 %v2163
      %v2273 = vunpack.c.l.b16 %v2164
      %v2274 = vunpack.c.l.b16 %v2165
      %v2275 = vunpack.c.l.b16 %v2166
      %v2276 = vunpack.c.l.b16 %v2167
      %v2277 = vunpack.c.l.b16 %v2168
      %v2278 = vunpack.c.l.b16 %v2169
      %v2279 = vunpack.c.l.b16 %v2170
      %v2280 = vunpack.c.l.b16 %v2171
      %v2281 = vunpack.c.l.b16 %v2172
      %v2282 = vunpack.c.l.b16 %v2173
      %v2283 = vunpack.c.l.b16 %v2174
      %v2284 = vunpack.c.l.b16 %v2175
      %v2285 = vunpack.c.l.b16 %v2176
      %v2286 = vunpack.c.l.b16 %v2177
      %v2287 = vunpack.c.l.b16 %v2178
      %v2288 = vunpack.c.l.b16 %v2179
      %v2289 = vunpack.c.l.b16 %v2180
      %v2290 = vunpack.c.l.b16 %v2181
      %v2291 = vunpack.c.l.b16 %v2182
      %v2292 = vunpack.c.l.b16 %v2183
      %v2293 = vunpack.c.l.b16 %v2184
      %v2294 = vunpack.c.l.b16 %v2185
      %v2295 = vunpack.c.l.b16 %v2186
      %v2296 = vunpack.c.l.b16 %v2187
      %v2297 = vunpack.c.l.b16 %v2188
      %v2298 = vunpack.c.l.b16 %v2189
      %v2299 = vunpack.c.l.b16 %v2190
      %v2300 = vunpack.c.l.b16 %v2191
      %v2301 = vunpack.c.l.b16 %v2192
      %v2302 = vunpack.c.l.b16 %v2193
      %v2303 = vunpack.c.l.b16 %v2194
      %v2304 = vunpack.c.l.b16 %v2195
      %v2305 = vpack.c.b16 %v2257, %v2256
      %v2306 = vpack.c.b16 %v2259, %v2258
      %v2307 = vpack.c.b16 %v2261, %v2260
      %v2308 = vpack.c.b16 %v2263, %v2262
      %v2309 = vpack.c.b16 %v2265, %v2264
      %v2310 = vpack.c.b16 %v2267, %v2266
      %v2311 = vpack.c.b16 %v2269, %v2268
      %v2312 = vpack.c.b16 %v2271, %v2270
      %v2313 = vpack.c.b16 %v2273, %v2272
      %v2314 = vpack.c.b16 %v2275, %v2274
      %v2315 = vpack.c.b16 %v2277, %v2276
      %v2316 = vpack.c.b16 %v2279, %v2278
      %v2317 = vpack.c.b16 %v2281, %v2280
      %v2318 = vpack.c.b16 %v2283, %v2282
      %v2319 = vpack.c.b16 %v2285, %v2284
      %v2320 = vpack.c.b16 %v2287, %v2286
      %v2321 = vpack.c.b16 %v2289, %v2288
      %v2322 = vpack.c.b16 %v2291, %v2290
      %v2323 = vpack.c.b16 %v2293, %v2292
      %v2324 = vpack.c.b16 %v2295, %v2294
      %v2325 = vpack.c.b16 %v2297, %v2296
      %v2326 = vpack.c.b16 %v2299, %v2298
      %v2327 = vpack.c.b16 %v2301, %v2300
      %v2328 = vpack.c.b16 %v2303, %v2302
      %v2329 = vpack.c.b16 %v2304, %v2304
      %v2330 = vpack.c.b16 %v2258, %v2257
      %v2331 = vpack.c.b16 %v2260, %v2259
      %v2332 = vpack.c.b16 %v2262, %v2261
      %v2333 = vpack.c.b16 %v2264, %v2263
      %v2334 = vpack.c.b16 %v2266, %v2265
      %v2335 = vpack.c.b16 %v2268, %v2267
      %v2336 = vpack.c.b16 %v2270, %v2269
      %v2337 = vpack.c.b16 %v2272, %v2271
      %v2338 = vpack.c.b16 %v2274, %v2273
      %v2339 = vpack.c.b16 %v2276, %v2275
      %v2340 = vpack.c.b16 %v2278, %v2277
      %v2341 = vpack.c.b16 %v2280, %v2279
      %v2342 = vpack.c.b16 %v2282, %v2281
      %v2343 = vpack.c.b16 %v2284, %v2283
      %v2344 = vpack.c.b16 %v2286, %v2285
      %v2345 = vpack.c.b16 %v2288, %v2287
      %v2346 = vpack.c.b16 %v2290, %v2289
      %v2347 = vpack.c.b16 %v2292, %v2291
      %v2348 = vpack.c.b16 %v2294, %v2293
      %v2349 = vpack.c.b16 %v2296, %v2295
      %v2350 = vpack.c.b16 %v2298, %v2297
      %v2351 = vpack.c.b16 %v2300, %v2299
      %v2352 = vpack.c.b16 %v2302, %v2301
      %v2353 = vpack.c.b16 %v2304, %v2303
      %vm2354 = vsmask.f32 3328
      %v2356 = vshrl.u32 %v2330, 16
      %v2358 = vrot.slane %v2356, 4
      %v2359 = vshll.u32 %v2330, 16
      %v2361 = vrot.slane %v2359, 5
      %v2362 = vor.u32 %v2358, %v2361
      %v2364 = vshrl.u32 %v2331, 16
      %v2366 = vrot.slane %v2364, 4
      %v2367 = vshll.u32 %v2331, 16
      %v2369 = vrot.slane %v2367, 5
      %v2370 = vor.u32 %v2366, %v2369
      %v2371 = vsel %vm2354, %v2362, %v2370
      %v2373 = vshrl.u32 %v2332, 16
      %v2375 = vrot.slane %v2373, 4
      %v2376 = vshll.u32 %v2332, 16
      %v2378 = vrot.slane %v2376, 5
      %v2379 = vor.u32 %v2375, %v2378
      %v2380 = vsel %vm2354, %v2370, %v2379
      %v2382 = vshrl.u32 %v2333, 16
      %v2384 = vrot.slane %v2382, 4
      %v2385 = vshll.u32 %v2333, 16
      %v2387 = vrot.slane %v2385, 5
      %v2388 = vor.u32 %v2384, %v2387
      %v2389 = vsel %vm2354, %v2379, %v2388
      %v2391 = vshrl.u32 %v2334, 16
      %v2393 = vrot.slane %v2391, 4
      %v2394 = vshll.u32 %v2334, 16
      %v2396 = vrot.slane %v2394, 5
      %v2397 = vor.u32 %v2393, %v2396
      %v2398 = vsel %vm2354, %v2388, %v2397
      %v2400 = vshrl.u32 %v2335, 16
      %v2402 = vrot.slane %v2400, 4
      %v2403 = vshll.u32 %v2335, 16
      %v2405 = vrot.slane %v2403, 5
      %v2406 = vor.u32 %v2402, %v2405
      %v2407 = vsel %vm2354, %v2397, %v2406
      %v2409 = vshrl.u32 %v2336, 16
      %v2411 = vrot.slane %v2409, 4
      %v2412 = vshll.u32 %v2336, 16
      %v2414 = vrot.slane %v2412, 5
      %v2415 = vor.u32 %v2411, %v2414
      %v2416 = vsel %vm2354, %v2406, %v2415
      %v2418 = vshrl.u32 %v2337, 16
      %v2420 = vrot.slane %v2418, 4
      %v2421 = vshll.u32 %v2337, 16
      %v2423 = vrot.slane %v2421, 5
      %v2424 = vor.u32 %v2420, %v2423
      %v2425 = vsel %vm2354, %v2415, %v2424
      %v2427 = vshrl.u32 %v2338, 16
      %v2429 = vrot.slane %v2427, 4
      %v2430 = vshll.u32 %v2338, 16
      %v2432 = vrot.slane %v2430, 5
      %v2433 = vor.u32 %v2429, %v2432
      %v2434 = vsel %vm2354, %v2424, %v2433
      %v2436 = vshrl.u32 %v2339, 16
      %v2438 = vrot.slane %v2436, 4
      %v2439 = vshll.u32 %v2339, 16
      %v2441 = vrot.slane %v2439, 5
      %v2442 = vor.u32 %v2438, %v2441
      %v2443 = vsel %vm2354, %v2433, %v2442
      %v2445 = vshrl.u32 %v2340, 16
      %v2447 = vrot.slane %v2445, 4
      %v2448 = vshll.u32 %v2340, 16
      %v2450 = vrot.slane %v2448, 5
      %v2451 = vor.u32 %v2447, %v2450
      %v2452 = vsel %vm2354, %v2442, %v2451
      %v2454 = vshrl.u32 %v2341, 16
      %v2456 = vrot.slane %v2454, 4
      %v2457 = vshll.u32 %v2341, 16
      %v2459 = vrot.slane %v2457, 5
      %v2460 = vor.u32 %v2456, %v2459
      %v2461 = vsel %vm2354, %v2451, %v2460
      %v2463 = vshrl.u32 %v2342, 16
      %v2465 = vrot.slane %v2463, 4
      %v2466 = vshll.u32 %v2342, 16
      %v2468 = vrot.slane %v2466, 5
      %v2469 = vor.u32 %v2465, %v2468
      %v2470 = vsel %vm2354, %v2460, %v2469
      %v2472 = vshrl.u32 %v2343, 16
      %v2474 = vrot.slane %v2472, 4
      %v2475 = vshll.u32 %v2343, 16
      %v2477 = vrot.slane %v2475, 5
      %v2478 = vor.u32 %v2474, %v2477
      %v2479 = vsel %vm2354, %v2469, %v2478
      %v2481 = vshrl.u32 %v2344, 16
      %v2483 = vrot.slane %v2481, 4
      %v2484 = vshll.u32 %v2344, 16
      %v2486 = vrot.slane %v2484, 5
      %v2487 = vor.u32 %v2483, %v2486
      %v2488 = vsel %vm2354, %v2478, %v2487
      %v2490 = vshrl.u32 %v2345, 16
      %v2492 = vrot.slane %v2490, 4
      %v2493 = vshll.u32 %v2345, 16
      %v2495 = vrot.slane %v2493, 5
      %v2496 = vor.u32 %v2492, %v2495
      %v2497 = vsel %vm2354, %v2487, %v2496
      %v2499 = vshrl.u32 %v2346, 16
      %v2501 = vrot.slane %v2499, 4
      %v2502 = vshll.u32 %v2346, 16
      %v2504 = vrot.slane %v2502, 5
      %v2505 = vor.u32 %v2501, %v2504
      %v2506 = vsel %vm2354, %v2496, %v2505
      %v2508 = vshrl.u32 %v2347, 16
      %v2510 = vrot.slane %v2508, 4
      %v2511 = vshll.u32 %v2347, 16
      %v2513 = vrot.slane %v2511, 5
      %v2514 = vor.u32 %v2510, %v2513
      %v2515 = vsel %vm2354, %v2505, %v2514
      %v2517 = vshrl.u32 %v2348, 16
      %v2519 = vrot.slane %v2517, 4
      %v2520 = vshll.u32 %v2348, 16
      %v2522 = vrot.slane %v2520, 5
      %v2523 = vor.u32 %v2519, %v2522
      %v2524 = vsel %vm2354, %v2514, %v2523
      %v2526 = vshrl.u32 %v2349, 16
      %v2528 = vrot.slane %v2526, 4
      %v2529 = vshll.u32 %v2349, 16
      %v2531 = vrot.slane %v2529, 5
      %v2532 = vor.u32 %v2528, %v2531
      %v2533 = vsel %vm2354, %v2523, %v2532
      %v2535 = vshrl.u32 %v2350, 16
      %v2537 = vrot.slane %v2535, 4
      %v2538 = vshll.u32 %v2350, 16
      %v2540 = vrot.slane %v2538, 5
      %v2541 = vor.u32 %v2537, %v2540
      %v2542 = vsel %vm2354, %v2532, %v2541
      %v2544 = vshrl.u32 %v2351, 16
      %v2546 = vrot.slane %v2544, 4
      %v2547 = vshll.u32 %v2351, 16
      %v2549 = vrot.slane %v2547, 5
      %v2550 = vor.u32 %v2546, %v2549
      %v2551 = vsel %vm2354, %v2541, %v2550
      %v2553 = vshrl.u32 %v2352, 16
      %v2555 = vrot.slane %v2553, 4
      %v2556 = vshll.u32 %v2352, 16
      %v2558 = vrot.slane %v2556, 5
      %v2559 = vor.u32 %v2555, %v2558
      %v2560 = vsel %vm2354, %v2550, %v2559
      %v2562 = vshrl.u32 %v2353, 16
      %v2564 = vrot.slane %v2562, 4
      %v2565 = vshll.u32 %v2353, 16
      %v2567 = vrot.slane %v2565, 5
      %v2568 = vor.u32 %v2564, %v2567
      %v2569 = vsel %vm2354, %v2559, %v2568
      %2570 = vrot.lane.b32.xlu0 %v2362, 16
      %v2571 = vpop.permute.xlu0 %2570
      %2572 = vrot.lane.b32.xlu0 %v2371, 16
      %v2573 = vpop.permute.xlu0 %2572
      %2574 = vrot.lane.b32.xlu0 %v2380, 16
      %v2575 = vpop.permute.xlu0 %2574
      %2576 = vrot.lane.b32.xlu0 %v2389, 16
      %v2577 = vpop.permute.xlu0 %2576
      %2578 = vrot.lane.b32.xlu0 %v2398, 16
      %v2579 = vpop.permute.xlu0 %2578
      %2580 = vrot.lane.b32.xlu0 %v2407, 16
      %v2581 = vpop.permute.xlu0 %2580
      %2582 = vrot.lane.b32.xlu0 %v2416, 16
      %v2583 = vpop.permute.xlu0 %2582
      %2584 = vrot.lane.b32.xlu0 %v2425, 16
      %v2585 = vpop.permute.xlu0 %2584
      %2586 = vrot.lane.b32.xlu0 %v2434, 16
      %v2587 = vpop.permute.xlu0 %2586
      %2588 = vrot.lane.b32.xlu0 %v2443, 16
      %v2589 = vpop.permute.xlu0 %2588
      %2590 = vrot.lane.b32.xlu0 %v2452, 16
      %v2591 = vpop.permute.xlu0 %2590
      %2592 = vrot.lane.b32.xlu0 %v2461, 16
      %v2593 = vpop.permute.xlu0 %2592
      %2594 = vrot.lane.b32.xlu0 %v2470, 16
      %v2595 = vpop.permute.xlu0 %2594
      %2596 = vrot.lane.b32.xlu0 %v2479, 16
      %v2597 = vpop.permute.xlu0 %2596
      %2598 = vrot.lane.b32.xlu0 %v2488, 16
      %v2599 = vpop.permute.xlu0 %2598
      %2600 = vrot.lane.b32.xlu0 %v2497, 16
      %v2601 = vpop.permute.xlu0 %2600
      %2602 = vrot.lane.b32.xlu0 %v2506, 16
      %v2603 = vpop.permute.xlu0 %2602
      %2604 = vrot.lane.b32.xlu0 %v2515, 16
      %v2605 = vpop.permute.xlu0 %2604
      %2606 = vrot.lane.b32.xlu0 %v2524, 16
      %v2607 = vpop.permute.xlu0 %2606
      %2608 = vrot.lane.b32.xlu0 %v2533, 16
      %v2609 = vpop.permute.xlu0 %2608
      %2610 = vrot.lane.b32.xlu0 %v2542, 16
      %v2611 = vpop.permute.xlu0 %2610
      %2612 = vrot.lane.b32.xlu0 %v2551, 16
      %v2613 = vpop.permute.xlu0 %2612
      %2614 = vrot.lane.b32.xlu0 %v2560, 16
      %v2615 = vpop.permute.xlu0 %2614
      %2616 = vrot.lane.b32.xlu0 %v2569, 16
      %v2617 = vpop.permute.xlu0 %2616
      %2618 = vrot.lane.b32.xlu0 %v2568, 16
      %v2619 = vpop.permute.xlu0 %2618
      %v2621 = vunpack.c.l.b16 %v2196
      %v2622 = vpack.c.b16 %v2621, %v2621
      %vm2623 = vcmask 1042432
      %v2624 = vrot.slane %v2330, 5
      %v2625 = vrot.slane %v2331, 5
      %v2626 = vsel %vm2623, %v2624, %v2625
      %v2627 = vrot.slane %v2332, 5
      %v2628 = vsel %vm2623, %v2625, %v2627
      %v2629 = vrot.slane %v2333, 5
      %v2630 = vsel %vm2623, %v2627, %v2629
      %v2631 = vrot.slane %v2334, 5
      %v2632 = vsel %vm2623, %v2629, %v2631
      %v2633 = vrot.slane %v2335, 5
      %v2634 = vsel %vm2623, %v2631, %v2633
      %v2635 = vrot.slane %v2336, 5
      %v2636 = vsel %vm2623, %v2633, %v2635
      %v2637 = vrot.slane %v2337, 5
      %v2638 = vsel %vm2623, %v2635, %v2637
      %v2639 = vrot.slane %v2338, 5
      %v2640 = vsel %vm2623, %v2637, %v2639
      %v2641 = vrot.slane %v2339, 5
      %v2642 = vsel %vm2623, %v2639, %v2641
      %v2643 = vrot.slane %v2340, 5
      %v2644 = vsel %vm2623, %v2641, %v2643
      %v2645 = vrot.slane %v2341, 5
      %v2646 = vsel %vm2623, %v2643, %v2645
      %v2647 = vrot.slane %v2342, 5
      %v2648 = vsel %vm2623, %v2645, %v2647
      %v2649 = vrot.slane %v2343, 5
      %v2650 = vsel %vm2623, %v2647, %v2649
      %v2651 = vrot.slane %v2344, 5
      %v2652 = vsel %vm2623, %v2649, %v2651
      %v2653 = vrot.slane %v2345, 5
      %v2654 = vsel %vm2623, %v2651, %v2653
      %v2655 = vrot.slane %v2346, 5
      %v2656 = vsel %vm2623, %v2653, %v2655
      %v2657 = vrot.slane %v2347, 5
      %v2658 = vsel %vm2623, %v2655, %v2657
      %v2659 = vrot.slane %v2348, 5
      %v2660 = vsel %vm2623, %v2657, %v2659
      %v2661 = vrot.slane %v2349, 5
      %v2662 = vsel %vm2623, %v2659, %v2661
      %v2663 = vrot.slane %v2350, 5
      %v2664 = vsel %vm2623, %v2661, %v2663
      %v2665 = vrot.slane %v2351, 5
      %v2666 = vsel %vm2623, %v2663, %v2665
      %v2667 = vrot.slane %v2352, 5
      %v2668 = vsel %vm2623, %v2665, %v2667
      %v2669 = vrot.slane %v2353, 5
      %v2670 = vsel %vm2623, %v2667, %v2669
      %v2671 = vrot.slane %v2622, 5
      %v2672 = vsel %vm2623, %v2669, %v2671
      %2673 = vrot.lane.b32.xlu0 %v2624, 32
      %v2674 = vpop.permute.xlu0 %2673
      %2675 = vrot.lane.b32.xlu0 %v2626, 32
      %v2676 = vpop.permute.xlu0 %2675
      %2677 = vrot.lane.b32.xlu0 %v2628, 32
      %v2678 = vpop.permute.xlu0 %2677
      %2679 = vrot.lane.b32.xlu0 %v2630, 32
      %v2680 = vpop.permute.xlu0 %2679
      %2681 = vrot.lane.b32.xlu0 %v2632, 32
      %v2682 = vpop.permute.xlu0 %2681
      %2683 = vrot.lane.b32.xlu0 %v2634, 32
      %v2684 = vpop.permute.xlu0 %2683
      %2685 = vrot.lane.b32.xlu0 %v2636, 32
      %v2686 = vpop.permute.xlu0 %2685
      %2687 = vrot.lane.b32.xlu0 %v2638, 32
      %v2688 = vpop.permute.xlu0 %2687
      %2689 = vrot.lane.b32.xlu0 %v2640, 32
      %v2690 = vpop.permute.xlu0 %2689
      %2691 = vrot.lane.b32.xlu0 %v2642, 32
      %v2692 = vpop.permute.xlu0 %2691
      %2693 = vrot.lane.b32.xlu0 %v2644, 32
      %v2694 = vpop.permute.xlu0 %2693
      %2695 = vrot.lane.b32.xlu0 %v2646, 32
      %v2696 = vpop.permute.xlu0 %2695
      %2697 = vrot.lane.b32.xlu0 %v2648, 32
      %v2698 = vpop.permute.xlu0 %2697
      %2699 = vrot.lane.b32.xlu0 %v2650, 32
      %v2700 = vpop.permute.xlu0 %2699
      %2701 = vrot.lane.b32.xlu0 %v2652, 32
      %v2702 = vpop.permute.xlu0 %2701
      %2703 = vrot.lane.b32.xlu0 %v2654, 32
      %v2704 = vpop.permute.xlu0 %2703
      %2705 = vrot.lane.b32.xlu0 %v2656, 32
      %v2706 = vpop.permute.xlu0 %2705
      %2707 = vrot.lane.b32.xlu0 %v2658, 32
      %v2708 = vpop.permute.xlu0 %2707
      %2709 = vrot.lane.b32.xlu0 %v2660, 32
      %v2710 = vpop.permute.xlu0 %2709
      %2711 = vrot.lane.b32.xlu0 %v2662, 32
      %v2712 = vpop.permute.xlu0 %2711
      %2713 = vrot.lane.b32.xlu0 %v2664, 32
      %v2714 = vpop.permute.xlu0 %2713
      %2715 = vrot.lane.b32.xlu0 %v2666, 32
      %v2716 = vpop.permute.xlu0 %2715
      %2717 = vrot.lane.b32.xlu0 %v2668, 32
      %v2718 = vpop.permute.xlu0 %2717
      %2719 = vrot.lane.b32.xlu0 %v2670, 32
      %v2720 = vpop.permute.xlu0 %2719
      %2721 = vrot.lane.b32.xlu0 %v2672, 32
      %v2722 = vpop.permute.xlu0 %2721
      %v2727 = vunpack.c.l.b16 %v2197
      %v2728 = vunpack.c.l.b16 %v2198
      %v2729 = vunpack.c.l.b16 %v2199
      %v2730 = vunpack.c.l.b16 %v2200
      %v2731 = vpack.c.b16 %v2260, %v2727
      %v2732 = vpack.c.b16 %v2729, %v2728
      %v2733 = vpack.c.b16 %v2730, %v2730
      %2734 = vrot.lane.b32.xlu0 %v2731, 48
      %v2735 = vpop.permute.xlu0 %2734
      %2736 = vrot.lane.b32.xlu0 %v2332, 48
      %v2737 = vpop.permute.xlu0 %2736
      %2738 = vrot.lane.b32.xlu0 %v2333, 48
      %v2739 = vpop.permute.xlu0 %2738
      %2740 = vrot.lane.b32.xlu0 %v2334, 48
      %v2741 = vpop.permute.xlu0 %2740
      %2742 = vrot.lane.b32.xlu0 %v2335, 48
      %v2743 = vpop.permute.xlu0 %2742
      %2744 = vrot.lane.b32.xlu0 %v2336, 48
      %v2745 = vpop.permute.xlu0 %2744
      %2746 = vrot.lane.b32.xlu0 %v2337, 48
      %v2747 = vpop.permute.xlu0 %2746
      %2748 = vrot.lane.b32.xlu0 %v2338, 48
      %v2749 = vpop.permute.xlu0 %2748
      %2750 = vrot.lane.b32.xlu0 %v2339, 48
      %v2751 = vpop.permute.xlu0 %2750
      %2752 = vrot.lane.b32.xlu0 %v2340, 48
      %v2753 = vpop.permute.xlu0 %2752
      %2754 = vrot.lane.b32.xlu0 %v2341, 48
      %v2755 = vpop.permute.xlu0 %2754
      %2756 = vrot.lane.b32.xlu0 %v2342, 48
      %v2757 = vpop.permute.xlu0 %2756
      %2758 = vrot.lane.b32.xlu0 %v2343, 48
      %v2759 = vpop.permute.xlu0 %2758
      %2760 = vrot.lane.b32.xlu0 %v2344, 48
      %v2761 = vpop.permute.xlu0 %2760
      %2762 = vrot.lane.b32.xlu0 %v2345, 48
      %v2763 = vpop.permute.xlu0 %2762
      %2764 = vrot.lane.b32.xlu0 %v2346, 48
      %v2765 = vpop.permute.xlu0 %2764
      %2766 = vrot.lane.b32.xlu0 %v2347, 48
      %v2767 = vpop.permute.xlu0 %2766
      %2768 = vrot.lane.b32.xlu0 %v2348, 48
      %v2769 = vpop.permute.xlu0 %2768
      %2770 = vrot.lane.b32.xlu0 %v2349, 48
      %v2771 = vpop.permute.xlu0 %2770
      %2772 = vrot.lane.b32.xlu0 %v2350, 48
      %v2773 = vpop.permute.xlu0 %2772
      %2774 = vrot.lane.b32.xlu0 %v2351, 48
      %v2775 = vpop.permute.xlu0 %2774
      %2776 = vrot.lane.b32.xlu0 %v2352, 48
      %v2777 = vpop.permute.xlu0 %2776
      %2778 = vrot.lane.b32.xlu0 %v2353, 48
      %v2779 = vpop.permute.xlu0 %2778
      %2780 = vrot.lane.b32.xlu0 %v2732, 48
      %v2781 = vpop.permute.xlu0 %2780
      %2782 = vrot.lane.b32.xlu0 %v2733, 48
      %v2783 = vpop.permute.xlu0 %2782
      %v2784 = vpack.c.b16 %v2728, %v2304
      %v2785 = vpack.c.b16 %v2730, %v2729
      %v2787 = vshrl.u32 %v2307, 16
      %v2789 = vrot.slane %v2787, 4
      %v2790 = vshll.u32 %v2307, 16
      %v2792 = vrot.slane %v2790, 5
      %v2793 = vor.u32 %v2789, %v2792
      %v2795 = vshrl.u32 %v2308, 16
      %v2797 = vrot.slane %v2795, 4
      %v2798 = vshll.u32 %v2308, 16
      %v2800 = vrot.slane %v2798, 5
      %v2801 = vor.u32 %v2797, %v2800
      %v2802 = vsel %vm2354, %v2793, %v2801
      %v2804 = vshrl.u32 %v2309, 16
      %v2806 = vrot.slane %v2804, 4
      %v2807 = vshll.u32 %v2309, 16
      %v2809 = vrot.slane %v2807, 5
      %v2810 = vor.u32 %v2806, %v2809
      %v2811 = vsel %vm2354, %v2801, %v2810
      %v2813 = vshrl.u32 %v2310, 16
      %v2815 = vrot.slane %v2813, 4
      %v2816 = vshll.u32 %v2310, 16
      %v2818 = vrot.slane %v2816, 5
      %v2819 = vor.u32 %v2815, %v2818
      %v2820 = vsel %vm2354, %v2810, %v2819
      %v2822 = vshrl.u32 %v2311, 16
      %v2824 = vrot.slane %v2822, 4
      %v2825 = vshll.u32 %v2311, 16
      %v2827 = vrot.slane %v2825, 5
      %v2828 = vor.u32 %v2824, %v2827
      %v2829 = vsel %vm2354, %v2819, %v2828
      %v2831 = vshrl.u32 %v2312, 16
      %v2833 = vrot.slane %v2831, 4
      %v2834 = vshll.u32 %v2312, 16
      %v2836 = vrot.slane %v2834, 5
      %v2837 = vor.u32 %v2833, %v2836
      %v2838 = vsel %vm2354, %v2828, %v2837
      %v2840 = vshrl.u32 %v2313, 16
      %v2842 = vrot.slane %v2840, 4
      %v2843 = vshll.u32 %v2313, 16
      %v2845 = vrot.slane %v2843, 5
      %v2846 = vor.u32 %v2842, %v2845
      %v2847 = vsel %vm2354, %v2837, %v2846
      %v2849 = vshrl.u32 %v2314, 16
      %v2851 = vrot.slane %v2849, 4
      %v2852 = vshll.u32 %v2314, 16
      %v2854 = vrot.slane %v2852, 5
      %v2855 = vor.u32 %v2851, %v2854
      %v2856 = vsel %vm2354, %v2846, %v2855
      %v2858 = vshrl.u32 %v2315, 16
      %v2860 = vrot.slane %v2858, 4
      %v2861 = vshll.u32 %v2315, 16
      %v2863 = vrot.slane %v2861, 5
      %v2864 = vor.u32 %v2860, %v2863
      %v2865 = vsel %vm2354, %v2855, %v2864
      %v2867 = vshrl.u32 %v2316, 16
      %v2869 = vrot.slane %v2867, 4
      %v2870 = vshll.u32 %v2316, 16
      %v2872 = vrot.slane %v2870, 5
      %v2873 = vor.u32 %v2869, %v2872
      %v2874 = vsel %vm2354, %v2864, %v2873
      %v2876 = vshrl.u32 %v2317, 16
      %v2878 = vrot.slane %v2876, 4
      %v2879 = vshll.u32 %v2317, 16
      %v2881 = vrot.slane %v2879, 5
      %v2882 = vor.u32 %v2878, %v2881
      %v2883 = vsel %vm2354, %v2873, %v2882
      %v2885 = vshrl.u32 %v2318, 16
      %v2887 = vrot.slane %v2885, 4
      %v2888 = vshll.u32 %v2318, 16
      %v2890 = vrot.slane %v2888, 5
      %v2891 = vor.u32 %v2887, %v2890
      %v2892 = vsel %vm2354, %v2882, %v2891
      %v2894 = vshrl.u32 %v2319, 16
      %v2896 = vrot.slane %v2894, 4
      %v2897 = vshll.u32 %v2319, 16
      %v2899 = vrot.slane %v2897, 5
      %v2900 = vor.u32 %v2896, %v2899
      %v2901 = vsel %vm2354, %v2891, %v2900
      %v2903 = vshrl.u32 %v2320, 16
      %v2905 = vrot.slane %v2903, 4
      %v2906 = vshll.u32 %v2320, 16
      %v2908 = vrot.slane %v2906, 5
      %v2909 = vor.u32 %v2905, %v2908
      %v2910 = vsel %vm2354, %v2900, %v2909
      %v2912 = vshrl.u32 %v2321, 16
      %v2914 = vrot.slane %v2912, 4
      %v2915 = vshll.u32 %v2321, 16
      %v2917 = vrot.slane %v2915, 5
      %v2918 = vor.u32 %v2914, %v2917
      %v2919 = vsel %vm2354, %v2909, %v2918
      %v2921 = vshrl.u32 %v2322, 16
      %v2923 = vrot.slane %v2921, 4
      %v2924 = vshll.u32 %v2322, 16
      %v2926 = vrot.slane %v2924, 5
      %v2927 = vor.u32 %v2923, %v2926
      %v2928 = vsel %vm2354, %v2918, %v2927
      %v2930 = vshrl.u32 %v2323, 16
      %v2932 = vrot.slane %v2930, 4
      %v2933 = vshll.u32 %v2323, 16
      %v2935 = vrot.slane %v2933, 5
      %v2936 = vor.u32 %v2932, %v2935
      %v2937 = vsel %vm2354, %v2927, %v2936
      %v2939 = vshrl.u32 %v2324, 16
      %v2941 = vrot.slane %v2939, 4
      %v2942 = vshll.u32 %v2324, 16
      %v2944 = vrot.slane %v2942, 5
      %v2945 = vor.u32 %v2941, %v2944
      %v2946 = vsel %vm2354, %v2936, %v2945
      %v2948 = vshrl.u32 %v2325, 16
      %v2950 = vrot.slane %v2948, 4
      %v2951 = vshll.u32 %v2325, 16
      %v2953 = vrot.slane %v2951, 5
      %v2954 = vor.u32 %v2950, %v2953
      %v2955 = vsel %vm2354, %v2945, %v2954
      %v2957 = vshrl.u32 %v2326, 16
      %v2959 = vrot.slane %v2957, 4
      %v2960 = vshll.u32 %v2326, 16
      %v2962 = vrot.slane %v2960, 5
      %v2963 = vor.u32 %v2959, %v2962
      %v2964 = vsel %vm2354, %v2954, %v2963
      %v2966 = vshrl.u32 %v2327, 16
      %v2968 = vrot.slane %v2966, 4
      %v2969 = vshll.u32 %v2327, 16
      %v2971 = vrot.slane %v2969, 5
      %v2972 = vor.u32 %v2968, %v2971
      %v2973 = vsel %vm2354, %v2963, %v2972
      %v2975 = vshrl.u32 %v2328, 16
      %v2977 = vrot.slane %v2975, 4
      %v2978 = vshll.u32 %v2328, 16
      %v2980 = vrot.slane %v2978, 5
      %v2981 = vor.u32 %v2977, %v2980
      %v2982 = vsel %vm2354, %v2972, %v2981
      %v2984 = vshrl.u32 %v2784, 16
      %v2986 = vrot.slane %v2984, 4
      %v2987 = vshll.u32 %v2784, 16
      %v2989 = vrot.slane %v2987, 5
      %v2990 = vor.u32 %v2986, %v2989
      %v2991 = vsel %vm2354, %v2981, %v2990
      %v2993 = vshrl.u32 %v2785, 16
      %v2995 = vrot.slane %v2993, 4
      %v2996 = vshll.u32 %v2785, 16
      %v2998 = vrot.slane %v2996, 5
      %v2999 = vor.u32 %v2995, %v2998
      %v3000 = vsel %vm2354, %v2990, %v2999
      %3001 = vrot.lane.b32.xlu0 %v2793, 64
      %v3002 = vpop.permute.xlu0 %3001
      %3003 = vrot.lane.b32.xlu0 %v2802, 64
      %v3004 = vpop.permute.xlu0 %3003
      %3005 = vrot.lane.b32.xlu0 %v2811, 64
      %v3006 = vpop.permute.xlu0 %3005
      %3007 = vrot.lane.b32.xlu0 %v2820, 64
      %v3008 = vpop.permute.xlu0 %3007
      %3009 = vrot.lane.b32.xlu0 %v2829, 64
      %v3010 = vpop.permute.xlu0 %3009
      %3011 = vrot.lane.b32.xlu0 %v2838, 64
      %v3012 = vpop.permute.xlu0 %3011
      %3013 = vrot.lane.b32.xlu0 %v2847, 64
      %v3014 = vpop.permute.xlu0 %3013
      %3015 = vrot.lane.b32.xlu0 %v2856, 64
      %v3016 = vpop.permute.xlu0 %3015
      %3017 = vrot.lane.b32.xlu0 %v2865, 64
      %v3018 = vpop.permute.xlu0 %3017
      %3019 = vrot.lane.b32.xlu0 %v2874, 64
      %v3020 = vpop.permute.xlu0 %3019
      %3021 = vrot.lane.b32.xlu0 %v2883, 64
      %v3022 = vpop.permute.xlu0 %3021
      %3023 = vrot.lane.b32.xlu0 %v2892, 64
      %v3024 = vpop.permute.xlu0 %3023
      %3025 = vrot.lane.b32.xlu0 %v2901, 64
      %v3026 = vpop.permute.xlu0 %3025
      %3027 = vrot.lane.b32.xlu0 %v2910, 64
      %v3028 = vpop.permute.xlu0 %3027
      %3029 = vrot.lane.b32.xlu0 %v2919, 64
      %v3030 = vpop.permute.xlu0 %3029
      %3031 = vrot.lane.b32.xlu0 %v2928, 64
      %v3032 = vpop.permute.xlu0 %3031
      %3033 = vrot.lane.b32.xlu0 %v2937, 64
      %v3034 = vpop.permute.xlu0 %3033
      %3035 = vrot.lane.b32.xlu0 %v2946, 64
      %v3036 = vpop.permute.xlu0 %3035
      %3037 = vrot.lane.b32.xlu0 %v2955, 64
      %v3038 = vpop.permute.xlu0 %3037
      %3039 = vrot.lane.b32.xlu0 %v2964, 64
      %v3040 = vpop.permute.xlu0 %3039
      %3041 = vrot.lane.b32.xlu0 %v2973, 64
      %v3042 = vpop.permute.xlu0 %3041
      %3043 = vrot.lane.b32.xlu0 %v2982, 64
      %v3044 = vpop.permute.xlu0 %3043
      %3045 = vrot.lane.b32.xlu0 %v2991, 64
      %v3046 = vpop.permute.xlu0 %3045
      %3047 = vrot.lane.b32.xlu0 %v3000, 64
      %v3048 = vpop.permute.xlu0 %3047
      %3049 = vrot.lane.b32.xlu0 %v2999, 64
      %v3050 = vpop.permute.xlu0 %3049
      %v3052 = vunpack.c.l.b16 %v2201
      %v3053 = vpack.c.b16 %v3052, %v3052
      %v3054 = vrot.slane %v2307, 5
      %v3055 = vrot.slane %v2308, 5
      %v3056 = vsel %vm2623, %v3054, %v3055
      %v3057 = vrot.slane %v2309, 5
      %v3058 = vsel %vm2623, %v3055, %v3057
      %v3059 = vrot.slane %v2310, 5
      %v3060 = vsel %vm2623, %v3057, %v3059
      %v3061 = vrot.slane %v2311, 5
      %v3062 = vsel %vm2623, %v3059, %v3061
      %v3063 = vrot.slane %v2312, 5
      %v3064 = vsel %vm2623, %v3061, %v3063
      %v3065 = vrot.slane %v2313, 5
      %v3066 = vsel %vm2623, %v3063, %v3065
      %v3067 = vrot.slane %v2314, 5
      %v3068 = vsel %vm2623, %v3065, %v3067
      %v3069 = vrot.slane %v2315, 5
      %v3070 = vsel %vm2623, %v3067, %v3069
      %v3071 = vrot.slane %v2316, 5
      %v3072 = vsel %vm2623, %v3069, %v3071
      %v3073 = vrot.slane %v2317, 5
      %v3074 = vsel %vm2623, %v3071, %v3073
      %v3075 = vrot.slane %v2318, 5
      %v3076 = vsel %vm2623, %v3073, %v3075
      %v3077 = vrot.slane %v2319, 5
      %v3078 = vsel %vm2623, %v3075, %v3077
      %v3079 = vrot.slane %v2320, 5
      %v3080 = vsel %vm2623, %v3077, %v3079
      %v3081 = vrot.slane %v2321, 5
      %v3082 = vsel %vm2623, %v3079, %v3081
      %v3083 = vrot.slane %v2322, 5
      %v3084 = vsel %vm2623, %v3081, %v3083
      %v3085 = vrot.slane %v2323, 5
      %v3086 = vsel %vm2623, %v3083, %v3085
      %v3087 = vrot.slane %v2324, 5
      %v3088 = vsel %vm2623, %v3085, %v3087
      %v3089 = vrot.slane %v2325, 5
      %v3090 = vsel %vm2623, %v3087, %v3089
      %v3091 = vrot.slane %v2326, 5
      %v3092 = vsel %vm2623, %v3089, %v3091
      %v3093 = vrot.slane %v2327, 5
      %v3094 = vsel %vm2623, %v3091, %v3093
      %v3095 = vrot.slane %v2328, 5
      %v3096 = vsel %vm2623, %v3093, %v3095
      %v3097 = vrot.slane %v2784, 5
      %v3098 = vsel %vm2623, %v3095, %v3097
      %v3099 = vrot.slane %v2785, 5
      %v3100 = vsel %vm2623, %v3097, %v3099
      %v3101 = vrot.slane %v3053, 5
      %v3102 = vsel %vm2623, %v3099, %v3101
      %3103 = vrot.lane.b32.xlu0 %v3054, 80
      %v3104 = vpop.permute.xlu0 %3103
      %3105 = vrot.lane.b32.xlu0 %v3056, 80
      %v3106 = vpop.permute.xlu0 %3105
      %3107 = vrot.lane.b32.xlu0 %v3058, 80
      %v3108 = vpop.permute.xlu0 %3107
      %3109 = vrot.lane.b32.xlu0 %v3060, 80
      %v3110 = vpop.permute.xlu0 %3109
      %3111 = vrot.lane.b32.xlu0 %v3062, 80
      %v3112 = vpop.permute.xlu0 %3111
      %3113 = vrot.lane.b32.xlu0 %v3064, 80
      %v3114 = vpop.permute.xlu0 %3113
      %3115 = vrot.lane.b32.xlu0 %v3066, 80
      %v3116 = vpop.permute.xlu0 %3115
      %3117 = vrot.lane.b32.xlu0 %v3068, 80
      %v3118 = vpop.permute.xlu0 %3117
      %3119 = vrot.lane.b32.xlu0 %v3070, 80
      %v3120 = vpop.permute.xlu0 %3119
      %3121 = vrot.lane.b32.xlu0 %v3072, 80
      %v3122 = vpop.permute.xlu0 %3121
      %3123 = vrot.lane.b32.xlu0 %v3074, 80
      %v3124 = vpop.permute.xlu0 %3123
      %3125 = vrot.lane.b32.xlu0 %v3076, 80
      %v3126 = vpop.permute.xlu0 %3125
      %3127 = vrot.lane.b32.xlu0 %v3078, 80
      %v3128 = vpop.permute.xlu0 %3127
      %3129 = vrot.lane.b32.xlu0 %v3080, 80
      %v3130 = vpop.permute.xlu0 %3129
      %3131 = vrot.lane.b32.xlu0 %v3082, 80
      %v3132 = vpop.permute.xlu0 %3131
      %3133 = vrot.lane.b32.xlu0 %v3084, 80
      %v3134 = vpop.permute.xlu0 %3133
      %3135 = vrot.lane.b32.xlu0 %v3086, 80
      %v3136 = vpop.permute.xlu0 %3135
      %3137 = vrot.lane.b32.xlu0 %v3088, 80
      %v3138 = vpop.permute.xlu0 %3137
      %3139 = vrot.lane.b32.xlu0 %v3090, 80
      %v3140 = vpop.permute.xlu0 %3139
      %3141 = vrot.lane.b32.xlu0 %v3092, 80
      %v3142 = vpop.permute.xlu0 %3141
      %3143 = vrot.lane.b32.xlu0 %v3094, 80
      %v3144 = vpop.permute.xlu0 %3143
      %3145 = vrot.lane.b32.xlu0 %v3096, 80
      %v3146 = vpop.permute.xlu0 %3145
      %3147 = vrot.lane.b32.xlu0 %v3098, 80
      %v3148 = vpop.permute.xlu0 %3147
      %3149 = vrot.lane.b32.xlu0 %v3100, 80
      %v3150 = vpop.permute.xlu0 %3149
      %3151 = vrot.lane.b32.xlu0 %v3102, 80
      %v3152 = vpop.permute.xlu0 %3151
      %v3157 = vunpack.c.l.b16 %v2202
      %v3158 = vunpack.c.l.b16 %v2203
      %v3159 = vunpack.c.l.b16 %v2204
      %v3160 = vunpack.c.l.b16 %v2205
      %v3161 = vpack.c.b16 %v2263, %v3157
      %v3162 = vpack.c.b16 %v3159, %v3158
      %v3163 = vpack.c.b16 %v3160, %v3160
      %3164 = vrot.lane.b32.xlu0 %v3161, 96
      %v3165 = vpop.permute.xlu0 %3164
      %3166 = vrot.lane.b32.xlu0 %v2309, 96
      %v3167 = vpop.permute.xlu0 %3166
      %3168 = vrot.lane.b32.xlu0 %v2310, 96
      %v3169 = vpop.permute.xlu0 %3168
      %3170 = vrot.lane.b32.xlu0 %v2311, 96
      %v3171 = vpop.permute.xlu0 %3170
      %3172 = vrot.lane.b32.xlu0 %v2312, 96
      %v3173 = vpop.permute.xlu0 %3172
      %3174 = vrot.lane.b32.xlu0 %v2313, 96
      %v3175 = vpop.permute.xlu0 %3174
      %3176 = vrot.lane.b32.xlu0 %v2314, 96
      %v3177 = vpop.permute.xlu0 %3176
      %3178 = vrot.lane.b32.xlu0 %v2315, 96
      %v3179 = vpop.permute.xlu0 %3178
      %3180 = vrot.lane.b32.xlu0 %v2316, 96
      %v3181 = vpop.permute.xlu0 %3180
      %3182 = vrot.lane.b32.xlu0 %v2317, 96
      %v3183 = vpop.permute.xlu0 %3182
      %3184 = vrot.lane.b32.xlu0 %v2318, 96
      %v3185 = vpop.permute.xlu0 %3184
      %3186 = vrot.lane.b32.xlu0 %v2319, 96
      %v3187 = vpop.permute.xlu0 %3186
      %3188 = vrot.lane.b32.xlu0 %v2320, 96
      %v3189 = vpop.permute.xlu0 %3188
      %3190 = vrot.lane.b32.xlu0 %v2321, 96
      %v3191 = vpop.permute.xlu0 %3190
      %3192 = vrot.lane.b32.xlu0 %v2322, 96
      %v3193 = vpop.permute.xlu0 %3192
      %3194 = vrot.lane.b32.xlu0 %v2323, 96
      %v3195 = vpop.permute.xlu0 %3194
      %3196 = vrot.lane.b32.xlu0 %v2324, 96
      %v3197 = vpop.permute.xlu0 %3196
      %3198 = vrot.lane.b32.xlu0 %v2325, 96
      %v3199 = vpop.permute.xlu0 %3198
      %3200 = vrot.lane.b32.xlu0 %v2326, 96
      %v3201 = vpop.permute.xlu0 %3200
      %3202 = vrot.lane.b32.xlu0 %v2327, 96
      %v3203 = vpop.permute.xlu0 %3202
      %3204 = vrot.lane.b32.xlu0 %v2328, 96
      %v3205 = vpop.permute.xlu0 %3204
      %3206 = vrot.lane.b32.xlu0 %v2784, 96
      %v3207 = vpop.permute.xlu0 %3206
      %3208 = vrot.lane.b32.xlu0 %v2785, 96
      %v3209 = vpop.permute.xlu0 %3208
      %3210 = vrot.lane.b32.xlu0 %v3162, 96
      %v3211 = vpop.permute.xlu0 %3210
      %3212 = vrot.lane.b32.xlu0 %v3163, 96
      %v3213 = vpop.permute.xlu0 %3212
      %v3214 = vpack.c.b16 %v3158, %v2730
      %v3215 = vpack.c.b16 %v3160, %v3159
      %v3217 = vshrl.u32 %v2732, 16
      %v3219 = vrot.slane %v3217, 4
      %v3220 = vshll.u32 %v2732, 16
      %v3222 = vrot.slane %v3220, 5
      %v3223 = vor.u32 %v3219, %v3222
      %v3224 = vsel %vm2354, %v2568, %v3223
      %v3226 = vshrl.u32 %v3214, 16
      %v3228 = vrot.slane %v3226, 4
      %v3229 = vshll.u32 %v3214, 16
      %v3231 = vrot.slane %v3229, 5
      %v3232 = vor.u32 %v3228, %v3231
      %v3233 = vsel %vm2354, %v3223, %v3232
      %v3235 = vshrl.u32 %v3215, 16
      %v3237 = vrot.slane %v3235, 4
      %v3238 = vshll.u32 %v3215, 16
      %v3240 = vrot.slane %v3238, 5
      %v3241 = vor.u32 %v3237, %v3240
      %v3242 = vsel %vm2354, %v3232, %v3241
      %3243 = vrot.lane.b32.xlu0 %v2388, 112
      %v3244 = vpop.permute.xlu0 %3243
      %3245 = vrot.lane.b32.xlu0 %v2398, 112
      %v3246 = vpop.permute.xlu0 %3245
      %3247 = vrot.lane.b32.xlu0 %v2407, 112
      %v3248 = vpop.permute.xlu0 %3247
      %3249 = vrot.lane.b32.xlu0 %v2416, 112
      %v3250 = vpop.permute.xlu0 %3249
      %3251 = vrot.lane.b32.xlu0 %v2425, 112
      %v3252 = vpop.permute.xlu0 %3251
      %3253 = vrot.lane.b32.xlu0 %v2434, 112
      %v3254 = vpop.permute.xlu0 %3253
      %3255 = vrot.lane.b32.xlu0 %v2443, 112
      %v3256 = vpop.permute.xlu0 %3255
      %3257 = vrot.lane.b32.xlu0 %v2452, 112
      %v3258 = vpop.permute.xlu0 %3257
      %3259 = vrot.lane.b32.xlu0 %v2461, 112
      %v3260 = vpop.permute.xlu0 %3259
      %3261 = vrot.lane.b32.xlu0 %v2470, 112
      %v3262 = vpop.permute.xlu0 %3261
      %3263 = vrot.lane.b32.xlu0 %v2479, 112
      %v3264 = vpop.permute.xlu0 %3263
      %3265 = vrot.lane.b32.xlu0 %v2488, 112
      %v3266 = vpop.permute.xlu0 %3265
      %3267 = vrot.lane.b32.xlu0 %v2497, 112
      %v3268 = vpop.permute.xlu0 %3267
      %3269 = vrot.lane.b32.xlu0 %v2506, 112
      %v3270 = vpop.permute.xlu0 %3269
      %3271 = vrot.lane.b32.xlu0 %v2515, 112
      %v3272 = vpop.permute.xlu0 %3271
      %3273 = vrot.lane.b32.xlu0 %v2524, 112
      %v3274 = vpop.permute.xlu0 %3273
      %3275 = vrot.lane.b32.xlu0 %v2533, 112
      %v3276 = vpop.permute.xlu0 %3275
      %3277 = vrot.lane.b32.xlu0 %v2542, 112
      %v3278 = vpop.permute.xlu0 %3277
      %3279 = vrot.lane.b32.xlu0 %v2551, 112
      %v3280 = vpop.permute.xlu0 %3279
      %3281 = vrot.lane.b32.xlu0 %v2560, 112
      %v3282 = vpop.permute.xlu0 %3281
      %3283 = vrot.lane.b32.xlu0 %v2569, 112
      %v3284 = vpop.permute.xlu0 %3283
      %3285 = vrot.lane.b32.xlu0 %v3224, 112
      %v3286 = vpop.permute.xlu0 %3285
      %3287 = vrot.lane.b32.xlu0 %v3233, 112
      %v3288 = vpop.permute.xlu0 %3287
      %3289 = vrot.lane.b32.xlu0 %v3242, 112
      %v3290 = vpop.permute.xlu0 %3289
      %3291 = vrot.lane.b32.xlu0 %v3241, 112
      %v3292 = vpop.permute.xlu0 %3291
      %v3294 = vunpack.c.l.b16 %v2206
      %v3295 = vpack.c.b16 %v3294, %v3294
      %v3296 = vrot.slane %v2732, 5
      %v3297 = vsel %vm2623, %v2669, %v3296
      %v3298 = vrot.slane %v3214, 5
      %v3299 = vsel %vm2623, %v3296, %v3298
      %v3300 = vrot.slane %v3215, 5
      %v3301 = vsel %vm2623, %v3298, %v3300
      %v3302 = vrot.slane %v3295, 5
      %v3303 = vsel %vm2623, %v3300, %v3302
      %v3306 = vsel %vm857, %v2305, %v2571
      %v3309 = vsel %vm857, %v2306, %v2573
      %v3311 = vsel %vm857, %v2307, %v2575
      %v3313 = vsel %vm857, %v2308, %v2577
      %v3315 = vsel %vm857, %v2309, %v2579
      %v3317 = vsel %vm857, %v2310, %v2581
      %v3319 = vsel %vm857, %v2311, %v2583
      %v3321 = vsel %vm857, %v2312, %v2585
      %v3323 = vsel %vm857, %v2313, %v2587
      %v3325 = vsel %vm857, %v2314, %v2589
      %v3327 = vsel %vm857, %v2315, %v2591
      %v3329 = vsel %vm857, %v2316, %v2593
      %v3331 = vsel %vm857, %v2317, %v2595
      %v3333 = vsel %vm857, %v2318, %v2597
      %v3335 = vsel %vm857, %v2319, %v2599
      %v3337 = vsel %vm857, %v2320, %v2601
      %v3339 = vsel %vm857, %v2321, %v2603
      %v3341 = vsel %vm857, %v2322, %v2605
      %v3343 = vsel %vm857, %v2323, %v2607
      %v3345 = vsel %vm857, %v2324, %v2609
      %v3347 = vsel %vm857, %v2325, %v2611
      %v3349 = vsel %vm857, %v2326, %v2613
      %v3351 = vsel %vm857, %v2327, %v2615
      %v3353 = vsel %vm857, %v2328, %v2617
      %v3356 = vsel %vm857, %v2329, %v2619
      %vm3357 = vcmask 261120
      %v3359 = vsel %vm3357, %v3306, %v2674
      %v3361 = vsel %vm3357, %v3309, %v2676
      %v3363 = vsel %vm3357, %v3311, %v2678
      %v3365 = vsel %vm3357, %v3313, %v2680
      %v3367 = vsel %vm3357, %v3315, %v2682
      %v3369 = vsel %vm3357, %v3317, %v2684
      %v3371 = vsel %vm3357, %v3319, %v2686
      %v3373 = vsel %vm3357, %v3321, %v2688
      %v3375 = vsel %vm3357, %v3323, %v2690
      %v3377 = vsel %vm3357, %v3325, %v2692
      %v3379 = vsel %vm3357, %v3327, %v2694
      %v3381 = vsel %vm3357, %v3329, %v2696
      %v3383 = vsel %vm3357, %v3331, %v2698
      %v3385 = vsel %vm3357, %v3333, %v2700
      %v3387 = vsel %vm3357, %v3335, %v2702
      %v3389 = vsel %vm3357, %v3337, %v2704
      %v3391 = vsel %vm3357, %v3339, %v2706
      %v3393 = vsel %vm3357, %v3341, %v2708
      %v3395 = vsel %vm3357, %v3343, %v2710
      %v3397 = vsel %vm3357, %v3345, %v2712
      %v3399 = vsel %vm3357, %v3347, %v2714
      %v3401 = vsel %vm3357, %v3349, %v2716
      %v3403 = vsel %vm3357, %v3351, %v2718
      %v3405 = vsel %vm3357, %v3353, %v2720
      %v3407 = vsel %vm3357, %v3356, %v2722
      %vm3408 = vcmask 392192
      %v3410 = vsel %vm3408, %v3359, %v2735
      %v3412 = vsel %vm3408, %v3361, %v2737
      %v3414 = vsel %vm3408, %v3363, %v2739
      %v3416 = vsel %vm3408, %v3365, %v2741
      %v3418 = vsel %vm3408, %v3367, %v2743
      %v3420 = vsel %vm3408, %v3369, %v2745
      %v3422 = vsel %vm3408, %v3371, %v2747
      %v3424 = vsel %vm3408, %v3373, %v2749
      %v3426 = vsel %vm3408, %v3375, %v2751
      %v3428 = vsel %vm3408, %v3377, %v2753
      %v3430 = vsel %vm3408, %v3379, %v2755
      %v3432 = vsel %vm3408, %v3381, %v2757
      %v3434 = vsel %vm3408, %v3383, %v2759
      %v3436 = vsel %vm3408, %v3385, %v2761
      %v3438 = vsel %vm3408, %v3387, %v2763
      %v3440 = vsel %vm3408, %v3389, %v2765
      %v3442 = vsel %vm3408, %v3391, %v2767
      %v3444 = vsel %vm3408, %v3393, %v2769
      %v3446 = vsel %vm3408, %v3395, %v2771
      %v3448 = vsel %vm3408, %v3397, %v2773
      %v3450 = vsel %vm3408, %v3399, %v2775
      %v3452 = vsel %vm3408, %v3401, %v2777
      %v3454 = vsel %vm3408, %v3403, %v2779
      %v3456 = vsel %vm3408, %v3405, %v2781
      %v3458 = vsel %vm3408, %v3407, %v2783
      %vm3459 = vcmask 523264
      %v3461 = vsel %vm3459, %v3410, %v3002
      %v3463 = vsel %vm3459, %v3412, %v3004
      %v3465 = vsel %vm3459, %v3414, %v3006
      %v3467 = vsel %vm3459, %v3416, %v3008
      %v3469 = vsel %vm3459, %v3418, %v3010
      %v3471 = vsel %vm3459, %v3420, %v3012
      %v3473 = vsel %vm3459, %v3422, %v3014
      %v3475 = vsel %vm3459, %v3424, %v3016
      %v3477 = vsel %vm3459, %v3426, %v3018
      %v3479 = vsel %vm3459, %v3428, %v3020
      %v3481 = vsel %vm3459, %v3430, %v3022
      %v3483 = vsel %vm3459, %v3432, %v3024
      %v3485 = vsel %vm3459, %v3434, %v3026
      %v3487 = vsel %vm3459, %v3436, %v3028
      %v3489 = vsel %vm3459, %v3438, %v3030
      %v3491 = vsel %vm3459, %v3440, %v3032
      %v3493 = vsel %vm3459, %v3442, %v3034
      %v3495 = vsel %vm3459, %v3444, %v3036
      %v3497 = vsel %vm3459, %v3446, %v3038
      %v3499 = vsel %vm3459, %v3448, %v3040
      %v3501 = vsel %vm3459, %v3450, %v3042
      %v3503 = vsel %vm3459, %v3452, %v3044
      %v3505 = vsel %vm3459, %v3454, %v3046
      %v3507 = vsel %vm3459, %v3456, %v3048
      %v3509 = vsel %vm3459, %v3458, %v3050
      %vm3510 = vcmask 654336
      %v3512 = vsel %vm3510, %v3461, %v3104
      %v3514 = vsel %vm3510, %v3463, %v3106
      %v3516 = vsel %vm3510, %v3465, %v3108
      %v3518 = vsel %vm3510, %v3467, %v3110
      %v3520 = vsel %vm3510, %v3469, %v3112
      %v3522 = vsel %vm3510, %v3471, %v3114
      %v3524 = vsel %vm3510, %v3473, %v3116
      %v3526 = vsel %vm3510, %v3475, %v3118
      %v3528 = vsel %vm3510, %v3477, %v3120
      %v3530 = vsel %vm3510, %v3479, %v3122
      %v3532 = vsel %vm3510, %v3481, %v3124
      %v3534 = vsel %vm3510, %v3483, %v3126
      %v3536 = vsel %vm3510, %v3485, %v3128
      %v3538 = vsel %vm3510, %v3487, %v3130
      %v3540 = vsel %vm3510, %v3489, %v3132
      %v3542 = vsel %vm3510, %v3491, %v3134
      %v3544 = vsel %vm3510, %v3493, %v3136
      %v3546 = vsel %vm3510, %v3495, %v3138
      %v3548 = vsel %vm3510, %v3497, %v3140
      %v3550 = vsel %vm3510, %v3499, %v3142
      %v3552 = vsel %vm3510, %v3501, %v3144
      %v3554 = vsel %vm3510, %v3503, %v3146
      %v3556 = vsel %vm3510, %v3505, %v3148
      %v3558 = vsel %vm3510, %v3507, %v3150
      %v3560 = vsel %vm3510, %v3509, %v3152
      %vm3561 = vcmask 785408
      %v3563 = vsel %vm3561, %v3512, %v3165
      %v3565 = vsel %vm3561, %v3514, %v3167
      %v3567 = vsel %vm3561, %v3516, %v3169
      %v3569 = vsel %vm3561, %v3518, %v3171
      %v3571 = vsel %vm3561, %v3520, %v3173
      %v3573 = vsel %vm3561, %v3522, %v3175
      %v3575 = vsel %vm3561, %v3524, %v3177
      %v3577 = vsel %vm3561, %v3526, %v3179
      %v3579 = vsel %vm3561, %v3528, %v3181
      %v3581 = vsel %vm3561, %v3530, %v3183
      %v3583 = vsel %vm3561, %v3532, %v3185
      %v3585 = vsel %vm3561, %v3534, %v3187
      %v3587 = vsel %vm3561, %v3536, %v3189
      %v3589 = vsel %vm3561, %v3538, %v3191
      %v3591 = vsel %vm3561, %v3540, %v3193
      %v3593 = vsel %vm3561, %v3542, %v3195
      %v3595 = vsel %vm3561, %v3544, %v3197
      %v3597 = vsel %vm3561, %v3546, %v3199
      %v3599 = vsel %vm3561, %v3548, %v3201
      %v3601 = vsel %vm3561, %v3550, %v3203
      %v3603 = vsel %vm3561, %v3552, %v3205
      %v3605 = vsel %vm3561, %v3554, %v3207
      %v3607 = vsel %vm3561, %v3556, %v3209
      %v3609 = vsel %vm3561, %v3558, %v3211
      %v3611 = vsel %vm3561, %v3560, %v3213
      %vm3612 = vcmask 916480
      %v3614 = vsel %vm3612, %v3563, %v3244
      %v3616 = vsel %vm3612, %v3565, %v3246
      %v3618 = vsel %vm3612, %v3567, %v3248
      %v3620 = vsel %vm3612, %v3569, %v3250
      %v3622 = vsel %vm3612, %v3571, %v3252
      %v3624 = vsel %vm3612, %v3573, %v3254
      %v3626 = vsel %vm3612, %v3575, %v3256
      %v3628 = vsel %vm3612, %v3577, %v3258
      %v3630 = vsel %vm3612, %v3579, %v3260
      %v3632 = vsel %vm3612, %v3581, %v3262
      %v3634 = vsel %vm3612, %v3583, %v3264
      %v3636 = vsel %vm3612, %v3585, %v3266
      %v3638 = vsel %vm3612, %v3587, %v3268
      %v3640 = vsel %vm3612, %v3589, %v3270
      %v3642 = vsel %vm3612, %v3591, %v3272
      %v3644 = vsel %vm3612, %v3593, %v3274
      %v3646 = vsel %vm3612, %v3595, %v3276
      %v3648 = vsel %vm3612, %v3597, %v3278
      %v3650 = vsel %vm3612, %v3599, %v3280
      %v3652 = vsel %vm3612, %v3601, %v3282
      %v3654 = vsel %vm3612, %v3603, %v3284
      %v3656 = vsel %vm3612, %v3605, %v3286
      %v3658 = vsel %vm3612, %v3607, %v3288
      %v3660 = vsel %vm3612, %v3609, %v3290
      %v3662 = vsel %vm3612, %v3611, %v3292
      %v3663 = vld [vmem:[%s6] sm:$0xf]
      %v3664 = vld [vmem:[%s6 + $0x4] sm:$0xf]
      %v3665 = vld [vmem:[%s6 + $0x8] sm:$0xf]
      %v3666 = vld [vmem:[%s6 + $0xc] sm:$0xf]
      %v3667 = vld [vmem:[%s6 + $0x10] sm:$0xf]
      %v3668 = vld [vmem:[%s6 + $0x14] sm:$0xf]
      %v3669 = vld [vmem:[%s6 + $0x18] sm:$0xf]
      %v3670 = vld [vmem:[%s6 + $0x1c] sm:$0xf]
      %v3671 = vld [vmem:[%s6 + $0x20] sm:$0xf]
      %v3672 = vld [vmem:[%s6 + $0x24] sm:$0xf]
      %v3673 = vld [vmem:[%s6 + $0x28] sm:$0xf]
      %v3674 = vld [vmem:[%s6 + $0x2c] sm:$0xf]
      %v3675 = vld [vmem:[%s6 + $0x30] sm:$0xf]
      %v3676 = vld [vmem:[%s6 + $0x34] sm:$0xf]
      %v3677 = vld [vmem:[%s6 + $0x38] sm:$0xf]
      %v3678 = vld [vmem:[%s6 + $0x3c] sm:$0xf]
      %v3679 = vld [vmem:[%s6 + $0x40] sm:$0xf]
      %v3680 = vld [vmem:[%s6 + $0x44] sm:$0xf]
      %v3681 = vld [vmem:[%s7] sm:$0x1]
      %v3683 = vperm.slane %v3681, 0
      %vm3685 = vsmask.f32 4352
      %v3686 = vshrl.u32 %v3614, 16
      %v3688 = vrot.slane %v3686, 3
      %v3689 = vshll.u32 %v3614, 16
      %v3691 = vrot.slane %v3689, 4
      %v3692 = vor.u32 %v3688, %v3691
      %v3693 = vshrl.u32 %v3616, 16
      %v3695 = vrot.slane %v3693, 3
      %v3696 = vshll.u32 %v3616, 16
      %v3698 = vrot.slane %v3696, 4
      %v3699 = vor.u32 %v3695, %v3698
      %v3700 = vsel %vm3685, %v3692, %v3699
      %v3702 = vshrl.u32 %v2629, 16
      %v3704 = vrot.slane %v3702, 3
      %v3705 = vshll.u32 %v2629, 16
      %v3707 = vrot.slane %v3705, 4
      %v3708 = vor.u32 %v3704, %v3707
      %v3710 = vshrl.u32 %v2632, 16
      %v3712 = vrot.slane %v3710, 3
      %v3713 = vshll.u32 %v2632, 16
      %v3715 = vrot.slane %v3713, 4
      %v3716 = vor.u32 %v3712, %v3715
      %v3717 = vsel %vm3685, %v3708, %v3716
      %v3718 = vshrl.u32 %v3618, 16
      %v3720 = vrot.slane %v3718, 3
      %v3721 = vshll.u32 %v3618, 16
      %v3723 = vrot.slane %v3721, 4
      %v3724 = vor.u32 %v3720, %v3723
      %v3725 = vsel %vm3685, %v3699, %v3724
      %v3727 = vshrl.u32 %v2634, 16
      %v3729 = vrot.slane %v3727, 3
      %v3730 = vshll.u32 %v2634, 16
      %v3732 = vrot.slane %v3730, 4
      %v3733 = vor.u32 %v3729, %v3732
      %v3734 = vsel %vm3685, %v3716, %v3733
      %v3735 = vshrl.u32 %v3620, 16
      %v3737 = vrot.slane %v3735, 3
      %v3738 = vshll.u32 %v3620, 16
      %v3740 = vrot.slane %v3738, 4
      %v3741 = vor.u32 %v3737, %v3740
      %v3742 = vsel %vm3685, %v3724, %v3741
      %v3744 = vshrl.u32 %v2636, 16
      %v3746 = vrot.slane %v3744, 3
      %v3747 = vshll.u32 %v2636, 16
      %v3749 = vrot.slane %v3747, 4
      %v3750 = vor.u32 %v3746, %v3749
      %v3751 = vsel %vm3685, %v3733, %v3750
      %v3752 = vshrl.u32 %v3622, 16
      %v3754 = vrot.slane %v3752, 3
      %v3755 = vshll.u32 %v3622, 16
      %v3757 = vrot.slane %v3755, 4
      %v3758 = vor.u32 %v3754, %v3757
      %v3759 = vsel %vm3685, %v3741, %v3758
      %v3761 = vshrl.u32 %v2638, 16
      %v3763 = vrot.slane %v3761, 3
      %v3764 = vshll.u32 %v2638, 16
      %v3766 = vrot.slane %v3764, 4
      %v3767 = vor.u32 %v3763, %v3766
      %v3768 = vsel %vm3685, %v3750, %v3767
      %v3769 = vshrl.u32 %v3624, 16
      %v3771 = vrot.slane %v3769, 3
      %v3772 = vshll.u32 %v3624, 16
      %v3774 = vrot.slane %v3772, 4
      %v3775 = vor.u32 %v3771, %v3774
      %v3776 = vsel %vm3685, %v3758, %v3775
      %v3778 = vshrl.u32 %v2640, 16
      %v3780 = vrot.slane %v3778, 3
      %v3781 = vshll.u32 %v2640, 16
      %v3783 = vrot.slane %v3781, 4
      %v3784 = vor.u32 %v3780, %v3783
      %v3785 = vsel %vm3685, %v3767, %v3784
      %v3786 = vshrl.u32 %v3626, 16
      %v3788 = vrot.slane %v3786, 3
      %v3789 = vshll.u32 %v3626, 16
      %v3791 = vrot.slane %v3789, 4
      %v3792 = vor.u32 %v3788, %v3791
      %v3793 = vsel %vm3685, %v3775, %v3792
      %v3795 = vshrl.u32 %v2642, 16
      %v3797 = vrot.slane %v3795, 3
      %v3798 = vshll.u32 %v2642, 16
      %v3800 = vrot.slane %v3798, 4
      %v3801 = vor.u32 %v3797, %v3800
      %v3802 = vsel %vm3685, %v3784, %v3801
      %v3803 = vshrl.u32 %v3628, 16
      %v3805 = vrot.slane %v3803, 3
      %v3806 = vshll.u32 %v3628, 16
      %v3808 = vrot.slane %v3806, 4
      %v3809 = vor.u32 %v3805, %v3808
      %v3810 = vsel %vm3685, %v3792, %v3809
      %v3812 = vshrl.u32 %v2644, 16
      %v3814 = vrot.slane %v3812, 3
      %v3815 = vshll.u32 %v2644, 16
      %v3817 = vrot.slane %v3815, 4
      %v3818 = vor.u32 %v3814, %v3817
      %v3819 = vsel %vm3685, %v3801, %v3818
      %v3820 = vshrl.u32 %v3630, 16
      %v3822 = vrot.slane %v3820, 3
      %v3823 = vshll.u32 %v3630, 16
      %v3825 = vrot.slane %v3823, 4
      %v3826 = vor.u32 %v3822, %v3825
      %v3827 = vsel %vm3685, %v3809, %v3826
      %v3829 = vshrl.u32 %v2646, 16
      %v3831 = vrot.slane %v3829, 3
      %v3832 = vshll.u32 %v2646, 16
      %v3834 = vrot.slane %v3832, 4
      %v3835 = vor.u32 %v3831, %v3834
      %v3836 = vsel %vm3685, %v3818, %v3835
      %v3837 = vshrl.u32 %v3632, 16
      %v3839 = vrot.slane %v3837, 3
      %v3840 = vshll.u32 %v3632, 16
      %v3842 = vrot.slane %v3840, 4
      %v3843 = vor.u32 %v3839, %v3842
      %v3844 = vsel %vm3685, %v3826, %v3843
      %v3846 = vshrl.u32 %v2648, 16
      %v3848 = vrot.slane %v3846, 3
      %v3849 = vshll.u32 %v2648, 16
      %v3851 = vrot.slane %v3849, 4
      %v3852 = vor.u32 %v3848, %v3851
      %v3853 = vsel %vm3685, %v3835, %v3852
      %v3854 = vshrl.u32 %v3634, 16
      %v3856 = vrot.slane %v3854, 3
      %v3857 = vshll.u32 %v3634, 16
      %v3859 = vrot.slane %v3857, 4
      %v3860 = vor.u32 %v3856, %v3859
      %v3861 = vsel %vm3685, %v3843, %v3860
      %v3863 = vshrl.u32 %v2650, 16
      %v3865 = vrot.slane %v3863, 3
      %v3866 = vshll.u32 %v2650, 16
      %v3868 = vrot.slane %v3866, 4
      %v3869 = vor.u32 %v3865, %v3868
      %v3870 = vsel %vm3685, %v3852, %v3869
      %v3871 = vshrl.u32 %v3636, 16
      %v3873 = vrot.slane %v3871, 3
      %v3874 = vshll.u32 %v3636, 16
      %v3876 = vrot.slane %v3874, 4
      %v3877 = vor.u32 %v3873, %v3876
      %v3878 = vsel %vm3685, %v3860, %v3877
      %v3880 = vshrl.u32 %v2652, 16
      %v3882 = vrot.slane %v3880, 3
      %v3883 = vshll.u32 %v2652, 16
      %v3885 = vrot.slane %v3883, 4
      %v3886 = vor.u32 %v3882, %v3885
      %v3887 = vsel %vm3685, %v3869, %v3886
      %v3888 = vshrl.u32 %v3638, 16
      %v3890 = vrot.slane %v3888, 3
      %v3891 = vshll.u32 %v3638, 16
      %v3893 = vrot.slane %v3891, 4
      %v3894 = vor.u32 %v3890, %v3893
      %v3895 = vsel %vm3685, %v3877, %v3894
      %v3897 = vshrl.u32 %v2654, 16
      %v3899 = vrot.slane %v3897, 3
      %v3900 = vshll.u32 %v2654, 16
      %v3902 = vrot.slane %v3900, 4
      %v3903 = vor.u32 %v3899, %v3902
      %v3904 = vsel %vm3685, %v3886, %v3903
      %v3905 = vshrl.u32 %v3640, 16
      %v3907 = vrot.slane %v3905, 3
      %v3908 = vshll.u32 %v3640, 16
      %v3910 = vrot.slane %v3908, 4
      %v3911 = vor.u32 %v3907, %v3910
      %v3912 = vsel %vm3685, %v3894, %v3911
      %v3914 = vshrl.u32 %v2656, 16
      %v3916 = vrot.slane %v3914, 3
      %v3917 = vshll.u32 %v2656, 16
      %v3919 = vrot.slane %v3917, 4
      %v3920 = vor.u32 %v3916, %v3919
      %v3921 = vsel %vm3685, %v3903, %v3920
      %v3922 = vshrl.u32 %v3642, 16
      %v3924 = vrot.slane %v3922, 3
      %v3925 = vshll.u32 %v3642, 16
      %v3927 = vrot.slane %v3925, 4
      %v3928 = vor.u32 %v3924, %v3927
      %v3929 = vsel %vm3685, %v3911, %v3928
      %v3931 = vshrl.u32 %v2658, 16
      %v3933 = vrot.slane %v3931, 3
      %v3934 = vshll.u32 %v2658, 16
      %v3936 = vrot.slane %v3934, 4
      %v3937 = vor.u32 %v3933, %v3936
      %v3938 = vsel %vm3685, %v3920, %v3937
      %v3939 = vshrl.u32 %v3644, 16
      %v3941 = vrot.slane %v3939, 3
      %v3942 = vshll.u32 %v3644, 16
      %v3944 = vrot.slane %v3942, 4
      %v3945 = vor.u32 %v3941, %v3944
      %v3946 = vsel %vm3685, %v3928, %v3945
      %v3948 = vshrl.u32 %v2660, 16
      %v3950 = vrot.slane %v3948, 3
      %v3951 = vshll.u32 %v2660, 16
      %v3953 = vrot.slane %v3951, 4
      %v3954 = vor.u32 %v3950, %v3953
      %v3955 = vsel %vm3685, %v3937, %v3954
      %v3956 = vshrl.u32 %v3646, 16
      %v3958 = vrot.slane %v3956, 3
      %v3959 = vshll.u32 %v3646, 16
      %v3961 = vrot.slane %v3959, 4
      %v3962 = vor.u32 %v3958, %v3961
      %v3963 = vsel %vm3685, %v3945, %v3962
      %v3965 = vshrl.u32 %v2662, 16
      %v3967 = vrot.slane %v3965, 3
      %v3968 = vshll.u32 %v2662, 16
      %v3970 = vrot.slane %v3968, 4
      %v3971 = vor.u32 %v3967, %v3970
      %v3972 = vsel %vm3685, %v3954, %v3971
      %v3973 = vshrl.u32 %v3648, 16
      %v3975 = vrot.slane %v3973, 3
      %v3976 = vshll.u32 %v3648, 16
      %v3978 = vrot.slane %v3976, 4
      %v3979 = vor.u32 %v3975, %v3978
      %v3980 = vsel %vm3685, %v3962, %v3979
      %v3982 = vshrl.u32 %v2664, 16
      %v3984 = vrot.slane %v3982, 3
      %v3985 = vshll.u32 %v2664, 16
      %v3987 = vrot.slane %v3985, 4
      %v3988 = vor.u32 %v3984, %v3987
      %v3989 = vsel %vm3685, %v3971, %v3988
      %v3990 = vshrl.u32 %v3650, 16
      %v3992 = vrot.slane %v3990, 3
      %v3993 = vshll.u32 %v3650, 16
      %v3995 = vrot.slane %v3993, 4
      %v3996 = vor.u32 %v3992, %v3995
      %v3997 = vsel %vm3685, %v3979, %v3996
      %v3999 = vshrl.u32 %v2666, 16
      %v4001 = vrot.slane %v3999, 3
      %v4002 = vshll.u32 %v2666, 16
      %v4004 = vrot.slane %v4002, 4
      %v4005 = vor.u32 %v4001, %v4004
      %v4006 = vsel %vm3685, %v3988, %v4005
      %v4007 = vshrl.u32 %v3652, 16
      %v4009 = vrot.slane %v4007, 3
      %v4010 = vshll.u32 %v3652, 16
      %v4012 = vrot.slane %v4010, 4
      %v4013 = vor.u32 %v4009, %v4012
      %v4014 = vsel %vm3685, %v3996, %v4013
      %v4016 = vshrl.u32 %v2668, 16
      %v4018 = vrot.slane %v4016, 3
      %v4019 = vshll.u32 %v2668, 16
      %v4021 = vrot.slane %v4019, 4
      %v4022 = vor.u32 %v4018, %v4021
      %v4023 = vsel %vm3685, %v4005, %v4022
      %v4024 = vshrl.u32 %v3654, 16
      %v4026 = vrot.slane %v4024, 3
      %v4027 = vshll.u32 %v3654, 16
      %v4029 = vrot.slane %v4027, 4
      %v4030 = vor.u32 %v4026, %v4029
      %v4031 = vsel %vm3685, %v4013, %v4030
      %v4033 = vshrl.u32 %v2670, 16
      %v4035 = vrot.slane %v4033, 3
      %v4036 = vshll.u32 %v2670, 16
      %v4038 = vrot.slane %v4036, 4
      %v4039 = vor.u32 %v4035, %v4038
      %v4040 = vsel %vm3685, %v4022, %v4039
      %v4041 = vshrl.u32 %v3656, 16
      %v4043 = vrot.slane %v4041, 3
      %v4044 = vshll.u32 %v3656, 16
      %v4046 = vrot.slane %v4044, 4
      %v4047 = vor.u32 %v4043, %v4046
      %v4048 = vsel %vm3685, %v4030, %v4047
      %v4050 = vshrl.u32 %v3297, 16
      %v4052 = vrot.slane %v4050, 3
      %v4053 = vshll.u32 %v3297, 16
      %v4055 = vrot.slane %v4053, 4
      %v4056 = vor.u32 %v4052, %v4055
      %v4057 = vsel %vm3685, %v4039, %v4056
      %v4058 = vshrl.u32 %v3658, 16
      %v4060 = vrot.slane %v4058, 3
      %v4061 = vshll.u32 %v3658, 16
      %v4063 = vrot.slane %v4061, 4
      %v4064 = vor.u32 %v4060, %v4063
      %v4065 = vsel %vm3685, %v4047, %v4064
      %v4067 = vshrl.u32 %v3299, 16
      %v4069 = vrot.slane %v4067, 3
      %v4070 = vshll.u32 %v3299, 16
      %v4072 = vrot.slane %v4070, 4
      %v4073 = vor.u32 %v4069, %v4072
      %v4074 = vsel %vm3685, %v4056, %v4073
      %v4075 = vshrl.u32 %v3660, 16
      %v4077 = vrot.slane %v4075, 3
      %v4078 = vshll.u32 %v3660, 16
      %v4080 = vrot.slane %v4078, 4
      %v4081 = vor.u32 %v4077, %v4080
      %v4082 = vsel %vm3685, %v4064, %v4081
      %v4084 = vshrl.u32 %v3301, 16
      %v4086 = vrot.slane %v4084, 3
      %v4087 = vshll.u32 %v3301, 16
      %v4089 = vrot.slane %v4087, 4
      %v4090 = vor.u32 %v4086, %v4089
      %v4091 = vsel %vm3685, %v4073, %v4090
      %v4092 = vshrl.u32 %v3662, 16
      %v4094 = vrot.slane %v4092, 3
      %v4095 = vshll.u32 %v3662, 16
      %v4097 = vrot.slane %v4095, 4
      %v4098 = vor.u32 %v4094, %v4097
      %v4099 = vsel %vm3685, %v4081, %v4098
      %v4101 = vshrl.u32 %v3303, 16
      %v4103 = vrot.slane %v4101, 3
      %v4104 = vshll.u32 %v3303, 16
      %v4106 = vrot.slane %v4104, 4
      %v4107 = vor.u32 %v4103, %v4106
      %v4108 = vsel %vm3685, %v4090, %v4107
      %v4151 = vunpack.c.l.b16 %v3663
      %v4152 = vunpack.c.l.b16 %v3664
      %v4153 = vunpack.c.l.b16 %v3665
      %v4154 = vunpack.c.l.b16 %v3666
      %v4155 = vunpack.c.l.b16 %v3667
      %v4156 = vunpack.c.l.b16 %v3668
      %v4157 = vunpack.c.l.b16 %v3669
      %v4158 = vunpack.c.l.b16 %v3670
      %v4159 = vunpack.c.l.b16 %v3671
      %v4160 = vunpack.c.l.b16 %v3672
      %v4161 = vunpack.c.l.b16 %v3673
      %v4162 = vunpack.c.l.b16 %v3674
      %v4163 = vunpack.c.l.b16 %v3675
      %v4164 = vunpack.c.l.b16 %v3676
      %v4165 = vunpack.c.l.b16 %v3677
      %v4166 = vunpack.c.l.b16 %v3678
      %v4167 = vunpack.c.l.b16 %v3679
      %v4168 = vunpack.c.l.b16 %v3680
      %v4169 = vpack.c.b16 %v4152, %v4151
      %v4170 = vpack.c.b16 %v4154, %v4153
      %v4171 = vpack.c.b16 %v4156, %v4155
      %v4172 = vpack.c.b16 %v4158, %v4157
      %v4173 = vpack.c.b16 %v4160, %v4159
      %v4174 = vpack.c.b16 %v4162, %v4161
      %v4175 = vpack.c.b16 %v4164, %v4163
      %v4176 = vpack.c.b16 %v4166, %v4165
      %v4177 = vpack.c.b16 %v4168, %v4167
      %v4188 = vsel %vm857, %v3717, 0
      %v4191 = vsel %vm857, %v3734, 0
      %v4194 = vsel %vm857, %v3751, 0
      %v4197 = vsel %vm857, %v3768, 0
      %v4200 = vsel %vm857, %v3785, 0
      %v4203 = vsel %vm857, %v3802, 0
      %v4206 = vsel %vm857, %v3819, 0
      %v4209 = vsel %vm857, %v3836, 0
      %v4212 = vsel %vm857, %v3853, 0
      %v4215 = vsel %vm857, %v3870, 0
      %v4218 = vsel %vm857, %v3887, 0
      %v4221 = vsel %vm857, %v3904, 0
      %v4224 = vsel %vm857, %v3921, 0
      %v4227 = vsel %vm857, %v3938, 0
      %v4230 = vsel %vm857, %v3955, 0
      %v4233 = vsel %vm857, %v3972, 0
      %v4236 = vsel %vm857, %v3989, 0
      %v4239 = vsel %vm857, %v4006, 0
      %v4242 = vsel %vm857, %v4023, 0
      %v4245 = vsel %vm857, %v4040, 0
      %v4248 = vsel %vm857, %v4057, 0
      %v4251 = vsel %vm857, %v4074, 0
      %v4254 = vsel %vm857, %v4091, 0
      %v4257 = vsel %vm857, %v4108, 0
      %4259 = vmatpush.bf16.msra.mxu0 %v4176
      %4260 = vmatpush.bf16.msra.mxu0 %v4175
      %4261 = vmatpush.bf16.msra.mxu0 %v4174
      %4262 = vmatpush.bf16.msra.mxu0 %v4173
      %4263 = vmatpush.bf16.msra.mxu0 %v4172
      %4264 = vmatpush.bf16.msra.mxu0 %v4171
      %4265 = vmatpush.bf16.msra.mxu0 %v4170
      %4266 = vmatpush.bf16.msra.mxu0 %v4169
      %4267 = vmatmul.bf16.gmra.mxu0 %v3700
      %v4268 = vpop.f32.mrf.mxu0
      %v4269 = vadd.f32 %v3683, %v4268
      %v4270 = vpop.f32.mrf.mxu0
      %v4271 = vadd.f32 %v3683, %v4270
      %4272 = vmatmul.bf16.gmra.mxu0 %v3725
      %v4273 = vpop.f32.mrf.mxu0
      %v4274 = vadd.f32 %v3683, %v4273
      %v4275 = vpop.f32.mrf.mxu0
      %v4276 = vadd.f32 %v3683, %v4275
      %4277 = vmatmul.bf16.gmra.mxu0 %v3742
      %v4278 = vpop.f32.mrf.mxu0
      %v4279 = vadd.f32 %v3683, %v4278
      %v4280 = vpop.f32.mrf.mxu0
      %v4281 = vadd.f32 %v3683, %v4280
      %4282 = vmatmul.bf16.gmra.mxu0 %v3759
      %v4283 = vpop.f32.mrf.mxu0
      %v4284 = vadd.f32 %v3683, %v4283
      %v4285 = vpop.f32.mrf.mxu0
      %v4286 = vadd.f32 %v3683, %v4285
      %4287 = vmatmul.bf16.gmra.mxu0 %v3776
      %v4288 = vpop.f32.mrf.mxu0
      %v4289 = vadd.f32 %v3683, %v4288
      %v4290 = vpop.f32.mrf.mxu0
      %v4291 = vadd.f32 %v3683, %v4290
      %4292 = vmatmul.bf16.gmra.mxu0 %v3793
      %v4293 = vpop.f32.mrf.mxu0
      %v4294 = vadd.f32 %v3683, %v4293
      %v4295 = vpop.f32.mrf.mxu0
      %v4296 = vadd.f32 %v3683, %v4295
      %4297 = vmatmul.bf16.gmra.mxu0 %v3810
      %v4298 = vpop.f32.mrf.mxu0
      %v4299 = vadd.f32 %v3683, %v4298
      %v4300 = vpop.f32.mrf.mxu0
      %v4301 = vadd.f32 %v3683, %v4300
      %4302 = vmatmul.bf16.gmra.mxu0 %v3827
      %v4303 = vpop.f32.mrf.mxu0
      %v4304 = vadd.f32 %v3683, %v4303
      %v4305 = vpop.f32.mrf.mxu0
      %v4306 = vadd.f32 %v3683, %v4305
      %4307 = vmatmul.bf16.gmra.mxu0 %v3844
      %v4308 = vpop.f32.mrf.mxu0
      %v4309 = vadd.f32 %v3683, %v4308
      %v4310 = vpop.f32.mrf.mxu0
      %v4311 = vadd.f32 %v3683, %v4310
      %4312 = vmatmul.bf16.gmra.mxu0 %v3861
      %v4313 = vpop.f32.mrf.mxu0
      %v4314 = vadd.f32 %v3683, %v4313
      %v4315 = vpop.f32.mrf.mxu0
      %v4316 = vadd.f32 %v3683, %v4315
      %4317 = vmatmul.bf16.gmra.mxu0 %v3878
      %v4318 = vpop.f32.mrf.mxu0
      %v4319 = vadd.f32 %v3683, %v4318
      %v4320 = vpop.f32.mrf.mxu0
      %v4321 = vadd.f32 %v3683, %v4320
      %4322 = vmatmul.bf16.gmra.mxu0 %v3895
      %v4323 = vpop.f32.mrf.mxu0
      %v4324 = vadd.f32 %v3683, %v4323
      %v4325 = vpop.f32.mrf.mxu0
      %v4326 = vadd.f32 %v3683, %v4325
      %4327 = vmatmul.bf16.gmra.mxu0 %v3912
      %v4328 = vpop.f32.mrf.mxu0
      %v4329 = vadd.f32 %v3683, %v4328
      %v4330 = vpop.f32.mrf.mxu0
      %v4331 = vadd.f32 %v3683, %v4330
      %4332 = vmatmul.bf16.gmra.mxu0 %v3929
      %v4333 = vpop.f32.mrf.mxu0
      %v4334 = vadd.f32 %v3683, %v4333
      %v4335 = vpop.f32.mrf.mxu0
      %v4336 = vadd.f32 %v3683, %v4335
      %4337 = vmatmul.bf16.gmra.mxu0 %v3946
      %v4338 = vpop.f32.mrf.mxu0
      %v4339 = vadd.f32 %v3683, %v4338
      %v4340 = vpop.f32.mrf.mxu0
      %v4341 = vadd.f32 %v3683, %v4340
      %4342 = vmatmul.bf16.gmra.mxu0 %v3963
      %v4343 = vpop.f32.mrf.mxu0
      %v4344 = vadd.f32 %v3683, %v4343
      %v4345 = vpop.f32.mrf.mxu0
      %v4346 = vadd.f32 %v3683, %v4345
      %4347 = vmatmul.bf16.gmra.mxu0 %v3980
      %v4348 = vpop.f32.mrf.mxu0
      %v4349 = vadd.f32 %v3683, %v4348
      %v4350 = vpop.f32.mrf.mxu0
      %v4351 = vadd.f32 %v3683, %v4350
      %4352 = vmatmul.bf16.gmra.mxu0 %v3997
      %v4353 = vpop.f32.mrf.mxu0
      %v4354 = vadd.f32 %v3683, %v4353
      %v4355 = vpop.f32.mrf.mxu0
      %v4356 = vadd.f32 %v3683, %v4355
      %4357 = vmatmul.bf16.gmra.mxu0 %v4014
      %v4358 = vpop.f32.mrf.mxu0
      %v4359 = vadd.f32 %v3683, %v4358
      %v4360 = vpop.f32.mrf.mxu0
      %v4361 = vadd.f32 %v3683, %v4360
      %4362 = vmatmul.bf16.gmra.mxu0 %v4031
      %v4363 = vpop.f32.mrf.mxu0
      %v4364 = vadd.f32 %v3683, %v4363
      %v4365 = vpop.f32.mrf.mxu0
      %v4366 = vadd.f32 %v3683, %v4365
      %4367 = vmatmul.bf16.gmra.mxu0 %v4048
      %v4368 = vpop.f32.mrf.mxu0
      %v4369 = vadd.f32 %v3683, %v4368
      %v4370 = vpop.f32.mrf.mxu0
      %v4371 = vadd.f32 %v3683, %v4370
      %4372 = vmatmul.bf16.gmra.mxu0 %v4065
      %v4373 = vpop.f32.mrf.mxu0
      %v4374 = vadd.f32 %v3683, %v4373
      %v4375 = vpop.f32.mrf.mxu0
      %v4376 = vadd.f32 %v3683, %v4375
      %4377 = vmatmul.bf16.gmra.mxu0 %v4082
      %v4378 = vpop.f32.mrf.mxu0
      %v4379 = vadd.f32 %v3683, %v4378
      %v4380 = vpop.f32.mrf.mxu0
      %v4381 = vadd.f32 %v3683, %v4380
      %4382 = vmatmul.bf16.gmra.mxu0 %v4099
      %v4383 = vpop.f32.mrf.mxu0
      %v4384 = vadd.f32 %v3683, %v4383
      %v4385 = vpop.f32.mrf.mxu0
      %v4386 = vadd.f32 %v3683, %v4385
      %4387 = vdwg.mxu0
      %4388 = vmatpush.bf16.msra.mxu0 0
      %4389 = vmatpush.bf16.msra.mxu0 0
      %4390 = vmatpush.bf16.msra.mxu0 0
      %4391 = vmatpush.bf16.msra.mxu0 0
      %4392 = vmatpush.bf16.msra.mxu0 0
      %4393 = vmatpush.bf16.msra.mxu0 0
      %4394 = vmatpush.bf16.msra.mxu0 0
      %4395 = vmatpush.bf16.msra.mxu0 %v4177
      %4396 = vmatmul.bf16.gmra.mxu0 %v4188
      %v4397 = vpop.f32.mrf.mxu0
      %v4398 = vadd.f32 %v4269, %v4397
      %v4399 = vpop.f32.mrf.mxu0
      %v4400 = vadd.f32 %v4271, %v4399
      %4401 = vmatmul.bf16.gmra.mxu0 %v4191
      %v4402 = vpop.f32.mrf.mxu0
      %v4403 = vadd.f32 %v4274, %v4402
      %v4404 = vpop.f32.mrf.mxu0
      %v4405 = vadd.f32 %v4276, %v4404
      %4406 = vmatmul.bf16.gmra.mxu0 %v4194
      %v4407 = vpop.f32.mrf.mxu0
      %v4408 = vadd.f32 %v4279, %v4407
      %v4409 = vpop.f32.mrf.mxu0
      %v4410 = vadd.f32 %v4281, %v4409
      %4411 = vmatmul.bf16.gmra.mxu0 %v4197
      %v4412 = vpop.f32.mrf.mxu0
      %v4413 = vadd.f32 %v4284, %v4412
      %v4414 = vpop.f32.mrf.mxu0
      %v4415 = vadd.f32 %v4286, %v4414
      %4416 = vmatmul.bf16.gmra.mxu0 %v4200
      %v4417 = vpop.f32.mrf.mxu0
      %v4418 = vadd.f32 %v4289, %v4417
      %v4419 = vpop.f32.mrf.mxu0
      %v4420 = vadd.f32 %v4291, %v4419
      %4421 = vmatmul.bf16.gmra.mxu0 %v4203
      %v4422 = vpop.f32.mrf.mxu0
      %v4423 = vadd.f32 %v4294, %v4422
      %v4424 = vpop.f32.mrf.mxu0
      %v4425 = vadd.f32 %v4296, %v4424
      %4426 = vmatmul.bf16.gmra.mxu0 %v4206
      %v4427 = vpop.f32.mrf.mxu0
      %v4428 = vadd.f32 %v4299, %v4427
      %v4429 = vpop.f32.mrf.mxu0
      %v4430 = vadd.f32 %v4301, %v4429
      %4431 = vmatmul.bf16.gmra.mxu0 %v4209
      %v4432 = vpop.f32.mrf.mxu0
      %v4433 = vadd.f32 %v4304, %v4432
      %v4434 = vpop.f32.mrf.mxu0
      %v4435 = vadd.f32 %v4306, %v4434
      %4436 = vmatmul.bf16.gmra.mxu0 %v4212
      %v4437 = vpop.f32.mrf.mxu0
      %v4438 = vadd.f32 %v4309, %v4437
      %v4439 = vpop.f32.mrf.mxu0
      %v4440 = vadd.f32 %v4311, %v4439
      %4441 = vmatmul.bf16.gmra.mxu0 %v4215
      %v4442 = vpop.f32.mrf.mxu0
      %v4443 = vadd.f32 %v4314, %v4442
      %v4444 = vpop.f32.mrf.mxu0
      %v4445 = vadd.f32 %v4316, %v4444
      %4446 = vmatmul.bf16.gmra.mxu0 %v4218
      %v4447 = vpop.f32.mrf.mxu0
      %v4448 = vadd.f32 %v4319, %v4447
      %v4449 = vpop.f32.mrf.mxu0
      %v4450 = vadd.f32 %v4321, %v4449
      %4451 = vmatmul.bf16.gmra.mxu0 %v4221
      %v4452 = vpop.f32.mrf.mxu0
      %v4453 = vadd.f32 %v4324, %v4452
      %v4454 = vpop.f32.mrf.mxu0
      %v4455 = vadd.f32 %v4326, %v4454
      %4456 = vmatmul.bf16.gmra.mxu0 %v4224
      %v4457 = vpop.f32.mrf.mxu0
      %v4458 = vadd.f32 %v4329, %v4457
      %v4459 = vpop.f32.mrf.mxu0
      %v4460 = vadd.f32 %v4331, %v4459
      %4461 = vmatmul.bf16.gmra.mxu0 %v4227
      %v4462 = vpop.f32.mrf.mxu0
      %v4463 = vadd.f32 %v4334, %v4462
      %v4464 = vpop.f32.mrf.mxu0
      %v4465 = vadd.f32 %v4336, %v4464
      %4466 = vmatmul.bf16.gmra.mxu0 %v4230
      %v4467 = vpop.f32.mrf.mxu0
      %v4468 = vadd.f32 %v4339, %v4467
      %v4469 = vpop.f32.mrf.mxu0
      %v4470 = vadd.f32 %v4341, %v4469
      %4471 = vmatmul.bf16.gmra.mxu0 %v4233
      %v4472 = vpop.f32.mrf.mxu0
      %v4473 = vadd.f32 %v4344, %v4472
      %v4474 = vpop.f32.mrf.mxu0
      %v4475 = vadd.f32 %v4346, %v4474
      %4476 = vmatmul.bf16.gmra.mxu0 %v4236
      %v4477 = vpop.f32.mrf.mxu0
      %v4478 = vadd.f32 %v4349, %v4477
      %v4479 = vpop.f32.mrf.mxu0
      %v4480 = vadd.f32 %v4351, %v4479
      %4481 = vmatmul.bf16.gmra.mxu0 %v4239
      %v4482 = vpop.f32.mrf.mxu0
      %v4483 = vadd.f32 %v4354, %v4482
      %v4484 = vpop.f32.mrf.mxu0
      %v4485 = vadd.f32 %v4356, %v4484
      %4486 = vmatmul.bf16.gmra.mxu0 %v4242
      %v4487 = vpop.f32.mrf.mxu0
      %v4488 = vadd.f32 %v4359, %v4487
      %v4489 = vpop.f32.mrf.mxu0
      %v4490 = vadd.f32 %v4361, %v4489
      %4491 = vmatmul.bf16.gmra.mxu0 %v4245
      %v4492 = vpop.f32.mrf.mxu0
      %v4493 = vadd.f32 %v4364, %v4492
      %v4494 = vpop.f32.mrf.mxu0
      %v4495 = vadd.f32 %v4366, %v4494
      %4496 = vmatmul.bf16.gmra.mxu0 %v4248
      %v4497 = vpop.f32.mrf.mxu0
      %v4498 = vadd.f32 %v4369, %v4497
      %v4499 = vpop.f32.mrf.mxu0
      %v4500 = vadd.f32 %v4371, %v4499
      %4501 = vmatmul.bf16.gmra.mxu0 %v4251
      %v4502 = vpop.f32.mrf.mxu0
      %v4503 = vadd.f32 %v4374, %v4502
      %v4504 = vpop.f32.mrf.mxu0
      %v4505 = vadd.f32 %v4376, %v4504
      %4506 = vmatmul.bf16.gmra.mxu0 %v4254
      %v4507 = vpop.f32.mrf.mxu0
      %v4508 = vadd.f32 %v4379, %v4507
      %v4509 = vpop.f32.mrf.mxu0
      %v4510 = vadd.f32 %v4381, %v4509
      %4511 = vmatmul.bf16.gmra.mxu0 %v4257
      %v4512 = vpop.f32.mrf.mxu0
      %v4513 = vadd.f32 %v4384, %v4512
      %v4514 = vpop.f32.mrf.mxu0
      %v4515 = vadd.f32 %v4386, %v4514
      %4516 = vdwg.mxu0
      %v4517 = vmax.f32 %v4398, 0.0
      %v4518 = vmax.f32 %v4400, 0.0
      %v4519 = vmax.f32 %v4403, 0.0
      %v4520 = vmax.f32 %v4405, 0.0
      %v4521 = vmax.f32 %v4408, 0.0
      %v4522 = vmax.f32 %v4410, 0.0
      %v4523 = vmax.f32 %v4413, 0.0
      %v4524 = vmax.f32 %v4415, 0.0
      %v4525 = vmax.f32 %v4418, 0.0
      %v4526 = vmax.f32 %v4420, 0.0
      %v4527 = vmax.f32 %v4423, 0.0
      %v4528 = vmax.f32 %v4425, 0.0
      %v4529 = vmax.f32 %v4428, 0.0
      %v4530 = vmax.f32 %v4430, 0.0
      %v4531 = vmax.f32 %v4433, 0.0
      %v4532 = vmax.f32 %v4435, 0.0
      %v4533 = vmax.f32 %v4438, 0.0
      %v4534 = vmax.f32 %v4440, 0.0
      %v4535 = vmax.f32 %v4443, 0.0
      %v4536 = vmax.f32 %v4445, 0.0
      %v4537 = vmax.f32 %v4448, 0.0
      %v4538 = vmax.f32 %v4450, 0.0
      %v4539 = vmax.f32 %v4453, 0.0
      %v4540 = vmax.f32 %v4455, 0.0
      %v4541 = vmax.f32 %v4458, 0.0
      %v4542 = vmax.f32 %v4460, 0.0
      %v4543 = vmax.f32 %v4463, 0.0
      %v4544 = vmax.f32 %v4465, 0.0
      %v4545 = vmax.f32 %v4468, 0.0
      %v4546 = vmax.f32 %v4470, 0.0
      %v4547 = vmax.f32 %v4473, 0.0
      %v4548 = vmax.f32 %v4475, 0.0
      %v4549 = vmax.f32 %v4478, 0.0
      %v4550 = vmax.f32 %v4480, 0.0
      %v4551 = vmax.f32 %v4483, 0.0
      %v4552 = vmax.f32 %v4485, 0.0
      %v4553 = vmax.f32 %v4488, 0.0
      %v4554 = vmax.f32 %v4490, 0.0
      %v4555 = vmax.f32 %v4493, 0.0
      %v4556 = vmax.f32 %v4495, 0.0
      %v4557 = vmax.f32 %v4498, 0.0
      %v4558 = vmax.f32 %v4500, 0.0
      %v4559 = vmax.f32 %v4503, 0.0
      %v4560 = vmax.f32 %v4505, 0.0
      %v4561 = vmax.f32 %v4508, 0.0
      %v4562 = vmax.f32 %v4510, 0.0
      %v4563 = vmax.f32 %v4513, 0.0
      %v4564 = vmax.f32 %v4515, 0.0
      %v4565 = vld [vmem:[#allocation3] sm:$0x8]
      %v4566 = vld [vmem:[#allocation3 + $0x4] sm:$0xf]
      %v4567 = vld [vmem:[#allocation3 + $0x8] sm:$0xf]
      %v4568 = vld [vmem:[#allocation3 + $0xc] sm:$0xf]
      %v4569 = vld [vmem:[#allocation3 + $0x10] sm:$0xf]
      %v4570 = vld [vmem:[#allocation3 + $0x14] sm:$0xf]
      %v4571 = vld [vmem:[#allocation3 + $0x18] sm:$0xf]
      %v4572 = vld [vmem:[#allocation3 + $0x1c] sm:$0xf]
      %v4573 = vld [vmem:[#allocation3 + $0x20] sm:$0xf]
      %v4574 = vld [vmem:[#allocation3 + $0x24] sm:$0xf]
      %v4575 = vld [vmem:[#allocation3 + $0x28] sm:$0xf]
      %v4576 = vld [vmem:[#allocation3 + $0x2c] sm:$0xf]
      %v4577 = vld [vmem:[#allocation3 + $0x30] sm:$0xf]
      %v4578 = vld [vmem:[#allocation3 + $0x34] sm:$0xf]
      %v4579 = vld [vmem:[#allocation3 + $0x38] sm:$0xf]
      %v4580 = vld [vmem:[#allocation3 + $0x3c] sm:$0xf]
      %v4581 = vld [vmem:[#allocation3 + $0x40] sm:$0xf]
      %v4582 = vld [vmem:[#allocation3 + $0x44] sm:$0xf]
      %v4583 = vld [vmem:[#allocation3 + $0x48] sm:$0xf]
      %v4584 = vld [vmem:[#allocation3 + $0x4c] sm:$0xf]
      %v4585 = vld [vmem:[#allocation3 + $0x50] sm:$0xf]
      %v4586 = vld [vmem:[#allocation3 + $0x54] sm:$0xf]
      %v4587 = vld [vmem:[#allocation3 + $0x58] sm:$0xf]
      %v4588 = vld [vmem:[#allocation3 + $0x5c] sm:$0xf]
      %v4589 = vld [vmem:[#allocation3 + $0x60] sm:$0xf]
      %v4590 = vld [vmem:[#allocation3 + $0x64] sm:$0xf]
      %v4591 = vld [vmem:[#allocation3 + $0x68] sm:$0xf]
      %v4592 = vld [vmem:[#allocation3 + $0x6c] sm:$0xf]
      %v4593 = vld [vmem:[#allocation3 + $0x70] sm:$0xf]
      %v4594 = vld [vmem:[#allocation3 + $0x74] sm:$0xf]
      %v4595 = vld [vmem:[#allocation3 + $0x78] sm:$0xf]
      %v4596 = vld [vmem:[#allocation3 + $0x7c] sm:$0xf]
      %v4597 = vld [vmem:[#allocation3 + $0x80] sm:$0xf]
      %v4598 = vld [vmem:[#allocation3 + $0x84] sm:$0xf]
      %v4599 = vld [vmem:[#allocation3 + $0x88] sm:$0xf]
      %v4600 = vld [vmem:[#allocation3 + $0x8c] sm:$0xf]
      %v4601 = vld [vmem:[#allocation3 + $0x90] sm:$0xf]
      %v4602 = vld [vmem:[#allocation3 + $0x94] sm:$0xf]
      %v4603 = vld [vmem:[#allocation3 + $0x98] sm:$0xf]
      %v4604 = vld [vmem:[#allocation3 + $0x9c] sm:$0xf]
      %v4605 = vld [vmem:[#allocation3 + $0xa0] sm:$0xf]
      %v4606 = vld [vmem:[#allocation3 + $0xa4] sm:$0xf]
      %v4607 = vld [vmem:[#allocation3 + $0xa8] sm:$0xf]
      %v4608 = vld [vmem:[#allocation3 + $0xac] sm:$0xf]
      %v4609 = vld [vmem:[#allocation3 + $0xb0] sm:$0xf]
      %v4610 = vld [vmem:[#allocation3 + $0xb4] sm:$0xf]
      %v4611 = vld [vmem:[#allocation3 + $0xb8] sm:$0xf]
      %v4612 = vld [vmem:[#allocation3 + $0xbc] sm:$0xf]
      %v4613 = vld [vmem:[#allocation3 + $0xc0] sm:$0xf]
      %v4614 = vld [vmem:[#allocation3 + $0xc4] sm:$0x1]
      %v4615 = vld [vmem:[#allocation3 + $0xc] sm:$0x8]
      %v4616 = vld [vmem:[#allocation3 + $0xc4] sm:$0xf]
      %v4617 = vld [vmem:[#allocation3 + $0xc8] sm:$0xf]
      %v4618 = vld [vmem:[#allocation3 + $0xcc] sm:$0xf]
      %v4619 = vld [vmem:[#allocation3 + $0xd0] sm:$0x1]
      %v4620 = vld [vmem:[#allocation3 + $0x18] sm:$0x8]
      %v4621 = vld [vmem:[#allocation3 + $0xd0] sm:$0xf]
      %v4622 = vld [vmem:[#allocation3 + $0xd4] sm:$0xf]
      %v4623 = vld [vmem:[#allocation3 + $0xd8] sm:$0xf]
      %v4624 = vld [vmem:[#allocation3 + $0xdc] sm:$0x1]
      %v4674 = vunpack.c.l.b16 %v4565
      %v4675 = vunpack.c.l.b16 %v4566
      %v4676 = vunpack.c.l.b16 %v4567
      %v4677 = vunpack.c.l.b16 %v4568
      %v4678 = vunpack.c.l.b16 %v4569
      %v4679 = vunpack.c.l.b16 %v4570
      %v4680 = vunpack.c.l.b16 %v4571
      %v4681 = vunpack.c.l.b16 %v4572
      %v4682 = vunpack.c.l.b16 %v4573
      %v4683 = vunpack.c.l.b16 %v4574
      %v4684 = vunpack.c.l.b16 %v4575
      %v4685 = vunpack.c.l.b16 %v4576
      %v4686 = vunpack.c.l.b16 %v4577
      %v4687 = vunpack.c.l.b16 %v4578
      %v4688 = vunpack.c.l.b16 %v4579
      %v4689 = vunpack.c.l.b16 %v4580
      %v4690 = vunpack.c.l.b16 %v4581
      %v4691 = vunpack.c.l.b16 %v4582
      %v4692 = vunpack.c.l.b16 %v4583
      %v4693 = vunpack.c.l.b16 %v4584
      %v4694 = vunpack.c.l.b16 %v4585
      %v4695 = vunpack.c.l.b16 %v4586
      %v4696 = vunpack.c.l.b16 %v4587
      %v4697 = vunpack.c.l.b16 %v4588
      %v4698 = vunpack.c.l.b16 %v4589
      %v4699 = vunpack.c.l.b16 %v4590
      %v4700 = vunpack.c.l.b16 %v4591
      %v4701 = vunpack.c.l.b16 %v4592
      %v4702 = vunpack.c.l.b16 %v4593
      %v4703 = vunpack.c.l.b16 %v4594
      %v4704 = vunpack.c.l.b16 %v4595
      %v4705 = vunpack.c.l.b16 %v4596
      %v4706 = vunpack.c.l.b16 %v4597
      %v4707 = vunpack.c.l.b16 %v4598
      %v4708 = vunpack.c.l.b16 %v4599
      %v4709 = vunpack.c.l.b16 %v4600
      %v4710 = vunpack.c.l.b16 %v4601
      %v4711 = vunpack.c.l.b16 %v4602
      %v4712 = vunpack.c.l.b16 %v4603
      %v4713 = vunpack.c.l.b16 %v4604
      %v4714 = vunpack.c.l.b16 %v4605
      %v4715 = vunpack.c.l.b16 %v4606
      %v4716 = vunpack.c.l.b16 %v4607
      %v4717 = vunpack.c.l.b16 %v4608
      %v4718 = vunpack.c.l.b16 %v4609
      %v4719 = vunpack.c.l.b16 %v4610
      %v4720 = vunpack.c.l.b16 %v4611
      %v4721 = vunpack.c.l.b16 %v4612
      %v4722 = vunpack.c.l.b16 %v4613
      %v4723 = vpack.c.b16 %v4675, %v4674
      %v4724 = vpack.c.b16 %v4677, %v4676
      %v4725 = vpack.c.b16 %v4679, %v4678
      %v4726 = vpack.c.b16 %v4681, %v4680
      %v4727 = vpack.c.b16 %v4683, %v4682
      %v4728 = vpack.c.b16 %v4685, %v4684
      %v4729 = vpack.c.b16 %v4687, %v4686
      %v4730 = vpack.c.b16 %v4689, %v4688
      %v4731 = vpack.c.b16 %v4691, %v4690
      %v4732 = vpack.c.b16 %v4693, %v4692
      %v4733 = vpack.c.b16 %v4695, %v4694
      %v4734 = vpack.c.b16 %v4697, %v4696
      %v4735 = vpack.c.b16 %v4699, %v4698
      %v4736 = vpack.c.b16 %v4701, %v4700
      %v4737 = vpack.c.b16 %v4703, %v4702
      %v4738 = vpack.c.b16 %v4705, %v4704
      %v4739 = vpack.c.b16 %v4707, %v4706
      %v4740 = vpack.c.b16 %v4709, %v4708
      %v4741 = vpack.c.b16 %v4711, %v4710
      %v4742 = vpack.c.b16 %v4713, %v4712
      %v4743 = vpack.c.b16 %v4715, %v4714
      %v4744 = vpack.c.b16 %v4717, %v4716
      %v4745 = vpack.c.b16 %v4719, %v4718
      %v4746 = vpack.c.b16 %v4721, %v4720
      %v4747 = vpack.c.b16 %v4722, %v4722
      %v4748 = vpack.c.b16 %v4676, %v4675
      %v4749 = vpack.c.b16 %v4678, %v4677
      %v4750 = vpack.c.b16 %v4680, %v4679
      %v4751 = vpack.c.b16 %v4682, %v4681
      %v4752 = vpack.c.b16 %v4684, %v4683
      %v4753 = vpack.c.b16 %v4686, %v4685
      %v4754 = vpack.c.b16 %v4688, %v4687
      %v4755 = vpack.c.b16 %v4690, %v4689
      %v4756 = vpack.c.b16 %v4692, %v4691
      %v4757 = vpack.c.b16 %v4694, %v4693
      %v4758 = vpack.c.b16 %v4696, %v4695
      %v4759 = vpack.c.b16 %v4698, %v4697
      %v4760 = vpack.c.b16 %v4700, %v4699
      %v4761 = vpack.c.b16 %v4702, %v4701
      %v4762 = vpack.c.b16 %v4704, %v4703
      %v4763 = vpack.c.b16 %v4706, %v4705
      %v4764 = vpack.c.b16 %v4708, %v4707
      %v4765 = vpack.c.b16 %v4710, %v4709
      %v4766 = vpack.c.b16 %v4712, %v4711
      %v4767 = vpack.c.b16 %v4714, %v4713
      %v4768 = vpack.c.b16 %v4716, %v4715
      %v4769 = vpack.c.b16 %v4718, %v4717
      %v4770 = vpack.c.b16 %v4720, %v4719
      %v4771 = vpack.c.b16 %v4722, %v4721
      %v4773 = vshrl.u32 %v4748, 16
      %v4775 = vrot.slane %v4773, 4
      %v4776 = vshll.u32 %v4748, 16
      %v4778 = vrot.slane %v4776, 5
      %v4779 = vor.u32 %v4775, %v4778
      %v4781 = vshrl.u32 %v4749, 16
      %v4783 = vrot.slane %v4781, 4
      %v4784 = vshll.u32 %v4749, 16
      %v4786 = vrot.slane %v4784, 5
      %v4787 = vor.u32 %v4783, %v4786
      %v4788 = vsel %vm2354, %v4779, %v4787
      %v4790 = vshrl.u32 %v4750, 16
      %v4792 = vrot.slane %v4790, 4
      %v4793 = vshll.u32 %v4750, 16
      %v4795 = vrot.slane %v4793, 5
      %v4796 = vor.u32 %v4792, %v4795
      %v4797 = vsel %vm2354, %v4787, %v4796
      %v4799 = vshrl.u32 %v4751, 16
      %v4801 = vrot.slane %v4799, 4
      %v4802 = vshll.u32 %v4751, 16
      %v4804 = vrot.slane %v4802, 5
      %v4805 = vor.u32 %v4801, %v4804
      %v4806 = vsel %vm2354, %v4796, %v4805
      %v4808 = vshrl.u32 %v4752, 16
      %v4810 = vrot.slane %v4808, 4
      %v4811 = vshll.u32 %v4752, 16
      %v4813 = vrot.slane %v4811, 5
      %v4814 = vor.u32 %v4810, %v4813
      %v4815 = vsel %vm2354, %v4805, %v4814
      %v4817 = vshrl.u32 %v4753, 16
      %v4819 = vrot.slane %v4817, 4
      %v4820 = vshll.u32 %v4753, 16
      %v4822 = vrot.slane %v4820, 5
      %v4823 = vor.u32 %v4819, %v4822
      %v4824 = vsel %vm2354, %v4814, %v4823
      %v4826 = vshrl.u32 %v4754, 16
      %v4828 = vrot.slane %v4826, 4
      %v4829 = vshll.u32 %v4754, 16
      %v4831 = vrot.slane %v4829, 5
      %v4832 = vor.u32 %v4828, %v4831
      %v4833 = vsel %vm2354, %v4823, %v4832
      %v4835 = vshrl.u32 %v4755, 16
      %v4837 = vrot.slane %v4835, 4
      %v4838 = vshll.u32 %v4755, 16
      %v4840 = vrot.slane %v4838, 5
      %v4841 = vor.u32 %v4837, %v4840
      %v4842 = vsel %vm2354, %v4832, %v4841
      %v4844 = vshrl.u32 %v4756, 16
      %v4846 = vrot.slane %v4844, 4
      %v4847 = vshll.u32 %v4756, 16
      %v4849 = vrot.slane %v4847, 5
      %v4850 = vor.u32 %v4846, %v4849
      %v4851 = vsel %vm2354, %v4841, %v4850
      %v4853 = vshrl.u32 %v4757, 16
      %v4855 = vrot.slane %v4853, 4
      %v4856 = vshll.u32 %v4757, 16
      %v4858 = vrot.slane %v4856, 5
      %v4859 = vor.u32 %v4855, %v4858
      %v4860 = vsel %vm2354, %v4850, %v4859
      %v4862 = vshrl.u32 %v4758, 16
      %v4864 = vrot.slane %v4862, 4
      %v4865 = vshll.u32 %v4758, 16
      %v4867 = vrot.slane %v4865, 5
      %v4868 = vor.u32 %v4864, %v4867
      %v4869 = vsel %vm2354, %v4859, %v4868
      %v4871 = vshrl.u32 %v4759, 16
      %v4873 = vrot.slane %v4871, 4
      %v4874 = vshll.u32 %v4759, 16
      %v4876 = vrot.slane %v4874, 5
      %v4877 = vor.u32 %v4873, %v4876
      %v4878 = vsel %vm2354, %v4868, %v4877
      %v4880 = vshrl.u32 %v4760, 16
      %v4882 = vrot.slane %v4880, 4
      %v4883 = vshll.u32 %v4760, 16
      %v4885 = vrot.slane %v4883, 5
      %v4886 = vor.u32 %v4882, %v4885
      %v4887 = vsel %vm2354, %v4877, %v4886
      %v4889 = vshrl.u32 %v4761, 16
      %v4891 = vrot.slane %v4889, 4
      %v4892 = vshll.u32 %v4761, 16
      %v4894 = vrot.slane %v4892, 5
      %v4895 = vor.u32 %v4891, %v4894
      %v4896 = vsel %vm2354, %v4886, %v4895
      %v4898 = vshrl.u32 %v4762, 16
      %v4900 = vrot.slane %v4898, 4
      %v4901 = vshll.u32 %v4762, 16
      %v4903 = vrot.slane %v4901, 5
      %v4904 = vor.u32 %v4900, %v4903
      %v4905 = vsel %vm2354, %v4895, %v4904
      %v4907 = vshrl.u32 %v4763, 16
      %v4909 = vrot.slane %v4907, 4
      %v4910 = vshll.u32 %v4763, 16
      %v4912 = vrot.slane %v4910, 5
      %v4913 = vor.u32 %v4909, %v4912
      %v4914 = vsel %vm2354, %v4904, %v4913
      %v4916 = vshrl.u32 %v4764, 16
      %v4918 = vrot.slane %v4916, 4
      %v4919 = vshll.u32 %v4764, 16
      %v4921 = vrot.slane %v4919, 5
      %v4922 = vor.u32 %v4918, %v4921
      %v4923 = vsel %vm2354, %v4913, %v4922
      %v4925 = vshrl.u32 %v4765, 16
      %v4927 = vrot.slane %v4925, 4
      %v4928 = vshll.u32 %v4765, 16
      %v4930 = vrot.slane %v4928, 5
      %v4931 = vor.u32 %v4927, %v4930
      %v4932 = vsel %vm2354, %v4922, %v4931
      %v4934 = vshrl.u32 %v4766, 16
      %v4936 = vrot.slane %v4934, 4
      %v4937 = vshll.u32 %v4766, 16
      %v4939 = vrot.slane %v4937, 5
      %v4940 = vor.u32 %v4936, %v4939
      %v4941 = vsel %vm2354, %v4931, %v4940
      %v4943 = vshrl.u32 %v4767, 16
      %v4945 = vrot.slane %v4943, 4
      %v4946 = vshll.u32 %v4767, 16
      %v4948 = vrot.slane %v4946, 5
      %v4949 = vor.u32 %v4945, %v4948
      %v4950 = vsel %vm2354, %v4940, %v4949
      %v4952 = vshrl.u32 %v4768, 16
      %v4954 = vrot.slane %v4952, 4
      %v4955 = vshll.u32 %v4768, 16
      %v4957 = vrot.slane %v4955, 5
      %v4958 = vor.u32 %v4954, %v4957
      %v4959 = vsel %vm2354, %v4949, %v4958
      %v4961 = vshrl.u32 %v4769, 16
      %v4963 = vrot.slane %v4961, 4
      %v4964 = vshll.u32 %v4769, 16
      %v4966 = vrot.slane %v4964, 5
      %v4967 = vor.u32 %v4963, %v4966
      %v4968 = vsel %vm2354, %v4958, %v4967
      %v4970 = vshrl.u32 %v4770, 16
      %v4972 = vrot.slane %v4970, 4
      %v4973 = vshll.u32 %v4770, 16
      %v4975 = vrot.slane %v4973, 5
      %v4976 = vor.u32 %v4972, %v4975
      %v4977 = vsel %vm2354, %v4967, %v4976
      %v4979 = vshrl.u32 %v4771, 16
      %v4981 = vrot.slane %v4979, 4
      %v4982 = vshll.u32 %v4771, 16
      %v4984 = vrot.slane %v4982, 5
      %v4985 = vor.u32 %v4981, %v4984
      %v4986 = vsel %vm2354, %v4976, %v4985
      %4987 = vrot.lane.b32.xlu0 %v4779, 8
      %v4988 = vpop.permute.xlu0 %4987
      %4989 = vrot.lane.b32.xlu0 %v4788, 8
      %v4990 = vpop.permute.xlu0 %4989
      %4991 = vrot.lane.b32.xlu0 %v4797, 8
      %v4992 = vpop.permute.xlu0 %4991
      %4993 = vrot.lane.b32.xlu0 %v4806, 8
      %v4994 = vpop.permute.xlu0 %4993
      %4995 = vrot.lane.b32.xlu0 %v4815, 8
      %v4996 = vpop.permute.xlu0 %4995
      %4997 = vrot.lane.b32.xlu0 %v4824, 8
      %v4998 = vpop.permute.xlu0 %4997
      %4999 = vrot.lane.b32.xlu0 %v4833, 8
      %v5000 = vpop.permute.xlu0 %4999
      %5001 = vrot.lane.b32.xlu0 %v4842, 8
      %v5002 = vpop.permute.xlu0 %5001
      %5003 = vrot.lane.b32.xlu0 %v4851, 8
      %v5004 = vpop.permute.xlu0 %5003
      %5005 = vrot.lane.b32.xlu0 %v4860, 8
      %v5006 = vpop.permute.xlu0 %5005
      %5007 = vrot.lane.b32.xlu0 %v4869, 8
      %v5008 = vpop.permute.xlu0 %5007
      %5009 = vrot.lane.b32.xlu0 %v4878, 8
      %v5010 = vpop.permute.xlu0 %5009
      %5011 = vrot.lane.b32.xlu0 %v4887, 8
      %v5012 = vpop.permute.xlu0 %5011
      %5013 = vrot.lane.b32.xlu0 %v4896, 8
      %v5014 = vpop.permute.xlu0 %5013
      %5015 = vrot.lane.b32.xlu0 %v4905, 8
      %v5016 = vpop.permute.xlu0 %5015
      %5017 = vrot.lane.b32.xlu0 %v4914, 8
      %v5018 = vpop.permute.xlu0 %5017
      %5019 = vrot.lane.b32.xlu0 %v4923, 8
      %v5020 = vpop.permute.xlu0 %5019
      %5021 = vrot.lane.b32.xlu0 %v4932, 8
      %v5022 = vpop.permute.xlu0 %5021
      %5023 = vrot.lane.b32.xlu0 %v4941, 8
      %v5024 = vpop.permute.xlu0 %5023
      %5025 = vrot.lane.b32.xlu0 %v4950, 8
      %v5026 = vpop.permute.xlu0 %5025
      %5027 = vrot.lane.b32.xlu0 %v4959, 8
      %v5028 = vpop.permute.xlu0 %5027
      %5029 = vrot.lane.b32.xlu0 %v4968, 8
      %v5030 = vpop.permute.xlu0 %5029
      %5031 = vrot.lane.b32.xlu0 %v4977, 8
      %v5032 = vpop.permute.xlu0 %5031
      %5033 = vrot.lane.b32.xlu0 %v4986, 8
      %v5034 = vpop.permute.xlu0 %5033
      %5035 = vrot.lane.b32.xlu0 %v4985, 8
      %v5036 = vpop.permute.xlu0 %5035
      %v5038 = vunpack.c.l.b16 %v4614
      %v5039 = vpack.c.b16 %v5038, %v5038
      %v5040 = vrot.slane %v4748, 5
      %v5041 = vrot.slane %v4749, 5
      %v5042 = vsel %vm2623, %v5040, %v5041
      %v5043 = vrot.slane %v4750, 5
      %v5044 = vsel %vm2623, %v5041, %v5043
      %v5045 = vrot.slane %v4751, 5
      %v5046 = vsel %vm2623, %v5043, %v5045
      %v5047 = vrot.slane %v4752, 5
      %v5048 = vsel %vm2623, %v5045, %v5047
      %v5049 = vrot.slane %v4753, 5
      %v5050 = vsel %vm2623, %v5047, %v5049
      %v5051 = vrot.slane %v4754, 5
      %v5052 = vsel %vm2623, %v5049, %v5051
      %v5053 = vrot.slane %v4755, 5
      %v5054 = vsel %vm2623, %v5051, %v5053
      %v5055 = vrot.slane %v4756, 5
      %v5056 = vsel %vm2623, %v5053, %v5055
      %v5057 = vrot.slane %v4757, 5
      %v5058 = vsel %vm2623, %v5055, %v5057
      %v5059 = vrot.slane %v4758, 5
      %v5060 = vsel %vm2623, %v5057, %v5059
      %v5061 = vrot.slane %v4759, 5
      %v5062 = vsel %vm2623, %v5059, %v5061
      %v5063 = vrot.slane %v4760, 5
      %v5064 = vsel %vm2623, %v5061, %v5063
      %v5065 = vrot.slane %v4761, 5
      %v5066 = vsel %vm2623, %v5063, %v5065
      %v5067 = vrot.slane %v4762, 5
      %v5068 = vsel %vm2623, %v5065, %v5067
      %v5069 = vrot.slane %v4763, 5
      %v5070 = vsel %vm2623, %v5067, %v5069
      %v5071 = vrot.slane %v4764, 5
      %v5072 = vsel %vm2623, %v5069, %v5071
      %v5073 = vrot.slane %v4765, 5
      %v5074 = vsel %vm2623, %v5071, %v5073
      %v5075 = vrot.slane %v4766, 5
      %v5076 = vsel %vm2623, %v5073, %v5075
      %v5077 = vrot.slane %v4767, 5
      %v5078 = vsel %vm2623, %v5075, %v5077
      %v5079 = vrot.slane %v4768, 5
      %v5080 = vsel %vm2623, %v5077, %v5079
      %v5081 = vrot.slane %v4769, 5
      %v5082 = vsel %vm2623, %v5079, %v5081
      %v5083 = vrot.slane %v4770, 5
      %v5084 = vsel %vm2623, %v5081, %v5083
      %v5085 = vrot.slane %v4771, 5
      %v5086 = vsel %vm2623, %v5083, %v5085
      %v5087 = vrot.slane %v5039, 5
      %v5088 = vsel %vm2623, %v5085, %v5087
      %5089 = vrot.lane.b32.xlu0 %v5040, 16
      %v5090 = vpop.permute.xlu0 %5089
      %5091 = vrot.lane.b32.xlu0 %v5042, 16
      %v5092 = vpop.permute.xlu0 %5091
      %5093 = vrot.lane.b32.xlu0 %v5044, 16
      %v5094 = vpop.permute.xlu0 %5093
      %5095 = vrot.lane.b32.xlu0 %v5046, 16
      %v5096 = vpop.permute.xlu0 %5095
      %5097 = vrot.lane.b32.xlu0 %v5048, 16
      %v5098 = vpop.permute.xlu0 %5097
      %5099 = vrot.lane.b32.xlu0 %v5050, 16
      %v5100 = vpop.permute.xlu0 %5099
      %5101 = vrot.lane.b32.xlu0 %v5052, 16
      %v5102 = vpop.permute.xlu0 %5101
      %5103 = vrot.lane.b32.xlu0 %v5054, 16
      %v5104 = vpop.permute.xlu0 %5103
      %5105 = vrot.lane.b32.xlu0 %v5056, 16
      %v5106 = vpop.permute.xlu0 %5105
      %5107 = vrot.lane.b32.xlu0 %v5058, 16
      %v5108 = vpop.permute.xlu0 %5107
      %5109 = vrot.lane.b32.xlu0 %v5060, 16
      %v5110 = vpop.permute.xlu0 %5109
      %5111 = vrot.lane.b32.xlu0 %v5062, 16
      %v5112 = vpop.permute.xlu0 %5111
      %5113 = vrot.lane.b32.xlu0 %v5064, 16
      %v5114 = vpop.permute.xlu0 %5113
      %5115 = vrot.lane.b32.xlu0 %v5066, 16
      %v5116 = vpop.permute.xlu0 %5115
      %5117 = vrot.lane.b32.xlu0 %v5068, 16
      %v5118 = vpop.permute.xlu0 %5117
      %5119 = vrot.lane.b32.xlu0 %v5070, 16
      %v5120 = vpop.permute.xlu0 %5119
      %5121 = vrot.lane.b32.xlu0 %v5072, 16
      %v5122 = vpop.permute.xlu0 %5121
      %5123 = vrot.lane.b32.xlu0 %v5074, 16
      %v5124 = vpop.permute.xlu0 %5123
      %5125 = vrot.lane.b32.xlu0 %v5076, 16
      %v5126 = vpop.permute.xlu0 %5125
      %5127 = vrot.lane.b32.xlu0 %v5078, 16
      %v5128 = vpop.permute.xlu0 %5127
      %5129 = vrot.lane.b32.xlu0 %v5080, 16
      %v5130 = vpop.permute.xlu0 %5129
      %5131 = vrot.lane.b32.xlu0 %v5082, 16
      %v5132 = vpop.permute.xlu0 %5131
      %5133 = vrot.lane.b32.xlu0 %v5084, 16
      %v5134 = vpop.permute.xlu0 %5133
      %5135 = vrot.lane.b32.xlu0 %v5086, 16
      %v5136 = vpop.permute.xlu0 %5135
      %5137 = vrot.lane.b32.xlu0 %v5088, 16
      %v5138 = vpop.permute.xlu0 %5137
      %v5143 = vunpack.c.l.b16 %v4615
      %v5144 = vunpack.c.l.b16 %v4616
      %v5145 = vunpack.c.l.b16 %v4617
      %v5146 = vunpack.c.l.b16 %v4618
      %v5147 = vpack.c.b16 %v4678, %v5143
      %v5148 = vpack.c.b16 %v5145, %v5144
      %v5149 = vpack.c.b16 %v5146, %v5146
      %5150 = vrot.lane.b32.xlu0 %v5147, 24
      %v5151 = vpop.permute.xlu0 %5150
      %5152 = vrot.lane.b32.xlu0 %v4750, 24
      %v5153 = vpop.permute.xlu0 %5152
      %5154 = vrot.lane.b32.xlu0 %v4751, 24
      %v5155 = vpop.permute.xlu0 %5154
      %5156 = vrot.lane.b32.xlu0 %v4752, 24
      %v5157 = vpop.permute.xlu0 %5156
      %5158 = vrot.lane.b32.xlu0 %v4753, 24
      %v5159 = vpop.permute.xlu0 %5158
      %5160 = vrot.lane.b32.xlu0 %v4754, 24
      %v5161 = vpop.permute.xlu0 %5160
      %5162 = vrot.lane.b32.xlu0 %v4755, 24
      %v5163 = vpop.permute.xlu0 %5162
      %5164 = vrot.lane.b32.xlu0 %v4756, 24
      %v5165 = vpop.permute.xlu0 %5164
      %5166 = vrot.lane.b32.xlu0 %v4757, 24
      %v5167 = vpop.permute.xlu0 %5166
      %5168 = vrot.lane.b32.xlu0 %v4758, 24
      %v5169 = vpop.permute.xlu0 %5168
      %5170 = vrot.lane.b32.xlu0 %v4759, 24
      %v5171 = vpop.permute.xlu0 %5170
      %5172 = vrot.lane.b32.xlu0 %v4760, 24
      %v5173 = vpop.permute.xlu0 %5172
      %5174 = vrot.lane.b32.xlu0 %v4761, 24
      %v5175 = vpop.permute.xlu0 %5174
      %5176 = vrot.lane.b32.xlu0 %v4762, 24
      %v5177 = vpop.permute.xlu0 %5176
      %5178 = vrot.lane.b32.xlu0 %v4763, 24
      %v5179 = vpop.permute.xlu0 %5178
      %5180 = vrot.lane.b32.xlu0 %v4764, 24
      %v5181 = vpop.permute.xlu0 %5180
      %5182 = vrot.lane.b32.xlu0 %v4765, 24
      %v5183 = vpop.permute.xlu0 %5182
      %5184 = vrot.lane.b32.xlu0 %v4766, 24
      %v5185 = vpop.permute.xlu0 %5184
      %5186 = vrot.lane.b32.xlu0 %v4767, 24
      %v5187 = vpop.permute.xlu0 %5186
      %5188 = vrot.lane.b32.xlu0 %v4768, 24
      %v5189 = vpop.permute.xlu0 %5188
      %5190 = vrot.lane.b32.xlu0 %v4769, 24
      %v5191 = vpop.permute.xlu0 %5190
      %5192 = vrot.lane.b32.xlu0 %v4770, 24
      %v5193 = vpop.permute.xlu0 %5192
      %5194 = vrot.lane.b32.xlu0 %v4771, 24
      %v5195 = vpop.permute.xlu0 %5194
      %5196 = vrot.lane.b32.xlu0 %v5148, 24
      %v5197 = vpop.permute.xlu0 %5196
      %5198 = vrot.lane.b32.xlu0 %v5149, 24
      %v5199 = vpop.permute.xlu0 %5198
      %v5200 = vpack.c.b16 %v5144, %v4722
      %v5201 = vpack.c.b16 %v5146, %v5145
      %v5203 = vshrl.u32 %v4725, 16
      %v5205 = vrot.slane %v5203, 4
      %v5206 = vshll.u32 %v4725, 16
      %v5208 = vrot.slane %v5206, 5
      %v5209 = vor.u32 %v5205, %v5208
      %v5211 = vshrl.u32 %v4726, 16
      %v5213 = vrot.slane %v5211, 4
      %v5214 = vshll.u32 %v4726, 16
      %v5216 = vrot.slane %v5214, 5
      %v5217 = vor.u32 %v5213, %v5216
      %v5218 = vsel %vm2354, %v5209, %v5217
      %v5220 = vshrl.u32 %v4727, 16
      %v5222 = vrot.slane %v5220, 4
      %v5223 = vshll.u32 %v4727, 16
      %v5225 = vrot.slane %v5223, 5
      %v5226 = vor.u32 %v5222, %v5225
      %v5227 = vsel %vm2354, %v5217, %v5226
      %v5229 = vshrl.u32 %v4728, 16
      %v5231 = vrot.slane %v5229, 4
      %v5232 = vshll.u32 %v4728, 16
      %v5234 = vrot.slane %v5232, 5
      %v5235 = vor.u32 %v5231, %v5234
      %v5236 = vsel %vm2354, %v5226, %v5235
      %v5238 = vshrl.u32 %v4729, 16
      %v5240 = vrot.slane %v5238, 4
      %v5241 = vshll.u32 %v4729, 16
      %v5243 = vrot.slane %v5241, 5
      %v5244 = vor.u32 %v5240, %v5243
      %v5245 = vsel %vm2354, %v5235, %v5244
      %v5247 = vshrl.u32 %v4730, 16
      %v5249 = vrot.slane %v5247, 4
      %v5250 = vshll.u32 %v4730, 16
      %v5252 = vrot.slane %v5250, 5
      %v5253 = vor.u32 %v5249, %v5252
      %v5254 = vsel %vm2354, %v5244, %v5253
      %v5256 = vshrl.u32 %v4731, 16
      %v5258 = vrot.slane %v5256, 4
      %v5259 = vshll.u32 %v4731, 16
      %v5261 = vrot.slane %v5259, 5
      %v5262 = vor.u32 %v5258, %v5261
      %v5263 = vsel %vm2354, %v5253, %v5262
      %v5265 = vshrl.u32 %v4732, 16
      %v5267 = vrot.slane %v5265, 4
      %v5268 = vshll.u32 %v4732, 16
      %v5270 = vrot.slane %v5268, 5
      %v5271 = vor.u32 %v5267, %v5270
      %v5272 = vsel %vm2354, %v5262, %v5271
      %v5274 = vshrl.u32 %v4733, 16
      %v5276 = vrot.slane %v5274, 4
      %v5277 = vshll.u32 %v4733, 16
      %v5279 = vrot.slane %v5277, 5
      %v5280 = vor.u32 %v5276, %v5279
      %v5281 = vsel %vm2354, %v5271, %v5280
      %v5283 = vshrl.u32 %v4734, 16
      %v5285 = vrot.slane %v5283, 4
      %v5286 = vshll.u32 %v4734, 16
      %v5288 = vrot.slane %v5286, 5
      %v5289 = vor.u32 %v5285, %v5288
      %v5290 = vsel %vm2354, %v5280, %v5289
      %v5292 = vshrl.u32 %v4735, 16
      %v5294 = vrot.slane %v5292, 4
      %v5295 = vshll.u32 %v4735, 16
      %v5297 = vrot.slane %v5295, 5
      %v5298 = vor.u32 %v5294, %v5297
      %v5299 = vsel %vm2354, %v5289, %v5298
      %v5301 = vshrl.u32 %v4736, 16
      %v5303 = vrot.slane %v5301, 4
      %v5304 = vshll.u32 %v4736, 16
      %v5306 = vrot.slane %v5304, 5
      %v5307 = vor.u32 %v5303, %v5306
      %v5308 = vsel %vm2354, %v5298, %v5307
      %v5310 = vshrl.u32 %v4737, 16
      %v5312 = vrot.slane %v5310, 4
      %v5313 = vshll.u32 %v4737, 16
      %v5315 = vrot.slane %v5313, 5
      %v5316 = vor.u32 %v5312, %v5315
      %v5317 = vsel %vm2354, %v5307, %v5316
      %v5319 = vshrl.u32 %v4738, 16
      %v5321 = vrot.slane %v5319, 4
      %v5322 = vshll.u32 %v4738, 16
      %v5324 = vrot.slane %v5322, 5
      %v5325 = vor.u32 %v5321, %v5324
      %v5326 = vsel %vm2354, %v5316, %v5325
      %v5328 = vshrl.u32 %v4739, 16
      %v5330 = vrot.slane %v5328, 4
      %v5331 = vshll.u32 %v4739, 16
      %v5333 = vrot.slane %v5331, 5
      %v5334 = vor.u32 %v5330, %v5333
      %v5335 = vsel %vm2354, %v5325, %v5334
      %v5337 = vshrl.u32 %v4740, 16
      %v5339 = vrot.slane %v5337, 4
      %v5340 = vshll.u32 %v4740, 16
      %v5342 = vrot.slane %v5340, 5
      %v5343 = vor.u32 %v5339, %v5342
      %v5344 = vsel %vm2354, %v5334, %v5343
      %v5346 = vshrl.u32 %v4741, 16
      %v5348 = vrot.slane %v5346, 4
      %v5349 = vshll.u32 %v4741, 16
      %v5351 = vrot.slane %v5349, 5
      %v5352 = vor.u32 %v5348, %v5351
      %v5353 = vsel %vm2354, %v5343, %v5352
      %v5355 = vshrl.u32 %v4742, 16
      %v5357 = vrot.slane %v5355, 4
      %v5358 = vshll.u32 %v4742, 16
      %v5360 = vrot.slane %v5358, 5
      %v5361 = vor.u32 %v5357, %v5360
      %v5362 = vsel %vm2354, %v5352, %v5361
      %v5364 = vshrl.u32 %v4743, 16
      %v5366 = vrot.slane %v5364, 4
      %v5367 = vshll.u32 %v4743, 16
      %v5369 = vrot.slane %v5367, 5
      %v5370 = vor.u32 %v5366, %v5369
      %v5371 = vsel %vm2354, %v5361, %v5370
      %v5373 = vshrl.u32 %v4744, 16
      %v5375 = vrot.slane %v5373, 4
      %v5376 = vshll.u32 %v4744, 16
      %v5378 = vrot.slane %v5376, 5
      %v5379 = vor.u32 %v5375, %v5378
      %v5380 = vsel %vm2354, %v5370, %v5379
      %v5382 = vshrl.u32 %v4745, 16
      %v5384 = vrot.slane %v5382, 4
      %v5385 = vshll.u32 %v4745, 16
      %v5387 = vrot.slane %v5385, 5
      %v5388 = vor.u32 %v5384, %v5387
      %v5389 = vsel %vm2354, %v5379, %v5388
      %v5391 = vshrl.u32 %v4746, 16
      %v5393 = vrot.slane %v5391, 4
      %v5394 = vshll.u32 %v4746, 16
      %v5396 = vrot.slane %v5394, 5
      %v5397 = vor.u32 %v5393, %v5396
      %v5398 = vsel %vm2354, %v5388, %v5397
      %v5400 = vshrl.u32 %v5200, 16
      %v5402 = vrot.slane %v5400, 4
      %v5403 = vshll.u32 %v5200, 16
      %v5405 = vrot.slane %v5403, 5
      %v5406 = vor.u32 %v5402, %v5405
      %v5407 = vsel %vm2354, %v5397, %v5406
      %v5409 = vshrl.u32 %v5201, 16
      %v5411 = vrot.slane %v5409, 4
      %v5412 = vshll.u32 %v5201, 16
      %v5414 = vrot.slane %v5412, 5
      %v5415 = vor.u32 %v5411, %v5414
      %v5416 = vsel %vm2354, %v5406, %v5415
      %5417 = vrot.lane.b32.xlu0 %v5209, 32
      %v5418 = vpop.permute.xlu0 %5417
      %5419 = vrot.lane.b32.xlu0 %v5218, 32
      %v5420 = vpop.permute.xlu0 %5419
      %5421 = vrot.lane.b32.xlu0 %v5227, 32
      %v5422 = vpop.permute.xlu0 %5421
      %5423 = vrot.lane.b32.xlu0 %v5236, 32
      %v5424 = vpop.permute.xlu0 %5423
      %5425 = vrot.lane.b32.xlu0 %v5245, 32
      %v5426 = vpop.permute.xlu0 %5425
      %5427 = vrot.lane.b32.xlu0 %v5254, 32
      %v5428 = vpop.permute.xlu0 %5427
      %5429 = vrot.lane.b32.xlu0 %v5263, 32
      %v5430 = vpop.permute.xlu0 %5429
      %5431 = vrot.lane.b32.xlu0 %v5272, 32
      %v5432 = vpop.permute.xlu0 %5431
      %5433 = vrot.lane.b32.xlu0 %v5281, 32
      %v5434 = vpop.permute.xlu0 %5433
      %5435 = vrot.lane.b32.xlu0 %v5290, 32
      %v5436 = vpop.permute.xlu0 %5435
      %5437 = vrot.lane.b32.xlu0 %v5299, 32
      %v5438 = vpop.permute.xlu0 %5437
      %5439 = vrot.lane.b32.xlu0 %v5308, 32
      %v5440 = vpop.permute.xlu0 %5439
      %5441 = vrot.lane.b32.xlu0 %v5317, 32
      %v5442 = vpop.permute.xlu0 %5441
      %5443 = vrot.lane.b32.xlu0 %v5326, 32
      %v5444 = vpop.permute.xlu0 %5443
      %5445 = vrot.lane.b32.xlu0 %v5335, 32
      %v5446 = vpop.permute.xlu0 %5445
      %5447 = vrot.lane.b32.xlu0 %v5344, 32
      %v5448 = vpop.permute.xlu0 %5447
      %5449 = vrot.lane.b32.xlu0 %v5353, 32
      %v5450 = vpop.permute.xlu0 %5449
      %5451 = vrot.lane.b32.xlu0 %v5362, 32
      %v5452 = vpop.permute.xlu0 %5451
      %5453 = vrot.lane.b32.xlu0 %v5371, 32
      %v5454 = vpop.permute.xlu0 %5453
      %5455 = vrot.lane.b32.xlu0 %v5380, 32
      %v5456 = vpop.permute.xlu0 %5455
      %5457 = vrot.lane.b32.xlu0 %v5389, 32
      %v5458 = vpop.permute.xlu0 %5457
      %5459 = vrot.lane.b32.xlu0 %v5398, 32
      %v5460 = vpop.permute.xlu0 %5459
      %5461 = vrot.lane.b32.xlu0 %v5407, 32
      %v5462 = vpop.permute.xlu0 %5461
      %5463 = vrot.lane.b32.xlu0 %v5416, 32
      %v5464 = vpop.permute.xlu0 %5463
      %5465 = vrot.lane.b32.xlu0 %v5415, 32
      %v5466 = vpop.permute.xlu0 %5465
      %v5468 = vunpack.c.l.b16 %v4619
      %v5469 = vpack.c.b16 %v5468, %v5468
      %v5470 = vrot.slane %v4725, 5
      %v5471 = vrot.slane %v4726, 5
      %v5472 = vsel %vm2623, %v5470, %v5471
      %v5473 = vrot.slane %v4727, 5
      %v5474 = vsel %vm2623, %v5471, %v5473
      %v5475 = vrot.slane %v4728, 5
      %v5476 = vsel %vm2623, %v5473, %v5475
      %v5477 = vrot.slane %v4729, 5
      %v5478 = vsel %vm2623, %v5475, %v5477
      %v5479 = vrot.slane %v4730, 5
      %v5480 = vsel %vm2623, %v5477, %v5479
      %v5481 = vrot.slane %v4731, 5
      %v5482 = vsel %vm2623, %v5479, %v5481
      %v5483 = vrot.slane %v4732, 5
      %v5484 = vsel %vm2623, %v5481, %v5483
      %v5485 = vrot.slane %v4733, 5
      %v5486 = vsel %vm2623, %v5483, %v5485
      %v5487 = vrot.slane %v4734, 5
      %v5488 = vsel %vm2623, %v5485, %v5487
      %v5489 = vrot.slane %v4735, 5
      %v5490 = vsel %vm2623, %v5487, %v5489
      %v5491 = vrot.slane %v4736, 5
      %v5492 = vsel %vm2623, %v5489, %v5491
      %v5493 = vrot.slane %v4737, 5
      %v5494 = vsel %vm2623, %v5491, %v5493
      %v5495 = vrot.slane %v4738, 5
      %v5496 = vsel %vm2623, %v5493, %v5495
      %v5497 = vrot.slane %v4739, 5
      %v5498 = vsel %vm2623, %v5495, %v5497
      %v5499 = vrot.slane %v4740, 5
      %v5500 = vsel %vm2623, %v5497, %v5499
      %v5501 = vrot.slane %v4741, 5
      %v5502 = vsel %vm2623, %v5499, %v5501
      %v5503 = vrot.slane %v4742, 5
      %v5504 = vsel %vm2623, %v5501, %v5503
      %v5505 = vrot.slane %v4743, 5
      %v5506 = vsel %vm2623, %v5503, %v5505
      %v5507 = vrot.slane %v4744, 5
      %v5508 = vsel %vm2623, %v5505, %v5507
      %v5509 = vrot.slane %v4745, 5
      %v5510 = vsel %vm2623, %v5507, %v5509
      %v5511 = vrot.slane %v4746, 5
      %v5512 = vsel %vm2623, %v5509, %v5511
      %v5513 = vrot.slane %v5200, 5
      %v5514 = vsel %vm2623, %v5511, %v5513
      %v5515 = vrot.slane %v5201, 5
      %v5516 = vsel %vm2623, %v5513, %v5515
      %v5517 = vrot.slane %v5469, 5
      %v5518 = vsel %vm2623, %v5515, %v5517
      %5519 = vrot.lane.b32.xlu0 %v5470, 40
      %v5520 = vpop.permute.xlu0 %5519
      %5521 = vrot.lane.b32.xlu0 %v5472, 40
      %v5522 = vpop.permute.xlu0 %5521
      %5523 = vrot.lane.b32.xlu0 %v5474, 40
      %v5524 = vpop.permute.xlu0 %5523
      %5525 = vrot.lane.b32.xlu0 %v5476, 40
      %v5526 = vpop.permute.xlu0 %5525
      %5527 = vrot.lane.b32.xlu0 %v5478, 40
      %v5528 = vpop.permute.xlu0 %5527
      %5529 = vrot.lane.b32.xlu0 %v5480, 40
      %v5530 = vpop.permute.xlu0 %5529
      %5531 = vrot.lane.b32.xlu0 %v5482, 40
      %v5532 = vpop.permute.xlu0 %5531
      %5533 = vrot.lane.b32.xlu0 %v5484, 40
      %v5534 = vpop.permute.xlu0 %5533
      %5535 = vrot.lane.b32.xlu0 %v5486, 40
      %v5536 = vpop.permute.xlu0 %5535
      %5537 = vrot.lane.b32.xlu0 %v5488, 40
      %v5538 = vpop.permute.xlu0 %5537
      %5539 = vrot.lane.b32.xlu0 %v5490, 40
      %v5540 = vpop.permute.xlu0 %5539
      %5541 = vrot.lane.b32.xlu0 %v5492, 40
      %v5542 = vpop.permute.xlu0 %5541
      %5543 = vrot.lane.b32.xlu0 %v5494, 40
      %v5544 = vpop.permute.xlu0 %5543
      %5545 = vrot.lane.b32.xlu0 %v5496, 40
      %v5546 = vpop.permute.xlu0 %5545
      %5547 = vrot.lane.b32.xlu0 %v5498, 40
      %v5548 = vpop.permute.xlu0 %5547
      %5549 = vrot.lane.b32.xlu0 %v5500, 40
      %v5550 = vpop.permute.xlu0 %5549
      %5551 = vrot.lane.b32.xlu0 %v5502, 40
      %v5552 = vpop.permute.xlu0 %5551
      %5553 = vrot.lane.b32.xlu0 %v5504, 40
      %v5554 = vpop.permute.xlu0 %5553
      %5555 = vrot.lane.b32.xlu0 %v5506, 40
      %v5556 = vpop.permute.xlu0 %5555
      %5557 = vrot.lane.b32.xlu0 %v5508, 40
      %v5558 = vpop.permute.xlu0 %5557
      %5559 = vrot.lane.b32.xlu0 %v5510, 40
      %v5560 = vpop.permute.xlu0 %5559
      %5561 = vrot.lane.b32.xlu0 %v5512, 40
      %v5562 = vpop.permute.xlu0 %5561
      %5563 = vrot.lane.b32.xlu0 %v5514, 40
      %v5564 = vpop.permute.xlu0 %5563
      %5565 = vrot.lane.b32.xlu0 %v5516, 40
      %v5566 = vpop.permute.xlu0 %5565
      %5567 = vrot.lane.b32.xlu0 %v5518, 40
      %v5568 = vpop.permute.xlu0 %5567
      %v5573 = vunpack.c.l.b16 %v4620
      %v5574 = vunpack.c.l.b16 %v4621
      %v5575 = vunpack.c.l.b16 %v4622
      %v5576 = vunpack.c.l.b16 %v4623
      %v5577 = vpack.c.b16 %v4681, %v5573
      %v5578 = vpack.c.b16 %v5575, %v5574
      %v5579 = vpack.c.b16 %v5576, %v5576
      %5580 = vrot.lane.b32.xlu0 %v5577, 48
      %v5581 = vpop.permute.xlu0 %5580
      %5582 = vrot.lane.b32.xlu0 %v4727, 48
      %v5583 = vpop.permute.xlu0 %5582
      %5584 = vrot.lane.b32.xlu0 %v4728, 48
      %v5585 = vpop.permute.xlu0 %5584
      %5586 = vrot.lane.b32.xlu0 %v4729, 48
      %v5587 = vpop.permute.xlu0 %5586
      %5588 = vrot.lane.b32.xlu0 %v4730, 48
      %v5589 = vpop.permute.xlu0 %5588
      %5590 = vrot.lane.b32.xlu0 %v4731, 48
      %v5591 = vpop.permute.xlu0 %5590
      %5592 = vrot.lane.b32.xlu0 %v4732, 48
      %v5593 = vpop.permute.xlu0 %5592
      %5594 = vrot.lane.b32.xlu0 %v4733, 48
      %v5595 = vpop.permute.xlu0 %5594
      %5596 = vrot.lane.b32.xlu0 %v4734, 48
      %v5597 = vpop.permute.xlu0 %5596
      %5598 = vrot.lane.b32.xlu0 %v4735, 48
      %v5599 = vpop.permute.xlu0 %5598
      %5600 = vrot.lane.b32.xlu0 %v4736, 48
      %v5601 = vpop.permute.xlu0 %5600
      %5602 = vrot.lane.b32.xlu0 %v4737, 48
      %v5603 = vpop.permute.xlu0 %5602
      %5604 = vrot.lane.b32.xlu0 %v4738, 48
      %v5605 = vpop.permute.xlu0 %5604
      %5606 = vrot.lane.b32.xlu0 %v4739, 48
      %v5607 = vpop.permute.xlu0 %5606
      %5608 = vrot.lane.b32.xlu0 %v4740, 48
      %v5609 = vpop.permute.xlu0 %5608
      %5610 = vrot.lane.b32.xlu0 %v4741, 48
      %v5611 = vpop.permute.xlu0 %5610
      %5612 = vrot.lane.b32.xlu0 %v4742, 48
      %v5613 = vpop.permute.xlu0 %5612
      %5614 = vrot.lane.b32.xlu0 %v4743, 48
      %v5615 = vpop.permute.xlu0 %5614
      %5616 = vrot.lane.b32.xlu0 %v4744, 48
      %v5617 = vpop.permute.xlu0 %5616
      %5618 = vrot.lane.b32.xlu0 %v4745, 48
      %v5619 = vpop.permute.xlu0 %5618
      %5620 = vrot.lane.b32.xlu0 %v4746, 48
      %v5621 = vpop.permute.xlu0 %5620
      %5622 = vrot.lane.b32.xlu0 %v5200, 48
      %v5623 = vpop.permute.xlu0 %5622
      %5624 = vrot.lane.b32.xlu0 %v5201, 48
      %v5625 = vpop.permute.xlu0 %5624
      %5626 = vrot.lane.b32.xlu0 %v5578, 48
      %v5627 = vpop.permute.xlu0 %5626
      %5628 = vrot.lane.b32.xlu0 %v5579, 48
      %v5629 = vpop.permute.xlu0 %5628
      %v5630 = vpack.c.b16 %v5574, %v5146
      %v5631 = vpack.c.b16 %v5576, %v5575
      %v5633 = vshrl.u32 %v5148, 16
      %v5635 = vrot.slane %v5633, 4
      %v5636 = vshll.u32 %v5148, 16
      %v5638 = vrot.slane %v5636, 5
      %v5639 = vor.u32 %v5635, %v5638
      %v5640 = vsel %vm2354, %v4985, %v5639
      %v5642 = vshrl.u32 %v5630, 16
      %v5644 = vrot.slane %v5642, 4
      %v5645 = vshll.u32 %v5630, 16
      %v5647 = vrot.slane %v5645, 5
      %v5648 = vor.u32 %v5644, %v5647
      %v5649 = vsel %vm2354, %v5639, %v5648
      %v5651 = vshrl.u32 %v5631, 16
      %v5653 = vrot.slane %v5651, 4
      %v5654 = vshll.u32 %v5631, 16
      %v5656 = vrot.slane %v5654, 5
      %v5657 = vor.u32 %v5653, %v5656
      %v5658 = vsel %vm2354, %v5648, %v5657
      %5659 = vrot.lane.b32.xlu0 %v4805, 56
      %v5660 = vpop.permute.xlu0 %5659
      %5661 = vrot.lane.b32.xlu0 %v4815, 56
      %v5662 = vpop.permute.xlu0 %5661
      %5663 = vrot.lane.b32.xlu0 %v4824, 56
      %v5664 = vpop.permute.xlu0 %5663
      %5665 = vrot.lane.b32.xlu0 %v4833, 56
      %v5666 = vpop.permute.xlu0 %5665
      %5667 = vrot.lane.b32.xlu0 %v4842, 56
      %v5668 = vpop.permute.xlu0 %5667
      %5669 = vrot.lane.b32.xlu0 %v4851, 56
      %v5670 = vpop.permute.xlu0 %5669
      %5671 = vrot.lane.b32.xlu0 %v4860, 56
      %v5672 = vpop.permute.xlu0 %5671
      %5673 = vrot.lane.b32.xlu0 %v4869, 56
      %v5674 = vpop.permute.xlu0 %5673
      %5675 = vrot.lane.b32.xlu0 %v4878, 56
      %v5676 = vpop.permute.xlu0 %5675
      %5677 = vrot.lane.b32.xlu0 %v4887, 56
      %v5678 = vpop.permute.xlu0 %5677
      %5679 = vrot.lane.b32.xlu0 %v4896, 56
      %v5680 = vpop.permute.xlu0 %5679
      %5681 = vrot.lane.b32.xlu0 %v4905, 56
      %v5682 = vpop.permute.xlu0 %5681
      %5683 = vrot.lane.b32.xlu0 %v4914, 56
      %v5684 = vpop.permute.xlu0 %5683
      %5685 = vrot.lane.b32.xlu0 %v4923, 56
      %v5686 = vpop.permute.xlu0 %5685
      %5687 = vrot.lane.b32.xlu0 %v4932, 56
      %v5688 = vpop.permute.xlu0 %5687
      %5689 = vrot.lane.b32.xlu0 %v4941, 56
      %v5690 = vpop.permute.xlu0 %5689
      %5691 = vrot.lane.b32.xlu0 %v4950, 56
      %v5692 = vpop.permute.xlu0 %5691
      %5693 = vrot.lane.b32.xlu0 %v4959, 56
      %v5694 = vpop.permute.xlu0 %5693
      %5695 = vrot.lane.b32.xlu0 %v4968, 56
      %v5696 = vpop.permute.xlu0 %5695
      %5697 = vrot.lane.b32.xlu0 %v4977, 56
      %v5698 = vpop.permute.xlu0 %5697
      %5699 = vrot.lane.b32.xlu0 %v4986, 56
      %v5700 = vpop.permute.xlu0 %5699
      %5701 = vrot.lane.b32.xlu0 %v5640, 56
      %v5702 = vpop.permute.xlu0 %5701
      %5703 = vrot.lane.b32.xlu0 %v5649, 56
      %v5704 = vpop.permute.xlu0 %5703
      %5705 = vrot.lane.b32.xlu0 %v5658, 56
      %v5706 = vpop.permute.xlu0 %5705
      %5707 = vrot.lane.b32.xlu0 %v5657, 56
      %v5708 = vpop.permute.xlu0 %5707
      %v5710 = vunpack.c.l.b16 %v4624
      %v5711 = vpack.c.b16 %v5710, %v5710
      %v5712 = vrot.slane %v5148, 5
      %v5713 = vsel %vm2623, %v5085, %v5712
      %v5714 = vrot.slane %v5630, 5
      %v5715 = vsel %vm2623, %v5712, %v5714
      %v5716 = vrot.slane %v5631, 5
      %v5717 = vsel %vm2623, %v5714, %v5716
      %v5718 = vrot.slane %v5711, 5
      %v5719 = vsel %vm2623, %v5716, %v5718
      %5720 = vrot.lane.b32.xlu0 %v5045, 64
      %v5721 = vpop.permute.xlu0 %5720
      %5722 = vrot.lane.b32.xlu0 %v5048, 64
      %v5723 = vpop.permute.xlu0 %5722
      %5724 = vrot.lane.b32.xlu0 %v5050, 64
      %v5725 = vpop.permute.xlu0 %5724
      %5726 = vrot.lane.b32.xlu0 %v5052, 64
      %v5727 = vpop.permute.xlu0 %5726
      %5728 = vrot.lane.b32.xlu0 %v5054, 64
      %v5729 = vpop.permute.xlu0 %5728
      %5730 = vrot.lane.b32.xlu0 %v5056, 64
      %v5731 = vpop.permute.xlu0 %5730
      %5732 = vrot.lane.b32.xlu0 %v5058, 64
      %v5733 = vpop.permute.xlu0 %5732
      %5734 = vrot.lane.b32.xlu0 %v5060, 64
      %v5735 = vpop.permute.xlu0 %5734
      %5736 = vrot.lane.b32.xlu0 %v5062, 64
      %v5737 = vpop.permute.xlu0 %5736
      %5738 = vrot.lane.b32.xlu0 %v5064, 64
      %v5739 = vpop.permute.xlu0 %5738
      %5740 = vrot.lane.b32.xlu0 %v5066, 64
      %v5741 = vpop.permute.xlu0 %5740
      %5742 = vrot.lane.b32.xlu0 %v5068, 64
      %v5743 = vpop.permute.xlu0 %5742
      %5744 = vrot.lane.b32.xlu0 %v5070, 64
      %v5745 = vpop.permute.xlu0 %5744
      %5746 = vrot.lane.b32.xlu0 %v5072, 64
      %v5747 = vpop.permute.xlu0 %5746
      %5748 = vrot.lane.b32.xlu0 %v5074, 64
      %v5749 = vpop.permute.xlu0 %5748
      %5750 = vrot.lane.b32.xlu0 %v5076, 64
      %v5751 = vpop.permute.xlu0 %5750
      %5752 = vrot.lane.b32.xlu0 %v5078, 64
      %v5753 = vpop.permute.xlu0 %5752
      %5754 = vrot.lane.b32.xlu0 %v5080, 64
      %v5755 = vpop.permute.xlu0 %5754
      %5756 = vrot.lane.b32.xlu0 %v5082, 64
      %v5757 = vpop.permute.xlu0 %5756
      %5758 = vrot.lane.b32.xlu0 %v5084, 64
      %v5759 = vpop.permute.xlu0 %5758
      %5760 = vrot.lane.b32.xlu0 %v5086, 64
      %v5761 = vpop.permute.xlu0 %5760
      %5762 = vrot.lane.b32.xlu0 %v5713, 64
      %v5763 = vpop.permute.xlu0 %5762
      %5764 = vrot.lane.b32.xlu0 %v5715, 64
      %v5765 = vpop.permute.xlu0 %5764
      %5766 = vrot.lane.b32.xlu0 %v5717, 64
      %v5767 = vpop.permute.xlu0 %5766
      %5768 = vrot.lane.b32.xlu0 %v5719, 64
      %v5769 = vpop.permute.xlu0 %5768
      %vm5770 = vcmask 64512
      %v5773 = vsel %vm5770, %v4723, %v4988
      %v5776 = vsel %vm5770, %v4724, %v4990
      %v5778 = vsel %vm5770, %v4725, %v4992
      %v5780 = vsel %vm5770, %v4726, %v4994
      %v5782 = vsel %vm5770, %v4727, %v4996
      %v5784 = vsel %vm5770, %v4728, %v4998
      %v5786 = vsel %vm5770, %v4729, %v5000
      %v5788 = vsel %vm5770, %v4730, %v5002
      %v5790 = vsel %vm5770, %v4731, %v5004
      %v5792 = vsel %vm5770, %v4732, %v5006
      %v5794 = vsel %vm5770, %v4733, %v5008
      %v5796 = vsel %vm5770, %v4734, %v5010
      %v5798 = vsel %vm5770, %v4735, %v5012
      %v5800 = vsel %vm5770, %v4736, %v5014
      %v5802 = vsel %vm5770, %v4737, %v5016
      %v5804 = vsel %vm5770, %v4738, %v5018
      %v5806 = vsel %vm5770, %v4739, %v5020
      %v5808 = vsel %vm5770, %v4740, %v5022
      %v5810 = vsel %vm5770, %v4741, %v5024
      %v5812 = vsel %vm5770, %v4742, %v5026
      %v5814 = vsel %vm5770, %v4743, %v5028
      %v5816 = vsel %vm5770, %v4744, %v5030
      %v5818 = vsel %vm5770, %v4745, %v5032
      %v5820 = vsel %vm5770, %v4746, %v5034
      %v5823 = vsel %vm5770, %v4747, %v5036
      %v5825 = vsel %vm857, %v5773, %v5090
      %v5827 = vsel %vm857, %v5776, %v5092
      %v5829 = vsel %vm857, %v5778, %v5094
      %v5831 = vsel %vm857, %v5780, %v5096
      %v5833 = vsel %vm857, %v5782, %v5098
      %v5835 = vsel %vm857, %v5784, %v5100
      %v5837 = vsel %vm857, %v5786, %v5102
      %v5839 = vsel %vm857, %v5788, %v5104
      %v5841 = vsel %vm857, %v5790, %v5106
      %v5843 = vsel %vm857, %v5792, %v5108
      %v5845 = vsel %vm857, %v5794, %v5110
      %v5847 = vsel %vm857, %v5796, %v5112
      %v5849 = vsel %vm857, %v5798, %v5114
      %v5851 = vsel %vm857, %v5800, %v5116
      %v5853 = vsel %vm857, %v5802, %v5118
      %v5855 = vsel %vm857, %v5804, %v5120
      %v5857 = vsel %vm857, %v5806, %v5122
      %v5859 = vsel %vm857, %v5808, %v5124
      %v5861 = vsel %vm857, %v5810, %v5126
      %v5863 = vsel %vm857, %v5812, %v5128
      %v5865 = vsel %vm857, %v5814, %v5130
      %v5867 = vsel %vm857, %v5816, %v5132
      %v5869 = vsel %vm857, %v5818, %v5134
      %v5871 = vsel %vm857, %v5820, %v5136
      %v5873 = vsel %vm857, %v5823, %v5138
      %vm5874 = vcmask 195584
      %v5876 = vsel %vm5874, %v5825, %v5151
      %v5878 = vsel %vm5874, %v5827, %v5153
      %v5880 = vsel %vm5874, %v5829, %v5155
      %v5882 = vsel %vm5874, %v5831, %v5157
      %v5884 = vsel %vm5874, %v5833, %v5159
      %v5886 = vsel %vm5874, %v5835, %v5161
      %v5888 = vsel %vm5874, %v5837, %v5163
      %v5890 = vsel %vm5874, %v5839, %v5165
      %v5892 = vsel %vm5874, %v5841, %v5167
      %v5894 = vsel %vm5874, %v5843, %v5169
      %v5896 = vsel %vm5874, %v5845, %v5171
      %v5898 = vsel %vm5874, %v5847, %v5173
      %v5900 = vsel %vm5874, %v5849, %v5175
      %v5902 = vsel %vm5874, %v5851, %v5177
      %v5904 = vsel %vm5874, %v5853, %v5179
      %v5906 = vsel %vm5874, %v5855, %v5181
      %v5908 = vsel %vm5874, %v5857, %v5183
      %v5910 = vsel %vm5874, %v5859, %v5185
      %v5912 = vsel %vm5874, %v5861, %v5187
      %v5914 = vsel %vm5874, %v5863, %v5189
      %v5916 = vsel %vm5874, %v5865, %v5191
      %v5918 = vsel %vm5874, %v5867, %v5193
      %v5920 = vsel %vm5874, %v5869, %v5195
      %v5922 = vsel %vm5874, %v5871, %v5197
      %v5924 = vsel %vm5874, %v5873, %v5199
      %v5926 = vsel %vm3357, %v5876, %v5418
      %v5928 = vsel %vm3357, %v5878, %v5420
      %v5930 = vsel %vm3357, %v5880, %v5422
      %v5932 = vsel %vm3357, %v5882, %v5424
      %v5934 = vsel %vm3357, %v5884, %v5426
      %v5936 = vsel %vm3357, %v5886, %v5428
      %v5938 = vsel %vm3357, %v5888, %v5430
      %v5940 = vsel %vm3357, %v5890, %v5432
      %v5942 = vsel %vm3357, %v5892, %v5434
      %v5944 = vsel %vm3357, %v5894, %v5436
      %v5946 = vsel %vm3357, %v5896, %v5438
      %v5948 = vsel %vm3357, %v5898, %v5440
      %v5950 = vsel %vm3357, %v5900, %v5442
      %v5952 = vsel %vm3357, %v5902, %v5444
      %v5954 = vsel %vm3357, %v5904, %v5446
      %v5956 = vsel %vm3357, %v5906, %v5448
      %v5958 = vsel %vm3357, %v5908, %v5450
      %v5960 = vsel %vm3357, %v5910, %v5452
      %v5962 = vsel %vm3357, %v5912, %v5454
      %v5964 = vsel %vm3357, %v5914, %v5456
      %v5966 = vsel %vm3357, %v5916, %v5458
      %v5968 = vsel %vm3357, %v5918, %v5460
      %v5970 = vsel %vm3357, %v5920, %v5462
      %v5972 = vsel %vm3357, %v5922, %v5464
      %v5974 = vsel %vm3357, %v5924, %v5466
      %vm5975 = vcmask 326656
      %v5977 = vsel %vm5975, %v5926, %v5520
      %v5979 = vsel %vm5975, %v5928, %v5522
      %v5981 = vsel %vm5975, %v5930, %v5524
      %v5983 = vsel %vm5975, %v5932, %v5526
      %v5985 = vsel %vm5975, %v5934, %v5528
      %v5987 = vsel %vm5975, %v5936, %v5530
      %v5989 = vsel %vm5975, %v5938, %v5532
      %v5991 = vsel %vm5975, %v5940, %v5534
      %v5993 = vsel %vm5975, %v5942, %v5536
      %v5995 = vsel %vm5975, %v5944, %v5538
      %v5997 = vsel %vm5975, %v5946, %v5540
      %v5999 = vsel %vm5975, %v5948, %v5542
      %v6001 = vsel %vm5975, %v5950, %v5544
      %v6003 = vsel %vm5975, %v5952, %v5546
      %v6005 = vsel %vm5975, %v5954, %v5548
      %v6007 = vsel %vm5975, %v5956, %v5550
      %v6009 = vsel %vm5975, %v5958, %v5552
      %v6011 = vsel %vm5975, %v5960, %v5554
      %v6013 = vsel %vm5975, %v5962, %v5556
      %v6015 = vsel %vm5975, %v5964, %v5558
      %v6017 = vsel %vm5975, %v5966, %v5560
      %v6019 = vsel %vm5975, %v5968, %v5562
      %v6021 = vsel %vm5975, %v5970, %v5564
      %v6023 = vsel %vm5975, %v5972, %v5566
      %v6025 = vsel %vm5975, %v5974, %v5568
      %v6027 = vsel %vm3408, %v5977, %v5581
      %v6029 = vsel %vm3408, %v5979, %v5583
      %v6031 = vsel %vm3408, %v5981, %v5585
      %v6033 = vsel %vm3408, %v5983, %v5587
      %v6035 = vsel %vm3408, %v5985, %v5589
      %v6037 = vsel %vm3408, %v5987, %v5591
      %v6039 = vsel %vm3408, %v5989, %v5593
      %v6041 = vsel %vm3408, %v5991, %v5595
      %v6043 = vsel %vm3408, %v5993, %v5597
      %v6045 = vsel %vm3408, %v5995, %v5599
      %v6047 = vsel %vm3408, %v5997, %v5601
      %v6049 = vsel %vm3408, %v5999, %v5603
      %v6051 = vsel %vm3408, %v6001, %v5605
      %v6053 = vsel %vm3408, %v6003, %v5607
      %v6055 = vsel %vm3408, %v6005, %v5609
      %v6057 = vsel %vm3408, %v6007, %v5611
      %v6059 = vsel %vm3408, %v6009, %v5613
      %v6061 = vsel %vm3408, %v6011, %v5615
      %v6063 = vsel %vm3408, %v6013, %v5617
      %v6065 = vsel %vm3408, %v6015, %v5619
      %v6067 = vsel %vm3408, %v6017, %v5621
      %v6069 = vsel %vm3408, %v6019, %v5623
      %v6071 = vsel %vm3408, %v6021, %v5625
      %v6073 = vsel %vm3408, %v6023, %v5627
      %v6075 = vsel %vm3408, %v6025, %v5629
      %vm6076 = vcmask 457728
      %v6078 = vsel %vm6076, %v6027, %v5660
      %v6080 = vsel %vm6076, %v6029, %v5662
      %v6082 = vsel %vm6076, %v6031, %v5664
      %v6084 = vsel %vm6076, %v6033, %v5666
      %v6086 = vsel %vm6076, %v6035, %v5668
      %v6088 = vsel %vm6076, %v6037, %v5670
      %v6090 = vsel %vm6076, %v6039, %v5672
      %v6092 = vsel %vm6076, %v6041, %v5674
      %v6094 = vsel %vm6076, %v6043, %v5676
      %v6096 = vsel %vm6076, %v6045, %v5678
      %v6098 = vsel %vm6076, %v6047, %v5680
      %v6100 = vsel %vm6076, %v6049, %v5682
      %v6102 = vsel %vm6076, %v6051, %v5684
      %v6104 = vsel %vm6076, %v6053, %v5686
      %v6106 = vsel %vm6076, %v6055, %v5688
      %v6108 = vsel %vm6076, %v6057, %v5690
      %v6110 = vsel %vm6076, %v6059, %v5692
      %v6112 = vsel %vm6076, %v6061, %v5694
      %v6114 = vsel %vm6076, %v6063, %v5696
      %v6116 = vsel %vm6076, %v6065, %v5698
      %v6118 = vsel %vm6076, %v6067, %v5700
      %v6120 = vsel %vm6076, %v6069, %v5702
      %v6122 = vsel %vm6076, %v6071, %v5704
      %v6124 = vsel %vm6076, %v6073, %v5706
      %v6126 = vsel %vm6076, %v6075, %v5708
      %v6128 = vsel %vm3459, %v6078, %v5721
      %v6130 = vsel %vm3459, %v6080, %v5723
      %v6132 = vsel %vm3459, %v6082, %v5725
      %v6134 = vsel %vm3459, %v6084, %v5727
      %v6136 = vsel %vm3459, %v6086, %v5729
      %v6138 = vsel %vm3459, %v6088, %v5731
      %v6140 = vsel %vm3459, %v6090, %v5733
      %v6142 = vsel %vm3459, %v6092, %v5735
      %v6144 = vsel %vm3459, %v6094, %v5737
      %v6146 = vsel %vm3459, %v6096, %v5739
      %v6148 = vsel %vm3459, %v6098, %v5741
      %v6150 = vsel %vm3459, %v6100, %v5743
      %v6152 = vsel %vm3459, %v6102, %v5745
      %v6154 = vsel %vm3459, %v6104, %v5747
      %v6156 = vsel %vm3459, %v6106, %v5749
      %v6158 = vsel %vm3459, %v6108, %v5751
      %v6160 = vsel %vm3459, %v6110, %v5753
      %v6162 = vsel %vm3459, %v6112, %v5755
      %v6164 = vsel %vm3459, %v6114, %v5757
      %v6166 = vsel %vm3459, %v6116, %v5759
      %v6168 = vsel %vm3459, %v6118, %v5761
      %v6170 = vsel %vm3459, %v6120, %v5763
      %v6172 = vsel %vm3459, %v6122, %v5765
      %v6174 = vsel %vm3459, %v6124, %v5767
      %v6176 = vsel %vm3459, %v6126, %v5769
      %v6177 = vld [vmem:[%s8] sm:$0xf]
      %v6178 = vld [vmem:[%s8 + $0x4] sm:$0xf]
      %v6179 = vld [vmem:[%s8 + $0x8] sm:$0xf]
      %v6180 = vld [vmem:[%s8 + $0xc] sm:$0xf]
      %v6181 = vld [vmem:[%s8 + $0x10] sm:$0xf]
      %v6182 = vld [vmem:[%s8 + $0x14] sm:$0xf]
      %v6183 = vld [vmem:[%s8 + $0x18] sm:$0xf]
      %v6184 = vld [vmem:[%s8 + $0x1c] sm:$0xf]
      %v6185 = vld [vmem:[%s8 + $0x20] sm:$0xf]
      %v6186 = vld [vmem:[%s9] sm:$0x1]
      %v6188 = vperm.slane %v6186, 0
      %v6190 = vshrl.u32 %v6128, 16
      %v6192 = vrot.slane %v6190, 3
      %v6193 = vshll.u32 %v6128, 16
      %v6195 = vrot.slane %v6193, 4
      %v6196 = vor.u32 %v6192, %v6195
      %v6197 = vshrl.u32 %v6130, 16
      %v6199 = vrot.slane %v6197, 3
      %v6200 = vshll.u32 %v6130, 16
      %v6202 = vrot.slane %v6200, 4
      %v6203 = vor.u32 %v6199, %v6202
      %v6204 = vsel %vm3685, %v6196, %v6203
      %v6205 = vshrl.u32 %v6132, 16
      %v6207 = vrot.slane %v6205, 3
      %v6208 = vshll.u32 %v6132, 16
      %v6210 = vrot.slane %v6208, 4
      %v6211 = vor.u32 %v6207, %v6210
      %v6212 = vsel %vm3685, %v6203, %v6211
      %v6213 = vshrl.u32 %v6134, 16
      %v6215 = vrot.slane %v6213, 3
      %v6216 = vshll.u32 %v6134, 16
      %v6218 = vrot.slane %v6216, 4
      %v6219 = vor.u32 %v6215, %v6218
      %v6220 = vsel %vm3685, %v6211, %v6219
      %v6221 = vshrl.u32 %v6136, 16
      %v6223 = vrot.slane %v6221, 3
      %v6224 = vshll.u32 %v6136, 16
      %v6226 = vrot.slane %v6224, 4
      %v6227 = vor.u32 %v6223, %v6226
      %v6228 = vsel %vm3685, %v6219, %v6227
      %v6229 = vshrl.u32 %v6138, 16
      %v6231 = vrot.slane %v6229, 3
      %v6232 = vshll.u32 %v6138, 16
      %v6234 = vrot.slane %v6232, 4
      %v6235 = vor.u32 %v6231, %v6234
      %v6236 = vsel %vm3685, %v6227, %v6235
      %v6237 = vshrl.u32 %v6140, 16
      %v6239 = vrot.slane %v6237, 3
      %v6240 = vshll.u32 %v6140, 16
      %v6242 = vrot.slane %v6240, 4
      %v6243 = vor.u32 %v6239, %v6242
      %v6244 = vsel %vm3685, %v6235, %v6243
      %v6245 = vshrl.u32 %v6142, 16
      %v6247 = vrot.slane %v6245, 3
      %v6248 = vshll.u32 %v6142, 16
      %v6250 = vrot.slane %v6248, 4
      %v6251 = vor.u32 %v6247, %v6250
      %v6252 = vsel %vm3685, %v6243, %v6251
      %v6253 = vshrl.u32 %v6144, 16
      %v6255 = vrot.slane %v6253, 3
      %v6256 = vshll.u32 %v6144, 16
      %v6258 = vrot.slane %v6256, 4
      %v6259 = vor.u32 %v6255, %v6258
      %v6260 = vsel %vm3685, %v6251, %v6259
      %v6261 = vshrl.u32 %v6146, 16
      %v6263 = vrot.slane %v6261, 3
      %v6264 = vshll.u32 %v6146, 16
      %v6266 = vrot.slane %v6264, 4
      %v6267 = vor.u32 %v6263, %v6266
      %v6268 = vsel %vm3685, %v6259, %v6267
      %v6269 = vshrl.u32 %v6148, 16
      %v6271 = vrot.slane %v6269, 3
      %v6272 = vshll.u32 %v6148, 16
      %v6274 = vrot.slane %v6272, 4
      %v6275 = vor.u32 %v6271, %v6274
      %v6276 = vsel %vm3685, %v6267, %v6275
      %v6277 = vshrl.u32 %v6150, 16
      %v6279 = vrot.slane %v6277, 3
      %v6280 = vshll.u32 %v6150, 16
      %v6282 = vrot.slane %v6280, 4
      %v6283 = vor.u32 %v6279, %v6282
      %v6284 = vsel %vm3685, %v6275, %v6283
      %v6285 = vshrl.u32 %v6152, 16
      %v6287 = vrot.slane %v6285, 3
      %v6288 = vshll.u32 %v6152, 16
      %v6290 = vrot.slane %v6288, 4
      %v6291 = vor.u32 %v6287, %v6290
      %v6292 = vsel %vm3685, %v6283, %v6291
      %v6293 = vshrl.u32 %v6154, 16
      %v6295 = vrot.slane %v6293, 3
      %v6296 = vshll.u32 %v6154, 16
      %v6298 = vrot.slane %v6296, 4
      %v6299 = vor.u32 %v6295, %v6298
      %v6300 = vsel %vm3685, %v6291, %v6299
      %v6301 = vshrl.u32 %v6156, 16
      %v6303 = vrot.slane %v6301, 3
      %v6304 = vshll.u32 %v6156, 16
      %v6306 = vrot.slane %v6304, 4
      %v6307 = vor.u32 %v6303, %v6306
      %v6308 = vsel %vm3685, %v6299, %v6307
      %v6309 = vshrl.u32 %v6158, 16
      %v6311 = vrot.slane %v6309, 3
      %v6312 = vshll.u32 %v6158, 16
      %v6314 = vrot.slane %v6312, 4
      %v6315 = vor.u32 %v6311, %v6314
      %v6316 = vsel %vm3685, %v6307, %v6315
      %v6317 = vshrl.u32 %v6160, 16
      %v6319 = vrot.slane %v6317, 3
      %v6320 = vshll.u32 %v6160, 16
      %v6322 = vrot.slane %v6320, 4
      %v6323 = vor.u32 %v6319, %v6322
      %v6324 = vsel %vm3685, %v6315, %v6323
      %v6325 = vshrl.u32 %v6162, 16
      %v6327 = vrot.slane %v6325, 3
      %v6328 = vshll.u32 %v6162, 16
      %v6330 = vrot.slane %v6328, 4
      %v6331 = vor.u32 %v6327, %v6330
      %v6332 = vsel %vm3685, %v6323, %v6331
      %v6333 = vshrl.u32 %v6164, 16
      %v6335 = vrot.slane %v6333, 3
      %v6336 = vshll.u32 %v6164, 16
      %v6338 = vrot.slane %v6336, 4
      %v6339 = vor.u32 %v6335, %v6338
      %v6340 = vsel %vm3685, %v6331, %v6339
      %v6341 = vshrl.u32 %v6166, 16
      %v6343 = vrot.slane %v6341, 3
      %v6344 = vshll.u32 %v6166, 16
      %v6346 = vrot.slane %v6344, 4
      %v6347 = vor.u32 %v6343, %v6346
      %v6348 = vsel %vm3685, %v6339, %v6347
      %v6349 = vshrl.u32 %v6168, 16
      %v6351 = vrot.slane %v6349, 3
      %v6352 = vshll.u32 %v6168, 16
      %v6354 = vrot.slane %v6352, 4
      %v6355 = vor.u32 %v6351, %v6354
      %v6356 = vsel %vm3685, %v6347, %v6355
      %v6357 = vshrl.u32 %v6170, 16
      %v6359 = vrot.slane %v6357, 3
      %v6360 = vshll.u32 %v6170, 16
      %v6362 = vrot.slane %v6360, 4
      %v6363 = vor.u32 %v6359, %v6362
      %v6364 = vsel %vm3685, %v6355, %v6363
      %v6365 = vshrl.u32 %v6172, 16
      %v6367 = vrot.slane %v6365, 3
      %v6368 = vshll.u32 %v6172, 16
      %v6370 = vrot.slane %v6368, 4
      %v6371 = vor.u32 %v6367, %v6370
      %v6372 = vsel %vm3685, %v6363, %v6371
      %v6373 = vshrl.u32 %v6174, 16
      %v6375 = vrot.slane %v6373, 3
      %v6376 = vshll.u32 %v6174, 16
      %v6378 = vrot.slane %v6376, 4
      %v6379 = vor.u32 %v6375, %v6378
      %v6380 = vsel %vm3685, %v6371, %v6379
      %v6381 = vshrl.u32 %v6176, 16
      %v6383 = vrot.slane %v6381, 3
      %v6384 = vshll.u32 %v6176, 16
      %v6386 = vrot.slane %v6384, 4
      %v6387 = vor.u32 %v6383, %v6386
      %v6388 = vsel %vm3685, %v6379, %v6387
      %v6398 = vunpack.c.l.b16 %v6177
      %v6399 = vunpack.c.l.b16 %v6178
      %v6400 = vunpack.c.l.b16 %v6179
      %v6401 = vunpack.c.l.b16 %v6180
      %v6402 = vunpack.c.l.b16 %v6181
      %v6403 = vunpack.c.l.b16 %v6182
      %v6404 = vunpack.c.l.b16 %v6183
      %v6405 = vunpack.c.l.b16 %v6184
      %v6406 = vunpack.c.l.b16 %v6185
      %v6407 = vpack.c.b16 %v6399, %v6398
      %v6408 = vpack.c.b16 %v6401, %v6400
      %v6409 = vpack.c.b16 %v6403, %v6402
      %v6410 = vpack.c.b16 %v6405, %v6404
      %v6411 = vpack.c.b16 %v6406, %v6406
      %vm6416 = vcmask 588800
      %v6418 = vsel %vm6416, %v6204, 0
      %v6421 = vsel %vm6416, %v6212, 0
      %v6424 = vsel %vm6416, %v6220, 0
      %v6427 = vsel %vm6416, %v6228, 0
      %v6430 = vsel %vm6416, %v6236, 0
      %v6433 = vsel %vm6416, %v6244, 0
      %v6436 = vsel %vm6416, %v6252, 0
      %v6439 = vsel %vm6416, %v6260, 0
      %v6442 = vsel %vm6416, %v6268, 0
      %v6445 = vsel %vm6416, %v6276, 0
      %v6448 = vsel %vm6416, %v6284, 0
      %v6451 = vsel %vm6416, %v6292, 0
      %v6454 = vsel %vm6416, %v6300, 0
      %v6457 = vsel %vm6416, %v6308, 0
      %v6460 = vsel %vm6416, %v6316, 0
      %v6463 = vsel %vm6416, %v6324, 0
      %v6466 = vsel %vm6416, %v6332, 0
      %v6469 = vsel %vm6416, %v6340, 0
      %v6472 = vsel %vm6416, %v6348, 0
      %v6475 = vsel %vm6416, %v6356, 0
      %v6478 = vsel %vm6416, %v6364, 0
      %v6481 = vsel %vm6416, %v6372, 0
      %v6484 = vsel %vm6416, %v6380, 0
      %v6487 = vsel %vm6416, %v6388, 0
      %vm6489 = vcmask 1043456
      %v6491 = vsel %vm6489, %v6411, 0
      %6493 = vmatpush.bf16.msra.mxu0 0
      %6494 = vmatpush.bf16.msra.mxu0 0
      %6495 = vmatpush.bf16.msra.mxu0 0
      %6496 = vmatpush.bf16.msra.mxu0 %v6491
      %6497 = vmatpush.bf16.msra.mxu0 %v6410
      %6498 = vmatpush.bf16.msra.mxu0 %v6409
      %6499 = vmatpush.bf16.msra.mxu0 %v6408
      %6500 = vmatpush.bf16.msra.mxu0 %v6407
      %6501 = vmatmul.bf16.gmra.mxu0 %v6418
      %v6502 = vpop.f32.mrf.mxu0
      %v6503 = vadd.f32 %v6188, %v6502
      %v6504 = vpop.f32.mrf.mxu0
      %v6505 = vadd.f32 %v6188, %v6504
      %6506 = vmatmul.bf16.gmra.mxu0 %v6421
      %v6507 = vpop.f32.mrf.mxu0
      %v6508 = vadd.f32 %v6188, %v6507
      %v6509 = vpop.f32.mrf.mxu0
      %v6510 = vadd.f32 %v6188, %v6509
      %6511 = vmatmul.bf16.gmra.mxu0 %v6424
      %v6512 = vpop.f32.mrf.mxu0
      %v6513 = vadd.f32 %v6188, %v6512
      %v6514 = vpop.f32.mrf.mxu0
      %v6515 = vadd.f32 %v6188, %v6514
      %6516 = vmatmul.bf16.gmra.mxu0 %v6427
      %v6517 = vpop.f32.mrf.mxu0
      %v6518 = vadd.f32 %v6188, %v6517
      %v6519 = vpop.f32.mrf.mxu0
      %v6520 = vadd.f32 %v6188, %v6519
      %6521 = vmatmul.bf16.gmra.mxu0 %v6430
      %v6522 = vpop.f32.mrf.mxu0
      %v6523 = vadd.f32 %v6188, %v6522
      %v6524 = vpop.f32.mrf.mxu0
      %v6525 = vadd.f32 %v6188, %v6524
      %6526 = vmatmul.bf16.gmra.mxu0 %v6433
      %v6527 = vpop.f32.mrf.mxu0
      %v6528 = vadd.f32 %v6188, %v6527
      %v6529 = vpop.f32.mrf.mxu0
      %v6530 = vadd.f32 %v6188, %v6529
      %6531 = vmatmul.bf16.gmra.mxu0 %v6436
      %v6532 = vpop.f32.mrf.mxu0
      %v6533 = vadd.f32 %v6188, %v6532
      %v6534 = vpop.f32.mrf.mxu0
      %v6535 = vadd.f32 %v6188, %v6534
      %6536 = vmatmul.bf16.gmra.mxu0 %v6439
      %v6537 = vpop.f32.mrf.mxu0
      %v6538 = vadd.f32 %v6188, %v6537
      %v6539 = vpop.f32.mrf.mxu0
      %v6540 = vadd.f32 %v6188, %v6539
      %6541 = vmatmul.bf16.gmra.mxu0 %v6442
      %v6542 = vpop.f32.mrf.mxu0
      %v6543 = vadd.f32 %v6188, %v6542
      %v6544 = vpop.f32.mrf.mxu0
      %v6545 = vadd.f32 %v6188, %v6544
      %6546 = vmatmul.bf16.gmra.mxu0 %v6445
      %v6547 = vpop.f32.mrf.mxu0
      %v6548 = vadd.f32 %v6188, %v6547
      %v6549 = vpop.f32.mrf.mxu0
      %v6550 = vadd.f32 %v6188, %v6549
      %6551 = vmatmul.bf16.gmra.mxu0 %v6448
      %v6552 = vpop.f32.mrf.mxu0
      %v6553 = vadd.f32 %v6188, %v6552
      %v6554 = vpop.f32.mrf.mxu0
      %v6555 = vadd.f32 %v6188, %v6554
      %6556 = vmatmul.bf16.gmra.mxu0 %v6451
      %v6557 = vpop.f32.mrf.mxu0
      %v6558 = vadd.f32 %v6188, %v6557
      %v6559 = vpop.f32.mrf.mxu0
      %v6560 = vadd.f32 %v6188, %v6559
      %6561 = vmatmul.bf16.gmra.mxu0 %v6454
      %v6562 = vpop.f32.mrf.mxu0
      %v6563 = vadd.f32 %v6188, %v6562
      %v6564 = vpop.f32.mrf.mxu0
      %v6565 = vadd.f32 %v6188, %v6564
      %6566 = vmatmul.bf16.gmra.mxu0 %v6457
      %v6567 = vpop.f32.mrf.mxu0
      %v6568 = vadd.f32 %v6188, %v6567
      %v6569 = vpop.f32.mrf.mxu0
      %v6570 = vadd.f32 %v6188, %v6569
      %6571 = vmatmul.bf16.gmra.mxu0 %v6460
      %v6572 = vpop.f32.mrf.mxu0
      %v6573 = vadd.f32 %v6188, %v6572
      %v6574 = vpop.f32.mrf.mxu0
      %v6575 = vadd.f32 %v6188, %v6574
      %6576 = vmatmul.bf16.gmra.mxu0 %v6463
      %v6577 = vpop.f32.mrf.mxu0
      %v6578 = vadd.f32 %v6188, %v6577
      %v6579 = vpop.f32.mrf.mxu0
      %v6580 = vadd.f32 %v6188, %v6579
      %6581 = vmatmul.bf16.gmra.mxu0 %v6466
      %v6582 = vpop.f32.mrf.mxu0
      %v6583 = vadd.f32 %v6188, %v6582
      %v6584 = vpop.f32.mrf.mxu0
      %v6585 = vadd.f32 %v6188, %v6584
      %6586 = vmatmul.bf16.gmra.mxu0 %v6469
      %v6587 = vpop.f32.mrf.mxu0
      %v6588 = vadd.f32 %v6188, %v6587
      %v6589 = vpop.f32.mrf.mxu0
      %v6590 = vadd.f32 %v6188, %v6589
      %6591 = vmatmul.bf16.gmra.mxu0 %v6472
      %v6592 = vpop.f32.mrf.mxu0
      %v6593 = vadd.f32 %v6188, %v6592
      %v6594 = vpop.f32.mrf.mxu0
      %v6595 = vadd.f32 %v6188, %v6594
      %6596 = vmatmul.bf16.gmra.mxu0 %v6475
      %v6597 = vpop.f32.mrf.mxu0
      %v6598 = vadd.f32 %v6188, %v6597
      %v6599 = vpop.f32.mrf.mxu0
      %v6600 = vadd.f32 %v6188, %v6599
      %6601 = vmatmul.bf16.gmra.mxu0 %v6478
      %v6602 = vpop.f32.mrf.mxu0
      %v6603 = vadd.f32 %v6188, %v6602
      %v6604 = vpop.f32.mrf.mxu0
      %v6605 = vadd.f32 %v6188, %v6604
      %6606 = vmatmul.bf16.gmra.mxu0 %v6481
      %v6607 = vpop.f32.mrf.mxu0
      %v6608 = vadd.f32 %v6188, %v6607
      %v6609 = vpop.f32.mrf.mxu0
      %v6610 = vadd.f32 %v6188, %v6609
      %6611 = vmatmul.bf16.gmra.mxu0 %v6484
      %v6612 = vpop.f32.mrf.mxu0
      %v6613 = vadd.f32 %v6188, %v6612
      %v6614 = vpop.f32.mrf.mxu0
      %v6615 = vadd.f32 %v6188, %v6614
      %6616 = vmatmul.bf16.gmra.mxu0 %v6487
      %v6617 = vpop.f32.mrf.mxu0
      %v6618 = vadd.f32 %v6188, %v6617
      %v6619 = vpop.f32.mrf.mxu0
      %v6620 = vadd.f32 %v6188, %v6619
      %6621 = vdwg.mxu0
      %v6622 = vmax.f32 %v6503, 0.0
      %v6623 = vmax.f32 %v6505, 0.0
      %v6624 = vmax.f32 %v6508, 0.0
      %v6625 = vmax.f32 %v6510, 0.0
      %v6626 = vmax.f32 %v6513, 0.0
      %v6627 = vmax.f32 %v6515, 0.0
      %v6628 = vmax.f32 %v6518, 0.0
      %v6629 = vmax.f32 %v6520, 0.0
      %v6630 = vmax.f32 %v6523, 0.0
      %v6631 = vmax.f32 %v6525, 0.0
      %v6632 = vmax.f32 %v6528, 0.0
      %v6633 = vmax.f32 %v6530, 0.0
      %v6634 = vmax.f32 %v6533, 0.0
      %v6635 = vmax.f32 %v6535, 0.0
      %v6636 = vmax.f32 %v6538, 0.0
      %v6637 = vmax.f32 %v6540, 0.0
      %v6638 = vmax.f32 %v6543, 0.0
      %v6639 = vmax.f32 %v6545, 0.0
      %v6640 = vmax.f32 %v6548, 0.0
      %v6641 = vmax.f32 %v6550, 0.0
      %v6642 = vmax.f32 %v6553, 0.0
      %v6643 = vmax.f32 %v6555, 0.0
      %v6644 = vmax.f32 %v6558, 0.0
      %v6645 = vmax.f32 %v6560, 0.0
      %v6646 = vmax.f32 %v6563, 0.0
      %v6647 = vmax.f32 %v6565, 0.0
      %v6648 = vmax.f32 %v6568, 0.0
      %v6649 = vmax.f32 %v6570, 0.0
      %v6650 = vmax.f32 %v6573, 0.0
      %v6651 = vmax.f32 %v6575, 0.0
      %v6652 = vmax.f32 %v6578, 0.0
      %v6653 = vmax.f32 %v6580, 0.0
      %v6654 = vmax.f32 %v6583, 0.0
      %v6655 = vmax.f32 %v6585, 0.0
      %v6656 = vmax.f32 %v6588, 0.0
      %v6657 = vmax.f32 %v6590, 0.0
      %v6658 = vmax.f32 %v6593, 0.0
      %v6659 = vmax.f32 %v6595, 0.0
      %v6660 = vmax.f32 %v6598, 0.0
      %v6661 = vmax.f32 %v6600, 0.0
      %v6662 = vmax.f32 %v6603, 0.0
      %v6663 = vmax.f32 %v6605, 0.0
      %v6664 = vmax.f32 %v6608, 0.0
      %v6665 = vmax.f32 %v6610, 0.0
      %v6666 = vmax.f32 %v6613, 0.0
      %v6667 = vmax.f32 %v6615, 0.0
      %v6668 = vmax.f32 %v6618, 0.0
      %v6669 = vmax.f32 %v6620, 0.0
      %v6670 = vmul.f32 %v6622, %v1306
      %v6671 = vmul.f32 %v6623, %v1308
      %v6672 = vmul.f32 %v6624, %v1310
      %v6673 = vmul.f32 %v6625, %v1312
      %v6674 = vmul.f32 %v6626, %v1314
      %v6675 = vmul.f32 %v6627, %v1316
      %v6676 = vmul.f32 %v6628, %v1318
      %v6677 = vmul.f32 %v6629, %v1320
      %v6678 = vmul.f32 %v6630, %v1322
      %v6679 = vmul.f32 %v6631, %v1324
      %v6680 = vmul.f32 %v6632, %v1326
      %v6681 = vmul.f32 %v6633, %v1328
      %v6682 = vmul.f32 %v6634, %v1330
      %v6683 = vmul.f32 %v6635, %v1332
      %v6684 = vmul.f32 %v6636, %v1334
      %v6685 = vmul.f32 %v6637, %v1336
      %v6686 = vmul.f32 %v6638, %v1338
      %v6687 = vmul.f32 %v6639, %v1340
      %v6688 = vmul.f32 %v6640, %v1342
      %v6689 = vmul.f32 %v6641, %v1344
      %v6690 = vmul.f32 %v6642, %v1346
      %v6691 = vmul.f32 %v6643, %v1348
      %v6692 = vmul.f32 %v6644, %v1350
      %v6693 = vmul.f32 %v6645, %v1352
      %v6694 = vmul.f32 %v6646, %v1354
      %v6695 = vmul.f32 %v6647, %v1356
      %v6696 = vmul.f32 %v6648, %v1358
      %v6697 = vmul.f32 %v6649, %v1360
      %v6698 = vmul.f32 %v6650, %v1362
      %v6699 = vmul.f32 %v6651, %v1364
      %v6700 = vmul.f32 %v6652, %v1366
      %v6701 = vmul.f32 %v6653, %v1368
      %v6702 = vmul.f32 %v6654, %v1370
      %v6703 = vmul.f32 %v6655, %v1372
      %v6704 = vmul.f32 %v6656, %v1374
      %v6705 = vmul.f32 %v6657, %v1376
      %v6706 = vmul.f32 %v6658, %v1378
      %v6707 = vmul.f32 %v6659, %v1380
      %v6708 = vmul.f32 %v6660, %v1382
      %v6709 = vmul.f32 %v6661, %v1384
      %v6710 = vmul.f32 %v6662, %v1386
      %v6711 = vmul.f32 %v6663, %v1388
      %v6712 = vmul.f32 %v6664, %v1390
      %v6713 = vmul.f32 %v6665, %v1392
      %v6714 = vmul.f32 %v6666, %v1394
      %v6715 = vmul.f32 %v6667, %v1396
      %v6716 = vmul.f32 %v6668, %v1398
      %v6717 = vmul.f32 %v6669, %v1400
      %v6718 = vpack.c.bf16 %v6670, %v6670
      %v6719 = vpack.c.bf16 %v6671, %v6671
      %v6720 = vpack.c.bf16 %v6672, %v6672
      %v6721 = vpack.c.bf16 %v6673, %v6673
      %v6722 = vpack.c.bf16 %v6674, %v6674
      %v6723 = vpack.c.bf16 %v6675, %v6675
      %v6724 = vpack.c.bf16 %v6676, %v6676
      %v6725 = vpack.c.bf16 %v6677, %v6677
      %v6726 = vpack.c.bf16 %v6678, %v6678
      %v6727 = vpack.c.bf16 %v6679, %v6679
      %v6728 = vpack.c.bf16 %v6680, %v6680
      %v6729 = vpack.c.bf16 %v6681, %v6681
      %v6730 = vpack.c.bf16 %v6682, %v6682
      %v6731 = vpack.c.bf16 %v6683, %v6683
      %v6732 = vpack.c.bf16 %v6684, %v6684
      %v6733 = vpack.c.bf16 %v6685, %v6685
      %v6734 = vpack.c.bf16 %v6686, %v6686
      %v6735 = vpack.c.bf16 %v6687, %v6687
      %v6736 = vpack.c.bf16 %v6688, %v6688
      %v6737 = vpack.c.bf16 %v6689, %v6689
      %v6738 = vpack.c.bf16 %v6690, %v6690
      %v6739 = vpack.c.bf16 %v6691, %v6691
      %v6740 = vpack.c.bf16 %v6692, %v6692
      %v6741 = vpack.c.bf16 %v6693, %v6693
      %v6742 = vpack.c.bf16 %v6694, %v6694
      %v6743 = vpack.c.bf16 %v6695, %v6695
      %v6744 = vpack.c.bf16 %v6696, %v6696
      %v6745 = vpack.c.bf16 %v6697, %v6697
      %v6746 = vpack.c.bf16 %v6698, %v6698
      %v6747 = vpack.c.bf16 %v6699, %v6699
      %v6748 = vpack.c.bf16 %v6700, %v6700
      %v6749 = vpack.c.bf16 %v6701, %v6701
      %v6750 = vpack.c.bf16 %v6702, %v6702
      %v6751 = vpack.c.bf16 %v6703, %v6703
      %v6752 = vpack.c.bf16 %v6704, %v6704
      %v6753 = vpack.c.bf16 %v6705, %v6705
      %v6754 = vpack.c.bf16 %v6706, %v6706
      %v6755 = vpack.c.bf16 %v6707, %v6707
      %v6756 = vpack.c.bf16 %v6708, %v6708
      %v6757 = vpack.c.bf16 %v6709, %v6709
      %v6758 = vpack.c.bf16 %v6710, %v6710
      %v6759 = vpack.c.bf16 %v6711, %v6711
      %v6760 = vpack.c.bf16 %v6712, %v6712
      %v6761 = vpack.c.bf16 %v6713, %v6713
      %v6762 = vpack.c.bf16 %v6714, %v6714
      %v6763 = vpack.c.bf16 %v6715, %v6715
      %v6764 = vpack.c.bf16 %v6716, %v6716
      %v6765 = vpack.c.bf16 %v6717, %v6717
      %6766 = vst.msk [vmem:[#allocation4 + $0x10] sm:$0xf] %vm1497, %v6718
      %6767 = vst.msk [vmem:[#allocation4 + $0x14] sm:$0xf] %vm1497, %v6719
      %6768 = vst.msk [vmem:[#allocation4 + $0x18] sm:$0xf] %vm1497, %v6720
      %6769 = vst.msk [vmem:[#allocation4 + $0x1c] sm:$0xf] %vm1497, %v6721
      %6770 = vst.msk [vmem:[#allocation4 + $0x20] sm:$0xf] %vm1497, %v6722
      %6771 = vst.msk [vmem:[#allocation4 + $0x24] sm:$0xf] %vm1497, %v6723
      %6772 = vst.msk [vmem:[#allocation4 + $0x28] sm:$0xf] %vm1497, %v6724
      %6773 = vst.msk [vmem:[#allocation4 + $0x2c] sm:$0xf] %vm1497, %v6725
      %6774 = vst.msk [vmem:[#allocation4 + $0x30] sm:$0xf] %vm1497, %v6726
      %6775 = vst.msk [vmem:[#allocation4 + $0x34] sm:$0xf] %vm1497, %v6727
      %6776 = vst.msk [vmem:[#allocation4 + $0x38] sm:$0xf] %vm1497, %v6728
      %6777 = vst.msk [vmem:[#allocation4 + $0x3c] sm:$0xf] %vm1497, %v6729
      %6778 = vst.msk [vmem:[#allocation4 + $0x40] sm:$0xf] %vm1497, %v6730
      %6779 = vst.msk [vmem:[#allocation4 + $0x44] sm:$0xf] %vm1497, %v6731
      %6780 = vst.msk [vmem:[#allocation4 + $0x48] sm:$0xf] %vm1497, %v6732
      %6781 = vst.msk [vmem:[#allocation4 + $0x4c] sm:$0xf] %vm1497, %v6733
      %6782 = vst.msk [vmem:[#allocation4 + $0x50] sm:$0xf] %vm1497, %v6734
      %6783 = vst.msk [vmem:[#allocation4 + $0x54] sm:$0xf] %vm1497, %v6735
      %6784 = vst.msk [vmem:[#allocation4 + $0x58] sm:$0xf] %vm1497, %v6736
      %6785 = vst.msk [vmem:[#allocation4 + $0x5c] sm:$0xf] %vm1497, %v6737
      %6786 = vst.msk [vmem:[#allocation4 + $0x60] sm:$0xf] %vm1497, %v6738
      %6787 = vst.msk [vmem:[#allocation4 + $0x64] sm:$0xf] %vm1497, %v6739
      %6788 = vst.msk [vmem:[#allocation4 + $0x68] sm:$0xf] %vm1497, %v6740
      %6789 = vst.msk [vmem:[#allocation4 + $0x6c] sm:$0xf] %vm1497, %v6741
      %6790 = vst.msk [vmem:[#allocation4 + $0x70] sm:$0xf] %vm1497, %v6742
      %6791 = vst.msk [vmem:[#allocation4 + $0x74] sm:$0xf] %vm1497, %v6743
      %6792 = vst.msk [vmem:[#allocation4 + $0x78] sm:$0xf] %vm1497, %v6744
      %6793 = vst.msk [vmem:[#allocation4 + $0x7c] sm:$0xf] %vm1497, %v6745
      %6794 = vst.msk [vmem:[#allocation4 + $0x80] sm:$0xf] %vm1497, %v6746
      %6795 = vst.msk [vmem:[#allocation4 + $0x84] sm:$0xf] %vm1497, %v6747
      %6796 = vst.msk [vmem:[#allocation4 + $0x88] sm:$0xf] %vm1497, %v6748
      %6797 = vst.msk [vmem:[#allocation4 + $0x8c] sm:$0xf] %vm1497, %v6749
      %6798 = vst.msk [vmem:[#allocation4 + $0x90] sm:$0xf] %vm1497, %v6750
      %6799 = vst.msk [vmem:[#allocation4 + $0x94] sm:$0xf] %vm1497, %v6751
      %6800 = vst.msk [vmem:[#allocation4 + $0x98] sm:$0xf] %vm1497, %v6752
      %6801 = vst.msk [vmem:[#allocation4 + $0x9c] sm:$0xf] %vm1497, %v6753
      %6802 = vst.msk [vmem:[#allocation4 + $0xa0] sm:$0xf] %vm1497, %v6754
      %6803 = vst.msk [vmem:[#allocation4 + $0xa4] sm:$0xf] %vm1497, %v6755
      %6804 = vst.msk [vmem:[#allocation4 + $0xa8] sm:$0xf] %vm1497, %v6756
      %6805 = vst.msk [vmem:[#allocation4 + $0xac] sm:$0xf] %vm1497, %v6757
      %6806 = vst.msk [vmem:[#allocation4 + $0xb0] sm:$0xf] %vm1497, %v6758
      %6807 = vst.msk [vmem:[#allocation4 + $0xb4] sm:$0xf] %vm1497, %v6759
      %6808 = vst.msk [vmem:[#allocation4 + $0xb8] sm:$0xf] %vm1497, %v6760
      %6809 = vst.msk [vmem:[#allocation4 + $0xbc] sm:$0xf] %vm1497, %v6761
      %6810 = vst.msk [vmem:[#allocation4 + $0xc0] sm:$0xf] %vm1497, %v6762
      %6811 = vst.msk [vmem:[#allocation4 + $0xc4] sm:$0xf] %vm1497, %v6763
      %6812 = vst.msk [vmem:[#allocation4 + $0xc8] sm:$0xf] %vm1497, %v6764
      %6813 = vst.msk [vmem:[#allocation4 + $0xcc] sm:$0xf] %vm1497, %v6765
      %v6814 = vld [vmem:[#allocation4] sm:$0x8]
      %v6815 = vld [vmem:[#allocation4 + $0x4] sm:$0xf]
      %v6816 = vld [vmem:[#allocation4 + $0x8] sm:$0xf]
      %v6817 = vld [vmem:[#allocation4 + $0xc] sm:$0xf]
      %v6818 = vld [vmem:[#allocation4 + $0x10] sm:$0xf]
      %v6819 = vld [vmem:[#allocation4 + $0x14] sm:$0xf]
      %v6820 = vld [vmem:[#allocation4 + $0x18] sm:$0xf]
      %v6821 = vld [vmem:[#allocation4 + $0x1c] sm:$0xf]
      %v6822 = vld [vmem:[#allocation4 + $0x20] sm:$0xf]
      %v6823 = vld [vmem:[#allocation4 + $0x24] sm:$0xf]
      %v6824 = vld [vmem:[#allocation4 + $0x28] sm:$0xf]
      %v6825 = vld [vmem:[#allocation4 + $0x2c] sm:$0xf]
      %v6826 = vld [vmem:[#allocation4 + $0x30] sm:$0xf]
      %v6827 = vld [vmem:[#allocation4 + $0x34] sm:$0xf]
      %v6828 = vld [vmem:[#allocation4 + $0x38] sm:$0xf]
      %v6829 = vld [vmem:[#allocation4 + $0x3c] sm:$0xf]
      %v6830 = vld [vmem:[#allocation4 + $0x40] sm:$0xf]
      %v6831 = vld [vmem:[#allocation4 + $0x44] sm:$0xf]
      %v6832 = vld [vmem:[#allocation4 + $0x48] sm:$0xf]
      %v6833 = vld [vmem:[#allocation4 + $0x4c] sm:$0xf]
      %v6834 = vld [vmem:[#allocation4 + $0x50] sm:$0xf]
      %v6835 = vld [vmem:[#allocation4 + $0x54] sm:$0xf]
      %v6836 = vld [vmem:[#allocation4 + $0x58] sm:$0xf]
      %v6837 = vld [vmem:[#allocation4 + $0x5c] sm:$0xf]
      %v6838 = vld [vmem:[#allocation4 + $0x60] sm:$0xf]
      %v6839 = vld [vmem:[#allocation4 + $0x64] sm:$0xf]
      %v6840 = vld [vmem:[#allocation4 + $0x68] sm:$0xf]
      %v6841 = vld [vmem:[#allocation4 + $0x6c] sm:$0xf]
      %v6842 = vld [vmem:[#allocation4 + $0x70] sm:$0xf]
      %v6843 = vld [vmem:[#allocation4 + $0x74] sm:$0xf]
      %v6844 = vld [vmem:[#allocation4 + $0x78] sm:$0xf]
      %v6845 = vld [vmem:[#allocation4 + $0x7c] sm:$0xf]
      %v6846 = vld [vmem:[#allocation4 + $0x80] sm:$0xf]
      %v6847 = vld [vmem:[#allocation4 + $0x84] sm:$0xf]
      %v6848 = vld [vmem:[#allocation4 + $0x88] sm:$0xf]
      %v6849 = vld [vmem:[#allocation4 + $0x8c] sm:$0xf]
      %v6850 = vld [vmem:[#allocation4 + $0x90] sm:$0xf]
      %v6851 = vld [vmem:[#allocation4 + $0x94] sm:$0xf]
      %v6852 = vld [vmem:[#allocation4 + $0x98] sm:$0xf]
      %v6853 = vld [vmem:[#allocation4 + $0x9c] sm:$0xf]
      %v6854 = vld [vmem:[#allocation4 + $0xa0] sm:$0xf]
      %v6855 = vld [vmem:[#allocation4 + $0xa4] sm:$0xf]
      %v6856 = vld [vmem:[#allocation4 + $0xa8] sm:$0xf]
      %v6857 = vld [vmem:[#allocation4 + $0xac] sm:$0xf]
      %v6858 = vld [vmem:[#allocation4 + $0xb0] sm:$0xf]
      %v6859 = vld [vmem:[#allocation4 + $0xb4] sm:$0xf]
      %v6860 = vld [vmem:[#allocation4 + $0xb8] sm:$0xf]
      %v6861 = vld [vmem:[#allocation4 + $0xbc] sm:$0xf]
      %v6862 = vld [vmem:[#allocation4 + $0xc0] sm:$0xf]
      %v6863 = vld [vmem:[#allocation4 + $0xc4] sm:$0x1]
      %v6864 = vld [vmem:[#allocation4 + $0xc] sm:$0x8]
      %v6865 = vld [vmem:[#allocation4 + $0xc4] sm:$0xf]
      %v6866 = vld [vmem:[#allocation4 + $0xc8] sm:$0xf]
      %v6867 = vld [vmem:[#allocation4 + $0xcc] sm:$0xf]
      %v6868 = vld [vmem:[#allocation4 + $0xd0] sm:$0x1]
      %v6869 = vld [vmem:[#allocation4 + $0x18] sm:$0x8]
      %v6870 = vld [vmem:[#allocation4 + $0xd0] sm:$0xf]
      %v6871 = vld [vmem:[#allocation4 + $0xd4] sm:$0xf]
      %v6872 = vld [vmem:[#allocation4 + $0xd8] sm:$0xf]
      %v6873 = vld [vmem:[#allocation4 + $0xdc] sm:$0x1]
      %v6923 = vunpack.c.l.b16 %v6814
      %v6924 = vunpack.c.l.b16 %v6815
      %v6925 = vunpack.c.l.b16 %v6816
      %v6926 = vunpack.c.l.b16 %v6817
      %v6927 = vunpack.c.l.b16 %v6818
      %v6928 = vunpack.c.l.b16 %v6819
      %v6929 = vunpack.c.l.b16 %v6820
      %v6930 = vunpack.c.l.b16 %v6821
      %v6931 = vunpack.c.l.b16 %v6822
      %v6932 = vunpack.c.l.b16 %v6823
      %v6933 = vunpack.c.l.b16 %v6824
      %v6934 = vunpack.c.l.b16 %v6825
      %v6935 = vunpack.c.l.b16 %v6826
      %v6936 = vunpack.c.l.b16 %v6827
      %v6937 = vunpack.c.l.b16 %v6828
      %v6938 = vunpack.c.l.b16 %v6829
      %v6939 = vunpack.c.l.b16 %v6830
      %v6940 = vunpack.c.l.b16 %v6831
      %v6941 = vunpack.c.l.b16 %v6832
      %v6942 = vunpack.c.l.b16 %v6833
      %v6943 = vunpack.c.l.b16 %v6834
      %v6944 = vunpack.c.l.b16 %v6835
      %v6945 = vunpack.c.l.b16 %v6836
      %v6946 = vunpack.c.l.b16 %v6837
      %v6947 = vunpack.c.l.b16 %v6838
      %v6948 = vunpack.c.l.b16 %v6839
      %v6949 = vunpack.c.l.b16 %v6840
      %v6950 = vunpack.c.l.b16 %v6841
      %v6951 = vunpack.c.l.b16 %v6842
      %v6952 = vunpack.c.l.b16 %v6843
      %v6953 = vunpack.c.l.b16 %v6844
      %v6954 = vunpack.c.l.b16 %v6845
      %v6955 = vunpack.c.l.b16 %v6846
      %v6956 = vunpack.c.l.b16 %v6847
      %v6957 = vunpack.c.l.b16 %v6848
      %v6958 = vunpack.c.l.b16 %v6849
      %v6959 = vunpack.c.l.b16 %v6850
      %v6960 = vunpack.c.l.b16 %v6851
      %v6961 = vunpack.c.l.b16 %v6852
      %v6962 = vunpack.c.l.b16 %v6853
      %v6963 = vunpack.c.l.b16 %v6854
      %v6964 = vunpack.c.l.b16 %v6855
      %v6965 = vunpack.c.l.b16 %v6856
      %v6966 = vunpack.c.l.b16 %v6857
      %v6967 = vunpack.c.l.b16 %v6858
      %v6968 = vunpack.c.l.b16 %v6859
      %v6969 = vunpack.c.l.b16 %v6860
      %v6970 = vunpack.c.l.b16 %v6861
      %v6971 = vunpack.c.l.b16 %v6862
      %v6972 = vpack.c.b16 %v6924, %v6923
      %v6973 = vpack.c.b16 %v6926, %v6925
      %v6974 = vpack.c.b16 %v6928, %v6927
      %v6975 = vpack.c.b16 %v6930, %v6929
      %v6976 = vpack.c.b16 %v6932, %v6931
      %v6977 = vpack.c.b16 %v6934, %v6933
      %v6978 = vpack.c.b16 %v6936, %v6935
      %v6979 = vpack.c.b16 %v6938, %v6937
      %v6980 = vpack.c.b16 %v6940, %v6939
      %v6981 = vpack.c.b16 %v6942, %v6941
      %v6982 = vpack.c.b16 %v6944, %v6943
      %v6983 = vpack.c.b16 %v6946, %v6945
      %v6984 = vpack.c.b16 %v6948, %v6947
      %v6985 = vpack.c.b16 %v6950, %v6949
      %v6986 = vpack.c.b16 %v6952, %v6951
      %v6987 = vpack.c.b16 %v6954, %v6953
      %v6988 = vpack.c.b16 %v6956, %v6955
      %v6989 = vpack.c.b16 %v6958, %v6957
      %v6990 = vpack.c.b16 %v6960, %v6959
      %v6991 = vpack.c.b16 %v6962, %v6961
      %v6992 = vpack.c.b16 %v6964, %v6963
      %v6993 = vpack.c.b16 %v6966, %v6965
      %v6994 = vpack.c.b16 %v6968, %v6967
      %v6995 = vpack.c.b16 %v6970, %v6969
      %v6996 = vpack.c.b16 %v6971, %v6971
      %v6997 = vpack.c.b16 %v6925, %v6924
      %v6998 = vpack.c.b16 %v6927, %v6926
      %v6999 = vpack.c.b16 %v6929, %v6928
      %v7000 = vpack.c.b16 %v6931, %v6930
      %v7001 = vpack.c.b16 %v6933, %v6932
      %v7002 = vpack.c.b16 %v6935, %v6934
      %v7003 = vpack.c.b16 %v6937, %v6936
      %v7004 = vpack.c.b16 %v6939, %v6938
      %v7005 = vpack.c.b16 %v6941, %v6940
      %v7006 = vpack.c.b16 %v6943, %v6942
      %v7007 = vpack.c.b16 %v6945, %v6944
      %v7008 = vpack.c.b16 %v6947, %v6946
      %v7009 = vpack.c.b16 %v6949, %v6948
      %v7010 = vpack.c.b16 %v6951, %v6950
      %v7011 = vpack.c.b16 %v6953, %v6952
      %v7012 = vpack.c.b16 %v6955, %v6954
      %v7013 = vpack.c.b16 %v6957, %v6956
      %v7014 = vpack.c.b16 %v6959, %v6958
      %v7015 = vpack.c.b16 %v6961, %v6960
      %v7016 = vpack.c.b16 %v6963, %v6962
      %v7017 = vpack.c.b16 %v6965, %v6964
      %v7018 = vpack.c.b16 %v6967, %v6966
      %v7019 = vpack.c.b16 %v6969, %v6968
      %v7020 = vpack.c.b16 %v6971, %v6970
      %v7022 = vshrl.u32 %v6997, 16
      %v7024 = vrot.slane %v7022, 4
      %v7025 = vshll.u32 %v6997, 16
      %v7027 = vrot.slane %v7025, 5
      %v7028 = vor.u32 %v7024, %v7027
      %v7030 = vshrl.u32 %v6998, 16
      %v7032 = vrot.slane %v7030, 4
      %v7033 = vshll.u32 %v6998, 16
      %v7035 = vrot.slane %v7033, 5
      %v7036 = vor.u32 %v7032, %v7035
      %v7037 = vsel %vm2354, %v7028, %v7036
      %v7039 = vshrl.u32 %v6999, 16
      %v7041 = vrot.slane %v7039, 4
      %v7042 = vshll.u32 %v6999, 16
      %v7044 = vrot.slane %v7042, 5
      %v7045 = vor.u32 %v7041, %v7044
      %v7046 = vsel %vm2354, %v7036, %v7045
      %v7048 = vshrl.u32 %v7000, 16
      %v7050 = vrot.slane %v7048, 4
      %v7051 = vshll.u32 %v7000, 16
      %v7053 = vrot.slane %v7051, 5
      %v7054 = vor.u32 %v7050, %v7053
      %v7055 = vsel %vm2354, %v7045, %v7054
      %v7057 = vshrl.u32 %v7001, 16
      %v7059 = vrot.slane %v7057, 4
      %v7060 = vshll.u32 %v7001, 16
      %v7062 = vrot.slane %v7060, 5
      %v7063 = vor.u32 %v7059, %v7062
      %v7064 = vsel %vm2354, %v7054, %v7063
      %v7066 = vshrl.u32 %v7002, 16
      %v7068 = vrot.slane %v7066, 4
      %v7069 = vshll.u32 %v7002, 16
      %v7071 = vrot.slane %v7069, 5
      %v7072 = vor.u32 %v7068, %v7071
      %v7073 = vsel %vm2354, %v7063, %v7072
      %v7075 = vshrl.u32 %v7003, 16
      %v7077 = vrot.slane %v7075, 4
      %v7078 = vshll.u32 %v7003, 16
      %v7080 = vrot.slane %v7078, 5
      %v7081 = vor.u32 %v7077, %v7080
      %v7082 = vsel %vm2354, %v7072, %v7081
      %v7084 = vshrl.u32 %v7004, 16
      %v7086 = vrot.slane %v7084, 4
      %v7087 = vshll.u32 %v7004, 16
      %v7089 = vrot.slane %v7087, 5
      %v7090 = vor.u32 %v7086, %v7089
      %v7091 = vsel %vm2354, %v7081, %v7090
      %v7093 = vshrl.u32 %v7005, 16
      %v7095 = vrot.slane %v7093, 4
      %v7096 = vshll.u32 %v7005, 16
      %v7098 = vrot.slane %v7096, 5
      %v7099 = vor.u32 %v7095, %v7098
      %v7100 = vsel %vm2354, %v7090, %v7099
      %v7102 = vshrl.u32 %v7006, 16
      %v7104 = vrot.slane %v7102, 4
      %v7105 = vshll.u32 %v7006, 16
      %v7107 = vrot.slane %v7105, 5
      %v7108 = vor.u32 %v7104, %v7107
      %v7109 = vsel %vm2354, %v7099, %v7108
      %v7111 = vshrl.u32 %v7007, 16
      %v7113 = vrot.slane %v7111, 4
      %v7114 = vshll.u32 %v7007, 16
      %v7116 = vrot.slane %v7114, 5
      %v7117 = vor.u32 %v7113, %v7116
      %v7118 = vsel %vm2354, %v7108, %v7117
      %v7120 = vshrl.u32 %v7008, 16
      %v7122 = vrot.slane %v7120, 4
      %v7123 = vshll.u32 %v7008, 16
      %v7125 = vrot.slane %v7123, 5
      %v7126 = vor.u32 %v7122, %v7125
      %v7127 = vsel %vm2354, %v7117, %v7126
      %v7129 = vshrl.u32 %v7009, 16
      %v7131 = vrot.slane %v7129, 4
      %v7132 = vshll.u32 %v7009, 16
      %v7134 = vrot.slane %v7132, 5
      %v7135 = vor.u32 %v7131, %v7134
      %v7136 = vsel %vm2354, %v7126, %v7135
      %v7138 = vshrl.u32 %v7010, 16
      %v7140 = vrot.slane %v7138, 4
      %v7141 = vshll.u32 %v7010, 16
      %v7143 = vrot.slane %v7141, 5
      %v7144 = vor.u32 %v7140, %v7143
      %v7145 = vsel %vm2354, %v7135, %v7144
      %v7147 = vshrl.u32 %v7011, 16
      %v7149 = vrot.slane %v7147, 4
      %v7150 = vshll.u32 %v7011, 16
      %v7152 = vrot.slane %v7150, 5
      %v7153 = vor.u32 %v7149, %v7152
      %v7154 = vsel %vm2354, %v7144, %v7153
      %v7156 = vshrl.u32 %v7012, 16
      %v7158 = vrot.slane %v7156, 4
      %v7159 = vshll.u32 %v7012, 16
      %v7161 = vrot.slane %v7159, 5
      %v7162 = vor.u32 %v7158, %v7161
      %v7163 = vsel %vm2354, %v7153, %v7162
      %v7165 = vshrl.u32 %v7013, 16
      %v7167 = vrot.slane %v7165, 4
      %v7168 = vshll.u32 %v7013, 16
      %v7170 = vrot.slane %v7168, 5
      %v7171 = vor.u32 %v7167, %v7170
      %v7172 = vsel %vm2354, %v7162, %v7171
      %v7174 = vshrl.u32 %v7014, 16
      %v7176 = vrot.slane %v7174, 4
      %v7177 = vshll.u32 %v7014, 16
      %v7179 = vrot.slane %v7177, 5
      %v7180 = vor.u32 %v7176, %v7179
      %v7181 = vsel %vm2354, %v7171, %v7180
      %v7183 = vshrl.u32 %v7015, 16
      %v7185 = vrot.slane %v7183, 4
      %v7186 = vshll.u32 %v7015, 16
      %v7188 = vrot.slane %v7186, 5
      %v7189 = vor.u32 %v7185, %v7188
      %v7190 = vsel %vm2354, %v7180, %v7189
      %v7192 = vshrl.u32 %v7016, 16
      %v7194 = vrot.slane %v7192, 4
      %v7195 = vshll.u32 %v7016, 16
      %v7197 = vrot.slane %v7195, 5
      %v7198 = vor.u32 %v7194, %v7197
      %v7199 = vsel %vm2354, %v7189, %v7198
      %v7201 = vshrl.u32 %v7017, 16
      %v7203 = vrot.slane %v7201, 4
      %v7204 = vshll.u32 %v7017, 16
      %v7206 = vrot.slane %v7204, 5
      %v7207 = vor.u32 %v7203, %v7206
      %v7208 = vsel %vm2354, %v7198, %v7207
      %v7210 = vshrl.u32 %v7018, 16
      %v7212 = vrot.slane %v7210, 4
      %v7213 = vshll.u32 %v7018, 16
      %v7215 = vrot.slane %v7213, 5
      %v7216 = vor.u32 %v7212, %v7215
      %v7217 = vsel %vm2354, %v7207, %v7216
      %v7219 = vshrl.u32 %v7019, 16
      %v7221 = vrot.slane %v7219, 4
      %v7222 = vshll.u32 %v7019, 16
      %v7224 = vrot.slane %v7222, 5
      %v7225 = vor.u32 %v7221, %v7224
      %v7226 = vsel %vm2354, %v7216, %v7225
      %v7228 = vshrl.u32 %v7020, 16
      %v7230 = vrot.slane %v7228, 4
      %v7231 = vshll.u32 %v7020, 16
      %v7233 = vrot.slane %v7231, 5
      %v7234 = vor.u32 %v7230, %v7233
      %v7235 = vsel %vm2354, %v7225, %v7234
      %7236 = vrot.lane.b32.xlu0 %v7028, 16
      %v7237 = vpop.permute.xlu0 %7236
      %7238 = vrot.lane.b32.xlu0 %v7037, 16
      %v7239 = vpop.permute.xlu0 %7238
      %7240 = vrot.lane.b32.xlu0 %v7046, 16
      %v7241 = vpop.permute.xlu0 %7240
      %7242 = vrot.lane.b32.xlu0 %v7055, 16
      %v7243 = vpop.permute.xlu0 %7242
      %7244 = vrot.lane.b32.xlu0 %v7064, 16
      %v7245 = vpop.permute.xlu0 %7244
      %7246 = vrot.lane.b32.xlu0 %v7073, 16
      %v7247 = vpop.permute.xlu0 %7246
      %7248 = vrot.lane.b32.xlu0 %v7082, 16
      %v7249 = vpop.permute.xlu0 %7248
      %7250 = vrot.lane.b32.xlu0 %v7091, 16
      %v7251 = vpop.permute.xlu0 %7250
      %7252 = vrot.lane.b32.xlu0 %v7100, 16
      %v7253 = vpop.permute.xlu0 %7252
      %7254 = vrot.lane.b32.xlu0 %v7109, 16
      %v7255 = vpop.permute.xlu0 %7254
      %7256 = vrot.lane.b32.xlu0 %v7118, 16
      %v7257 = vpop.permute.xlu0 %7256
      %7258 = vrot.lane.b32.xlu0 %v7127, 16
      %v7259 = vpop.permute.xlu0 %7258
      %7260 = vrot.lane.b32.xlu0 %v7136, 16
      %v7261 = vpop.permute.xlu0 %7260
      %7262 = vrot.lane.b32.xlu0 %v7145, 16
      %v7263 = vpop.permute.xlu0 %7262
      %7264 = vrot.lane.b32.xlu0 %v7154, 16
      %v7265 = vpop.permute.xlu0 %7264
      %7266 = vrot.lane.b32.xlu0 %v7163, 16
      %v7267 = vpop.permute.xlu0 %7266
      %7268 = vrot.lane.b32.xlu0 %v7172, 16
      %v7269 = vpop.permute.xlu0 %7268
      %7270 = vrot.lane.b32.xlu0 %v7181, 16
      %v7271 = vpop.permute.xlu0 %7270
      %7272 = vrot.lane.b32.xlu0 %v7190, 16
      %v7273 = vpop.permute.xlu0 %7272
      %7274 = vrot.lane.b32.xlu0 %v7199, 16
      %v7275 = vpop.permute.xlu0 %7274
      %7276 = vrot.lane.b32.xlu0 %v7208, 16
      %v7277 = vpop.permute.xlu0 %7276
      %7278 = vrot.lane.b32.xlu0 %v7217, 16
      %v7279 = vpop.permute.xlu0 %7278
      %7280 = vrot.lane.b32.xlu0 %v7226, 16
      %v7281 = vpop.permute.xlu0 %7280
      %7282 = vrot.lane.b32.xlu0 %v7235, 16
      %v7283 = vpop.permute.xlu0 %7282
      %7284 = vrot.lane.b32.xlu0 %v7234, 16
      %v7285 = vpop.permute.xlu0 %7284
      %v7287 = vunpack.c.l.b16 %v6863
      %v7288 = vpack.c.b16 %v7287, %v7287
      %v7289 = vrot.slane %v6997, 5
      %v7290 = vrot.slane %v6998, 5
      %v7291 = vsel %vm2623, %v7289, %v7290
      %v7292 = vrot.slane %v6999, 5
      %v7293 = vsel %vm2623, %v7290, %v7292
      %v7294 = vrot.slane %v7000, 5
      %v7295 = vsel %vm2623, %v7292, %v7294
      %v7296 = vrot.slane %v7001, 5
      %v7297 = vsel %vm2623, %v7294, %v7296
      %v7298 = vrot.slane %v7002, 5
      %v7299 = vsel %vm2623, %v7296, %v7298
      %v7300 = vrot.slane %v7003, 5
      %v7301 = vsel %vm2623, %v7298, %v7300
      %v7302 = vrot.slane %v7004, 5
      %v7303 = vsel %vm2623, %v7300, %v7302
      %v7304 = vrot.slane %v7005, 5
      %v7305 = vsel %vm2623, %v7302, %v7304
      %v7306 = vrot.slane %v7006, 5
      %v7307 = vsel %vm2623, %v7304, %v7306
      %v7308 = vrot.slane %v7007, 5
      %v7309 = vsel %vm2623, %v7306, %v7308
      %v7310 = vrot.slane %v7008, 5
      %v7311 = vsel %vm2623, %v7308, %v7310
      %v7312 = vrot.slane %v7009, 5
      %v7313 = vsel %vm2623, %v7310, %v7312
      %v7314 = vrot.slane %v7010, 5
      %v7315 = vsel %vm2623, %v7312, %v7314
      %v7316 = vrot.slane %v7011, 5
      %v7317 = vsel %vm2623, %v7314, %v7316
      %v7318 = vrot.slane %v7012, 5
      %v7319 = vsel %vm2623, %v7316, %v7318
      %v7320 = vrot.slane %v7013, 5
      %v7321 = vsel %vm2623, %v7318, %v7320
      %v7322 = vrot.slane %v7014, 5
      %v7323 = vsel %vm2623, %v7320, %v7322
      %v7324 = vrot.slane %v7015, 5
      %v7325 = vsel %vm2623, %v7322, %v7324
      %v7326 = vrot.slane %v7016, 5
      %v7327 = vsel %vm2623, %v7324, %v7326
      %v7328 = vrot.slane %v7017, 5
      %v7329 = vsel %vm2623, %v7326, %v7328
      %v7330 = vrot.slane %v7018, 5
      %v7331 = vsel %vm2623, %v7328, %v7330
      %v7332 = vrot.slane %v7019, 5
      %v7333 = vsel %vm2623, %v7330, %v7332
      %v7334 = vrot.slane %v7020, 5
      %v7335 = vsel %vm2623, %v7332, %v7334
      %v7336 = vrot.slane %v7288, 5
      %v7337 = vsel %vm2623, %v7334, %v7336
      %7338 = vrot.lane.b32.xlu0 %v7289, 32
      %v7339 = vpop.permute.xlu0 %7338
      %7340 = vrot.lane.b32.xlu0 %v7291, 32
      %v7341 = vpop.permute.xlu0 %7340
      %7342 = vrot.lane.b32.xlu0 %v7293, 32
      %v7343 = vpop.permute.xlu0 %7342
      %7344 = vrot.lane.b32.xlu0 %v7295, 32
      %v7345 = vpop.permute.xlu0 %7344
      %7346 = vrot.lane.b32.xlu0 %v7297, 32
      %v7347 = vpop.permute.xlu0 %7346
      %7348 = vrot.lane.b32.xlu0 %v7299, 32
      %v7349 = vpop.permute.xlu0 %7348
      %7350 = vrot.lane.b32.xlu0 %v7301, 32
      %v7351 = vpop.permute.xlu0 %7350
      %7352 = vrot.lane.b32.xlu0 %v7303, 32
      %v7353 = vpop.permute.xlu0 %7352
      %7354 = vrot.lane.b32.xlu0 %v7305, 32
      %v7355 = vpop.permute.xlu0 %7354
      %7356 = vrot.lane.b32.xlu0 %v7307, 32
      %v7357 = vpop.permute.xlu0 %7356
      %7358 = vrot.lane.b32.xlu0 %v7309, 32
      %v7359 = vpop.permute.xlu0 %7358
      %7360 = vrot.lane.b32.xlu0 %v7311, 32
      %v7361 = vpop.permute.xlu0 %7360
      %7362 = vrot.lane.b32.xlu0 %v7313, 32
      %v7363 = vpop.permute.xlu0 %7362
      %7364 = vrot.lane.b32.xlu0 %v7315, 32
      %v7365 = vpop.permute.xlu0 %7364
      %7366 = vrot.lane.b32.xlu0 %v7317, 32
      %v7367 = vpop.permute.xlu0 %7366
      %7368 = vrot.lane.b32.xlu0 %v7319, 32
      %v7369 = vpop.permute.xlu0 %7368
      %7370 = vrot.lane.b32.xlu0 %v7321, 32
      %v7371 = vpop.permute.xlu0 %7370
      %7372 = vrot.lane.b32.xlu0 %v7323, 32
      %v7373 = vpop.permute.xlu0 %7372
      %7374 = vrot.lane.b32.xlu0 %v7325, 32
      %v7375 = vpop.permute.xlu0 %7374
      %7376 = vrot.lane.b32.xlu0 %v7327, 32
      %v7377 = vpop.permute.xlu0 %7376
      %7378 = vrot.lane.b32.xlu0 %v7329, 32
      %v7379 = vpop.permute.xlu0 %7378
      %7380 = vrot.lane.b32.xlu0 %v7331, 32
      %v7381 = vpop.permute.xlu0 %7380
      %7382 = vrot.lane.b32.xlu0 %v7333, 32
      %v7383 = vpop.permute.xlu0 %7382
      %7384 = vrot.lane.b32.xlu0 %v7335, 32
      %v7385 = vpop.permute.xlu0 %7384
      %7386 = vrot.lane.b32.xlu0 %v7337, 32
      %v7387 = vpop.permute.xlu0 %7386
      %v7392 = vunpack.c.l.b16 %v6864
      %v7393 = vunpack.c.l.b16 %v6865
      %v7394 = vunpack.c.l.b16 %v6866
      %v7395 = vunpack.c.l.b16 %v6867
      %v7396 = vpack.c.b16 %v6927, %v7392
      %v7397 = vpack.c.b16 %v7394, %v7393
      %v7398 = vpack.c.b16 %v7395, %v7395
      %7399 = vrot.lane.b32.xlu0 %v7396, 48
      %v7400 = vpop.permute.xlu0 %7399
      %7401 = vrot.lane.b32.xlu0 %v6999, 48
      %v7402 = vpop.permute.xlu0 %7401
      %7403 = vrot.lane.b32.xlu0 %v7000, 48
      %v7404 = vpop.permute.xlu0 %7403
      %7405 = vrot.lane.b32.xlu0 %v7001, 48
      %v7406 = vpop.permute.xlu0 %7405
      %7407 = vrot.lane.b32.xlu0 %v7002, 48
      %v7408 = vpop.permute.xlu0 %7407
      %7409 = vrot.lane.b32.xlu0 %v7003, 48
      %v7410 = vpop.permute.xlu0 %7409
      %7411 = vrot.lane.b32.xlu0 %v7004, 48
      %v7412 = vpop.permute.xlu0 %7411
      %7413 = vrot.lane.b32.xlu0 %v7005, 48
      %v7414 = vpop.permute.xlu0 %7413
      %7415 = vrot.lane.b32.xlu0 %v7006, 48
      %v7416 = vpop.permute.xlu0 %7415
      %7417 = vrot.lane.b32.xlu0 %v7007, 48
      %v7418 = vpop.permute.xlu0 %7417
      %7419 = vrot.lane.b32.xlu0 %v7008, 48
      %v7420 = vpop.permute.xlu0 %7419
      %7421 = vrot.lane.b32.xlu0 %v7009, 48
      %v7422 = vpop.permute.xlu0 %7421
      %7423 = vrot.lane.b32.xlu0 %v7010, 48
      %v7424 = vpop.permute.xlu0 %7423
      %7425 = vrot.lane.b32.xlu0 %v7011, 48
      %v7426 = vpop.permute.xlu0 %7425
      %7427 = vrot.lane.b32.xlu0 %v7012, 48
      %v7428 = vpop.permute.xlu0 %7427
      %7429 = vrot.lane.b32.xlu0 %v7013, 48
      %v7430 = vpop.permute.xlu0 %7429
      %7431 = vrot.lane.b32.xlu0 %v7014, 48
      %v7432 = vpop.permute.xlu0 %7431
      %7433 = vrot.lane.b32.xlu0 %v7015, 48
      %v7434 = vpop.permute.xlu0 %7433
      %7435 = vrot.lane.b32.xlu0 %v7016, 48
      %v7436 = vpop.permute.xlu0 %7435
      %7437 = vrot.lane.b32.xlu0 %v7017, 48
      %v7438 = vpop.permute.xlu0 %7437
      %7439 = vrot.lane.b32.xlu0 %v7018, 48
      %v7440 = vpop.permute.xlu0 %7439
      %7441 = vrot.lane.b32.xlu0 %v7019, 48
      %v7442 = vpop.permute.xlu0 %7441
      %7443 = vrot.lane.b32.xlu0 %v7020, 48
      %v7444 = vpop.permute.xlu0 %7443
      %7445 = vrot.lane.b32.xlu0 %v7397, 48
      %v7446 = vpop.permute.xlu0 %7445
      %7447 = vrot.lane.b32.xlu0 %v7398, 48
      %v7448 = vpop.permute.xlu0 %7447
      %v7449 = vpack.c.b16 %v7393, %v6971
      %v7450 = vpack.c.b16 %v7395, %v7394
      %v7452 = vshrl.u32 %v6974, 16
      %v7454 = vrot.slane %v7452, 4
      %v7455 = vshll.u32 %v6974, 16
      %v7457 = vrot.slane %v7455, 5
      %v7458 = vor.u32 %v7454, %v7457
      %v7460 = vshrl.u32 %v6975, 16
      %v7462 = vrot.slane %v7460, 4
      %v7463 = vshll.u32 %v6975, 16
      %v7465 = vrot.slane %v7463, 5
      %v7466 = vor.u32 %v7462, %v7465
      %v7467 = vsel %vm2354, %v7458, %v7466
      %v7469 = vshrl.u32 %v6976, 16
      %v7471 = vrot.slane %v7469, 4
      %v7472 = vshll.u32 %v6976, 16
      %v7474 = vrot.slane %v7472, 5
      %v7475 = vor.u32 %v7471, %v7474
      %v7476 = vsel %vm2354, %v7466, %v7475
      %v7478 = vshrl.u32 %v6977, 16
      %v7480 = vrot.slane %v7478, 4
      %v7481 = vshll.u32 %v6977, 16
      %v7483 = vrot.slane %v7481, 5
      %v7484 = vor.u32 %v7480, %v7483
      %v7485 = vsel %vm2354, %v7475, %v7484
      %v7487 = vshrl.u32 %v6978, 16
      %v7489 = vrot.slane %v7487, 4
      %v7490 = vshll.u32 %v6978, 16
      %v7492 = vrot.slane %v7490, 5
      %v7493 = vor.u32 %v7489, %v7492
      %v7494 = vsel %vm2354, %v7484, %v7493
      %v7496 = vshrl.u32 %v6979, 16
      %v7498 = vrot.slane %v7496, 4
      %v7499 = vshll.u32 %v6979, 16
      %v7501 = vrot.slane %v7499, 5
      %v7502 = vor.u32 %v7498, %v7501
      %v7503 = vsel %vm2354, %v7493, %v7502
      %v7505 = vshrl.u32 %v6980, 16
      %v7507 = vrot.slane %v7505, 4
      %v7508 = vshll.u32 %v6980, 16
      %v7510 = vrot.slane %v7508, 5
      %v7511 = vor.u32 %v7507, %v7510
      %v7512 = vsel %vm2354, %v7502, %v7511
      %v7514 = vshrl.u32 %v6981, 16
      %v7516 = vrot.slane %v7514, 4
      %v7517 = vshll.u32 %v6981, 16
      %v7519 = vrot.slane %v7517, 5
      %v7520 = vor.u32 %v7516, %v7519
      %v7521 = vsel %vm2354, %v7511, %v7520
      %v7523 = vshrl.u32 %v6982, 16
      %v7525 = vrot.slane %v7523, 4
      %v7526 = vshll.u32 %v6982, 16
      %v7528 = vrot.slane %v7526, 5
      %v7529 = vor.u32 %v7525, %v7528
      %v7530 = vsel %vm2354, %v7520, %v7529
      %v7532 = vshrl.u32 %v6983, 16
      %v7534 = vrot.slane %v7532, 4
      %v7535 = vshll.u32 %v6983, 16
      %v7537 = vrot.slane %v7535, 5
      %v7538 = vor.u32 %v7534, %v7537
      %v7539 = vsel %vm2354, %v7529, %v7538
      %v7541 = vshrl.u32 %v6984, 16
      %v7543 = vrot.slane %v7541, 4
      %v7544 = vshll.u32 %v6984, 16
      %v7546 = vrot.slane %v7544, 5
      %v7547 = vor.u32 %v7543, %v7546
      %v7548 = vsel %vm2354, %v7538, %v7547
      %v7550 = vshrl.u32 %v6985, 16
      %v7552 = vrot.slane %v7550, 4
      %v7553 = vshll.u32 %v6985, 16
      %v7555 = vrot.slane %v7553, 5
      %v7556 = vor.u32 %v7552, %v7555
      %v7557 = vsel %vm2354, %v7547, %v7556
      %v7559 = vshrl.u32 %v6986, 16
      %v7561 = vrot.slane %v7559, 4
      %v7562 = vshll.u32 %v6986, 16
      %v7564 = vrot.slane %v7562, 5
      %v7565 = vor.u32 %v7561, %v7564
      %v7566 = vsel %vm2354, %v7556, %v7565
      %v7568 = vshrl.u32 %v6987, 16
      %v7570 = vrot.slane %v7568, 4
      %v7571 = vshll.u32 %v6987, 16
      %v7573 = vrot.slane %v7571, 5
      %v7574 = vor.u32 %v7570, %v7573
      %v7575 = vsel %vm2354, %v7565, %v7574
      %v7577 = vshrl.u32 %v6988, 16
      %v7579 = vrot.slane %v7577, 4
      %v7580 = vshll.u32 %v6988, 16
      %v7582 = vrot.slane %v7580, 5
      %v7583 = vor.u32 %v7579, %v7582
      %v7584 = vsel %vm2354, %v7574, %v7583
      %v7586 = vshrl.u32 %v6989, 16
      %v7588 = vrot.slane %v7586, 4
      %v7589 = vshll.u32 %v6989, 16
      %v7591 = vrot.slane %v7589, 5
      %v7592 = vor.u32 %v7588, %v7591
      %v7593 = vsel %vm2354, %v7583, %v7592
      %v7595 = vshrl.u32 %v6990, 16
      %v7597 = vrot.slane %v7595, 4
      %v7598 = vshll.u32 %v6990, 16
      %v7600 = vrot.slane %v7598, 5
      %v7601 = vor.u32 %v7597, %v7600
      %v7602 = vsel %vm2354, %v7592, %v7601
      %v7604 = vshrl.u32 %v6991, 16
      %v7606 = vrot.slane %v7604, 4
      %v7607 = vshll.u32 %v6991, 16
      %v7609 = vrot.slane %v7607, 5
      %v7610 = vor.u32 %v7606, %v7609
      %v7611 = vsel %vm2354, %v7601, %v7610
      %v7613 = vshrl.u32 %v6992, 16
      %v7615 = vrot.slane %v7613, 4
      %v7616 = vshll.u32 %v6992, 16
      %v7618 = vrot.slane %v7616, 5
      %v7619 = vor.u32 %v7615, %v7618
      %v7620 = vsel %vm2354, %v7610, %v7619
      %v7622 = vshrl.u32 %v6993, 16
      %v7624 = vrot.slane %v7622, 4
      %v7625 = vshll.u32 %v6993, 16
      %v7627 = vrot.slane %v7625, 5
      %v7628 = vor.u32 %v7624, %v7627
      %v7629 = vsel %vm2354, %v7619, %v7628
      %v7631 = vshrl.u32 %v6994, 16
      %v7633 = vrot.slane %v7631, 4
      %v7634 = vshll.u32 %v6994, 16
      %v7636 = vrot.slane %v7634, 5
      %v7637 = vor.u32 %v7633, %v7636
      %v7638 = vsel %vm2354, %v7628, %v7637
      %v7640 = vshrl.u32 %v6995, 16
      %v7642 = vrot.slane %v7640, 4
      %v7643 = vshll.u32 %v6995, 16
      %v7645 = vrot.slane %v7643, 5
      %v7646 = vor.u32 %v7642, %v7645
      %v7647 = vsel %vm2354, %v7637, %v7646
      %v7649 = vshrl.u32 %v7449, 16
      %v7651 = vrot.slane %v7649, 4
      %v7652 = vshll.u32 %v7449, 16
      %v7654 = vrot.slane %v7652, 5
      %v7655 = vor.u32 %v7651, %v7654
      %v7656 = vsel %vm2354, %v7646, %v7655
      %v7658 = vshrl.u32 %v7450, 16
      %v7660 = vrot.slane %v7658, 4
      %v7661 = vshll.u32 %v7450, 16
      %v7663 = vrot.slane %v7661, 5
      %v7664 = vor.u32 %v7660, %v7663
      %v7665 = vsel %vm2354, %v7655, %v7664
      %7666 = vrot.lane.b32.xlu0 %v7458, 64
      %v7667 = vpop.permute.xlu0 %7666
      %7668 = vrot.lane.b32.xlu0 %v7467, 64
      %v7669 = vpop.permute.xlu0 %7668
      %7670 = vrot.lane.b32.xlu0 %v7476, 64
      %v7671 = vpop.permute.xlu0 %7670
      %7672 = vrot.lane.b32.xlu0 %v7485, 64
      %v7673 = vpop.permute.xlu0 %7672
      %7674 = vrot.lane.b32.xlu0 %v7494, 64
      %v7675 = vpop.permute.xlu0 %7674
      %7676 = vrot.lane.b32.xlu0 %v7503, 64
      %v7677 = vpop.permute.xlu0 %7676
      %7678 = vrot.lane.b32.xlu0 %v7512, 64
      %v7679 = vpop.permute.xlu0 %7678
      %7680 = vrot.lane.b32.xlu0 %v7521, 64
      %v7681 = vpop.permute.xlu0 %7680
      %7682 = vrot.lane.b32.xlu0 %v7530, 64
      %v7683 = vpop.permute.xlu0 %7682
      %7684 = vrot.lane.b32.xlu0 %v7539, 64
      %v7685 = vpop.permute.xlu0 %7684
      %7686 = vrot.lane.b32.xlu0 %v7548, 64
      %v7687 = vpop.permute.xlu0 %7686
      %7688 = vrot.lane.b32.xlu0 %v7557, 64
      %v7689 = vpop.permute.xlu0 %7688
      %7690 = vrot.lane.b32.xlu0 %v7566, 64
      %v7691 = vpop.permute.xlu0 %7690
      %7692 = vrot.lane.b32.xlu0 %v7575, 64
      %v7693 = vpop.permute.xlu0 %7692
      %7694 = vrot.lane.b32.xlu0 %v7584, 64
      %v7695 = vpop.permute.xlu0 %7694
      %7696 = vrot.lane.b32.xlu0 %v7593, 64
      %v7697 = vpop.permute.xlu0 %7696
      %7698 = vrot.lane.b32.xlu0 %v7602, 64
      %v7699 = vpop.permute.xlu0 %7698
      %7700 = vrot.lane.b32.xlu0 %v7611, 64
      %v7701 = vpop.permute.xlu0 %7700
      %7702 = vrot.lane.b32.xlu0 %v7620, 64
      %v7703 = vpop.permute.xlu0 %7702
      %7704 = vrot.lane.b32.xlu0 %v7629, 64
      %v7705 = vpop.permute.xlu0 %7704
      %7706 = vrot.lane.b32.xlu0 %v7638, 64
      %v7707 = vpop.permute.xlu0 %7706
      %7708 = vrot.lane.b32.xlu0 %v7647, 64
      %v7709 = vpop.permute.xlu0 %7708
      %7710 = vrot.lane.b32.xlu0 %v7656, 64
      %v7711 = vpop.permute.xlu0 %7710
      %7712 = vrot.lane.b32.xlu0 %v7665, 64
      %v7713 = vpop.permute.xlu0 %7712
      %7714 = vrot.lane.b32.xlu0 %v7664, 64
      %v7715 = vpop.permute.xlu0 %7714
      %v7717 = vunpack.c.l.b16 %v6868
      %v7718 = vpack.c.b16 %v7717, %v7717
      %v7719 = vrot.slane %v6974, 5
      %v7720 = vrot.slane %v6975, 5
      %v7721 = vsel %vm2623, %v7719, %v7720
      %v7722 = vrot.slane %v6976, 5
      %v7723 = vsel %vm2623, %v7720, %v7722
      %v7724 = vrot.slane %v6977, 5
      %v7725 = vsel %vm2623, %v7722, %v7724
      %v7726 = vrot.slane %v6978, 5
      %v7727 = vsel %vm2623, %v7724, %v7726
      %v7728 = vrot.slane %v6979, 5
      %v7729 = vsel %vm2623, %v7726, %v7728
      %v7730 = vrot.slane %v6980, 5
      %v7731 = vsel %vm2623, %v7728, %v7730
      %v7732 = vrot.slane %v6981, 5
      %v7733 = vsel %vm2623, %v7730, %v7732
      %v7734 = vrot.slane %v6982, 5
      %v7735 = vsel %vm2623, %v7732, %v7734
      %v7736 = vrot.slane %v6983, 5
      %v7737 = vsel %vm2623, %v7734, %v7736
      %v7738 = vrot.slane %v6984, 5
      %v7739 = vsel %vm2623, %v7736, %v7738
      %v7740 = vrot.slane %v6985, 5
      %v7741 = vsel %vm2623, %v7738, %v7740
      %v7742 = vrot.slane %v6986, 5
      %v7743 = vsel %vm2623, %v7740, %v7742
      %v7744 = vrot.slane %v6987, 5
      %v7745 = vsel %vm2623, %v7742, %v7744
      %v7746 = vrot.slane %v6988, 5
      %v7747 = vsel %vm2623, %v7744, %v7746
      %v7748 = vrot.slane %v6989, 5
      %v7749 = vsel %vm2623, %v7746, %v7748
      %v7750 = vrot.slane %v6990, 5
      %v7751 = vsel %vm2623, %v7748, %v7750
      %v7752 = vrot.slane %v6991, 5
      %v7753 = vsel %vm2623, %v7750, %v7752
      %v7754 = vrot.slane %v6992, 5
      %v7755 = vsel %vm2623, %v7752, %v7754
      %v7756 = vrot.slane %v6993, 5
      %v7757 = vsel %vm2623, %v7754, %v7756
      %v7758 = vrot.slane %v6994, 5
      %v7759 = vsel %vm2623, %v7756, %v7758
      %v7760 = vrot.slane %v6995, 5
      %v7761 = vsel %vm2623, %v7758, %v7760
      %v7762 = vrot.slane %v7449, 5
      %v7763 = vsel %vm2623, %v7760, %v7762
      %v7764 = vrot.slane %v7450, 5
      %v7765 = vsel %vm2623, %v7762, %v7764
      %v7766 = vrot.slane %v7718, 5
      %v7767 = vsel %vm2623, %v7764, %v7766
      %7768 = vrot.lane.b32.xlu0 %v7719, 80
      %v7769 = vpop.permute.xlu0 %7768
      %7770 = vrot.lane.b32.xlu0 %v7721, 80
      %v7771 = vpop.permute.xlu0 %7770
      %7772 = vrot.lane.b32.xlu0 %v7723, 80
      %v7773 = vpop.permute.xlu0 %7772
      %7774 = vrot.lane.b32.xlu0 %v7725, 80
      %v7775 = vpop.permute.xlu0 %7774
      %7776 = vrot.lane.b32.xlu0 %v7727, 80
      %v7777 = vpop.permute.xlu0 %7776
      %7778 = vrot.lane.b32.xlu0 %v7729, 80
      %v7779 = vpop.permute.xlu0 %7778
      %7780 = vrot.lane.b32.xlu0 %v7731, 80
      %v7781 = vpop.permute.xlu0 %7780
      %7782 = vrot.lane.b32.xlu0 %v7733, 80
      %v7783 = vpop.permute.xlu0 %7782
      %7784 = vrot.lane.b32.xlu0 %v7735, 80
      %v7785 = vpop.permute.xlu0 %7784
      %7786 = vrot.lane.b32.xlu0 %v7737, 80
      %v7787 = vpop.permute.xlu0 %7786
      %7788 = vrot.lane.b32.xlu0 %v7739, 80
      %v7789 = vpop.permute.xlu0 %7788
      %7790 = vrot.lane.b32.xlu0 %v7741, 80
      %v7791 = vpop.permute.xlu0 %7790
      %7792 = vrot.lane.b32.xlu0 %v7743, 80
      %v7793 = vpop.permute.xlu0 %7792
      %7794 = vrot.lane.b32.xlu0 %v7745, 80
      %v7795 = vpop.permute.xlu0 %7794
      %7796 = vrot.lane.b32.xlu0 %v7747, 80
      %v7797 = vpop.permute.xlu0 %7796
      %7798 = vrot.lane.b32.xlu0 %v7749, 80
      %v7799 = vpop.permute.xlu0 %7798
      %7800 = vrot.lane.b32.xlu0 %v7751, 80
      %v7801 = vpop.permute.xlu0 %7800
      %7802 = vrot.lane.b32.xlu0 %v7753, 80
      %v7803 = vpop.permute.xlu0 %7802
      %7804 = vrot.lane.b32.xlu0 %v7755, 80
      %v7805 = vpop.permute.xlu0 %7804
      %7806 = vrot.lane.b32.xlu0 %v7757, 80
      %v7807 = vpop.permute.xlu0 %7806
      %7808 = vrot.lane.b32.xlu0 %v7759, 80
      %v7809 = vpop.permute.xlu0 %7808
      %7810 = vrot.lane.b32.xlu0 %v7761, 80
      %v7811 = vpop.permute.xlu0 %7810
      %7812 = vrot.lane.b32.xlu0 %v7763, 80
      %v7813 = vpop.permute.xlu0 %7812
      %7814 = vrot.lane.b32.xlu0 %v7765, 80
      %v7815 = vpop.permute.xlu0 %7814
      %7816 = vrot.lane.b32.xlu0 %v7767, 80
      %v7817 = vpop.permute.xlu0 %7816
      %v7822 = vunpack.c.l.b16 %v6869
      %v7823 = vunpack.c.l.b16 %v6870
      %v7824 = vunpack.c.l.b16 %v6871
      %v7825 = vunpack.c.l.b16 %v6872
      %v7826 = vpack.c.b16 %v6930, %v7822
      %v7827 = vpack.c.b16 %v7824, %v7823
      %v7828 = vpack.c.b16 %v7825, %v7825
      %7829 = vrot.lane.b32.xlu0 %v7826, 96
      %v7830 = vpop.permute.xlu0 %7829
      %7831 = vrot.lane.b32.xlu0 %v6976, 96
      %v7832 = vpop.permute.xlu0 %7831
      %7833 = vrot.lane.b32.xlu0 %v6977, 96
      %v7834 = vpop.permute.xlu0 %7833
      %7835 = vrot.lane.b32.xlu0 %v6978, 96
      %v7836 = vpop.permute.xlu0 %7835
      %7837 = vrot.lane.b32.xlu0 %v6979, 96
      %v7838 = vpop.permute.xlu0 %7837
      %7839 = vrot.lane.b32.xlu0 %v6980, 96
      %v7840 = vpop.permute.xlu0 %7839
      %7841 = vrot.lane.b32.xlu0 %v6981, 96
      %v7842 = vpop.permute.xlu0 %7841
      %7843 = vrot.lane.b32.xlu0 %v6982, 96
      %v7844 = vpop.permute.xlu0 %7843
      %7845 = vrot.lane.b32.xlu0 %v6983, 96
      %v7846 = vpop.permute.xlu0 %7845
      %7847 = vrot.lane.b32.xlu0 %v6984, 96
      %v7848 = vpop.permute.xlu0 %7847
      %7849 = vrot.lane.b32.xlu0 %v6985, 96
      %v7850 = vpop.permute.xlu0 %7849
      %7851 = vrot.lane.b32.xlu0 %v6986, 96
      %v7852 = vpop.permute.xlu0 %7851
      %7853 = vrot.lane.b32.xlu0 %v6987, 96
      %v7854 = vpop.permute.xlu0 %7853
      %7855 = vrot.lane.b32.xlu0 %v6988, 96
      %v7856 = vpop.permute.xlu0 %7855
      %7857 = vrot.lane.b32.xlu0 %v6989, 96
      %v7858 = vpop.permute.xlu0 %7857
      %7859 = vrot.lane.b32.xlu0 %v6990, 96
      %v7860 = vpop.permute.xlu0 %7859
      %7861 = vrot.lane.b32.xlu0 %v6991, 96
      %v7862 = vpop.permute.xlu0 %7861
      %7863 = vrot.lane.b32.xlu0 %v6992, 96
      %v7864 = vpop.permute.xlu0 %7863
      %7865 = vrot.lane.b32.xlu0 %v6993, 96
      %v7866 = vpop.permute.xlu0 %7865
      %7867 = vrot.lane.b32.xlu0 %v6994, 96
      %v7868 = vpop.permute.xlu0 %7867
      %7869 = vrot.lane.b32.xlu0 %v6995, 96
      %v7870 = vpop.permute.xlu0 %7869
      %7871 = vrot.lane.b32.xlu0 %v7449, 96
      %v7872 = vpop.permute.xlu0 %7871
      %7873 = vrot.lane.b32.xlu0 %v7450, 96
      %v7874 = vpop.permute.xlu0 %7873
      %7875 = vrot.lane.b32.xlu0 %v7827, 96
      %v7876 = vpop.permute.xlu0 %7875
      %7877 = vrot.lane.b32.xlu0 %v7828, 96
      %v7878 = vpop.permute.xlu0 %7877
      %v7879 = vpack.c.b16 %v7823, %v7395
      %v7880 = vpack.c.b16 %v7825, %v7824
      %v7882 = vshrl.u32 %v7397, 16
      %v7884 = vrot.slane %v7882, 4
      %v7885 = vshll.u32 %v7397, 16
      %v7887 = vrot.slane %v7885, 5
      %v7888 = vor.u32 %v7884, %v7887
      %v7889 = vsel %vm2354, %v7234, %v7888
      %v7891 = vshrl.u32 %v7879, 16
      %v7893 = vrot.slane %v7891, 4
      %v7894 = vshll.u32 %v7879, 16
      %v7896 = vrot.slane %v7894, 5
      %v7897 = vor.u32 %v7893, %v7896
      %v7898 = vsel %vm2354, %v7888, %v7897
      %v7900 = vshrl.u32 %v7880, 16
      %v7902 = vrot.slane %v7900, 4
      %v7903 = vshll.u32 %v7880, 16
      %v7905 = vrot.slane %v7903, 5
      %v7906 = vor.u32 %v7902, %v7905
      %v7907 = vsel %vm2354, %v7897, %v7906
      %7908 = vrot.lane.b32.xlu0 %v7054, 112
      %v7909 = vpop.permute.xlu0 %7908
      %7910 = vrot.lane.b32.xlu0 %v7064, 112
      %v7911 = vpop.permute.xlu0 %7910
      %7912 = vrot.lane.b32.xlu0 %v7073, 112
      %v7913 = vpop.permute.xlu0 %7912
      %7914 = vrot.lane.b32.xlu0 %v7082, 112
      %v7915 = vpop.permute.xlu0 %7914
      %7916 = vrot.lane.b32.xlu0 %v7091, 112
      %v7917 = vpop.permute.xlu0 %7916
      %7918 = vrot.lane.b32.xlu0 %v7100, 112
      %v7919 = vpop.permute.xlu0 %7918
      %7920 = vrot.lane.b32.xlu0 %v7109, 112
      %v7921 = vpop.permute.xlu0 %7920
      %7922 = vrot.lane.b32.xlu0 %v7118, 112
      %v7923 = vpop.permute.xlu0 %7922
      %7924 = vrot.lane.b32.xlu0 %v7127, 112
      %v7925 = vpop.permute.xlu0 %7924
      %7926 = vrot.lane.b32.xlu0 %v7136, 112
      %v7927 = vpop.permute.xlu0 %7926
      %7928 = vrot.lane.b32.xlu0 %v7145, 112
      %v7929 = vpop.permute.xlu0 %7928
      %7930 = vrot.lane.b32.xlu0 %v7154, 112
      %v7931 = vpop.permute.xlu0 %7930
      %7932 = vrot.lane.b32.xlu0 %v7163, 112
      %v7933 = vpop.permute.xlu0 %7932
      %7934 = vrot.lane.b32.xlu0 %v7172, 112
      %v7935 = vpop.permute.xlu0 %7934
      %7936 = vrot.lane.b32.xlu0 %v7181, 112
      %v7937 = vpop.permute.xlu0 %7936
      %7938 = vrot.lane.b32.xlu0 %v7190, 112
      %v7939 = vpop.permute.xlu0 %7938
      %7940 = vrot.lane.b32.xlu0 %v7199, 112
      %v7941 = vpop.permute.xlu0 %7940
      %7942 = vrot.lane.b32.xlu0 %v7208, 112
      %v7943 = vpop.permute.xlu0 %7942
      %7944 = vrot.lane.b32.xlu0 %v7217, 112
      %v7945 = vpop.permute.xlu0 %7944
      %7946 = vrot.lane.b32.xlu0 %v7226, 112
      %v7947 = vpop.permute.xlu0 %7946
      %7948 = vrot.lane.b32.xlu0 %v7235, 112
      %v7949 = vpop.permute.xlu0 %7948
      %7950 = vrot.lane.b32.xlu0 %v7889, 112
      %v7951 = vpop.permute.xlu0 %7950
      %7952 = vrot.lane.b32.xlu0 %v7898, 112
      %v7953 = vpop.permute.xlu0 %7952
      %7954 = vrot.lane.b32.xlu0 %v7907, 112
      %v7955 = vpop.permute.xlu0 %7954
      %7956 = vrot.lane.b32.xlu0 %v7906, 112
      %v7957 = vpop.permute.xlu0 %7956
      %v7959 = vunpack.c.l.b16 %v6873
      %v7960 = vpack.c.b16 %v7959, %v7959
      %v7961 = vrot.slane %v7397, 5
      %v7962 = vsel %vm2623, %v7334, %v7961
      %v7963 = vrot.slane %v7879, 5
      %v7964 = vsel %vm2623, %v7961, %v7963
      %v7965 = vrot.slane %v7880, 5
      %v7966 = vsel %vm2623, %v7963, %v7965
      %v7967 = vrot.slane %v7960, 5
      %v7968 = vsel %vm2623, %v7965, %v7967
      %v7971 = vsel %vm857, %v6972, %v7237
      %v7974 = vsel %vm857, %v6973, %v7239
      %v7976 = vsel %vm857, %v6974, %v7241
      %v7978 = vsel %vm857, %v6975, %v7243
      %v7980 = vsel %vm857, %v6976, %v7245
      %v7982 = vsel %vm857, %v6977, %v7247
      %v7984 = vsel %vm857, %v6978, %v7249
      %v7986 = vsel %vm857, %v6979, %v7251
      %v7988 = vsel %vm857, %v6980, %v7253
      %v7990 = vsel %vm857, %v6981, %v7255
      %v7992 = vsel %vm857, %v6982, %v7257
      %v7994 = vsel %vm857, %v6983, %v7259
      %v7996 = vsel %vm857, %v6984, %v7261
      %v7998 = vsel %vm857, %v6985, %v7263
      %v8000 = vsel %vm857, %v6986, %v7265
      %v8002 = vsel %vm857, %v6987, %v7267
      %v8004 = vsel %vm857, %v6988, %v7269
      %v8006 = vsel %vm857, %v6989, %v7271
      %v8008 = vsel %vm857, %v6990, %v7273
      %v8010 = vsel %vm857, %v6991, %v7275
      %v8012 = vsel %vm857, %v6992, %v7277
      %v8014 = vsel %vm857, %v6993, %v7279
      %v8016 = vsel %vm857, %v6994, %v7281
      %v8018 = vsel %vm857, %v6995, %v7283
      %v8021 = vsel %vm857, %v6996, %v7285
      %v8023 = vsel %vm3357, %v7971, %v7339
      %v8025 = vsel %vm3357, %v7974, %v7341
      %v8027 = vsel %vm3357, %v7976, %v7343
      %v8029 = vsel %vm3357, %v7978, %v7345
      %v8031 = vsel %vm3357, %v7980, %v7347
      %v8033 = vsel %vm3357, %v7982, %v7349
      %v8035 = vsel %vm3357, %v7984, %v7351
      %v8037 = vsel %vm3357, %v7986, %v7353
      %v8039 = vsel %vm3357, %v7988, %v7355
      %v8041 = vsel %vm3357, %v7990, %v7357
      %v8043 = vsel %vm3357, %v7992, %v7359
      %v8045 = vsel %vm3357, %v7994, %v7361
      %v8047 = vsel %vm3357, %v7996, %v7363
      %v8049 = vsel %vm3357, %v7998, %v7365
      %v8051 = vsel %vm3357, %v8000, %v7367
      %v8053 = vsel %vm3357, %v8002, %v7369
      %v8055 = vsel %vm3357, %v8004, %v7371
      %v8057 = vsel %vm3357, %v8006, %v7373
      %v8059 = vsel %vm3357, %v8008, %v7375
      %v8061 = vsel %vm3357, %v8010, %v7377
      %v8063 = vsel %vm3357, %v8012, %v7379
      %v8065 = vsel %vm3357, %v8014, %v7381
      %v8067 = vsel %vm3357, %v8016, %v7383
      %v8069 = vsel %vm3357, %v8018, %v7385
      %v8071 = vsel %vm3357, %v8021, %v7387
      %v8073 = vsel %vm3408, %v8023, %v7400
      %v8075 = vsel %vm3408, %v8025, %v7402
      %v8077 = vsel %vm3408, %v8027, %v7404
      %v8079 = vsel %vm3408, %v8029, %v7406
      %v8081 = vsel %vm3408, %v8031, %v7408
      %v8083 = vsel %vm3408, %v8033, %v7410
      %v8085 = vsel %vm3408, %v8035, %v7412
      %v8087 = vsel %vm3408, %v8037, %v7414
      %v8089 = vsel %vm3408, %v8039, %v7416
      %v8091 = vsel %vm3408, %v8041, %v7418
      %v8093 = vsel %vm3408, %v8043, %v7420
      %v8095 = vsel %vm3408, %v8045, %v7422
      %v8097 = vsel %vm3408, %v8047, %v7424
      %v8099 = vsel %vm3408, %v8049, %v7426
      %v8101 = vsel %vm3408, %v8051, %v7428
      %v8103 = vsel %vm3408, %v8053, %v7430
      %v8105 = vsel %vm3408, %v8055, %v7432
      %v8107 = vsel %vm3408, %v8057, %v7434
      %v8109 = vsel %vm3408, %v8059, %v7436
      %v8111 = vsel %vm3408, %v8061, %v7438
      %v8113 = vsel %vm3408, %v8063, %v7440
      %v8115 = vsel %vm3408, %v8065, %v7442
      %v8117 = vsel %vm3408, %v8067, %v7444
      %v8119 = vsel %vm3408, %v8069, %v7446
      %v8121 = vsel %vm3408, %v8071, %v7448
      %v8123 = vsel %vm3459, %v8073, %v7667
      %v8125 = vsel %vm3459, %v8075, %v7669
      %v8127 = vsel %vm3459, %v8077, %v7671
      %v8129 = vsel %vm3459, %v8079, %v7673
      %v8131 = vsel %vm3459, %v8081, %v7675
      %v8133 = vsel %vm3459, %v8083, %v7677
      %v8135 = vsel %vm3459, %v8085, %v7679
      %v8137 = vsel %vm3459, %v8087, %v7681
      %v8139 = vsel %vm3459, %v8089, %v7683
      %v8141 = vsel %vm3459, %v8091, %v7685
      %v8143 = vsel %vm3459, %v8093, %v7687
      %v8145 = vsel %vm3459, %v8095, %v7689
      %v8147 = vsel %vm3459, %v8097, %v7691
      %v8149 = vsel %vm3459, %v8099, %v7693
      %v8151 = vsel %vm3459, %v8101, %v7695
      %v8153 = vsel %vm3459, %v8103, %v7697
      %v8155 = vsel %vm3459, %v8105, %v7699
      %v8157 = vsel %vm3459, %v8107, %v7701
      %v8159 = vsel %vm3459, %v8109, %v7703
      %v8161 = vsel %vm3459, %v8111, %v7705
      %v8163 = vsel %vm3459, %v8113, %v7707
      %v8165 = vsel %vm3459, %v8115, %v7709
      %v8167 = vsel %vm3459, %v8117, %v7711
      %v8169 = vsel %vm3459, %v8119, %v7713
      %v8171 = vsel %vm3459, %v8121, %v7715
      %v8173 = vsel %vm3510, %v8123, %v7769
      %v8175 = vsel %vm3510, %v8125, %v7771
      %v8177 = vsel %vm3510, %v8127, %v7773
      %v8179 = vsel %vm3510, %v8129, %v7775
      %v8181 = vsel %vm3510, %v8131, %v7777
      %v8183 = vsel %vm3510, %v8133, %v7779
      %v8185 = vsel %vm3510, %v8135, %v7781
      %v8187 = vsel %vm3510, %v8137, %v7783
      %v8189 = vsel %vm3510, %v8139, %v7785
      %v8191 = vsel %vm3510, %v8141, %v7787
      %v8193 = vsel %vm3510, %v8143, %v7789
      %v8195 = vsel %vm3510, %v8145, %v7791
      %v8197 = vsel %vm3510, %v8147, %v7793
      %v8199 = vsel %vm3510, %v8149, %v7795
      %v8201 = vsel %vm3510, %v8151, %v7797
      %v8203 = vsel %vm3510, %v8153, %v7799
      %v8205 = vsel %vm3510, %v8155, %v7801
      %v8207 = vsel %vm3510, %v8157, %v7803
      %v8209 = vsel %vm3510, %v8159, %v7805
      %v8211 = vsel %vm3510, %v8161, %v7807
      %v8213 = vsel %vm3510, %v8163, %v7809
      %v8215 = vsel %vm3510, %v8165, %v7811
      %v8217 = vsel %vm3510, %v8167, %v7813
      %v8219 = vsel %vm3510, %v8169, %v7815
      %v8221 = vsel %vm3510, %v8171, %v7817
      %v8223 = vsel %vm3561, %v8173, %v7830
      %v8225 = vsel %vm3561, %v8175, %v7832
      %v8227 = vsel %vm3561, %v8177, %v7834
      %v8229 = vsel %vm3561, %v8179, %v7836
      %v8231 = vsel %vm3561, %v8181, %v7838
      %v8233 = vsel %vm3561, %v8183, %v7840
      %v8235 = vsel %vm3561, %v8185, %v7842
      %v8237 = vsel %vm3561, %v8187, %v7844
      %v8239 = vsel %vm3561, %v8189, %v7846
      %v8241 = vsel %vm3561, %v8191, %v7848
      %v8243 = vsel %vm3561, %v8193, %v7850
      %v8245 = vsel %vm3561, %v8195, %v7852
      %v8247 = vsel %vm3561, %v8197, %v7854
      %v8249 = vsel %vm3561, %v8199, %v7856
      %v8251 = vsel %vm3561, %v8201, %v7858
      %v8253 = vsel %vm3561, %v8203, %v7860
      %v8255 = vsel %vm3561, %v8205, %v7862
      %v8257 = vsel %vm3561, %v8207, %v7864
      %v8259 = vsel %vm3561, %v8209, %v7866
      %v8261 = vsel %vm3561, %v8211, %v7868
      %v8263 = vsel %vm3561, %v8213, %v7870
      %v8265 = vsel %vm3561, %v8215, %v7872
      %v8267 = vsel %vm3561, %v8217, %v7874
      %v8269 = vsel %vm3561, %v8219, %v7876
      %v8271 = vsel %vm3561, %v8221, %v7878
      %v8273 = vsel %vm3612, %v8223, %v7909
      %v8275 = vsel %vm3612, %v8225, %v7911
      %v8277 = vsel %vm3612, %v8227, %v7913
      %v8279 = vsel %vm3612, %v8229, %v7915
      %v8281 = vsel %vm3612, %v8231, %v7917
      %v8283 = vsel %vm3612, %v8233, %v7919
      %v8285 = vsel %vm3612, %v8235, %v7921
      %v8287 = vsel %vm3612, %v8237, %v7923
      %v8289 = vsel %vm3612, %v8239, %v7925
      %v8291 = vsel %vm3612, %v8241, %v7927
      %v8293 = vsel %vm3612, %v8243, %v7929
      %v8295 = vsel %vm3612, %v8245, %v7931
      %v8297 = vsel %vm3612, %v8247, %v7933
      %v8299 = vsel %vm3612, %v8249, %v7935
      %v8301 = vsel %vm3612, %v8251, %v7937
      %v8303 = vsel %vm3612, %v8253, %v7939
      %v8305 = vsel %vm3612, %v8255, %v7941
      %v8307 = vsel %vm3612, %v8257, %v7943
      %v8309 = vsel %vm3612, %v8259, %v7945
      %v8311 = vsel %vm3612, %v8261, %v7947
      %v8313 = vsel %vm3612, %v8263, %v7949
      %v8315 = vsel %vm3612, %v8265, %v7951
      %v8317 = vsel %vm3612, %v8267, %v7953
      %v8319 = vsel %vm3612, %v8269, %v7955
      %v8321 = vsel %vm3612, %v8271, %v7957
      %v8322 = vld [vmem:[%s10] sm:$0xf]
      %v8323 = vld [vmem:[%s10 + $0x4] sm:$0xf]
      %v8324 = vld [vmem:[%s10 + $0x8] sm:$0xf]
      %v8325 = vld [vmem:[%s10 + $0xc] sm:$0xf]
      %v8326 = vld [vmem:[%s10 + $0x10] sm:$0xf]
      %v8327 = vld [vmem:[%s10 + $0x14] sm:$0xf]
      %v8328 = vld [vmem:[%s10 + $0x18] sm:$0xf]
      %v8329 = vld [vmem:[%s10 + $0x1c] sm:$0xf]
      %v8330 = vld [vmem:[%s10 + $0x20] sm:$0xf]
      %v8331 = vld [vmem:[%s10 + $0x24] sm:$0xf]
      %v8332 = vld [vmem:[%s10 + $0x28] sm:$0xf]
      %v8333 = vld [vmem:[%s10 + $0x2c] sm:$0xf]
      %v8334 = vld [vmem:[%s10 + $0x30] sm:$0xf]
      %v8335 = vld [vmem:[%s10 + $0x34] sm:$0xf]
      %v8336 = vld [vmem:[%s10 + $0x38] sm:$0xf]
      %v8337 = vld [vmem:[%s10 + $0x3c] sm:$0xf]
      %v8338 = vld [vmem:[%s10 + $0x40] sm:$0xf]
      %v8339 = vld [vmem:[%s10 + $0x44] sm:$0xf]
      %v8340 = vld [vmem:[%s11] sm:$0x1]
      %v8342 = vperm.slane %v8340, 0
      %v8344 = vshrl.u32 %v8273, 16
      %v8346 = vrot.slane %v8344, 3
      %v8347 = vshll.u32 %v8273, 16
      %v8349 = vrot.slane %v8347, 4
      %v8350 = vor.u32 %v8346, %v8349
      %v8351 = vshrl.u32 %v8275, 16
      %v8353 = vrot.slane %v8351, 3
      %v8354 = vshll.u32 %v8275, 16
      %v8356 = vrot.slane %v8354, 4
      %v8357 = vor.u32 %v8353, %v8356
      %v8358 = vsel %vm3685, %v8350, %v8357
      %v8360 = vshrl.u32 %v7294, 16
      %v8362 = vrot.slane %v8360, 3
      %v8363 = vshll.u32 %v7294, 16
      %v8365 = vrot.slane %v8363, 4
      %v8366 = vor.u32 %v8362, %v8365
      %v8368 = vshrl.u32 %v7297, 16
      %v8370 = vrot.slane %v8368, 3
      %v8371 = vshll.u32 %v7297, 16
      %v8373 = vrot.slane %v8371, 4
      %v8374 = vor.u32 %v8370, %v8373
      %v8375 = vsel %vm3685, %v8366, %v8374
      %v8376 = vshrl.u32 %v8277, 16
      %v8378 = vrot.slane %v8376, 3
      %v8379 = vshll.u32 %v8277, 16
      %v8381 = vrot.slane %v8379, 4
      %v8382 = vor.u32 %v8378, %v8381
      %v8383 = vsel %vm3685, %v8357, %v8382
      %v8385 = vshrl.u32 %v7299, 16
      %v8387 = vrot.slane %v8385, 3
      %v8388 = vshll.u32 %v7299, 16
      %v8390 = vrot.slane %v8388, 4
      %v8391 = vor.u32 %v8387, %v8390
      %v8392 = vsel %vm3685, %v8374, %v8391
      %v8393 = vshrl.u32 %v8279, 16
      %v8395 = vrot.slane %v8393, 3
      %v8396 = vshll.u32 %v8279, 16
      %v8398 = vrot.slane %v8396, 4
      %v8399 = vor.u32 %v8395, %v8398
      %v8400 = vsel %vm3685, %v8382, %v8399
      %v8402 = vshrl.u32 %v7301, 16
      %v8404 = vrot.slane %v8402, 3
      %v8405 = vshll.u32 %v7301, 16
      %v8407 = vrot.slane %v8405, 4
      %v8408 = vor.u32 %v8404, %v8407
      %v8409 = vsel %vm3685, %v8391, %v8408
      %v8410 = vshrl.u32 %v8281, 16
      %v8412 = vrot.slane %v8410, 3
      %v8413 = vshll.u32 %v8281, 16
      %v8415 = vrot.slane %v8413, 4
      %v8416 = vor.u32 %v8412, %v8415
      %v8417 = vsel %vm3685, %v8399, %v8416
      %v8419 = vshrl.u32 %v7303, 16
      %v8421 = vrot.slane %v8419, 3
      %v8422 = vshll.u32 %v7303, 16
      %v8424 = vrot.slane %v8422, 4
      %v8425 = vor.u32 %v8421, %v8424
      %v8426 = vsel %vm3685, %v8408, %v8425
      %v8427 = vshrl.u32 %v8283, 16
      %v8429 = vrot.slane %v8427, 3
      %v8430 = vshll.u32 %v8283, 16
      %v8432 = vrot.slane %v8430, 4
      %v8433 = vor.u32 %v8429, %v8432
      %v8434 = vsel %vm3685, %v8416, %v8433
      %v8436 = vshrl.u32 %v7305, 16
      %v8438 = vrot.slane %v8436, 3
      %v8439 = vshll.u32 %v7305, 16
      %v8441 = vrot.slane %v8439, 4
      %v8442 = vor.u32 %v8438, %v8441
      %v8443 = vsel %vm3685, %v8425, %v8442
      %v8444 = vshrl.u32 %v8285, 16
      %v8446 = vrot.slane %v8444, 3
      %v8447 = vshll.u32 %v8285, 16
      %v8449 = vrot.slane %v8447, 4
      %v8450 = vor.u32 %v8446, %v8449
      %v8451 = vsel %vm3685, %v8433, %v8450
      %v8453 = vshrl.u32 %v7307, 16
      %v8455 = vrot.slane %v8453, 3
      %v8456 = vshll.u32 %v7307, 16
      %v8458 = vrot.slane %v8456, 4
      %v8459 = vor.u32 %v8455, %v8458
      %v8460 = vsel %vm3685, %v8442, %v8459
      %v8461 = vshrl.u32 %v8287, 16
      %v8463 = vrot.slane %v8461, 3
      %v8464 = vshll.u32 %v8287, 16
      %v8466 = vrot.slane %v8464, 4
      %v8467 = vor.u32 %v8463, %v8466
      %v8468 = vsel %vm3685, %v8450, %v8467
      %v8470 = vshrl.u32 %v7309, 16
      %v8472 = vrot.slane %v8470, 3
      %v8473 = vshll.u32 %v7309, 16
      %v8475 = vrot.slane %v8473, 4
      %v8476 = vor.u32 %v8472, %v8475
      %v8477 = vsel %vm3685, %v8459, %v8476
      %v8478 = vshrl.u32 %v8289, 16
      %v8480 = vrot.slane %v8478, 3
      %v8481 = vshll.u32 %v8289, 16
      %v8483 = vrot.slane %v8481, 4
      %v8484 = vor.u32 %v8480, %v8483
      %v8485 = vsel %vm3685, %v8467, %v8484
      %v8487 = vshrl.u32 %v7311, 16
      %v8489 = vrot.slane %v8487, 3
      %v8490 = vshll.u32 %v7311, 16
      %v8492 = vrot.slane %v8490, 4
      %v8493 = vor.u32 %v8489, %v8492
      %v8494 = vsel %vm3685, %v8476, %v8493
      %v8495 = vshrl.u32 %v8291, 16
      %v8497 = vrot.slane %v8495, 3
      %v8498 = vshll.u32 %v8291, 16
      %v8500 = vrot.slane %v8498, 4
      %v8501 = vor.u32 %v8497, %v8500
      %v8502 = vsel %vm3685, %v8484, %v8501
      %v8504 = vshrl.u32 %v7313, 16
      %v8506 = vrot.slane %v8504, 3
      %v8507 = vshll.u32 %v7313, 16
      %v8509 = vrot.slane %v8507, 4
      %v8510 = vor.u32 %v8506, %v8509
      %v8511 = vsel %vm3685, %v8493, %v8510
      %v8512 = vshrl.u32 %v8293, 16
      %v8514 = vrot.slane %v8512, 3
      %v8515 = vshll.u32 %v8293, 16
      %v8517 = vrot.slane %v8515, 4
      %v8518 = vor.u32 %v8514, %v8517
      %v8519 = vsel %vm3685, %v8501, %v8518
      %v8521 = vshrl.u32 %v7315, 16
      %v8523 = vrot.slane %v8521, 3
      %v8524 = vshll.u32 %v7315, 16
      %v8526 = vrot.slane %v8524, 4
      %v8527 = vor.u32 %v8523, %v8526
      %v8528 = vsel %vm3685, %v8510, %v8527
      %v8529 = vshrl.u32 %v8295, 16
      %v8531 = vrot.slane %v8529, 3
      %v8532 = vshll.u32 %v8295, 16
      %v8534 = vrot.slane %v8532, 4
      %v8535 = vor.u32 %v8531, %v8534
      %v8536 = vsel %vm3685, %v8518, %v8535
      %v8538 = vshrl.u32 %v7317, 16
      %v8540 = vrot.slane %v8538, 3
      %v8541 = vshll.u32 %v7317, 16
      %v8543 = vrot.slane %v8541, 4
      %v8544 = vor.u32 %v8540, %v8543
      %v8545 = vsel %vm3685, %v8527, %v8544
      %v8546 = vshrl.u32 %v8297, 16
      %v8548 = vrot.slane %v8546, 3
      %v8549 = vshll.u32 %v8297, 16
      %v8551 = vrot.slane %v8549, 4
      %v8552 = vor.u32 %v8548, %v8551
      %v8553 = vsel %vm3685, %v8535, %v8552
      %v8555 = vshrl.u32 %v7319, 16
      %v8557 = vrot.slane %v8555, 3
      %v8558 = vshll.u32 %v7319, 16
      %v8560 = vrot.slane %v8558, 4
      %v8561 = vor.u32 %v8557, %v8560
      %v8562 = vsel %vm3685, %v8544, %v8561
      %v8563 = vshrl.u32 %v8299, 16
      %v8565 = vrot.slane %v8563, 3
      %v8566 = vshll.u32 %v8299, 16
      %v8568 = vrot.slane %v8566, 4
      %v8569 = vor.u32 %v8565, %v8568
      %v8570 = vsel %vm3685, %v8552, %v8569
      %v8572 = vshrl.u32 %v7321, 16
      %v8574 = vrot.slane %v8572, 3
      %v8575 = vshll.u32 %v7321, 16
      %v8577 = vrot.slane %v8575, 4
      %v8578 = vor.u32 %v8574, %v8577
      %v8579 = vsel %vm3685, %v8561, %v8578
      %v8580 = vshrl.u32 %v8301, 16
      %v8582 = vrot.slane %v8580, 3
      %v8583 = vshll.u32 %v8301, 16
      %v8585 = vrot.slane %v8583, 4
      %v8586 = vor.u32 %v8582, %v8585
      %v8587 = vsel %vm3685, %v8569, %v8586
      %v8589 = vshrl.u32 %v7323, 16
      %v8591 = vrot.slane %v8589, 3
      %v8592 = vshll.u32 %v7323, 16
      %v8594 = vrot.slane %v8592, 4
      %v8595 = vor.u32 %v8591, %v8594
      %v8596 = vsel %vm3685, %v8578, %v8595
      %v8597 = vshrl.u32 %v8303, 16
      %v8599 = vrot.slane %v8597, 3
      %v8600 = vshll.u32 %v8303, 16
      %v8602 = vrot.slane %v8600, 4
      %v8603 = vor.u32 %v8599, %v8602
      %v8604 = vsel %vm3685, %v8586, %v8603
      %v8606 = vshrl.u32 %v7325, 16
      %v8608 = vrot.slane %v8606, 3
      %v8609 = vshll.u32 %v7325, 16
      %v8611 = vrot.slane %v8609, 4
      %v8612 = vor.u32 %v8608, %v8611
      %v8613 = vsel %vm3685, %v8595, %v8612
      %v8614 = vshrl.u32 %v8305, 16
      %v8616 = vrot.slane %v8614, 3
      %v8617 = vshll.u32 %v8305, 16
      %v8619 = vrot.slane %v8617, 4
      %v8620 = vor.u32 %v8616, %v8619
      %v8621 = vsel %vm3685, %v8603, %v8620
      %v8623 = vshrl.u32 %v7327, 16
      %v8625 = vrot.slane %v8623, 3
      %v8626 = vshll.u32 %v7327, 16
      %v8628 = vrot.slane %v8626, 4
      %v8629 = vor.u32 %v8625, %v8628
      %v8630 = vsel %vm3685, %v8612, %v8629
      %v8631 = vshrl.u32 %v8307, 16
      %v8633 = vrot.slane %v8631, 3
      %v8634 = vshll.u32 %v8307, 16
      %v8636 = vrot.slane %v8634, 4
      %v8637 = vor.u32 %v8633, %v8636
      %v8638 = vsel %vm3685, %v8620, %v8637
      %v8640 = vshrl.u32 %v7329, 16
      %v8642 = vrot.slane %v8640, 3
      %v8643 = vshll.u32 %v7329, 16
      %v8645 = vrot.slane %v8643, 4
      %v8646 = vor.u32 %v8642, %v8645
      %v8647 = vsel %vm3685, %v8629, %v8646
      %v8648 = vshrl.u32 %v8309, 16
      %v8650 = vrot.slane %v8648, 3
      %v8651 = vshll.u32 %v8309, 16
      %v8653 = vrot.slane %v8651, 4
      %v8654 = vor.u32 %v8650, %v8653
      %v8655 = vsel %vm3685, %v8637, %v8654
      %v8657 = vshrl.u32 %v7331, 16
      %v8659 = vrot.slane %v8657, 3
      %v8660 = vshll.u32 %v7331, 16
      %v8662 = vrot.slane %v8660, 4
      %v8663 = vor.u32 %v8659, %v8662
      %v8664 = vsel %vm3685, %v8646, %v8663
      %v8665 = vshrl.u32 %v8311, 16
      %v8667 = vrot.slane %v8665, 3
      %v8668 = vshll.u32 %v8311, 16
      %v8670 = vrot.slane %v8668, 4
      %v8671 = vor.u32 %v8667, %v8670
      %v8672 = vsel %vm3685, %v8654, %v8671
      %v8674 = vshrl.u32 %v7333, 16
      %v8676 = vrot.slane %v8674, 3
      %v8677 = vshll.u32 %v7333, 16
      %v8679 = vrot.slane %v8677, 4
      %v8680 = vor.u32 %v8676, %v8679
      %v8681 = vsel %vm3685, %v8663, %v8680
      %v8682 = vshrl.u32 %v8313, 16
      %v8684 = vrot.slane %v8682, 3
      %v8685 = vshll.u32 %v8313, 16
      %v8687 = vrot.slane %v8685, 4
      %v8688 = vor.u32 %v8684, %v8687
      %v8689 = vsel %vm3685, %v8671, %v8688
      %v8691 = vshrl.u32 %v7335, 16
      %v8693 = vrot.slane %v8691, 3
      %v8694 = vshll.u32 %v7335, 16
      %v8696 = vrot.slane %v8694, 4
      %v8697 = vor.u32 %v8693, %v8696
      %v8698 = vsel %vm3685, %v8680, %v8697
      %v8699 = vshrl.u32 %v8315, 16
      %v8701 = vrot.slane %v8699, 3
      %v8702 = vshll.u32 %v8315, 16
      %v8704 = vrot.slane %v8702, 4
      %v8705 = vor.u32 %v8701, %v8704
      %v8706 = vsel %vm3685, %v8688, %v8705
      %v8708 = vshrl.u32 %v7962, 16
      %v8710 = vrot.slane %v8708, 3
      %v8711 = vshll.u32 %v7962, 16
      %v8713 = vrot.slane %v8711, 4
      %v8714 = vor.u32 %v8710, %v8713
      %v8715 = vsel %vm3685, %v8697, %v8714
      %v8716 = vshrl.u32 %v8317, 16
      %v8718 = vrot.slane %v8716, 3
      %v8719 = vshll.u32 %v8317, 16
      %v8721 = vrot.slane %v8719, 4
      %v8722 = vor.u32 %v8718, %v8721
      %v8723 = vsel %vm3685, %v8705, %v8722
      %v8725 = vshrl.u32 %v7964, 16
      %v8727 = vrot.slane %v8725, 3
      %v8728 = vshll.u32 %v7964, 16
      %v8730 = vrot.slane %v8728, 4
      %v8731 = vor.u32 %v8727, %v8730
      %v8732 = vsel %vm3685, %v8714, %v8731
      %v8733 = vshrl.u32 %v8319, 16
      %v8735 = vrot.slane %v8733, 3
      %v8736 = vshll.u32 %v8319, 16
      %v8738 = vrot.slane %v8736, 4
      %v8739 = vor.u32 %v8735, %v8738
      %v8740 = vsel %vm3685, %v8722, %v8739
      %v8742 = vshrl.u32 %v7966, 16
      %v8744 = vrot.slane %v8742, 3
      %v8745 = vshll.u32 %v7966, 16
      %v8747 = vrot.slane %v8745, 4
      %v8748 = vor.u32 %v8744, %v8747
      %v8749 = vsel %vm3685, %v8731, %v8748
      %v8750 = vshrl.u32 %v8321, 16
      %v8752 = vrot.slane %v8750, 3
      %v8753 = vshll.u32 %v8321, 16
      %v8755 = vrot.slane %v8753, 4
      %v8756 = vor.u32 %v8752, %v8755
      %v8757 = vsel %vm3685, %v8739, %v8756
      %v8759 = vshrl.u32 %v7968, 16
      %v8761 = vrot.slane %v8759, 3
      %v8762 = vshll.u32 %v7968, 16
      %v8764 = vrot.slane %v8762, 4
      %v8765 = vor.u32 %v8761, %v8764
      %v8766 = vsel %vm3685, %v8748, %v8765
      %v8809 = vunpack.c.l.b16 %v8322
      %v8810 = vunpack.c.l.b16 %v8323
      %v8811 = vunpack.c.l.b16 %v8324
      %v8812 = vunpack.c.l.b16 %v8325
      %v8813 = vunpack.c.l.b16 %v8326
      %v8814 = vunpack.c.l.b16 %v8327
      %v8815 = vunpack.c.l.b16 %v8328
      %v8816 = vunpack.c.l.b16 %v8329
      %v8817 = vunpack.c.l.b16 %v8330
      %v8818 = vunpack.c.l.b16 %v8331
      %v8819 = vunpack.c.l.b16 %v8332
      %v8820 = vunpack.c.l.b16 %v8333
      %v8821 = vunpack.c.l.b16 %v8334
      %v8822 = vunpack.c.l.b16 %v8335
      %v8823 = vunpack.c.l.b16 %v8336
      %v8824 = vunpack.c.l.b16 %v8337
      %v8825 = vunpack.c.l.b16 %v8338
      %v8826 = vunpack.c.l.b16 %v8339
      %v8827 = vpack.c.b16 %v8810, %v8809
      %v8828 = vpack.c.b16 %v8812, %v8811
      %v8829 = vpack.c.b16 %v8814, %v8813
      %v8830 = vpack.c.b16 %v8816, %v8815
      %v8831 = vpack.c.b16 %v8818, %v8817
      %v8832 = vpack.c.b16 %v8820, %v8819
      %v8833 = vpack.c.b16 %v8822, %v8821
      %v8834 = vpack.c.b16 %v8824, %v8823
      %v8835 = vpack.c.b16 %v8826, %v8825
      %v8846 = vsel %vm857, %v8375, 0
      %v8849 = vsel %vm857, %v8392, 0
      %v8852 = vsel %vm857, %v8409, 0
      %v8855 = vsel %vm857, %v8426, 0
      %v8858 = vsel %vm857, %v8443, 0
      %v8861 = vsel %vm857, %v8460, 0
      %v8864 = vsel %vm857, %v8477, 0
      %v8867 = vsel %vm857, %v8494, 0
      %v8870 = vsel %vm857, %v8511, 0
      %v8873 = vsel %vm857, %v8528, 0
      %v8876 = vsel %vm857, %v8545, 0
      %v8879 = vsel %vm857, %v8562, 0
      %v8882 = vsel %vm857, %v8579, 0
      %v8885 = vsel %vm857, %v8596, 0
      %v8888 = vsel %vm857, %v8613, 0
      %v8891 = vsel %vm857, %v8630, 0
      %v8894 = vsel %vm857, %v8647, 0
      %v8897 = vsel %vm857, %v8664, 0
      %v8900 = vsel %vm857, %v8681, 0
      %v8903 = vsel %vm857, %v8698, 0
      %v8906 = vsel %vm857, %v8715, 0
      %v8909 = vsel %vm857, %v8732, 0
      %v8912 = vsel %vm857, %v8749, 0
      %v8915 = vsel %vm857, %v8766, 0
      %8917 = vmatpush.bf16.msra.mxu0 %v8834
      %8918 = vmatpush.bf16.msra.mxu0 %v8833
      %8919 = vmatpush.bf16.msra.mxu0 %v8832
      %8920 = vmatpush.bf16.msra.mxu0 %v8831
      %8921 = vmatpush.bf16.msra.mxu0 %v8830
      %8922 = vmatpush.bf16.msra.mxu0 %v8829
      %8923 = vmatpush.bf16.msra.mxu0 %v8828
      %8924 = vmatpush.bf16.msra.mxu0 %v8827
      %8925 = vmatmul.bf16.gmra.mxu0 %v8358
      %v8926 = vpop.f32.mrf.mxu0
      %v8927 = vadd.f32 %v8342, %v8926
      %v8928 = vpop.f32.mrf.mxu0
      %v8929 = vadd.f32 %v8342, %v8928
      %8930 = vmatmul.bf16.gmra.mxu0 %v8383
      %v8931 = vpop.f32.mrf.mxu0
      %v8932 = vadd.f32 %v8342, %v8931
      %v8933 = vpop.f32.mrf.mxu0
      %v8934 = vadd.f32 %v8342, %v8933
      %8935 = vmatmul.bf16.gmra.mxu0 %v8400
      %v8936 = vpop.f32.mrf.mxu0
      %v8937 = vadd.f32 %v8342, %v8936
      %v8938 = vpop.f32.mrf.mxu0
      %v8939 = vadd.f32 %v8342, %v8938
      %8940 = vmatmul.bf16.gmra.mxu0 %v8417
      %v8941 = vpop.f32.mrf.mxu0
      %v8942 = vadd.f32 %v8342, %v8941
      %v8943 = vpop.f32.mrf.mxu0
      %v8944 = vadd.f32 %v8342, %v8943
      %8945 = vmatmul.bf16.gmra.mxu0 %v8434
      %v8946 = vpop.f32.mrf.mxu0
      %v8947 = vadd.f32 %v8342, %v8946
      %v8948 = vpop.f32.mrf.mxu0
      %v8949 = vadd.f32 %v8342, %v8948
      %8950 = vmatmul.bf16.gmra.mxu0 %v8451
      %v8951 = vpop.f32.mrf.mxu0
      %v8952 = vadd.f32 %v8342, %v8951
      %v8953 = vpop.f32.mrf.mxu0
      %v8954 = vadd.f32 %v8342, %v8953
      %8955 = vmatmul.bf16.gmra.mxu0 %v8468
      %v8956 = vpop.f32.mrf.mxu0
      %v8957 = vadd.f32 %v8342, %v8956
      %v8958 = vpop.f32.mrf.mxu0
      %v8959 = vadd.f32 %v8342, %v8958
      %8960 = vmatmul.bf16.gmra.mxu0 %v8485
      %v8961 = vpop.f32.mrf.mxu0
      %v8962 = vadd.f32 %v8342, %v8961
      %v8963 = vpop.f32.mrf.mxu0
      %v8964 = vadd.f32 %v8342, %v8963
      %8965 = vmatmul.bf16.gmra.mxu0 %v8502
      %v8966 = vpop.f32.mrf.mxu0
      %v8967 = vadd.f32 %v8342, %v8966
      %v8968 = vpop.f32.mrf.mxu0
      %v8969 = vadd.f32 %v8342, %v8968
      %8970 = vmatmul.bf16.gmra.mxu0 %v8519
      %v8971 = vpop.f32.mrf.mxu0
      %v8972 = vadd.f32 %v8342, %v8971
      %v8973 = vpop.f32.mrf.mxu0
      %v8974 = vadd.f32 %v8342, %v8973
      %8975 = vmatmul.bf16.gmra.mxu0 %v8536
      %v8976 = vpop.f32.mrf.mxu0
      %v8977 = vadd.f32 %v8342, %v8976
      %v8978 = vpop.f32.mrf.mxu0
      %v8979 = vadd.f32 %v8342, %v8978
      %8980 = vmatmul.bf16.gmra.mxu0 %v8553
      %v8981 = vpop.f32.mrf.mxu0
      %v8982 = vadd.f32 %v8342, %v8981
      %v8983 = vpop.f32.mrf.mxu0
      %v8984 = vadd.f32 %v8342, %v8983
      %8985 = vmatmul.bf16.gmra.mxu0 %v8570
      %v8986 = vpop.f32.mrf.mxu0
      %v8987 = vadd.f32 %v8342, %v8986
      %v8988 = vpop.f32.mrf.mxu0
      %v8989 = vadd.f32 %v8342, %v8988
      %8990 = vmatmul.bf16.gmra.mxu0 %v8587
      %v8991 = vpop.f32.mrf.mxu0
      %v8992 = vadd.f32 %v8342, %v8991
      %v8993 = vpop.f32.mrf.mxu0
      %v8994 = vadd.f32 %v8342, %v8993
      %8995 = vmatmul.bf16.gmra.mxu0 %v8604
      %v8996 = vpop.f32.mrf.mxu0
      %v8997 = vadd.f32 %v8342, %v8996
      %v8998 = vpop.f32.mrf.mxu0
      %v8999 = vadd.f32 %v8342, %v8998
      %9000 = vmatmul.bf16.gmra.mxu0 %v8621
      %v9001 = vpop.f32.mrf.mxu0
      %v9002 = vadd.f32 %v8342, %v9001
      %v9003 = vpop.f32.mrf.mxu0
      %v9004 = vadd.f32 %v8342, %v9003
      %9005 = vmatmul.bf16.gmra.mxu0 %v8638
      %v9006 = vpop.f32.mrf.mxu0
      %v9007 = vadd.f32 %v8342, %v9006
      %v9008 = vpop.f32.mrf.mxu0
      %v9009 = vadd.f32 %v8342, %v9008
      %9010 = vmatmul.bf16.gmra.mxu0 %v8655
      %v9011 = vpop.f32.mrf.mxu0
      %v9012 = vadd.f32 %v8342, %v9011
      %v9013 = vpop.f32.mrf.mxu0
      %v9014 = vadd.f32 %v8342, %v9013
      %9015 = vmatmul.bf16.gmra.mxu0 %v8672
      %v9016 = vpop.f32.mrf.mxu0
      %v9017 = vadd.f32 %v8342, %v9016
      %v9018 = vpop.f32.mrf.mxu0
      %v9019 = vadd.f32 %v8342, %v9018
      %9020 = vmatmul.bf16.gmra.mxu0 %v8689
      %v9021 = vpop.f32.mrf.mxu0
      %v9022 = vadd.f32 %v8342, %v9021
      %v9023 = vpop.f32.mrf.mxu0
      %v9024 = vadd.f32 %v8342, %v9023
      %9025 = vmatmul.bf16.gmra.mxu0 %v8706
      %v9026 = vpop.f32.mrf.mxu0
      %v9027 = vadd.f32 %v8342, %v9026
      %v9028 = vpop.f32.mrf.mxu0
      %v9029 = vadd.f32 %v8342, %v9028
      %9030 = vmatmul.bf16.gmra.mxu0 %v8723
      %v9031 = vpop.f32.mrf.mxu0
      %v9032 = vadd.f32 %v8342, %v9031
      %v9033 = vpop.f32.mrf.mxu0
      %v9034 = vadd.f32 %v8342, %v9033
      %9035 = vmatmul.bf16.gmra.mxu0 %v8740
      %v9036 = vpop.f32.mrf.mxu0
      %v9037 = vadd.f32 %v8342, %v9036
      %v9038 = vpop.f32.mrf.mxu0
      %v9039 = vadd.f32 %v8342, %v9038
      %9040 = vmatmul.bf16.gmra.mxu0 %v8757
      %v9041 = vpop.f32.mrf.mxu0
      %v9042 = vadd.f32 %v8342, %v9041
      %v9043 = vpop.f32.mrf.mxu0
      %v9044 = vadd.f32 %v8342, %v9043
      %9045 = vdwg.mxu0
      %9046 = vmatpush.bf16.msra.mxu0 0
      %9047 = vmatpush.bf16.msra.mxu0 0
      %9048 = vmatpush.bf16.msra.mxu0 0
      %9049 = vmatpush.bf16.msra.mxu0 0
      %9050 = vmatpush.bf16.msra.mxu0 0
      %9051 = vmatpush.bf16.msra.mxu0 0
      %9052 = vmatpush.bf16.msra.mxu0 0
      %9053 = vmatpush.bf16.msra.mxu0 %v8835
      %9054 = vmatmul.bf16.gmra.mxu0 %v8846
      %v9055 = vpop.f32.mrf.mxu0
      %v9056 = vadd.f32 %v8927, %v9055
      %v9057 = vpop.f32.mrf.mxu0
      %v9058 = vadd.f32 %v8929, %v9057
      %9059 = vmatmul.bf16.gmra.mxu0 %v8849
      %v9060 = vpop.f32.mrf.mxu0
      %v9061 = vadd.f32 %v8932, %v9060
      %v9062 = vpop.f32.mrf.mxu0
      %v9063 = vadd.f32 %v8934, %v9062
      %9064 = vmatmul.bf16.gmra.mxu0 %v8852
      %v9065 = vpop.f32.mrf.mxu0
      %v9066 = vadd.f32 %v8937, %v9065
      %v9067 = vpop.f32.mrf.mxu0
      %v9068 = vadd.f32 %v8939, %v9067
      %9069 = vmatmul.bf16.gmra.mxu0 %v8855
      %v9070 = vpop.f32.mrf.mxu0
      %v9071 = vadd.f32 %v8942, %v9070
      %v9072 = vpop.f32.mrf.mxu0
      %v9073 = vadd.f32 %v8944, %v9072
      %9074 = vmatmul.bf16.gmra.mxu0 %v8858
      %v9075 = vpop.f32.mrf.mxu0
      %v9076 = vadd.f32 %v8947, %v9075
      %v9077 = vpop.f32.mrf.mxu0
      %v9078 = vadd.f32 %v8949, %v9077
      %9079 = vmatmul.bf16.gmra.mxu0 %v8861
      %v9080 = vpop.f32.mrf.mxu0
      %v9081 = vadd.f32 %v8952, %v9080
      %v9082 = vpop.f32.mrf.mxu0
      %v9083 = vadd.f32 %v8954, %v9082
      %9084 = vmatmul.bf16.gmra.mxu0 %v8864
      %v9085 = vpop.f32.mrf.mxu0
      %v9086 = vadd.f32 %v8957, %v9085
      %v9087 = vpop.f32.mrf.mxu0
      %v9088 = vadd.f32 %v8959, %v9087
      %9089 = vmatmul.bf16.gmra.mxu0 %v8867
      %v9090 = vpop.f32.mrf.mxu0
      %v9091 = vadd.f32 %v8962, %v9090
      %v9092 = vpop.f32.mrf.mxu0
      %v9093 = vadd.f32 %v8964, %v9092
      %9094 = vmatmul.bf16.gmra.mxu0 %v8870
      %v9095 = vpop.f32.mrf.mxu0
      %v9096 = vadd.f32 %v8967, %v9095
      %v9097 = vpop.f32.mrf.mxu0
      %v9098 = vadd.f32 %v8969, %v9097
      %9099 = vmatmul.bf16.gmra.mxu0 %v8873
      %v9100 = vpop.f32.mrf.mxu0
      %v9101 = vadd.f32 %v8972, %v9100
      %v9102 = vpop.f32.mrf.mxu0
      %v9103 = vadd.f32 %v8974, %v9102
      %9104 = vmatmul.bf16.gmra.mxu0 %v8876
      %v9105 = vpop.f32.mrf.mxu0
      %v9106 = vadd.f32 %v8977, %v9105
      %v9107 = vpop.f32.mrf.mxu0
      %v9108 = vadd.f32 %v8979, %v9107
      %9109 = vmatmul.bf16.gmra.mxu0 %v8879
      %v9110 = vpop.f32.mrf.mxu0
      %v9111 = vadd.f32 %v8982, %v9110
      %v9112 = vpop.f32.mrf.mxu0
      %v9113 = vadd.f32 %v8984, %v9112
      %9114 = vmatmul.bf16.gmra.mxu0 %v8882
      %v9115 = vpop.f32.mrf.mxu0
      %v9116 = vadd.f32 %v8987, %v9115
      %v9117 = vpop.f32.mrf.mxu0
      %v9118 = vadd.f32 %v8989, %v9117
      %9119 = vmatmul.bf16.gmra.mxu0 %v8885
      %v9120 = vpop.f32.mrf.mxu0
      %v9121 = vadd.f32 %v8992, %v9120
      %v9122 = vpop.f32.mrf.mxu0
      %v9123 = vadd.f32 %v8994, %v9122
      %9124 = vmatmul.bf16.gmra.mxu0 %v8888
      %v9125 = vpop.f32.mrf.mxu0
      %v9126 = vadd.f32 %v8997, %v9125
      %v9127 = vpop.f32.mrf.mxu0
      %v9128 = vadd.f32 %v8999, %v9127
      %9129 = vmatmul.bf16.gmra.mxu0 %v8891
      %v9130 = vpop.f32.mrf.mxu0
      %v9131 = vadd.f32 %v9002, %v9130
      %v9132 = vpop.f32.mrf.mxu0
      %v9133 = vadd.f32 %v9004, %v9132
      %9134 = vmatmul.bf16.gmra.mxu0 %v8894
      %v9135 = vpop.f32.mrf.mxu0
      %v9136 = vadd.f32 %v9007, %v9135
      %v9137 = vpop.f32.mrf.mxu0
      %v9138 = vadd.f32 %v9009, %v9137
      %9139 = vmatmul.bf16.gmra.mxu0 %v8897
      %v9140 = vpop.f32.mrf.mxu0
      %v9141 = vadd.f32 %v9012, %v9140
      %v9142 = vpop.f32.mrf.mxu0
      %v9143 = vadd.f32 %v9014, %v9142
      %9144 = vmatmul.bf16.gmra.mxu0 %v8900
      %v9145 = vpop.f32.mrf.mxu0
      %v9146 = vadd.f32 %v9017, %v9145
      %v9147 = vpop.f32.mrf.mxu0
      %v9148 = vadd.f32 %v9019, %v9147
      %9149 = vmatmul.bf16.gmra.mxu0 %v8903
      %v9150 = vpop.f32.mrf.mxu0
      %v9151 = vadd.f32 %v9022, %v9150
      %v9152 = vpop.f32.mrf.mxu0
      %v9153 = vadd.f32 %v9024, %v9152
      %9154 = vmatmul.bf16.gmra.mxu0 %v8906
      %v9155 = vpop.f32.mrf.mxu0
      %v9156 = vadd.f32 %v9027, %v9155
      %v9157 = vpop.f32.mrf.mxu0
      %v9158 = vadd.f32 %v9029, %v9157
      %9159 = vmatmul.bf16.gmra.mxu0 %v8909
      %v9160 = vpop.f32.mrf.mxu0
      %v9161 = vadd.f32 %v9032, %v9160
      %v9162 = vpop.f32.mrf.mxu0
      %v9163 = vadd.f32 %v9034, %v9162
      %9164 = vmatmul.bf16.gmra.mxu0 %v8912
      %v9165 = vpop.f32.mrf.mxu0
      %v9166 = vadd.f32 %v9037, %v9165
      %v9167 = vpop.f32.mrf.mxu0
      %v9168 = vadd.f32 %v9039, %v9167
      %9169 = vmatmul.bf16.gmra.mxu0 %v8915
      %v9170 = vpop.f32.mrf.mxu0
      %v9171 = vadd.f32 %v9042, %v9170
      %v9172 = vpop.f32.mrf.mxu0
      %v9173 = vadd.f32 %v9044, %v9172
      %9174 = vdwg.mxu0
      %v9175 = vmax.f32 %v9056, 0.0
      %v9176 = vmax.f32 %v9058, 0.0
      %v9177 = vmax.f32 %v9061, 0.0
      %v9178 = vmax.f32 %v9063, 0.0
      %v9179 = vmax.f32 %v9066, 0.0
      %v9180 = vmax.f32 %v9068, 0.0
      %v9181 = vmax.f32 %v9071, 0.0
      %v9182 = vmax.f32 %v9073, 0.0
      %v9183 = vmax.f32 %v9076, 0.0
      %v9184 = vmax.f32 %v9078, 0.0
      %v9185 = vmax.f32 %v9081, 0.0
      %v9186 = vmax.f32 %v9083, 0.0
      %v9187 = vmax.f32 %v9086, 0.0
      %v9188 = vmax.f32 %v9088, 0.0
      %v9189 = vmax.f32 %v9091, 0.0
      %v9190 = vmax.f32 %v9093, 0.0
      %v9191 = vmax.f32 %v9096, 0.0
      %v9192 = vmax.f32 %v9098, 0.0
      %v9193 = vmax.f32 %v9101, 0.0
      %v9194 = vmax.f32 %v9103, 0.0
      %v9195 = vmax.f32 %v9106, 0.0
      %v9196 = vmax.f32 %v9108, 0.0
      %v9197 = vmax.f32 %v9111, 0.0
      %v9198 = vmax.f32 %v9113, 0.0
      %v9199 = vmax.f32 %v9116, 0.0
      %v9200 = vmax.f32 %v9118, 0.0
      %v9201 = vmax.f32 %v9121, 0.0
      %v9202 = vmax.f32 %v9123, 0.0
      %v9203 = vmax.f32 %v9126, 0.0
      %v9204 = vmax.f32 %v9128, 0.0
      %v9205 = vmax.f32 %v9131, 0.0
      %v9206 = vmax.f32 %v9133, 0.0
      %v9207 = vmax.f32 %v9136, 0.0
      %v9208 = vmax.f32 %v9138, 0.0
      %v9209 = vmax.f32 %v9141, 0.0
      %v9210 = vmax.f32 %v9143, 0.0
      %v9211 = vmax.f32 %v9146, 0.0
      %v9212 = vmax.f32 %v9148, 0.0
      %v9213 = vmax.f32 %v9151, 0.0
      %v9214 = vmax.f32 %v9153, 0.0
      %v9215 = vmax.f32 %v9156, 0.0
      %v9216 = vmax.f32 %v9158, 0.0
      %v9217 = vmax.f32 %v9161, 0.0
      %v9218 = vmax.f32 %v9163, 0.0
      %v9219 = vmax.f32 %v9166, 0.0
      %v9220 = vmax.f32 %v9168, 0.0
      %v9221 = vmax.f32 %v9171, 0.0
      %v9222 = vmax.f32 %v9173, 0.0
      %v9223 = vsub.f32 %v470, 1.0
      %v9224 = vsub.f32 %v471, 1.0
      %v9225 = vsub.f32 %v472, 1.0
      %v9226 = vsub.f32 %v473, 1.0
      %v9227 = vsub.f32 %v474, 1.0
      %v9228 = vsub.f32 %v475, 1.0
      %v9229 = vsub.f32 %v476, 1.0
      %v9230 = vsub.f32 %v477, 1.0
      %v9231 = vsub.f32 %v478, 1.0
      %v9232 = vsub.f32 %v479, 1.0
      %v9233 = vsub.f32 %v480, 1.0
      %v9234 = vsub.f32 %v481, 1.0
      %v9235 = vsub.f32 %v482, 1.0
      %v9236 = vsub.f32 %v483, 1.0
      %v9237 = vsub.f32 %v484, 1.0
      %v9238 = vsub.f32 %v485, 1.0
      %v9239 = vsub.f32 %v486, 1.0
      %v9240 = vsub.f32 %v487, 1.0
      %v9241 = vsub.f32 %v488, 1.0
      %v9242 = vsub.f32 %v489, 1.0
      %v9243 = vsub.f32 %v490, 1.0
      %v9244 = vsub.f32 %v491, 1.0
      %v9245 = vsub.f32 %v492, 1.0
      %v9246 = vsub.f32 %v493, 1.0
      %v9247 = vsub.f32 %v494, 1.0
      %v9248 = vsub.f32 %v495, 1.0
      %v9249 = vsub.f32 %v496, 1.0
      %v9250 = vsub.f32 %v497, 1.0
      %v9251 = vsub.f32 %v498, 1.0
      %v9252 = vsub.f32 %v499, 1.0
      %v9253 = vsub.f32 %v500, 1.0
      %v9254 = vsub.f32 %v501, 1.0
      %v9255 = vsub.f32 %v502, 1.0
      %v9256 = vsub.f32 %v503, 1.0
      %v9257 = vsub.f32 %v504, 1.0
      %v9258 = vsub.f32 %v505, 1.0
      %v9259 = vsub.f32 %v506, 1.0
      %v9260 = vsub.f32 %v507, 1.0
      %v9261 = vsub.f32 %v508, 1.0
      %v9262 = vsub.f32 %v509, 1.0
      %v9263 = vsub.f32 %v510, 1.0
      %v9264 = vsub.f32 %v511, 1.0
      %v9265 = vsub.f32 %v512, 1.0
      %v9266 = vsub.f32 %v513, 1.0
      %v9267 = vsub.f32 %v514, 1.0
      %v9268 = vsub.f32 %v515, 1.0
      %v9269 = vsub.f32 %v516, 1.0
      %v9270 = vsub.f32 %v517, 1.0
      %v9271 = vsub.f32 %v518, 1.0
      %v9272 = vsub.f32 %v519, 1.0
      %v9273 = vsub.f32 %v520, 1.0
      %v9274 = vsub.f32 %v521, 1.0
      %v9275 = vsub.f32 %v522, 1.0
      %v9276 = vsub.f32 %v523, 1.0
      %v9277 = vsub.f32 %v524, 1.0
      %v9278 = vmul.f32 %v9223, 1e+30
      %v9279 = vmul.f32 %v9224, 1e+30
      %v9280 = vmul.f32 %v9225, 1e+30
      %v9281 = vmul.f32 %v9226, 1e+30
      %v9282 = vmul.f32 %v9227, 1e+30
      %v9283 = vmul.f32 %v9228, 1e+30
      %v9284 = vmul.f32 %v9229, 1e+30
      %v9285 = vmul.f32 %v9230, 1e+30
      %v9286 = vmul.f32 %v9231, 1e+30
      %v9287 = vmul.f32 %v9232, 1e+30
      %v9288 = vmul.f32 %v9233, 1e+30
      %v9289 = vmul.f32 %v9234, 1e+30
      %v9290 = vmul.f32 %v9235, 1e+30
      %v9291 = vmul.f32 %v9236, 1e+30
      %v9292 = vmul.f32 %v9237, 1e+30
      %v9293 = vmul.f32 %v9238, 1e+30
      %v9294 = vmul.f32 %v9239, 1e+30
      %v9295 = vmul.f32 %v9240, 1e+30
      %v9296 = vmul.f32 %v9241, 1e+30
      %v9297 = vmul.f32 %v9242, 1e+30
      %v9298 = vmul.f32 %v9243, 1e+30
      %v9299 = vmul.f32 %v9244, 1e+30
      %v9300 = vmul.f32 %v9245, 1e+30
      %v9301 = vmul.f32 %v9246, 1e+30
      %v9302 = vmul.f32 %v9247, 1e+30
      %v9303 = vmul.f32 %v9248, 1e+30
      %v9304 = vmul.f32 %v9249, 1e+30
      %v9305 = vmul.f32 %v9250, 1e+30
      %v9306 = vmul.f32 %v9251, 1e+30
      %v9307 = vmul.f32 %v9252, 1e+30
      %v9308 = vmul.f32 %v9253, 1e+30
      %v9309 = vmul.f32 %v9254, 1e+30
      %v9310 = vmul.f32 %v9255, 1e+30
      %v9311 = vmul.f32 %v9256, 1e+30
      %v9312 = vmul.f32 %v9257, 1e+30
      %v9313 = vmul.f32 %v9258, 1e+30
      %v9314 = vmul.f32 %v9259, 1e+30
      %v9315 = vmul.f32 %v9260, 1e+30
      %v9316 = vmul.f32 %v9261, 1e+30
      %v9317 = vmul.f32 %v9262, 1e+30
      %v9318 = vmul.f32 %v9263, 1e+30
      %v9319 = vmul.f32 %v9264, 1e+30
      %v9320 = vmul.f32 %v9265, 1e+30
      %v9321 = vmul.f32 %v9266, 1e+30
      %v9322 = vmul.f32 %v9267, 1e+30
      %v9323 = vmul.f32 %v9268, 1e+30
      %v9324 = vmul.f32 %v9269, 1e+30
      %v9325 = vmul.f32 %v9270, 1e+30
      %v9326 = vmul.f32 %v9271, 1e+30
      %v9327 = vmul.f32 %v9272, 1e+30
      %v9328 = vmul.f32 %v9273, 1e+30
      %v9329 = vmul.f32 %v9274, 1e+30
      %v9330 = vmul.f32 %v9275, 1e+30
      %v9331 = vmul.f32 %v9276, 1e+30
      %v9332 = vmul.f32 %v9277, 1e+30
      %v9333 = vpack.c.bf16 %v9278, %v9278
      %v9334 = vpack.c.bf16 %v9279, %v9279
      %v9335 = vpack.c.bf16 %v9280, %v9280
      %v9336 = vpack.c.bf16 %v9281, %v9281
      %v9337 = vpack.c.bf16 %v9282, %v9282
      %v9338 = vpack.c.bf16 %v9283, %v9283
      %v9339 = vpack.c.bf16 %v9284, %v9284
      %v9340 = vpack.c.bf16 %v9285, %v9285
      %v9341 = vpack.c.bf16 %v9286, %v9286
      %v9342 = vpack.c.bf16 %v9287, %v9287
      %v9343 = vpack.c.bf16 %v9288, %v9288
      %v9344 = vpack.c.bf16 %v9289, %v9289
      %v9345 = vpack.c.bf16 %v9290, %v9290
      %v9346 = vpack.c.bf16 %v9291, %v9291
      %v9347 = vpack.c.bf16 %v9292, %v9292
      %v9348 = vpack.c.bf16 %v9293, %v9293
      %v9349 = vpack.c.bf16 %v9294, %v9294
      %v9350 = vpack.c.bf16 %v9295, %v9295
      %v9351 = vpack.c.bf16 %v9296, %v9296
      %v9352 = vpack.c.bf16 %v9297, %v9297
      %v9353 = vpack.c.bf16 %v9298, %v9298
      %v9354 = vpack.c.bf16 %v9299, %v9299
      %v9355 = vpack.c.bf16 %v9300, %v9300
      %v9356 = vpack.c.bf16 %v9301, %v9301
      %v9357 = vpack.c.bf16 %v9302, %v9302
      %v9358 = vpack.c.bf16 %v9303, %v9303
      %v9359 = vpack.c.bf16 %v9304, %v9304
      %v9360 = vpack.c.bf16 %v9305, %v9305
      %v9361 = vpack.c.bf16 %v9306, %v9306
      %v9362 = vpack.c.bf16 %v9307, %v9307
      %v9363 = vpack.c.bf16 %v9308, %v9308
      %v9364 = vpack.c.bf16 %v9309, %v9309
      %v9365 = vpack.c.bf16 %v9310, %v9310
      %v9366 = vpack.c.bf16 %v9311, %v9311
      %v9367 = vpack.c.bf16 %v9312, %v9312
      %v9368 = vpack.c.bf16 %v9313, %v9313
      %v9369 = vpack.c.bf16 %v9314, %v9314
      %v9370 = vpack.c.bf16 %v9315, %v9315
      %v9371 = vpack.c.bf16 %v9316, %v9316
      %v9372 = vpack.c.bf16 %v9317, %v9317
      %v9373 = vpack.c.bf16 %v9318, %v9318
      %v9374 = vpack.c.bf16 %v9319, %v9319
      %v9375 = vpack.c.bf16 %v9320, %v9320
      %v9376 = vpack.c.bf16 %v9321, %v9321
      %v9377 = vpack.c.bf16 %v9322, %v9322
      %v9378 = vpack.c.bf16 %v9323, %v9323
      %v9379 = vpack.c.bf16 %v9324, %v9324
      %v9380 = vpack.c.bf16 %v9325, %v9325
      %v9381 = vpack.c.bf16 %v9326, %v9326
      %v9382 = vpack.c.bf16 %v9327, %v9327
      %v9383 = vpack.c.bf16 %v9328, %v9328
      %v9384 = vpack.c.bf16 %v9329, %v9329
      %v9385 = vpack.c.bf16 %v9330, %v9330
      %v9386 = vpack.c.bf16 %v9331, %v9331
      %v9387 = vpack.c.bf16 %v9332, %v9332
      %9389 = vset.pattern.permute.xlu0 0
      %9390 = vperm.xlu0 %9389, %v9333
      %v9391 = vpop.permute.xlu0 %9390
      %v9394 = vunpack.c.l.s4 839922192
      %v9395 = vunpack.c.0.s8 %v9394
      %v9396 = vperm.slane %v9391, %v9395
      %9398 = vset.pattern.permute.xlu0 0
      %9399 = vperm.xlu0 %9398, %v9334
      %v9400 = vpop.permute.xlu0 %9399
      %v9403 = vunpack.c.l.s4 839922192
      %v9404 = vunpack.c.0.s8 %v9403
      %v9405 = vperm.slane %v9400, %v9404
      %9407 = vset.pattern.permute.xlu0 0
      %9408 = vperm.xlu0 %9407, %v9335
      %v9409 = vpop.permute.xlu0 %9408
      %v9412 = vunpack.c.l.s4 839922192
      %v9413 = vunpack.c.0.s8 %v9412
      %v9414 = vperm.slane %v9409, %v9413
      %9416 = vset.pattern.permute.xlu0 0
      %9417 = vperm.xlu0 %9416, %v9336
      %v9418 = vpop.permute.xlu0 %9417
      %v9421 = vunpack.c.l.s4 839922192
      %v9422 = vunpack.c.0.s8 %v9421
      %v9423 = vperm.slane %v9418, %v9422
      %9425 = vset.pattern.permute.xlu0 0
      %9426 = vperm.xlu0 %9425, %v9337
      %v9427 = vpop.permute.xlu0 %9426
      %v9430 = vunpack.c.l.s4 839922192
      %v9431 = vunpack.c.0.s8 %v9430
      %v9432 = vperm.slane %v9427, %v9431
      %9434 = vset.pattern.permute.xlu0 0
      %9435 = vperm.xlu0 %9434, %v9338
      %v9436 = vpop.permute.xlu0 %9435
      %v9439 = vunpack.c.l.s4 839922192
      %v9440 = vunpack.c.0.s8 %v9439
      %v9441 = vperm.slane %v9436, %v9440
      %9443 = vset.pattern.permute.xlu0 0
      %9444 = vperm.xlu0 %9443, %v9339
      %v9445 = vpop.permute.xlu0 %9444
      %v9448 = vunpack.c.l.s4 839922192
      %v9449 = vunpack.c.0.s8 %v9448
      %v9450 = vperm.slane %v9445, %v9449
      %9452 = vset.pattern.permute.xlu0 0
      %9453 = vperm.xlu0 %9452, %v9340
      %v9454 = vpop.permute.xlu0 %9453
      %v9457 = vunpack.c.l.s4 839922192
      %v9458 = vunpack.c.0.s8 %v9457
      %v9459 = vperm.slane %v9454, %v9458
      %9461 = vset.pattern.permute.xlu0 0
      %9462 = vperm.xlu0 %9461, %v9341
      %v9463 = vpop.permute.xlu0 %9462
      %v9466 = vunpack.c.l.s4 839922192
      %v9467 = vunpack.c.0.s8 %v9466
      %v9468 = vperm.slane %v9463, %v9467
      %9470 = vset.pattern.permute.xlu0 0
      %9471 = vperm.xlu0 %9470, %v9342
      %v9472 = vpop.permute.xlu0 %9471
      %v9475 = vunpack.c.l.s4 839922192
      %v9476 = vunpack.c.0.s8 %v9475
      %v9477 = vperm.slane %v9472, %v9476
      %9479 = vset.pattern.permute.xlu0 0
      %9480 = vperm.xlu0 %9479, %v9343
      %v9481 = vpop.permute.xlu0 %9480
      %v9484 = vunpack.c.l.s4 839922192
      %v9485 = vunpack.c.0.s8 %v9484
      %v9486 = vperm.slane %v9481, %v9485
      %9488 = vset.pattern.permute.xlu0 0
      %9489 = vperm.xlu0 %9488, %v9344
      %v9490 = vpop.permute.xlu0 %9489
      %v9493 = vunpack.c.l.s4 839922192
      %v9494 = vunpack.c.0.s8 %v9493
      %v9495 = vperm.slane %v9490, %v9494
      %9497 = vset.pattern.permute.xlu0 0
      %9498 = vperm.xlu0 %9497, %v9345
      %v9499 = vpop.permute.xlu0 %9498
      %v9502 = vunpack.c.l.s4 839922192
      %v9503 = vunpack.c.0.s8 %v9502
      %v9504 = vperm.slane %v9499, %v9503
      %9506 = vset.pattern.permute.xlu0 0
      %9507 = vperm.xlu0 %9506, %v9346
      %v9508 = vpop.permute.xlu0 %9507
      %v9511 = vunpack.c.l.s4 839922192
      %v9512 = vunpack.c.0.s8 %v9511
      %v9513 = vperm.slane %v9508, %v9512
      %9515 = vset.pattern.permute.xlu0 0
      %9516 = vperm.xlu0 %9515, %v9347
      %v9517 = vpop.permute.xlu0 %9516
      %v9520 = vunpack.c.l.s4 839922192
      %v9521 = vunpack.c.0.s8 %v9520
      %v9522 = vperm.slane %v9517, %v9521
      %9524 = vset.pattern.permute.xlu0 0
      %9525 = vperm.xlu0 %9524, %v9348
      %v9526 = vpop.permute.xlu0 %9525
      %v9529 = vunpack.c.l.s4 839922192
      %v9530 = vunpack.c.0.s8 %v9529
      %v9531 = vperm.slane %v9526, %v9530
      %9533 = vset.pattern.permute.xlu0 0
      %9534 = vperm.xlu0 %9533, %v9349
      %v9535 = vpop.permute.xlu0 %9534
      %v9538 = vunpack.c.l.s4 839922192
      %v9539 = vunpack.c.0.s8 %v9538
      %v9540 = vperm.slane %v9535, %v9539
      %9542 = vset.pattern.permute.xlu0 0
      %9543 = vperm.xlu0 %9542, %v9350
      %v9544 = vpop.permute.xlu0 %9543
      %v9547 = vunpack.c.l.s4 839922192
      %v9548 = vunpack.c.0.s8 %v9547
      %v9549 = vperm.slane %v9544, %v9548
      %9551 = vset.pattern.permute.xlu0 0
      %9552 = vperm.xlu0 %9551, %v9351
      %v9553 = vpop.permute.xlu0 %9552
      %v9556 = vunpack.c.l.s4 839922192
      %v9557 = vunpack.c.0.s8 %v9556
      %v9558 = vperm.slane %v9553, %v9557
      %9560 = vset.pattern.permute.xlu0 0
      %9561 = vperm.xlu0 %9560, %v9352
      %v9562 = vpop.permute.xlu0 %9561
      %v9565 = vunpack.c.l.s4 839922192
      %v9566 = vunpack.c.0.s8 %v9565
      %v9567 = vperm.slane %v9562, %v9566
      %9569 = vset.pattern.permute.xlu0 0
      %9570 = vperm.xlu0 %9569, %v9353
      %v9571 = vpop.permute.xlu0 %9570
      %v9574 = vunpack.c.l.s4 839922192
      %v9575 = vunpack.c.0.s8 %v9574
      %v9576 = vperm.slane %v9571, %v9575
      %9578 = vset.pattern.permute.xlu0 0
      %9579 = vperm.xlu0 %9578, %v9354
      %v9580 = vpop.permute.xlu0 %9579
      %v9583 = vunpack.c.l.s4 839922192
      %v9584 = vunpack.c.0.s8 %v9583
      %v9585 = vperm.slane %v9580, %v9584
      %9587 = vset.pattern.permute.xlu0 0
      %9588 = vperm.xlu0 %9587, %v9355
      %v9589 = vpop.permute.xlu0 %9588
      %v9592 = vunpack.c.l.s4 839922192
      %v9593 = vunpack.c.0.s8 %v9592
      %v9594 = vperm.slane %v9589, %v9593
      %9596 = vset.pattern.permute.xlu0 0
      %9597 = vperm.xlu0 %9596, %v9356
      %v9598 = vpop.permute.xlu0 %9597
      %v9601 = vunpack.c.l.s4 839922192
      %v9602 = vunpack.c.0.s8 %v9601
      %v9603 = vperm.slane %v9598, %v9602
      %9605 = vset.pattern.permute.xlu0 0
      %9606 = vperm.xlu0 %9605, %v9357
      %v9607 = vpop.permute.xlu0 %9606
      %v9610 = vunpack.c.l.s4 839922192
      %v9611 = vunpack.c.0.s8 %v9610
      %v9612 = vperm.slane %v9607, %v9611
      %9614 = vset.pattern.permute.xlu0 0
      %9615 = vperm.xlu0 %9614, %v9358
      %v9616 = vpop.permute.xlu0 %9615
      %v9619 = vunpack.c.l.s4 839922192
      %v9620 = vunpack.c.0.s8 %v9619
      %v9621 = vperm.slane %v9616, %v9620
      %9623 = vset.pattern.permute.xlu0 0
      %9624 = vperm.xlu0 %9623, %v9359
      %v9625 = vpop.permute.xlu0 %9624
      %v9628 = vunpack.c.l.s4 839922192
      %v9629 = vunpack.c.0.s8 %v9628
      %v9630 = vperm.slane %v9625, %v9629
      %9632 = vset.pattern.permute.xlu0 0
      %9633 = vperm.xlu0 %9632, %v9360
      %v9634 = vpop.permute.xlu0 %9633
      %v9637 = vunpack.c.l.s4 839922192
      %v9638 = vunpack.c.0.s8 %v9637
      %v9639 = vperm.slane %v9634, %v9638
      %9641 = vset.pattern.permute.xlu0 0
      %9642 = vperm.xlu0 %9641, %v9361
      %v9643 = vpop.permute.xlu0 %9642
      %v9646 = vunpack.c.l.s4 839922192
      %v9647 = vunpack.c.0.s8 %v9646
      %v9648 = vperm.slane %v9643, %v9647
      %9650 = vset.pattern.permute.xlu0 0
      %9651 = vperm.xlu0 %9650, %v9362
      %v9652 = vpop.permute.xlu0 %9651
      %v9655 = vunpack.c.l.s4 839922192
      %v9656 = vunpack.c.0.s8 %v9655
      %v9657 = vperm.slane %v9652, %v9656
      %9659 = vset.pattern.permute.xlu0 0
      %9660 = vperm.xlu0 %9659, %v9363
      %v9661 = vpop.permute.xlu0 %9660
      %v9664 = vunpack.c.l.s4 839922192
      %v9665 = vunpack.c.0.s8 %v9664
      %v9666 = vperm.slane %v9661, %v9665
      %9668 = vset.pattern.permute.xlu0 0
      %9669 = vperm.xlu0 %9668, %v9364
      %v9670 = vpop.permute.xlu0 %9669
      %v9673 = vunpack.c.l.s4 839922192
      %v9674 = vunpack.c.0.s8 %v9673
      %v9675 = vperm.slane %v9670, %v9674
      %9677 = vset.pattern.permute.xlu0 0
      %9678 = vperm.xlu0 %9677, %v9365
      %v9679 = vpop.permute.xlu0 %9678
      %v9682 = vunpack.c.l.s4 839922192
      %v9683 = vunpack.c.0.s8 %v9682
      %v9684 = vperm.slane %v9679, %v9683
      %9686 = vset.pattern.permute.xlu0 0
      %9687 = vperm.xlu0 %9686, %v9366
      %v9688 = vpop.permute.xlu0 %9687
      %v9691 = vunpack.c.l.s4 839922192
      %v9692 = vunpack.c.0.s8 %v9691
      %v9693 = vperm.slane %v9688, %v9692
      %9695 = vset.pattern.permute.xlu0 0
      %9696 = vperm.xlu0 %9695, %v9367
      %v9697 = vpop.permute.xlu0 %9696
      %v9700 = vunpack.c.l.s4 839922192
      %v9701 = vunpack.c.0.s8 %v9700
      %v9702 = vperm.slane %v9697, %v9701
      %9704 = vset.pattern.permute.xlu0 0
      %9705 = vperm.xlu0 %9704, %v9368
      %v9706 = vpop.permute.xlu0 %9705
      %v9709 = vunpack.c.l.s4 839922192
      %v9710 = vunpack.c.0.s8 %v9709
      %v9711 = vperm.slane %v9706, %v9710
      %9713 = vset.pattern.permute.xlu0 0
      %9714 = vperm.xlu0 %9713, %v9369
      %v9715 = vpop.permute.xlu0 %9714
      %v9718 = vunpack.c.l.s4 839922192
      %v9719 = vunpack.c.0.s8 %v9718
      %v9720 = vperm.slane %v9715, %v9719
      %9722 = vset.pattern.permute.xlu0 0
      %9723 = vperm.xlu0 %9722, %v9370
      %v9724 = vpop.permute.xlu0 %9723
      %v9727 = vunpack.c.l.s4 839922192
      %v9728 = vunpack.c.0.s8 %v9727
      %v9729 = vperm.slane %v9724, %v9728
      %9731 = vset.pattern.permute.xlu0 0
      %9732 = vperm.xlu0 %9731, %v9371
      %v9733 = vpop.permute.xlu0 %9732
      %v9736 = vunpack.c.l.s4 839922192
      %v9737 = vunpack.c.0.s8 %v9736
      %v9738 = vperm.slane %v9733, %v9737
      %9740 = vset.pattern.permute.xlu0 0
      %9741 = vperm.xlu0 %9740, %v9372
      %v9742 = vpop.permute.xlu0 %9741
      %v9745 = vunpack.c.l.s4 839922192
      %v9746 = vunpack.c.0.s8 %v9745
      %v9747 = vperm.slane %v9742, %v9746
      %9749 = vset.pattern.permute.xlu0 0
      %9750 = vperm.xlu0 %9749, %v9373
      %v9751 = vpop.permute.xlu0 %9750
      %v9754 = vunpack.c.l.s4 839922192
      %v9755 = vunpack.c.0.s8 %v9754
      %v9756 = vperm.slane %v9751, %v9755
      %9758 = vset.pattern.permute.xlu0 0
      %9759 = vperm.xlu0 %9758, %v9374
      %v9760 = vpop.permute.xlu0 %9759
      %v9763 = vunpack.c.l.s4 839922192
      %v9764 = vunpack.c.0.s8 %v9763
      %v9765 = vperm.slane %v9760, %v9764
      %9767 = vset.pattern.permute.xlu0 0
      %9768 = vperm.xlu0 %9767, %v9375
      %v9769 = vpop.permute.xlu0 %9768
      %v9772 = vunpack.c.l.s4 839922192
      %v9773 = vunpack.c.0.s8 %v9772
      %v9774 = vperm.slane %v9769, %v9773
      %9776 = vset.pattern.permute.xlu0 0
      %9777 = vperm.xlu0 %9776, %v9376
      %v9778 = vpop.permute.xlu0 %9777
      %v9781 = vunpack.c.l.s4 839922192
      %v9782 = vunpack.c.0.s8 %v9781
      %v9783 = vperm.slane %v9778, %v9782
      %9785 = vset.pattern.permute.xlu0 0
      %9786 = vperm.xlu0 %9785, %v9377
      %v9787 = vpop.permute.xlu0 %9786
      %v9790 = vunpack.c.l.s4 839922192
      %v9791 = vunpack.c.0.s8 %v9790
      %v9792 = vperm.slane %v9787, %v9791
      %9794 = vset.pattern.permute.xlu0 0
      %9795 = vperm.xlu0 %9794, %v9378
      %v9796 = vpop.permute.xlu0 %9795
      %v9799 = vunpack.c.l.s4 839922192
      %v9800 = vunpack.c.0.s8 %v9799
      %v9801 = vperm.slane %v9796, %v9800
      %9803 = vset.pattern.permute.xlu0 0
      %9804 = vperm.xlu0 %9803, %v9379
      %v9805 = vpop.permute.xlu0 %9804
      %v9808 = vunpack.c.l.s4 839922192
      %v9809 = vunpack.c.0.s8 %v9808
      %v9810 = vperm.slane %v9805, %v9809
      %9812 = vset.pattern.permute.xlu0 0
      %9813 = vperm.xlu0 %9812, %v9380
      %v9814 = vpop.permute.xlu0 %9813
      %v9817 = vunpack.c.l.s4 839922192
      %v9818 = vunpack.c.0.s8 %v9817
      %v9819 = vperm.slane %v9814, %v9818
      %9821 = vset.pattern.permute.xlu0 0
      %9822 = vperm.xlu0 %9821, %v9381
      %v9823 = vpop.permute.xlu0 %9822
      %v9826 = vunpack.c.l.s4 839922192
      %v9827 = vunpack.c.0.s8 %v9826
      %v9828 = vperm.slane %v9823, %v9827
      %9830 = vset.pattern.permute.xlu0 0
      %9831 = vperm.xlu0 %9830, %v9382
      %v9832 = vpop.permute.xlu0 %9831
      %v9835 = vunpack.c.l.s4 839922192
      %v9836 = vunpack.c.0.s8 %v9835
      %v9837 = vperm.slane %v9832, %v9836
      %9839 = vset.pattern.permute.xlu0 0
      %9840 = vperm.xlu0 %9839, %v9383
      %v9841 = vpop.permute.xlu0 %9840
      %v9844 = vunpack.c.l.s4 839922192
      %v9845 = vunpack.c.0.s8 %v9844
      %v9846 = vperm.slane %v9841, %v9845
      %9848 = vset.pattern.permute.xlu0 0
      %9849 = vperm.xlu0 %9848, %v9384
      %v9850 = vpop.permute.xlu0 %9849
      %v9853 = vunpack.c.l.s4 839922192
      %v9854 = vunpack.c.0.s8 %v9853
      %v9855 = vperm.slane %v9850, %v9854
      %9857 = vset.pattern.permute.xlu0 0
      %9858 = vperm.xlu0 %9857, %v9385
      %v9859 = vpop.permute.xlu0 %9858
      %v9862 = vunpack.c.l.s4 839922192
      %v9863 = vunpack.c.0.s8 %v9862
      %v9864 = vperm.slane %v9859, %v9863
      %9866 = vset.pattern.permute.xlu0 0
      %9867 = vperm.xlu0 %9866, %v9386
      %v9868 = vpop.permute.xlu0 %9867
      %v9871 = vunpack.c.l.s4 839922192
      %v9872 = vunpack.c.0.s8 %v9871
      %v9873 = vperm.slane %v9868, %v9872
      %9875 = vset.pattern.permute.xlu0 0
      %9876 = vperm.xlu0 %9875, %v9387
      %v9877 = vpop.permute.xlu0 %9876
      %v9880 = vunpack.c.l.s4 839922192
      %v9881 = vunpack.c.0.s8 %v9880
      %v9882 = vperm.slane %v9877, %v9881
      %v9883 = vunpack.c.l.bf16 %v415
      %v9884 = vunpack.c.l.bf16 %v416
      %v9885 = vunpack.c.l.bf16 %v417
      %v9886 = vunpack.c.l.bf16 %v418
      %v9887 = vunpack.c.l.bf16 %v419
      %v9888 = vunpack.c.l.bf16 %v420
      %v9889 = vunpack.c.l.bf16 %v421
      %v9890 = vunpack.c.l.bf16 %v422
      %v9891 = vunpack.c.l.bf16 %v423
      %v9892 = vunpack.c.l.bf16 %v424
      %v9893 = vunpack.c.l.bf16 %v425
      %v9894 = vunpack.c.l.bf16 %v426
      %v9895 = vunpack.c.l.bf16 %v427
      %v9896 = vunpack.c.l.bf16 %v428
      %v9897 = vunpack.c.l.bf16 %v429
      %v9898 = vunpack.c.l.bf16 %v430
      %v9899 = vunpack.c.l.bf16 %v431
      %v9900 = vunpack.c.l.bf16 %v432
      %v9901 = vunpack.c.l.bf16 %v433
      %v9902 = vunpack.c.l.bf16 %v434
      %v9903 = vunpack.c.l.bf16 %v435
      %v9904 = vunpack.c.l.bf16 %v436
      %v9905 = vunpack.c.l.bf16 %v437
      %v9906 = vunpack.c.l.bf16 %v438
      %v9907 = vunpack.c.l.bf16 %v439
      %v9908 = vunpack.c.l.bf16 %v440
      %v9909 = vunpack.c.l.bf16 %v441
      %v9910 = vunpack.c.l.bf16 %v442
      %v9911 = vunpack.c.l.bf16 %v443
      %v9912 = vunpack.c.l.bf16 %v444
      %v9913 = vunpack.c.l.bf16 %v445
      %v9914 = vunpack.c.l.bf16 %v446
      %v9915 = vunpack.c.l.bf16 %v447
      %v9916 = vunpack.c.l.bf16 %v448
      %v9917 = vunpack.c.l.bf16 %v449
      %v9918 = vunpack.c.l.bf16 %v450
      %v9919 = vunpack.c.l.bf16 %v451
      %v9920 = vunpack.c.l.bf16 %v452
      %v9921 = vunpack.c.l.bf16 %v453
      %v9922 = vunpack.c.l.bf16 %v454
      %v9923 = vunpack.c.l.bf16 %v455
      %v9924 = vunpack.c.l.bf16 %v456
      %v9925 = vunpack.c.l.bf16 %v457
      %v9926 = vunpack.c.l.bf16 %v458
      %v9927 = vunpack.c.l.bf16 %v459
      %v9928 = vunpack.c.l.bf16 %v460
      %v9929 = vunpack.c.l.bf16 %v461
      %v9930 = vunpack.c.l.bf16 %v462
      %v9931 = vunpack.c.l.bf16 %v463
      %v9932 = vunpack.c.l.bf16 %v464
      %v9933 = vunpack.c.l.bf16 %v465
      %v9934 = vunpack.c.l.bf16 %v466
      %v9935 = vunpack.c.l.bf16 %v467
      %v9936 = vunpack.c.l.bf16 %v468
      %v9937 = vunpack.c.l.bf16 %v469
      %v9938 = vunpack.c.l.bf16 %v9396
      %v9939 = vunpack.c.l.bf16 %v9405
      %v9940 = vunpack.c.l.bf16 %v9414
      %v9941 = vunpack.c.l.bf16 %v9423
      %v9942 = vunpack.c.l.bf16 %v9432
      %v9943 = vunpack.c.l.bf16 %v9441
      %v9944 = vunpack.c.l.bf16 %v9450
      %v9945 = vunpack.c.l.bf16 %v9459
      %v9946 = vunpack.c.l.bf16 %v9468
      %v9947 = vunpack.c.l.bf16 %v9477
      %v9948 = vunpack.c.l.bf16 %v9486
      %v9949 = vunpack.c.l.bf16 %v9495
      %v9950 = vunpack.c.l.bf16 %v9504
      %v9951 = vunpack.c.l.bf16 %v9513
      %v9952 = vunpack.c.l.bf16 %v9522
      %v9953 = vunpack.c.l.bf16 %v9531
      %v9954 = vunpack.c.l.bf16 %v9540
      %v9955 = vunpack.c.l.bf16 %v9549
      %v9956 = vunpack.c.l.bf16 %v9558
      %v9957 = vunpack.c.l.bf16 %v9567
      %v9958 = vunpack.c.l.bf16 %v9576
      %v9959 = vunpack.c.l.bf16 %v9585
      %v9960 = vunpack.c.l.bf16 %v9594
      %v9961 = vunpack.c.l.bf16 %v9603
      %v9962 = vunpack.c.l.bf16 %v9612
      %v9963 = vunpack.c.l.bf16 %v9621
      %v9964 = vunpack.c.l.bf16 %v9630
      %v9965 = vunpack.c.l.bf16 %v9639
      %v9966 = vunpack.c.l.bf16 %v9648
      %v9967 = vunpack.c.l.bf16 %v9657
      %v9968 = vunpack.c.l.bf16 %v9666
      %v9969 = vunpack.c.l.bf16 %v9675
      %v9970 = vunpack.c.l.bf16 %v9684
      %v9971 = vunpack.c.l.bf16 %v9693
      %v9972 = vunpack.c.l.bf16 %v9702
      %v9973 = vunpack.c.l.bf16 %v9711
      %v9974 = vunpack.c.l.bf16 %v9720
      %v9975 = vunpack.c.l.bf16 %v9729
      %v9976 = vunpack.c.l.bf16 %v9738
      %v9977 = vunpack.c.l.bf16 %v9747
      %v9978 = vunpack.c.l.bf16 %v9756
      %v9979 = vunpack.c.l.bf16 %v9765
      %v9980 = vunpack.c.l.bf16 %v9774
      %v9981 = vunpack.c.l.bf16 %v9783
      %v9982 = vunpack.c.l.bf16 %v9792
      %v9983 = vunpack.c.l.bf16 %v9801
      %v9984 = vunpack.c.l.bf16 %v9810
      %v9985 = vunpack.c.l.bf16 %v9819
      %v9986 = vunpack.c.l.bf16 %v9828
      %v9987 = vunpack.c.l.bf16 %v9837
      %v9988 = vunpack.c.l.bf16 %v9846
      %v9989 = vunpack.c.l.bf16 %v9855
      %v9990 = vunpack.c.l.bf16 %v9864
      %v9991 = vunpack.c.l.bf16 %v9873
      %v9992 = vunpack.c.l.bf16 %v9882
      %v9993 = vadd.f32 %v9883, %v9938
      %v9994 = vadd.f32 %v9884, %v9939
      %v9995 = vadd.f32 %v9885, %v9940
      %v9996 = vadd.f32 %v9886, %v9941
      %v9997 = vadd.f32 %v9887, %v9942
      %v9998 = vadd.f32 %v9888, %v9943
      %v9999 = vadd.f32 %v9889, %v9944
      %v10000 = vadd.f32 %v9890, %v9945
      %v10001 = vadd.f32 %v9891, %v9946
      %v10002 = vadd.f32 %v9892, %v9947
      %v10003 = vadd.f32 %v9893, %v9948
      %v10004 = vadd.f32 %v9894, %v9949
      %v10005 = vadd.f32 %v9895, %v9950
      %v10006 = vadd.f32 %v9896, %v9951
      %v10007 = vadd.f32 %v9897, %v9952
      %v10008 = vadd.f32 %v9898, %v9953
      %v10009 = vadd.f32 %v9899, %v9954
      %v10010 = vadd.f32 %v9900, %v9955
      %v10011 = vadd.f32 %v9901, %v9956
      %v10012 = vadd.f32 %v9902, %v9957
      %v10013 = vadd.f32 %v9903, %v9958
      %v10014 = vadd.f32 %v9904, %v9959
      %v10015 = vadd.f32 %v9905, %v9960
      %v10016 = vadd.f32 %v9906, %v9961
      %v10017 = vadd.f32 %v9907, %v9962
      %v10018 = vadd.f32 %v9908, %v9963
      %v10019 = vadd.f32 %v9909, %v9964
      %v10020 = vadd.f32 %v9910, %v9965
      %v10021 = vadd.f32 %v9911, %v9966
      %v10022 = vadd.f32 %v9912, %v9967
      %v10023 = vadd.f32 %v9913, %v9968
      %v10024 = vadd.f32 %v9914, %v9969
      %v10025 = vadd.f32 %v9915, %v9970
      %v10026 = vadd.f32 %v9916, %v9971
      %v10027 = vadd.f32 %v9917, %v9972
      %v10028 = vadd.f32 %v9918, %v9973
      %v10029 = vadd.f32 %v9919, %v9974
      %v10030 = vadd.f32 %v9920, %v9975
      %v10031 = vadd.f32 %v9921, %v9976
      %v10032 = vadd.f32 %v9922, %v9977
      %v10033 = vadd.f32 %v9923, %v9978
      %v10034 = vadd.f32 %v9924, %v9979
      %v10035 = vadd.f32 %v9925, %v9980
      %v10036 = vadd.f32 %v9926, %v9981
      %v10037 = vadd.f32 %v9927, %v9982
      %v10038 = vadd.f32 %v9928, %v9983
      %v10039 = vadd.f32 %v9929, %v9984
      %v10040 = vadd.f32 %v9930, %v9985
      %v10041 = vadd.f32 %v9931, %v9986
      %v10042 = vadd.f32 %v9932, %v9987
      %v10043 = vadd.f32 %v9933, %v9988
      %v10044 = vadd.f32 %v9934, %v9989
      %v10045 = vadd.f32 %v9935, %v9990
      %v10046 = vadd.f32 %v9936, %v9991
      %v10047 = vadd.f32 %v9937, %v9992
      %v10048 = vpack.c.bf16 %v9993, %v9993
      %v10049 = vpack.c.bf16 %v9994, %v9994
      %v10050 = vpack.c.bf16 %v9995, %v9995
      %v10051 = vpack.c.bf16 %v9996, %v9996
      %v10052 = vpack.c.bf16 %v9997, %v9997
      %v10053 = vpack.c.bf16 %v9998, %v9998
      %v10054 = vpack.c.bf16 %v9999, %v9999
      %v10055 = vpack.c.bf16 %v10000, %v10000
      %v10056 = vpack.c.bf16 %v10001, %v10001
      %v10057 = vpack.c.bf16 %v10002, %v10002
      %v10058 = vpack.c.bf16 %v10003, %v10003
      %v10059 = vpack.c.bf16 %v10004, %v10004
      %v10060 = vpack.c.bf16 %v10005, %v10005
      %v10061 = vpack.c.bf16 %v10006, %v10006
      %v10062 = vpack.c.bf16 %v10007, %v10007
      %v10063 = vpack.c.bf16 %v10008, %v10008
      %v10064 = vpack.c.bf16 %v10009, %v10009
      %v10065 = vpack.c.bf16 %v10010, %v10010
      %v10066 = vpack.c.bf16 %v10011, %v10011
      %v10067 = vpack.c.bf16 %v10012, %v10012
      %v10068 = vpack.c.bf16 %v10013, %v10013
      %v10069 = vpack.c.bf16 %v10014, %v10014
      %v10070 = vpack.c.bf16 %v10015, %v10015
      %v10071 = vpack.c.bf16 %v10016, %v10016
      %v10072 = vpack.c.bf16 %v10017, %v10017
      %v10073 = vpack.c.bf16 %v10018, %v10018
      %v10074 = vpack.c.bf16 %v10019, %v10019
      %v10075 = vpack.c.bf16 %v10020, %v10020
      %v10076 = vpack.c.bf16 %v10021, %v10021
      %v10077 = vpack.c.bf16 %v10022, %v10022
      %v10078 = vpack.c.bf16 %v10023, %v10023
      %v10079 = vpack.c.bf16 %v10024, %v10024
      %v10080 = vpack.c.bf16 %v10025, %v10025
      %v10081 = vpack.c.bf16 %v10026, %v10026
      %v10082 = vpack.c.bf16 %v10027, %v10027
      %v10083 = vpack.c.bf16 %v10028, %v10028
      %v10084 = vpack.c.bf16 %v10029, %v10029
      %v10085 = vpack.c.bf16 %v10030, %v10030
      %v10086 = vpack.c.bf16 %v10031, %v10031
      %v10087 = vpack.c.bf16 %v10032, %v10032
      %v10088 = vpack.c.bf16 %v10033, %v10033
      %v10089 = vpack.c.bf16 %v10034, %v10034
      %v10090 = vpack.c.bf16 %v10035, %v10035
      %v10091 = vpack.c.bf16 %v10036, %v10036
      %v10092 = vpack.c.bf16 %v10037, %v10037
      %v10093 = vpack.c.bf16 %v10038, %v10038
      %v10094 = vpack.c.bf16 %v10039, %v10039
      %v10095 = vpack.c.bf16 %v10040, %v10040
      %v10096 = vpack.c.bf16 %v10041, %v10041
      %v10097 = vpack.c.bf16 %v10042, %v10042
      %v10098 = vpack.c.bf16 %v10043, %v10043
      %v10099 = vpack.c.bf16 %v10044, %v10044
      %v10100 = vpack.c.bf16 %v10045, %v10045
      %v10101 = vpack.c.bf16 %v10046, %v10046
      %v10102 = vpack.c.bf16 %v10047, %v10047
      %v10103 = vunpack.c.l.bf16 %v10048
      %v10104 = vunpack.c.l.bf16 %v10049
      %v10105 = vunpack.c.l.bf16 %v10050
      %v10106 = vunpack.c.l.bf16 %v10051
      %v10107 = vunpack.c.l.bf16 %v10052
      %v10108 = vunpack.c.l.bf16 %v10053
      %v10109 = vunpack.c.l.bf16 %v10054
      %v10110 = vunpack.c.l.bf16 %v10055
      %v10111 = vunpack.c.l.bf16 %v10056
      %v10112 = vunpack.c.l.bf16 %v10057
      %v10113 = vunpack.c.l.bf16 %v10058
      %v10114 = vunpack.c.l.bf16 %v10059
      %v10115 = vunpack.c.l.bf16 %v10060
      %v10116 = vunpack.c.l.bf16 %v10061
      %v10117 = vunpack.c.l.bf16 %v10062
      %v10118 = vunpack.c.l.bf16 %v10063
      %v10119 = vunpack.c.l.bf16 %v10064
      %v10120 = vunpack.c.l.bf16 %v10065
      %v10121 = vunpack.c.l.bf16 %v10066
      %v10122 = vunpack.c.l.bf16 %v10067
      %v10123 = vunpack.c.l.bf16 %v10068
      %v10124 = vunpack.c.l.bf16 %v10069
      %v10125 = vunpack.c.l.bf16 %v10070
      %v10126 = vunpack.c.l.bf16 %v10071
      %v10127 = vunpack.c.l.bf16 %v10072
      %v10128 = vunpack.c.l.bf16 %v10073
      %v10129 = vunpack.c.l.bf16 %v10074
      %v10130 = vunpack.c.l.bf16 %v10075
      %v10131 = vunpack.c.l.bf16 %v10076
      %v10132 = vunpack.c.l.bf16 %v10077
      %v10133 = vunpack.c.l.bf16 %v10078
      %v10134 = vunpack.c.l.bf16 %v10079
      %v10135 = vunpack.c.l.bf16 %v10080
      %v10136 = vunpack.c.l.bf16 %v10081
      %v10137 = vunpack.c.l.bf16 %v10082
      %v10138 = vunpack.c.l.bf16 %v10083
      %v10139 = vunpack.c.l.bf16 %v10084
      %v10140 = vunpack.c.l.bf16 %v10085
      %v10141 = vunpack.c.l.bf16 %v10086
      %v10142 = vunpack.c.l.bf16 %v10087
      %v10143 = vunpack.c.l.bf16 %v10088
      %v10144 = vunpack.c.l.bf16 %v10089
      %v10145 = vunpack.c.l.bf16 %v10090
      %v10146 = vunpack.c.l.bf16 %v10091
      %v10147 = vunpack.c.l.bf16 %v10092
      %v10148 = vunpack.c.l.bf16 %v10093
      %v10149 = vunpack.c.l.bf16 %v10094
      %v10150 = vunpack.c.l.bf16 %v10095
      %v10151 = vunpack.c.l.bf16 %v10096
      %v10152 = vunpack.c.l.bf16 %v10097
      %v10153 = vunpack.c.l.bf16 %v10098
      %v10154 = vunpack.c.l.bf16 %v10099
      %v10155 = vunpack.c.l.bf16 %v10100
      %v10156 = vunpack.c.l.bf16 %v10101
      %v10157 = vunpack.c.l.bf16 %v10102
      %v10213 = vrot.slane %v10103, 1
      %v10214 = vrot.slane %v10104, 1
      %v10215 = vsel %vm1303, %v10213, %v10214
      %v10216 = vrot.slane %v10105, 1
      %v10217 = vsel %vm1303, %v10214, %v10216
      %v10218 = vrot.slane %v10106, 1
      %v10219 = vsel %vm1303, %v10216, %v10218
      %v10220 = vrot.slane %v10107, 1
      %v10221 = vsel %vm1303, %v10218, %v10220
      %v10222 = vrot.slane %v10108, 1
      %v10223 = vsel %vm1303, %v10220, %v10222
      %v10224 = vrot.slane %v10109, 1
      %v10225 = vsel %vm1303, %v10222, %v10224
      %v10226 = vrot.slane %v10110, 1
      %v10227 = vsel %vm1303, %v10224, %v10226
      %v10228 = vrot.slane %v10111, 1
      %v10229 = vsel %vm1303, %v10226, %v10228
      %v10230 = vrot.slane %v10112, 1
      %v10231 = vsel %vm1303, %v10228, %v10230
      %v10232 = vrot.slane %v10113, 1
      %v10233 = vsel %vm1303, %v10230, %v10232
      %v10234 = vrot.slane %v10114, 1
      %v10235 = vsel %vm1303, %v10232, %v10234
      %v10236 = vrot.slane %v10115, 1
      %v10237 = vsel %vm1303, %v10234, %v10236
      %v10238 = vrot.slane %v10116, 1
      %v10239 = vsel %vm1303, %v10236, %v10238
      %v10240 = vrot.slane %v10117, 1
      %v10241 = vsel %vm1303, %v10238, %v10240
      %v10242 = vrot.slane %v10118, 1
      %v10243 = vsel %vm1303, %v10240, %v10242
      %v10244 = vrot.slane %v10119, 1
      %v10245 = vsel %vm1303, %v10242, %v10244
      %v10246 = vrot.slane %v10120, 1
      %v10247 = vsel %vm1303, %v10244, %v10246
      %v10248 = vrot.slane %v10121, 1
      %v10249 = vsel %vm1303, %v10246, %v10248
      %v10250 = vrot.slane %v10122, 1
      %v10251 = vsel %vm1303, %v10248, %v10250
      %v10252 = vrot.slane %v10123, 1
      %v10253 = vsel %vm1303, %v10250, %v10252
      %v10254 = vrot.slane %v10124, 1
      %v10255 = vsel %vm1303, %v10252, %v10254
      %v10256 = vrot.slane %v10125, 1
      %v10257 = vsel %vm1303, %v10254, %v10256
      %v10258 = vrot.slane %v10126, 1
      %v10259 = vsel %vm1303, %v10256, %v10258
      %v10260 = vrot.slane %v10127, 1
      %v10261 = vsel %vm1303, %v10258, %v10260
      %v10262 = vrot.slane %v10128, 1
      %v10263 = vsel %vm1303, %v10260, %v10262
      %v10264 = vrot.slane %v10129, 1
      %v10265 = vsel %vm1303, %v10262, %v10264
      %v10266 = vrot.slane %v10130, 1
      %v10267 = vsel %vm1303, %v10264, %v10266
      %v10268 = vrot.slane %v10131, 1
      %v10269 = vsel %vm1303, %v10266, %v10268
      %v10270 = vrot.slane %v10132, 1
      %v10271 = vsel %vm1303, %v10268, %v10270
      %v10272 = vrot.slane %v10133, 1
      %v10273 = vsel %vm1303, %v10270, %v10272
      %v10274 = vrot.slane %v10134, 1
      %v10275 = vsel %vm1303, %v10272, %v10274
      %v10276 = vrot.slane %v10135, 1
      %v10277 = vsel %vm1303, %v10274, %v10276
      %v10278 = vrot.slane %v10136, 1
      %v10279 = vsel %vm1303, %v10276, %v10278
      %v10280 = vrot.slane %v10137, 1
      %v10281 = vsel %vm1303, %v10278, %v10280
      %v10282 = vrot.slane %v10138, 1
      %v10283 = vsel %vm1303, %v10280, %v10282
      %v10284 = vrot.slane %v10139, 1
      %v10285 = vsel %vm1303, %v10282, %v10284
      %v10286 = vrot.slane %v10140, 1
      %v10287 = vsel %vm1303, %v10284, %v10286
      %v10288 = vrot.slane %v10141, 1
      %v10289 = vsel %vm1303, %v10286, %v10288
      %v10290 = vrot.slane %v10142, 1
      %v10291 = vsel %vm1303, %v10288, %v10290
      %v10292 = vrot.slane %v10143, 1
      %v10293 = vsel %vm1303, %v10290, %v10292
      %v10294 = vrot.slane %v10144, 1
      %v10295 = vsel %vm1303, %v10292, %v10294
      %v10296 = vrot.slane %v10145, 1
      %v10297 = vsel %vm1303, %v10294, %v10296
      %v10298 = vrot.slane %v10146, 1
      %v10299 = vsel %vm1303, %v10296, %v10298
      %v10300 = vrot.slane %v10147, 1
      %v10301 = vsel %vm1303, %v10298, %v10300
      %v10302 = vrot.slane %v10148, 1
      %v10303 = vsel %vm1303, %v10300, %v10302
      %v10304 = vrot.slane %v10149, 1
      %v10305 = vsel %vm1303, %v10302, %v10304
      %v10306 = vrot.slane %v10150, 1
      %v10307 = vsel %vm1303, %v10304, %v10306
      %v10308 = vrot.slane %v10151, 1
      %v10309 = vsel %vm1303, %v10306, %v10308
      %v10310 = vrot.slane %v10152, 1
      %v10311 = vsel %vm1303, %v10308, %v10310
      %v10312 = vrot.slane %v10153, 1
      %v10313 = vsel %vm1303, %v10310, %v10312
      %v10314 = vrot.slane %v10154, 1
      %v10315 = vsel %vm1303, %v10312, %v10314
      %v10316 = vrot.slane %v10155, 1
      %v10317 = vsel %vm1303, %v10314, %v10316
      %v10318 = vrot.slane %v10156, 1
      %v10319 = vsel %vm1303, %v10316, %v10318
      %v10320 = vrot.slane %v10157, 1
      %v10321 = vsel %vm1303, %v10318, %v10320
      %v10376 = vmax.f32 %v10103, %v10215
      %v10377 = vmax.f32 %v10104, %v10217
      %v10378 = vmax.f32 %v10105, %v10219
      %v10379 = vmax.f32 %v10106, %v10221
      %v10380 = vmax.f32 %v10107, %v10223
      %v10381 = vmax.f32 %v10108, %v10225
      %v10382 = vmax.f32 %v10109, %v10227
      %v10383 = vmax.f32 %v10110, %v10229
      %v10384 = vmax.f32 %v10111, %v10231
      %v10385 = vmax.f32 %v10112, %v10233
      %v10386 = vmax.f32 %v10113, %v10235
      %v10387 = vmax.f32 %v10114, %v10237
      %v10388 = vmax.f32 %v10115, %v10239
      %v10389 = vmax.f32 %v10116, %v10241
      %v10390 = vmax.f32 %v10117, %v10243
      %v10391 = vmax.f32 %v10118, %v10245
      %v10392 = vmax.f32 %v10119, %v10247
      %v10393 = vmax.f32 %v10120, %v10249
      %v10394 = vmax.f32 %v10121, %v10251
      %v10395 = vmax.f32 %v10122, %v10253
      %v10396 = vmax.f32 %v10123, %v10255
      %v10397 = vmax.f32 %v10124, %v10257
      %v10398 = vmax.f32 %v10125, %v10259
      %v10399 = vmax.f32 %v10126, %v10261
      %v10400 = vmax.f32 %v10127, %v10263
      %v10401 = vmax.f32 %v10128, %v10265
      %v10402 = vmax.f32 %v10129, %v10267
      %v10403 = vmax.f32 %v10130, %v10269
      %v10404 = vmax.f32 %v10131, %v10271
      %v10405 = vmax.f32 %v10132, %v10273
      %v10406 = vmax.f32 %v10133, %v10275
      %v10407 = vmax.f32 %v10134, %v10277
      %v10408 = vmax.f32 %v10135, %v10279
      %v10409 = vmax.f32 %v10136, %v10281
      %v10410 = vmax.f32 %v10137, %v10283
      %v10411 = vmax.f32 %v10138, %v10285
      %v10412 = vmax.f32 %v10139, %v10287
      %v10413 = vmax.f32 %v10140, %v10289
      %v10414 = vmax.f32 %v10141, %v10291
      %v10415 = vmax.f32 %v10142, %v10293
      %v10416 = vmax.f32 %v10143, %v10295
      %v10417 = vmax.f32 %v10144, %v10297
      %v10418 = vmax.f32 %v10145, %v10299
      %v10419 = vmax.f32 %v10146, %v10301
      %v10420 = vmax.f32 %v10147, %v10303
      %v10421 = vmax.f32 %v10148, %v10305
      %v10422 = vmax.f32 %v10149, %v10307
      %v10423 = vmax.f32 %v10150, %v10309
      %v10424 = vmax.f32 %v10151, %v10311
      %v10425 = vmax.f32 %v10152, %v10313
      %v10426 = vmax.f32 %v10153, %v10315
      %v10427 = vmax.f32 %v10154, %v10317
      %v10428 = vmax.f32 %v10155, %v10319
      %v10429 = vmax.f32 %v10156, %v10321
      %v10430 = vpack.c.bf16 %v10376, %v10376
      %v10431 = vpack.c.bf16 %v10377, %v10377
      %v10432 = vpack.c.bf16 %v10378, %v10378
      %v10433 = vpack.c.bf16 %v10379, %v10379
      %v10434 = vpack.c.bf16 %v10380, %v10380
      %v10435 = vpack.c.bf16 %v10381, %v10381
      %v10436 = vpack.c.bf16 %v10382, %v10382
      %v10437 = vpack.c.bf16 %v10383, %v10383
      %v10438 = vpack.c.bf16 %v10384, %v10384
      %v10439 = vpack.c.bf16 %v10385, %v10385
      %v10440 = vpack.c.bf16 %v10386, %v10386
      %v10441 = vpack.c.bf16 %v10387, %v10387
      %v10442 = vpack.c.bf16 %v10388, %v10388
      %v10443 = vpack.c.bf16 %v10389, %v10389
      %v10444 = vpack.c.bf16 %v10390, %v10390
      %v10445 = vpack.c.bf16 %v10391, %v10391
      %v10446 = vpack.c.bf16 %v10392, %v10392
      %v10447 = vpack.c.bf16 %v10393, %v10393
      %v10448 = vpack.c.bf16 %v10394, %v10394
      %v10449 = vpack.c.bf16 %v10395, %v10395
      %v10450 = vpack.c.bf16 %v10396, %v10396
      %v10451 = vpack.c.bf16 %v10397, %v10397
      %v10452 = vpack.c.bf16 %v10398, %v10398
      %v10453 = vpack.c.bf16 %v10399, %v10399
      %v10454 = vpack.c.bf16 %v10400, %v10400
      %v10455 = vpack.c.bf16 %v10401, %v10401
      %v10456 = vpack.c.bf16 %v10402, %v10402
      %v10457 = vpack.c.bf16 %v10403, %v10403
      %v10458 = vpack.c.bf16 %v10404, %v10404
      %v10459 = vpack.c.bf16 %v10405, %v10405
      %v10460 = vpack.c.bf16 %v10406, %v10406
      %v10461 = vpack.c.bf16 %v10407, %v10407
      %v10462 = vpack.c.bf16 %v10408, %v10408
      %v10463 = vpack.c.bf16 %v10409, %v10409
      %v10464 = vpack.c.bf16 %v10410, %v10410
      %v10465 = vpack.c.bf16 %v10411, %v10411
      %v10466 = vpack.c.bf16 %v10412, %v10412
      %v10467 = vpack.c.bf16 %v10413, %v10413
      %v10468 = vpack.c.bf16 %v10414, %v10414
      %v10469 = vpack.c.bf16 %v10415, %v10415
      %v10470 = vpack.c.bf16 %v10416, %v10416
      %v10471 = vpack.c.bf16 %v10417, %v10417
      %v10472 = vpack.c.bf16 %v10418, %v10418
      %v10473 = vpack.c.bf16 %v10419, %v10419
      %v10474 = vpack.c.bf16 %v10420, %v10420
      %v10475 = vpack.c.bf16 %v10421, %v10421
      %v10476 = vpack.c.bf16 %v10422, %v10422
      %v10477 = vpack.c.bf16 %v10423, %v10423
      %v10478 = vpack.c.bf16 %v10424, %v10424
      %v10479 = vpack.c.bf16 %v10425, %v10425
      %v10480 = vpack.c.bf16 %v10426, %v10426
      %v10481 = vpack.c.bf16 %v10427, %v10427
      %v10482 = vpack.c.bf16 %v10428, %v10428
      %v10483 = vpack.c.bf16 %v10429, %v10429
      %v10484 = vunpack.c.l.bf16 %v10430
      %v10485 = vunpack.c.l.bf16 %v10431
      %v10486 = vunpack.c.l.bf16 %v10432
      %v10487 = vunpack.c.l.bf16 %v10433
      %v10488 = vunpack.c.l.bf16 %v10434
      %v10489 = vunpack.c.l.bf16 %v10435
      %v10490 = vunpack.c.l.bf16 %v10436
      %v10491 = vunpack.c.l.bf16 %v10437
      %v10492 = vunpack.c.l.bf16 %v10438
      %v10493 = vunpack.c.l.bf16 %v10439
      %v10494 = vunpack.c.l.bf16 %v10440
      %v10495 = vunpack.c.l.bf16 %v10441
      %v10496 = vunpack.c.l.bf16 %v10442
      %v10497 = vunpack.c.l.bf16 %v10443
      %v10498 = vunpack.c.l.bf16 %v10444
      %v10499 = vunpack.c.l.bf16 %v10445
      %v10500 = vunpack.c.l.bf16 %v10446
      %v10501 = vunpack.c.l.bf16 %v10447
      %v10502 = vunpack.c.l.bf16 %v10448
      %v10503 = vunpack.c.l.bf16 %v10449
      %v10504 = vunpack.c.l.bf16 %v10450
      %v10505 = vunpack.c.l.bf16 %v10451
      %v10506 = vunpack.c.l.bf16 %v10452
      %v10507 = vunpack.c.l.bf16 %v10453
      %v10508 = vunpack.c.l.bf16 %v10454
      %v10509 = vunpack.c.l.bf16 %v10455
      %v10510 = vunpack.c.l.bf16 %v10456
      %v10511 = vunpack.c.l.bf16 %v10457
      %v10512 = vunpack.c.l.bf16 %v10458
      %v10513 = vunpack.c.l.bf16 %v10459
      %v10514 = vunpack.c.l.bf16 %v10460
      %v10515 = vunpack.c.l.bf16 %v10461
      %v10516 = vunpack.c.l.bf16 %v10462
      %v10517 = vunpack.c.l.bf16 %v10463
      %v10518 = vunpack.c.l.bf16 %v10464
      %v10519 = vunpack.c.l.bf16 %v10465
      %v10520 = vunpack.c.l.bf16 %v10466
      %v10521 = vunpack.c.l.bf16 %v10467
      %v10522 = vunpack.c.l.bf16 %v10468
      %v10523 = vunpack.c.l.bf16 %v10469
      %v10524 = vunpack.c.l.bf16 %v10470
      %v10525 = vunpack.c.l.bf16 %v10471
      %v10526 = vunpack.c.l.bf16 %v10472
      %v10527 = vunpack.c.l.bf16 %v10473
      %v10528 = vunpack.c.l.bf16 %v10474
      %v10529 = vunpack.c.l.bf16 %v10475
      %v10530 = vunpack.c.l.bf16 %v10476
      %v10531 = vunpack.c.l.bf16 %v10477
      %v10532 = vunpack.c.l.bf16 %v10478
      %v10533 = vunpack.c.l.bf16 %v10479
      %v10534 = vunpack.c.l.bf16 %v10480
      %v10535 = vunpack.c.l.bf16 %v10481
      %v10536 = vunpack.c.l.bf16 %v10482
      %v10537 = vunpack.c.l.bf16 %v10483
      %vm10538 = vcmask 1045504
      %v10539 = vrot.slane %v10103, 2
      %v10540 = vrot.slane %v10104, 2
      %v10541 = vsel %vm10538, %v10539, %v10540
      %v10542 = vrot.slane %v10105, 2
      %v10543 = vsel %vm10538, %v10540, %v10542
      %v10544 = vrot.slane %v10106, 2
      %v10545 = vsel %vm10538, %v10542, %v10544
      %v10546 = vrot.slane %v10107, 2
      %v10547 = vsel %vm10538, %v10544, %v10546
      %v10548 = vrot.slane %v10108, 2
      %v10549 = vsel %vm10538, %v10546, %v10548
      %v10550 = vrot.slane %v10109, 2
      %v10551 = vsel %vm10538, %v10548, %v10550
      %v10552 = vrot.slane %v10110, 2
      %v10553 = vsel %vm10538, %v10550, %v10552
      %v10554 = vrot.slane %v10111, 2
      %v10555 = vsel %vm10538, %v10552, %v10554
      %v10556 = vrot.slane %v10112, 2
      %v10557 = vsel %vm10538, %v10554, %v10556
      %v10558 = vrot.slane %v10113, 2
      %v10559 = vsel %vm10538, %v10556, %v10558
      %v10560 = vrot.slane %v10114, 2
      %v10561 = vsel %vm10538, %v10558, %v10560
      %v10562 = vrot.slane %v10115, 2
      %v10563 = vsel %vm10538, %v10560, %v10562
      %v10564 = vrot.slane %v10116, 2
      %v10565 = vsel %vm10538, %v10562, %v10564
      %v10566 = vrot.slane %v10117, 2
      %v10567 = vsel %vm10538, %v10564, %v10566
      %v10568 = vrot.slane %v10118, 2
      %v10569 = vsel %vm10538, %v10566, %v10568
      %v10570 = vrot.slane %v10119, 2
      %v10571 = vsel %vm10538, %v10568, %v10570
      %v10572 = vrot.slane %v10120, 2
      %v10573 = vsel %vm10538, %v10570, %v10572
      %v10574 = vrot.slane %v10121, 2
      %v10575 = vsel %vm10538, %v10572, %v10574
      %v10576 = vrot.slane %v10122, 2
      %v10577 = vsel %vm10538, %v10574, %v10576
      %v10578 = vrot.slane %v10123, 2
      %v10579 = vsel %vm10538, %v10576, %v10578
      %v10580 = vrot.slane %v10124, 2
      %v10581 = vsel %vm10538, %v10578, %v10580
      %v10582 = vrot.slane %v10125, 2
      %v10583 = vsel %vm10538, %v10580, %v10582
      %v10584 = vrot.slane %v10126, 2
      %v10585 = vsel %vm10538, %v10582, %v10584
      %v10586 = vrot.slane %v10127, 2
      %v10587 = vsel %vm10538, %v10584, %v10586
      %v10588 = vrot.slane %v10128, 2
      %v10589 = vsel %vm10538, %v10586, %v10588
      %v10590 = vrot.slane %v10129, 2
      %v10591 = vsel %vm10538, %v10588, %v10590
      %v10592 = vrot.slane %v10130, 2
      %v10593 = vsel %vm10538, %v10590, %v10592
      %v10594 = vrot.slane %v10131, 2
      %v10595 = vsel %vm10538, %v10592, %v10594
      %v10596 = vrot.slane %v10132, 2
      %v10597 = vsel %vm10538, %v10594, %v10596
      %v10598 = vrot.slane %v10133, 2
      %v10599 = vsel %vm10538, %v10596, %v10598
      %v10600 = vrot.slane %v10134, 2
      %v10601 = vsel %vm10538, %v10598, %v10600
      %v10602 = vrot.slane %v10135, 2
      %v10603 = vsel %vm10538, %v10600, %v10602
      %v10604 = vrot.slane %v10136, 2
      %v10605 = vsel %vm10538, %v10602, %v10604
      %v10606 = vrot.slane %v10137, 2
      %v10607 = vsel %vm10538, %v10604, %v10606
      %v10608 = vrot.slane %v10138, 2
      %v10609 = vsel %vm10538, %v10606, %v10608
      %v10610 = vrot.slane %v10139, 2
      %v10611 = vsel %vm10538, %v10608, %v10610
      %v10612 = vrot.slane %v10140, 2
      %v10613 = vsel %vm10538, %v10610, %v10612
      %v10614 = vrot.slane %v10141, 2
      %v10615 = vsel %vm10538, %v10612, %v10614
      %v10616 = vrot.slane %v10142, 2
      %v10617 = vsel %vm10538, %v10614, %v10616
      %v10618 = vrot.slane %v10143, 2
      %v10619 = vsel %vm10538, %v10616, %v10618
      %v10620 = vrot.slane %v10144, 2
      %v10621 = vsel %vm10538, %v10618, %v10620
      %v10622 = vrot.slane %v10145, 2
      %v10623 = vsel %vm10538, %v10620, %v10622
      %v10624 = vrot.slane %v10146, 2
      %v10625 = vsel %vm10538, %v10622, %v10624
      %v10626 = vrot.slane %v10147, 2
      %v10627 = vsel %vm10538, %v10624, %v10626
      %v10628 = vrot.slane %v10148, 2
      %v10629 = vsel %vm10538, %v10626, %v10628
      %v10630 = vrot.slane %v10149, 2
      %v10631 = vsel %vm10538, %v10628, %v10630
      %v10632 = vrot.slane %v10150, 2
      %v10633 = vsel %vm10538, %v10630, %v10632
      %v10634 = vrot.slane %v10151, 2
      %v10635 = vsel %vm10538, %v10632, %v10634
      %v10636 = vrot.slane %v10152, 2
      %v10637 = vsel %vm10538, %v10634, %v10636
      %v10638 = vrot.slane %v10153, 2
      %v10639 = vsel %vm10538, %v10636, %v10638
      %v10640 = vrot.slane %v10154, 2
      %v10641 = vsel %vm10538, %v10638, %v10640
      %v10642 = vrot.slane %v10155, 2
      %v10643 = vsel %vm10538, %v10640, %v10642
      %v10644 = vrot.slane %v10156, 2
      %v10645 = vsel %vm10538, %v10642, %v10644
      %v10646 = vrot.slane %v10157, 2
      %v10647 = vsel %vm10538, %v10644, %v10646
      %v10702 = vmax.f32 %v10484, %v10541
      %v10703 = vmax.f32 %v10485, %v10543
      %v10704 = vmax.f32 %v10486, %v10545
      %v10705 = vmax.f32 %v10487, %v10547
      %v10706 = vmax.f32 %v10488, %v10549
      %v10707 = vmax.f32 %v10489, %v10551
      %v10708 = vmax.f32 %v10490, %v10553
      %v10709 = vmax.f32 %v10491, %v10555
      %v10710 = vmax.f32 %v10492, %v10557
      %v10711 = vmax.f32 %v10493, %v10559
      %v10712 = vmax.f32 %v10494, %v10561
      %v10713 = vmax.f32 %v10495, %v10563
      %v10714 = vmax.f32 %v10496, %v10565
      %v10715 = vmax.f32 %v10497, %v10567
      %v10716 = vmax.f32 %v10498, %v10569
      %v10717 = vmax.f32 %v10499, %v10571
      %v10718 = vmax.f32 %v10500, %v10573
      %v10719 = vmax.f32 %v10501, %v10575
      %v10720 = vmax.f32 %v10502, %v10577
      %v10721 = vmax.f32 %v10503, %v10579
      %v10722 = vmax.f32 %v10504, %v10581
      %v10723 = vmax.f32 %v10505, %v10583
      %v10724 = vmax.f32 %v10506, %v10585
      %v10725 = vmax.f32 %v10507, %v10587
      %v10726 = vmax.f32 %v10508, %v10589
      %v10727 = vmax.f32 %v10509, %v10591
      %v10728 = vmax.f32 %v10510, %v10593
      %v10729 = vmax.f32 %v10511, %v10595
      %v10730 = vmax.f32 %v10512, %v10597
      %v10731 = vmax.f32 %v10513, %v10599
      %v10732 = vmax.f32 %v10514, %v10601
      %v10733 = vmax.f32 %v10515, %v10603
      %v10734 = vmax.f32 %v10516, %v10605
      %v10735 = vmax.f32 %v10517, %v10607
      %v10736 = vmax.f32 %v10518, %v10609
      %v10737 = vmax.f32 %v10519, %v10611
      %v10738 = vmax.f32 %v10520, %v10613
      %v10739 = vmax.f32 %v10521, %v10615
      %v10740 = vmax.f32 %v10522, %v10617
      %v10741 = vmax.f32 %v10523, %v10619
      %v10742 = vmax.f32 %v10524, %v10621
      %v10743 = vmax.f32 %v10525, %v10623
      %v10744 = vmax.f32 %v10526, %v10625
      %v10745 = vmax.f32 %v10527, %v10627
      %v10746 = vmax.f32 %v10528, %v10629
      %v10747 = vmax.f32 %v10529, %v10631
      %v10748 = vmax.f32 %v10530, %v10633
      %v10749 = vmax.f32 %v10531, %v10635
      %v10750 = vmax.f32 %v10532, %v10637
      %v10751 = vmax.f32 %v10533, %v10639
      %v10752 = vmax.f32 %v10534, %v10641
      %v10753 = vmax.f32 %v10535, %v10643
      %v10754 = vmax.f32 %v10536, %v10645
      %v10755 = vmax.f32 %v10537, %v10647
      %v10756 = vpack.c.bf16 %v10702, %v10702
      %v10757 = vpack.c.bf16 %v10703, %v10703
      %v10758 = vpack.c.bf16 %v10704, %v10704
      %v10759 = vpack.c.bf16 %v10705, %v10705
      %v10760 = vpack.c.bf16 %v10706, %v10706
      %v10761 = vpack.c.bf16 %v10707, %v10707
      %v10762 = vpack.c.bf16 %v10708, %v10708
      %v10763 = vpack.c.bf16 %v10709, %v10709
      %v10764 = vpack.c.bf16 %v10710, %v10710
      %v10765 = vpack.c.bf16 %v10711, %v10711
      %v10766 = vpack.c.bf16 %v10712, %v10712
      %v10767 = vpack.c.bf16 %v10713, %v10713
      %v10768 = vpack.c.bf16 %v10714, %v10714
      %v10769 = vpack.c.bf16 %v10715, %v10715
      %v10770 = vpack.c.bf16 %v10716, %v10716
      %v10771 = vpack.c.bf16 %v10717, %v10717
      %v10772 = vpack.c.bf16 %v10718, %v10718
      %v10773 = vpack.c.bf16 %v10719, %v10719
      %v10774 = vpack.c.bf16 %v10720, %v10720
      %v10775 = vpack.c.bf16 %v10721, %v10721
      %v10776 = vpack.c.bf16 %v10722, %v10722
      %v10777 = vpack.c.bf16 %v10723, %v10723
      %v10778 = vpack.c.bf16 %v10724, %v10724
      %v10779 = vpack.c.bf16 %v10725, %v10725
      %v10780 = vpack.c.bf16 %v10726, %v10726
      %v10781 = vpack.c.bf16 %v10727, %v10727
      %v10782 = vpack.c.bf16 %v10728, %v10728
      %v10783 = vpack.c.bf16 %v10729, %v10729
      %v10784 = vpack.c.bf16 %v10730, %v10730
      %v10785 = vpack.c.bf16 %v10731, %v10731
      %v10786 = vpack.c.bf16 %v10732, %v10732
      %v10787 = vpack.c.bf16 %v10733, %v10733
      %v10788 = vpack.c.bf16 %v10734, %v10734
      %v10789 = vpack.c.bf16 %v10735, %v10735
      %v10790 = vpack.c.bf16 %v10736, %v10736
      %v10791 = vpack.c.bf16 %v10737, %v10737
      %v10792 = vpack.c.bf16 %v10738, %v10738
      %v10793 = vpack.c.bf16 %v10739, %v10739
      %v10794 = vpack.c.bf16 %v10740, %v10740
      %v10795 = vpack.c.bf16 %v10741, %v10741
      %v10796 = vpack.c.bf16 %v10742, %v10742
      %v10797 = vpack.c.bf16 %v10743, %v10743
      %v10798 = vpack.c.bf16 %v10744, %v10744
      %v10799 = vpack.c.bf16 %v10745, %v10745
      %v10800 = vpack.c.bf16 %v10746, %v10746
      %v10801 = vpack.c.bf16 %v10747, %v10747
      %v10802 = vpack.c.bf16 %v10748, %v10748
      %v10803 = vpack.c.bf16 %v10749, %v10749
      %v10804 = vpack.c.bf16 %v10750, %v10750
      %v10805 = vpack.c.bf16 %v10751, %v10751
      %v10806 = vpack.c.bf16 %v10752, %v10752
      %v10807 = vpack.c.bf16 %v10753, %v10753
      %v10808 = vpack.c.bf16 %v10754, %v10754
      %v10809 = vpack.c.bf16 %v10755, %v10755
      %v10810 = vunpack.c.l.bf16 %v10756
      %v10811 = vunpack.c.l.bf16 %v10757
      %v10812 = vunpack.c.l.bf16 %v10758
      %v10813 = vunpack.c.l.bf16 %v10759
      %v10814 = vunpack.c.l.bf16 %v10760
      %v10815 = vunpack.c.l.bf16 %v10761
      %v10816 = vunpack.c.l.bf16 %v10762
      %v10817 = vunpack.c.l.bf16 %v10763
      %v10818 = vunpack.c.l.bf16 %v10764
      %v10819 = vunpack.c.l.bf16 %v10765
      %v10820 = vunpack.c.l.bf16 %v10766
      %v10821 = vunpack.c.l.bf16 %v10767
      %v10822 = vunpack.c.l.bf16 %v10768
      %v10823 = vunpack.c.l.bf16 %v10769
      %v10824 = vunpack.c.l.bf16 %v10770
      %v10825 = vunpack.c.l.bf16 %v10771
      %v10826 = vunpack.c.l.bf16 %v10772
      %v10827 = vunpack.c.l.bf16 %v10773
      %v10828 = vunpack.c.l.bf16 %v10774
      %v10829 = vunpack.c.l.bf16 %v10775
      %v10830 = vunpack.c.l.bf16 %v10776
      %v10831 = vunpack.c.l.bf16 %v10777
      %v10832 = vunpack.c.l.bf16 %v10778
      %v10833 = vunpack.c.l.bf16 %v10779
      %v10834 = vunpack.c.l.bf16 %v10780
      %v10835 = vunpack.c.l.bf16 %v10781
      %v10836 = vunpack.c.l.bf16 %v10782
      %v10837 = vunpack.c.l.bf16 %v10783
      %v10838 = vunpack.c.l.bf16 %v10784
      %v10839 = vunpack.c.l.bf16 %v10785
      %v10840 = vunpack.c.l.bf16 %v10786
      %v10841 = vunpack.c.l.bf16 %v10787
      %v10842 = vunpack.c.l.bf16 %v10788
      %v10843 = vunpack.c.l.bf16 %v10789
      %v10844 = vunpack.c.l.bf16 %v10790
      %v10845 = vunpack.c.l.bf16 %v10791
      %v10846 = vunpack.c.l.bf16 %v10792
      %v10847 = vunpack.c.l.bf16 %v10793
      %v10848 = vunpack.c.l.bf16 %v10794
      %v10849 = vunpack.c.l.bf16 %v10795
      %v10850 = vunpack.c.l.bf16 %v10796
      %v10851 = vunpack.c.l.bf16 %v10797
      %v10852 = vunpack.c.l.bf16 %v10798
      %v10853 = vunpack.c.l.bf16 %v10799
      %v10854 = vunpack.c.l.bf16 %v10800
      %v10855 = vunpack.c.l.bf16 %v10801
      %v10856 = vunpack.c.l.bf16 %v10802
      %v10857 = vunpack.c.l.bf16 %v10803
      %v10858 = vunpack.c.l.bf16 %v10804
      %v10859 = vunpack.c.l.bf16 %v10805
      %v10860 = vunpack.c.l.bf16 %v10806
      %v10861 = vmax.f32 %v10810, %v10813
      %v10862 = vmax.f32 %v10811, %v10814
      %v10863 = vmax.f32 %v10812, %v10815
      %v10864 = vmax.f32 %v10813, %v10816
      %v10865 = vmax.f32 %v10814, %v10817
      %v10866 = vmax.f32 %v10815, %v10818
      %v10867 = vmax.f32 %v10816, %v10819
      %v10868 = vmax.f32 %v10817, %v10820
      %v10869 = vmax.f32 %v10818, %v10821
      %v10870 = vmax.f32 %v10819, %v10822
      %v10871 = vmax.f32 %v10820, %v10823
      %v10872 = vmax.f32 %v10821, %v10824
      %v10873 = vmax.f32 %v10822, %v10825
      %v10874 = vmax.f32 %v10823, %v10826
      %v10875 = vmax.f32 %v10824, %v10827
      %v10876 = vmax.f32 %v10825, %v10828
      %v10877 = vmax.f32 %v10826, %v10829
      %v10878 = vmax.f32 %v10827, %v10830
      %v10879 = vmax.f32 %v10828, %v10831
      %v10880 = vmax.f32 %v10829, %v10832
      %v10881 = vmax.f32 %v10830, %v10833
      %v10882 = vmax.f32 %v10831, %v10834
      %v10883 = vmax.f32 %v10832, %v10835
      %v10884 = vmax.f32 %v10833, %v10836
      %v10885 = vmax.f32 %v10834, %v10837
      %v10886 = vmax.f32 %v10835, %v10838
      %v10887 = vmax.f32 %v10836, %v10839
      %v10888 = vmax.f32 %v10837, %v10840
      %v10889 = vmax.f32 %v10838, %v10841
      %v10890 = vmax.f32 %v10839, %v10842
      %v10891 = vmax.f32 %v10840, %v10843
      %v10892 = vmax.f32 %v10841, %v10844
      %v10893 = vmax.f32 %v10842, %v10845
      %v10894 = vmax.f32 %v10843, %v10846
      %v10895 = vmax.f32 %v10844, %v10847
      %v10896 = vmax.f32 %v10845, %v10848
      %v10897 = vmax.f32 %v10846, %v10849
      %v10898 = vmax.f32 %v10847, %v10850
      %v10899 = vmax.f32 %v10848, %v10851
      %v10900 = vmax.f32 %v10849, %v10852
      %v10901 = vmax.f32 %v10850, %v10853
      %v10902 = vmax.f32 %v10851, %v10854
      %v10903 = vmax.f32 %v10852, %v10855
      %v10904 = vmax.f32 %v10853, %v10856
      %v10905 = vmax.f32 %v10854, %v10857
      %v10906 = vmax.f32 %v10855, %v10858
      %v10907 = vmax.f32 %v10856, %v10859
      %v10908 = vmax.f32 %v10857, %v10860
      %v10909 = vpack.c.bf16 %v10861, %v10861
      %v10910 = vpack.c.bf16 %v10862, %v10862
      %v10911 = vpack.c.bf16 %v10863, %v10863
      %v10912 = vpack.c.bf16 %v10864, %v10864
      %v10913 = vpack.c.bf16 %v10865, %v10865
      %v10914 = vpack.c.bf16 %v10866, %v10866
      %v10915 = vpack.c.bf16 %v10867, %v10867
      %v10916 = vpack.c.bf16 %v10868, %v10868
      %v10917 = vpack.c.bf16 %v10869, %v10869
      %v10918 = vpack.c.bf16 %v10870, %v10870
      %v10919 = vpack.c.bf16 %v10871, %v10871
      %v10920 = vpack.c.bf16 %v10872, %v10872
      %v10921 = vpack.c.bf16 %v10873, %v10873
      %v10922 = vpack.c.bf16 %v10874, %v10874
      %v10923 = vpack.c.bf16 %v10875, %v10875
      %v10924 = vpack.c.bf16 %v10876, %v10876
      %v10925 = vpack.c.bf16 %v10877, %v10877
      %v10926 = vpack.c.bf16 %v10878, %v10878
      %v10927 = vpack.c.bf16 %v10879, %v10879
      %v10928 = vpack.c.bf16 %v10880, %v10880
      %v10929 = vpack.c.bf16 %v10881, %v10881
      %v10930 = vpack.c.bf16 %v10882, %v10882
      %v10931 = vpack.c.bf16 %v10883, %v10883
      %v10932 = vpack.c.bf16 %v10884, %v10884
      %v10933 = vpack.c.bf16 %v10885, %v10885
      %v10934 = vpack.c.bf16 %v10886, %v10886
      %v10935 = vpack.c.bf16 %v10887, %v10887
      %v10936 = vpack.c.bf16 %v10888, %v10888
      %v10937 = vpack.c.bf16 %v10889, %v10889
      %v10938 = vpack.c.bf16 %v10890, %v10890
      %v10939 = vpack.c.bf16 %v10891, %v10891
      %v10940 = vpack.c.bf16 %v10892, %v10892
      %v10941 = vpack.c.bf16 %v10893, %v10893
      %v10942 = vpack.c.bf16 %v10894, %v10894
      %v10943 = vpack.c.bf16 %v10895, %v10895
      %v10944 = vpack.c.bf16 %v10896, %v10896
      %v10945 = vpack.c.bf16 %v10897, %v10897
      %v10946 = vpack.c.bf16 %v10898, %v10898
      %v10947 = vpack.c.bf16 %v10899, %v10899
      %v10948 = vpack.c.bf16 %v10900, %v10900
      %v10949 = vpack.c.bf16 %v10901, %v10901
      %v10950 = vpack.c.bf16 %v10902, %v10902
      %v10951 = vpack.c.bf16 %v10903, %v10903
      %v10952 = vpack.c.bf16 %v10904, %v10904
      %v10953 = vpack.c.bf16 %v10905, %v10905
      %v10954 = vpack.c.bf16 %v10906, %v10906
      %v10955 = vpack.c.bf16 %v10907, %v10907
      %v10956 = vpack.c.bf16 %v10908, %v10908
      %v10957 = vunpack.c.l.bf16 %v10909
      %v10958 = vunpack.c.l.bf16 %v10910
      %v10959 = vunpack.c.l.bf16 %v10911
      %v10960 = vunpack.c.l.bf16 %v10912
      %v10961 = vunpack.c.l.bf16 %v10913
      %v10962 = vunpack.c.l.bf16 %v10914
      %v10963 = vunpack.c.l.bf16 %v10915
      %v10964 = vunpack.c.l.bf16 %v10916
      %v10965 = vunpack.c.l.bf16 %v10917
      %v10966 = vunpack.c.l.bf16 %v10918
      %v10967 = vunpack.c.l.bf16 %v10919
      %v10968 = vunpack.c.l.bf16 %v10920
      %v10969 = vunpack.c.l.bf16 %v10921
      %v10970 = vunpack.c.l.bf16 %v10922
      %v10971 = vunpack.c.l.bf16 %v10923
      %v10972 = vunpack.c.l.bf16 %v10924
      %v10973 = vunpack.c.l.bf16 %v10925
      %v10974 = vunpack.c.l.bf16 %v10926
      %v10975 = vunpack.c.l.bf16 %v10927
      %v10976 = vunpack.c.l.bf16 %v10928
      %v10977 = vunpack.c.l.bf16 %v10929
      %v10978 = vunpack.c.l.bf16 %v10930
      %v10979 = vunpack.c.l.bf16 %v10931
      %v10980 = vunpack.c.l.bf16 %v10932
      %v10981 = vunpack.c.l.bf16 %v10933
      %v10982 = vunpack.c.l.bf16 %v10934
      %v10983 = vunpack.c.l.bf16 %v10935
      %v10984 = vunpack.c.l.bf16 %v10936
      %v10985 = vunpack.c.l.bf16 %v10937
      %v10986 = vunpack.c.l.bf16 %v10938
      %v10987 = vunpack.c.l.bf16 %v10939
      %v10988 = vunpack.c.l.bf16 %v10940
      %v10989 = vunpack.c.l.bf16 %v10941
      %v10990 = vunpack.c.l.bf16 %v10942
      %v10991 = vunpack.c.l.bf16 %v10943
      %v10992 = vunpack.c.l.bf16 %v10944
      %v10993 = vunpack.c.l.bf16 %v10945
      %v10994 = vunpack.c.l.bf16 %v10946
      %v10995 = vunpack.c.l.bf16 %v10947
      %v10996 = vunpack.c.l.bf16 %v10948
      %v10997 = vunpack.c.l.bf16 %v10949
      %v10998 = vunpack.c.l.bf16 %v10950
      %v10999 = vunpack.c.l.bf16 %v10951
      %v11000 = vunpack.c.l.bf16 %v10952
      %v11001 = vunpack.c.l.bf16 %v10953
      %v11002 = vunpack.c.l.bf16 %v10954
      %v11003 = vunpack.c.l.bf16 %v10955
      %v11004 = vunpack.c.l.bf16 %v10956
      %v11005 = vunpack.c.l.bf16 %v10807
      %v11006 = vunpack.c.l.bf16 %v10808
      %v11007 = vunpack.c.l.bf16 %v10809
      %v11008 = vmax.f32 %v10957, %v10816
      %v11009 = vmax.f32 %v10958, %v10817
      %v11010 = vmax.f32 %v10959, %v10818
      %v11011 = vmax.f32 %v10960, %v10819
      %v11012 = vmax.f32 %v10961, %v10820
      %v11013 = vmax.f32 %v10962, %v10821
      %v11014 = vmax.f32 %v10963, %v10822
      %v11015 = vmax.f32 %v10964, %v10823
      %v11016 = vmax.f32 %v10965, %v10824
      %v11017 = vmax.f32 %v10966, %v10825
      %v11018 = vmax.f32 %v10967, %v10826
      %v11019 = vmax.f32 %v10968, %v10827
      %v11020 = vmax.f32 %v10969, %v10828
      %v11021 = vmax.f32 %v10970, %v10829
      %v11022 = vmax.f32 %v10971, %v10830
      %v11023 = vmax.f32 %v10972, %v10831
      %v11024 = vmax.f32 %v10973, %v10832
      %v11025 = vmax.f32 %v10974, %v10833
      %v11026 = vmax.f32 %v10975, %v10834
      %v11027 = vmax.f32 %v10976, %v10835
      %v11028 = vmax.f32 %v10977, %v10836
      %v11029 = vmax.f32 %v10978, %v10837
      %v11030 = vmax.f32 %v10979, %v10838
      %v11031 = vmax.f32 %v10980, %v10839
      %v11032 = vmax.f32 %v10981, %v10840
      %v11033 = vmax.f32 %v10982, %v10841
      %v11034 = vmax.f32 %v10983, %v10842
      %v11035 = vmax.f32 %v10984, %v10843
      %v11036 = vmax.f32 %v10985, %v10844
      %v11037 = vmax.f32 %v10986, %v10845
      %v11038 = vmax.f32 %v10987, %v10846
      %v11039 = vmax.f32 %v10988, %v10847
      %v11040 = vmax.f32 %v10989, %v10848
      %v11041 = vmax.f32 %v10990, %v10849
      %v11042 = vmax.f32 %v10991, %v10850
      %v11043 = vmax.f32 %v10992, %v10851
      %v11044 = vmax.f32 %v10993, %v10852
      %v11045 = vmax.f32 %v10994, %v10853
      %v11046 = vmax.f32 %v10995, %v10854
      %v11047 = vmax.f32 %v10996, %v10855
      %v11048 = vmax.f32 %v10997, %v10856
      %v11049 = vmax.f32 %v10998, %v10857
      %v11050 = vmax.f32 %v10999, %v10858
      %v11051 = vmax.f32 %v11000, %v10859
      %v11052 = vmax.f32 %v11001, %v10860
      %v11053 = vmax.f32 %v11002, %v11005
      %v11054 = vmax.f32 %v11003, %v11006
      %v11055 = vmax.f32 %v11004, %v11007
      %v11056 = vpack.c.bf16 %v11008, %v11008
      %v11057 = vpack.c.bf16 %v11009, %v11009
      %v11058 = vpack.c.bf16 %v11010, %v11010
      %v11059 = vpack.c.bf16 %v11011, %v11011
      %v11060 = vpack.c.bf16 %v11012, %v11012
      %v11061 = vpack.c.bf16 %v11013, %v11013
      %v11062 = vpack.c.bf16 %v11014, %v11014
      %v11063 = vpack.c.bf16 %v11015, %v11015
      %v11064 = vpack.c.bf16 %v11016, %v11016
      %v11065 = vpack.c.bf16 %v11017, %v11017
      %v11066 = vpack.c.bf16 %v11018, %v11018
      %v11067 = vpack.c.bf16 %v11019, %v11019
      %v11068 = vpack.c.bf16 %v11020, %v11020
      %v11069 = vpack.c.bf16 %v11021, %v11021
      %v11070 = vpack.c.bf16 %v11022, %v11022
      %v11071 = vpack.c.bf16 %v11023, %v11023
      %v11072 = vpack.c.bf16 %v11024, %v11024
      %v11073 = vpack.c.bf16 %v11025, %v11025
      %v11074 = vpack.c.bf16 %v11026, %v11026
      %v11075 = vpack.c.bf16 %v11027, %v11027
      %v11076 = vpack.c.bf16 %v11028, %v11028
      %v11077 = vpack.c.bf16 %v11029, %v11029
      %v11078 = vpack.c.bf16 %v11030, %v11030
      %v11079 = vpack.c.bf16 %v11031, %v11031
      %v11080 = vpack.c.bf16 %v11032, %v11032
      %v11081 = vpack.c.bf16 %v11033, %v11033
      %v11082 = vpack.c.bf16 %v11034, %v11034
      %v11083 = vpack.c.bf16 %v11035, %v11035
      %v11084 = vpack.c.bf16 %v11036, %v11036
      %v11085 = vpack.c.bf16 %v11037, %v11037
      %v11086 = vpack.c.bf16 %v11038, %v11038
      %v11087 = vpack.c.bf16 %v11039, %v11039
      %v11088 = vpack.c.bf16 %v11040, %v11040
      %v11089 = vpack.c.bf16 %v11041, %v11041
      %v11090 = vpack.c.bf16 %v11042, %v11042
      %v11091 = vpack.c.bf16 %v11043, %v11043
      %v11092 = vpack.c.bf16 %v11044, %v11044
      %v11093 = vpack.c.bf16 %v11045, %v11045
      %v11094 = vpack.c.bf16 %v11046, %v11046
      %v11095 = vpack.c.bf16 %v11047, %v11047
      %v11096 = vpack.c.bf16 %v11048, %v11048
      %v11097 = vpack.c.bf16 %v11049, %v11049
      %v11098 = vpack.c.bf16 %v11050, %v11050
      %v11099 = vpack.c.bf16 %v11051, %v11051
      %v11100 = vpack.c.bf16 %v11052, %v11052
      %v11101 = vpack.c.bf16 %v11053, %v11053
      %v11102 = vpack.c.bf16 %v11054, %v11054
      %v11103 = vpack.c.bf16 %v11055, %v11055
      %v11104 = vunpack.c.l.bf16 %v11056
      %v11105 = vunpack.c.l.bf16 %v11057
      %v11106 = vunpack.c.l.bf16 %v11058
      %v11107 = vunpack.c.l.bf16 %v11059
      %v11108 = vunpack.c.l.bf16 %v11060
      %v11109 = vunpack.c.l.bf16 %v11061
      %v11110 = vunpack.c.l.bf16 %v11062
      %v11111 = vunpack.c.l.bf16 %v11063
      %v11112 = vunpack.c.l.bf16 %v11064
      %v11113 = vunpack.c.l.bf16 %v11065
      %v11114 = vunpack.c.l.bf16 %v11066
      %v11115 = vunpack.c.l.bf16 %v11067
      %v11116 = vunpack.c.l.bf16 %v11068
      %v11117 = vunpack.c.l.bf16 %v11069
      %v11118 = vunpack.c.l.bf16 %v11070
      %v11119 = vunpack.c.l.bf16 %v11071
      %v11120 = vunpack.c.l.bf16 %v11072
      %v11121 = vunpack.c.l.bf16 %v11073
      %v11122 = vunpack.c.l.bf16 %v11074
      %v11123 = vunpack.c.l.bf16 %v11075
      %v11124 = vunpack.c.l.bf16 %v11076
      %v11125 = vunpack.c.l.bf16 %v11077
      %v11126 = vunpack.c.l.bf16 %v11078
      %v11127 = vunpack.c.l.bf16 %v11079
      %v11128 = vunpack.c.l.bf16 %v11080
      %v11129 = vunpack.c.l.bf16 %v11081
      %v11130 = vunpack.c.l.bf16 %v11082
      %v11131 = vunpack.c.l.bf16 %v11083
      %v11132 = vunpack.c.l.bf16 %v11084
      %v11133 = vunpack.c.l.bf16 %v11085
      %v11134 = vunpack.c.l.bf16 %v11086
      %v11135 = vunpack.c.l.bf16 %v11087
      %v11136 = vunpack.c.l.bf16 %v11088
      %v11137 = vunpack.c.l.bf16 %v11089
      %v11138 = vunpack.c.l.bf16 %v11090
      %v11139 = vunpack.c.l.bf16 %v11091
      %v11140 = vunpack.c.l.bf16 %v11092
      %v11141 = vunpack.c.l.bf16 %v11093
      %v11142 = vunpack.c.l.bf16 %v11094
      %v11143 = vunpack.c.l.bf16 %v11095
      %v11144 = vunpack.c.l.bf16 %v11096
      %v11145 = vunpack.c.l.bf16 %v11097
      %v11146 = vunpack.c.l.bf16 %v11098
      %v11147 = vunpack.c.l.bf16 %v11099
      %v11148 = vunpack.c.l.bf16 %v11100
      %v11149 = vunpack.c.l.bf16 %v11101
      %v11150 = vunpack.c.l.bf16 %v11102
      %v11151 = vunpack.c.l.bf16 %v11103
      %v11152 = vmul.f32 %v11104, %v1306
      %v11153 = vmul.f32 %v11105, %v1308
      %v11154 = vmul.f32 %v11106, %v1310
      %v11155 = vmul.f32 %v11107, %v1312
      %v11156 = vmul.f32 %v11108, %v1314
      %v11157 = vmul.f32 %v11109, %v1316
      %v11158 = vmul.f32 %v11110, %v1318
      %v11159 = vmul.f32 %v11111, %v1320
      %v11160 = vmul.f32 %v11112, %v1322
      %v11161 = vmul.f32 %v11113, %v1324
      %v11162 = vmul.f32 %v11114, %v1326
      %v11163 = vmul.f32 %v11115, %v1328
      %v11164 = vmul.f32 %v11116, %v1330
      %v11165 = vmul.f32 %v11117, %v1332
      %v11166 = vmul.f32 %v11118, %v1334
      %v11167 = vmul.f32 %v11119, %v1336
      %v11168 = vmul.f32 %v11120, %v1338
      %v11169 = vmul.f32 %v11121, %v1340
      %v11170 = vmul.f32 %v11122, %v1342
      %v11171 = vmul.f32 %v11123, %v1344
      %v11172 = vmul.f32 %v11124, %v1346
      %v11173 = vmul.f32 %v11125, %v1348
      %v11174 = vmul.f32 %v11126, %v1350
      %v11175 = vmul.f32 %v11127, %v1352
      %v11176 = vmul.f32 %v11128, %v1354
      %v11177 = vmul.f32 %v11129, %v1356
      %v11178 = vmul.f32 %v11130, %v1358
      %v11179 = vmul.f32 %v11131, %v1360
      %v11180 = vmul.f32 %v11132, %v1362
      %v11181 = vmul.f32 %v11133, %v1364
      %v11182 = vmul.f32 %v11134, %v1366
      %v11183 = vmul.f32 %v11135, %v1368
      %v11184 = vmul.f32 %v11136, %v1370
      %v11185 = vmul.f32 %v11137, %v1372
      %v11186 = vmul.f32 %v11138, %v1374
      %v11187 = vmul.f32 %v11139, %v1376
      %v11188 = vmul.f32 %v11140, %v1378
      %v11189 = vmul.f32 %v11141, %v1380
      %v11190 = vmul.f32 %v11142, %v1382
      %v11191 = vmul.f32 %v11143, %v1384
      %v11192 = vmul.f32 %v11144, %v1386
      %v11193 = vmul.f32 %v11145, %v1388
      %v11194 = vmul.f32 %v11146, %v1390
      %v11195 = vmul.f32 %v11147, %v1392
      %v11196 = vmul.f32 %v11148, %v1394
      %v11197 = vmul.f32 %v11149, %v1396
      %v11198 = vmul.f32 %v11150, %v1398
      %v11199 = vmul.f32 %v11151, %v1400
      %v11200 = vpack.c.bf16 %v11153, %v11152
      %v11201 = vpack.c.bf16 %v11155, %v11154
      %v11202 = vpack.c.bf16 %v11157, %v11156
      %v11203 = vpack.c.bf16 %v11159, %v11158
      %v11204 = vpack.c.bf16 %v11161, %v11160
      %v11205 = vpack.c.bf16 %v11163, %v11162
      %v11206 = vpack.c.bf16 %v11165, %v11164
      %v11207 = vpack.c.bf16 %v11167, %v11166
      %v11208 = vpack.c.bf16 %v11169, %v11168
      %v11209 = vpack.c.bf16 %v11171, %v11170
      %v11210 = vpack.c.bf16 %v11173, %v11172
      %v11211 = vpack.c.bf16 %v11175, %v11174
      %v11212 = vpack.c.bf16 %v11177, %v11176
      %v11213 = vpack.c.bf16 %v11179, %v11178
      %v11214 = vpack.c.bf16 %v11181, %v11180
      %v11215 = vpack.c.bf16 %v11183, %v11182
      %v11216 = vpack.c.bf16 %v11185, %v11184
      %v11217 = vpack.c.bf16 %v11187, %v11186
      %v11218 = vpack.c.bf16 %v11189, %v11188
      %v11219 = vpack.c.bf16 %v11191, %v11190
      %v11220 = vpack.c.bf16 %v11193, %v11192
      %v11221 = vpack.c.bf16 %v11195, %v11194
      %v11222 = vpack.c.bf16 %v11197, %v11196
      %v11223 = vpack.c.bf16 %v11199, %v11198
      %v11224 = vld [vmem:[%s4] sm:$0xf]
      %v11225 = vld [vmem:[%s4 + $0x4] sm:$0xf]
      %v11226 = vld [vmem:[%s5] sm:$0x1]
      %v11228 = vperm.slane %v11226, 0
      %v11232 = vunpack.c.l.b16 %v11224
      %v11233 = vunpack.c.l.b16 %v11225
      %v11234 = vpack.c.b16 %v11233, %v11232
      %v11237 = vsel %vm857, %v11200, 0
      %v11240 = vsel %vm857, %v11201, 0
      %v11243 = vsel %vm857, %v11202, 0
      %v11246 = vsel %vm857, %v11203, 0
      %v11249 = vsel %vm857, %v11204, 0
      %v11252 = vsel %vm857, %v11205, 0
      %v11255 = vsel %vm857, %v11206, 0
      %v11258 = vsel %vm857, %v11207, 0
      %v11261 = vsel %vm857, %v11208, 0
      %v11264 = vsel %vm857, %v11209, 0
      %v11267 = vsel %vm857, %v11210, 0
      %v11270 = vsel %vm857, %v11211, 0
      %v11273 = vsel %vm857, %v11212, 0
      %v11276 = vsel %vm857, %v11213, 0
      %v11279 = vsel %vm857, %v11214, 0
      %v11282 = vsel %vm857, %v11215, 0
      %v11285 = vsel %vm857, %v11216, 0
      %v11288 = vsel %vm857, %v11217, 0
      %v11291 = vsel %vm857, %v11218, 0
      %v11294 = vsel %vm857, %v11219, 0
      %v11297 = vsel %vm857, %v11220, 0
      %v11300 = vsel %vm857, %v11221, 0
      %v11303 = vsel %vm857, %v11222, 0
      %v11306 = vsel %vm857, %v11223, 0
      %11308 = vmatpush.bf16.msra.mxu0 0
      %11309 = vmatpush.bf16.msra.mxu0 0
      %11310 = vmatpush.bf16.msra.mxu0 0
      %11311 = vmatpush.bf16.msra.mxu0 0
      %11312 = vmatpush.bf16.msra.mxu0 0
      %11313 = vmatpush.bf16.msra.mxu0 0
      %11314 = vmatpush.bf16.msra.mxu0 0
      %11315 = vmatpush.bf16.msra.mxu0 %v11234
      %11316 = vmatmul.bf16.gmra.mxu0 %v11237
      %v11317 = vpop.f32.mrf.mxu0
      %v11318 = vadd.f32 %v11228, %v11317
      %v11319 = vpop.f32.mrf.mxu0
      %v11320 = vadd.f32 %v11228, %v11319
      %11321 = vmatmul.bf16.gmra.mxu0 %v11240
      %v11322 = vpop.f32.mrf.mxu0
      %v11323 = vadd.f32 %v11228, %v11322
      %v11324 = vpop.f32.mrf.mxu0
      %v11325 = vadd.f32 %v11228, %v11324
      %11326 = vmatmul.bf16.gmra.mxu0 %v11243
      %v11327 = vpop.f32.mrf.mxu0
      %v11328 = vadd.f32 %v11228, %v11327
      %v11329 = vpop.f32.mrf.mxu0
      %v11330 = vadd.f32 %v11228, %v11329
      %11331 = vmatmul.bf16.gmra.mxu0 %v11246
      %v11332 = vpop.f32.mrf.mxu0
      %v11333 = vadd.f32 %v11228, %v11332
      %v11334 = vpop.f32.mrf.mxu0
      %v11335 = vadd.f32 %v11228, %v11334
      %11336 = vmatmul.bf16.gmra.mxu0 %v11249
      %v11337 = vpop.f32.mrf.mxu0
      %v11338 = vadd.f32 %v11228, %v11337
      %v11339 = vpop.f32.mrf.mxu0
      %v11340 = vadd.f32 %v11228, %v11339
      %11341 = vmatmul.bf16.gmra.mxu0 %v11252
      %v11342 = vpop.f32.mrf.mxu0
      %v11343 = vadd.f32 %v11228, %v11342
      %v11344 = vpop.f32.mrf.mxu0
      %v11345 = vadd.f32 %v11228, %v11344
      %11346 = vmatmul.bf16.gmra.mxu0 %v11255
      %v11347 = vpop.f32.mrf.mxu0
      %v11348 = vadd.f32 %v11228, %v11347
      %v11349 = vpop.f32.mrf.mxu0
      %v11350 = vadd.f32 %v11228, %v11349
      %11351 = vmatmul.bf16.gmra.mxu0 %v11258
      %v11352 = vpop.f32.mrf.mxu0
      %v11353 = vadd.f32 %v11228, %v11352
      %v11354 = vpop.f32.mrf.mxu0
      %v11355 = vadd.f32 %v11228, %v11354
      %11356 = vmatmul.bf16.gmra.mxu0 %v11261
      %v11357 = vpop.f32.mrf.mxu0
      %v11358 = vadd.f32 %v11228, %v11357
      %v11359 = vpop.f32.mrf.mxu0
      %v11360 = vadd.f32 %v11228, %v11359
      %11361 = vmatmul.bf16.gmra.mxu0 %v11264
      %v11362 = vpop.f32.mrf.mxu0
      %v11363 = vadd.f32 %v11228, %v11362
      %v11364 = vpop.f32.mrf.mxu0
      %v11365 = vadd.f32 %v11228, %v11364
      %11366 = vmatmul.bf16.gmra.mxu0 %v11267
      %v11367 = vpop.f32.mrf.mxu0
      %v11368 = vadd.f32 %v11228, %v11367
      %v11369 = vpop.f32.mrf.mxu0
      %v11370 = vadd.f32 %v11228, %v11369
      %11371 = vmatmul.bf16.gmra.mxu0 %v11270
      %v11372 = vpop.f32.mrf.mxu0
      %v11373 = vadd.f32 %v11228, %v11372
      %v11374 = vpop.f32.mrf.mxu0
      %v11375 = vadd.f32 %v11228, %v11374
      %11376 = vmatmul.bf16.gmra.mxu0 %v11273
      %v11377 = vpop.f32.mrf.mxu0
      %v11378 = vadd.f32 %v11228, %v11377
      %v11379 = vpop.f32.mrf.mxu0
      %v11380 = vadd.f32 %v11228, %v11379
      %11381 = vmatmul.bf16.gmra.mxu0 %v11276
      %v11382 = vpop.f32.mrf.mxu0
      %v11383 = vadd.f32 %v11228, %v11382
      %v11384 = vpop.f32.mrf.mxu0
      %v11385 = vadd.f32 %v11228, %v11384
      %11386 = vmatmul.bf16.gmra.mxu0 %v11279
      %v11387 = vpop.f32.mrf.mxu0
      %v11388 = vadd.f32 %v11228, %v11387
      %v11389 = vpop.f32.mrf.mxu0
      %v11390 = vadd.f32 %v11228, %v11389
      %11391 = vmatmul.bf16.gmra.mxu0 %v11282
      %v11392 = vpop.f32.mrf.mxu0
      %v11393 = vadd.f32 %v11228, %v11392
      %v11394 = vpop.f32.mrf.mxu0
      %v11395 = vadd.f32 %v11228, %v11394
      %11396 = vmatmul.bf16.gmra.mxu0 %v11285
      %v11397 = vpop.f32.mrf.mxu0
      %v11398 = vadd.f32 %v11228, %v11397
      %v11399 = vpop.f32.mrf.mxu0
      %v11400 = vadd.f32 %v11228, %v11399
      %11401 = vmatmul.bf16.gmra.mxu0 %v11288
      %v11402 = vpop.f32.mrf.mxu0
      %v11403 = vadd.f32 %v11228, %v11402
      %v11404 = vpop.f32.mrf.mxu0
      %v11405 = vadd.f32 %v11228, %v11404
      %11406 = vmatmul.bf16.gmra.mxu0 %v11291
      %v11407 = vpop.f32.mrf.mxu0
      %v11408 = vadd.f32 %v11228, %v11407
      %v11409 = vpop.f32.mrf.mxu0
      %v11410 = vadd.f32 %v11228, %v11409
      %11411 = vmatmul.bf16.gmra.mxu0 %v11294
      %v11412 = vpop.f32.mrf.mxu0
      %v11413 = vadd.f32 %v11228, %v11412
      %v11414 = vpop.f32.mrf.mxu0
      %v11415 = vadd.f32 %v11228, %v11414
      %11416 = vmatmul.bf16.gmra.mxu0 %v11297
      %v11417 = vpop.f32.mrf.mxu0
      %v11418 = vadd.f32 %v11228, %v11417
      %v11419 = vpop.f32.mrf.mxu0
      %v11420 = vadd.f32 %v11228, %v11419
      %11421 = vmatmul.bf16.gmra.mxu0 %v11300
      %v11422 = vpop.f32.mrf.mxu0
      %v11423 = vadd.f32 %v11228, %v11422
      %v11424 = vpop.f32.mrf.mxu0
      %v11425 = vadd.f32 %v11228, %v11424
      %11426 = vmatmul.bf16.gmra.mxu0 %v11303
      %v11427 = vpop.f32.mrf.mxu0
      %v11428 = vadd.f32 %v11228, %v11427
      %v11429 = vpop.f32.mrf.mxu0
      %v11430 = vadd.f32 %v11228, %v11429
      %11431 = vmatmul.bf16.gmra.mxu0 %v11306
      %v11432 = vpop.f32.mrf.mxu0
      %v11433 = vadd.f32 %v11228, %v11432
      %v11434 = vpop.f32.mrf.mxu0
      %v11435 = vadd.f32 %v11228, %v11434
      %11436 = vdwg.mxu0
      %v11437 = vmax.f32 %v11318, 0.0
      %v11438 = vmax.f32 %v11320, 0.0
      %v11439 = vmax.f32 %v11323, 0.0
      %v11440 = vmax.f32 %v11325, 0.0
      %v11441 = vmax.f32 %v11328, 0.0
      %v11442 = vmax.f32 %v11330, 0.0
      %v11443 = vmax.f32 %v11333, 0.0
      %v11444 = vmax.f32 %v11335, 0.0
      %v11445 = vmax.f32 %v11338, 0.0
      %v11446 = vmax.f32 %v11340, 0.0
      %v11447 = vmax.f32 %v11343, 0.0
      %v11448 = vmax.f32 %v11345, 0.0
      %v11449 = vmax.f32 %v11348, 0.0
      %v11450 = vmax.f32 %v11350, 0.0
      %v11451 = vmax.f32 %v11353, 0.0
      %v11452 = vmax.f32 %v11355, 0.0
      %v11453 = vmax.f32 %v11358, 0.0
      %v11454 = vmax.f32 %v11360, 0.0
      %v11455 = vmax.f32 %v11363, 0.0
      %v11456 = vmax.f32 %v11365, 0.0
      %v11457 = vmax.f32 %v11368, 0.0
      %v11458 = vmax.f32 %v11370, 0.0
      %v11459 = vmax.f32 %v11373, 0.0
      %v11460 = vmax.f32 %v11375, 0.0
      %v11461 = vmax.f32 %v11378, 0.0
      %v11462 = vmax.f32 %v11380, 0.0
      %v11463 = vmax.f32 %v11383, 0.0
      %v11464 = vmax.f32 %v11385, 0.0
      %v11465 = vmax.f32 %v11388, 0.0
      %v11466 = vmax.f32 %v11390, 0.0
      %v11467 = vmax.f32 %v11393, 0.0
      %v11468 = vmax.f32 %v11395, 0.0
      %v11469 = vmax.f32 %v11398, 0.0
      %v11470 = vmax.f32 %v11400, 0.0
      %v11471 = vmax.f32 %v11403, 0.0
      %v11472 = vmax.f32 %v11405, 0.0
      %v11473 = vmax.f32 %v11408, 0.0
      %v11474 = vmax.f32 %v11410, 0.0
      %v11475 = vmax.f32 %v11413, 0.0
      %v11476 = vmax.f32 %v11415, 0.0
      %v11477 = vmax.f32 %v11418, 0.0
      %v11478 = vmax.f32 %v11420, 0.0
      %v11479 = vmax.f32 %v11423, 0.0
      %v11480 = vmax.f32 %v11425, 0.0
      %v11481 = vmax.f32 %v11428, 0.0
      %v11482 = vmax.f32 %v11430, 0.0
      %v11483 = vmax.f32 %v11433, 0.0
      %v11484 = vmax.f32 %v11435, 0.0
      %11533 = vrot.lane.b32.xlu0 %v4517, 32
      %v11534 = vpop.permute.xlu0 %11533
      %11535 = vrot.lane.b32.xlu0 %v4518, 32
      %v11536 = vpop.permute.xlu0 %11535
      %11537 = vrot.lane.b32.xlu0 %v4519, 32
      %v11538 = vpop.permute.xlu0 %11537
      %11539 = vrot.lane.b32.xlu0 %v4520, 32
      %v11540 = vpop.permute.xlu0 %11539
      %11541 = vrot.lane.b32.xlu0 %v4521, 32
      %v11542 = vpop.permute.xlu0 %11541
      %11543 = vrot.lane.b32.xlu0 %v4522, 32
      %v11544 = vpop.permute.xlu0 %11543
      %11545 = vrot.lane.b32.xlu0 %v4523, 32
      %v11546 = vpop.permute.xlu0 %11545
      %11547 = vrot.lane.b32.xlu0 %v4524, 32
      %v11548 = vpop.permute.xlu0 %11547
      %11549 = vrot.lane.b32.xlu0 %v4525, 32
      %v11550 = vpop.permute.xlu0 %11549
      %11551 = vrot.lane.b32.xlu0 %v4526, 32
      %v11552 = vpop.permute.xlu0 %11551
      %11553 = vrot.lane.b32.xlu0 %v4527, 32
      %v11554 = vpop.permute.xlu0 %11553
      %11555 = vrot.lane.b32.xlu0 %v4528, 32
      %v11556 = vpop.permute.xlu0 %11555
      %11557 = vrot.lane.b32.xlu0 %v4529, 32
      %v11558 = vpop.permute.xlu0 %11557
      %11559 = vrot.lane.b32.xlu0 %v4530, 32
      %v11560 = vpop.permute.xlu0 %11559
      %11561 = vrot.lane.b32.xlu0 %v4531, 32
      %v11562 = vpop.permute.xlu0 %11561
      %11563 = vrot.lane.b32.xlu0 %v4532, 32
      %v11564 = vpop.permute.xlu0 %11563
      %11565 = vrot.lane.b32.xlu0 %v4533, 32
      %v11566 = vpop.permute.xlu0 %11565
      %11567 = vrot.lane.b32.xlu0 %v4534, 32
      %v11568 = vpop.permute.xlu0 %11567
      %11569 = vrot.lane.b32.xlu0 %v4535, 32
      %v11570 = vpop.permute.xlu0 %11569
      %11571 = vrot.lane.b32.xlu0 %v4536, 32
      %v11572 = vpop.permute.xlu0 %11571
      %11573 = vrot.lane.b32.xlu0 %v4537, 32
      %v11574 = vpop.permute.xlu0 %11573
      %11575 = vrot.lane.b32.xlu0 %v4538, 32
      %v11576 = vpop.permute.xlu0 %11575
      %11577 = vrot.lane.b32.xlu0 %v4539, 32
      %v11578 = vpop.permute.xlu0 %11577
      %11579 = vrot.lane.b32.xlu0 %v4540, 32
      %v11580 = vpop.permute.xlu0 %11579
      %11581 = vrot.lane.b32.xlu0 %v4541, 32
      %v11582 = vpop.permute.xlu0 %11581
      %11583 = vrot.lane.b32.xlu0 %v4542, 32
      %v11584 = vpop.permute.xlu0 %11583
      %11585 = vrot.lane.b32.xlu0 %v4543, 32
      %v11586 = vpop.permute.xlu0 %11585
      %11587 = vrot.lane.b32.xlu0 %v4544, 32
      %v11588 = vpop.permute.xlu0 %11587
      %11589 = vrot.lane.b32.xlu0 %v4545, 32
      %v11590 = vpop.permute.xlu0 %11589
      %11591 = vrot.lane.b32.xlu0 %v4546, 32
      %v11592 = vpop.permute.xlu0 %11591
      %11593 = vrot.lane.b32.xlu0 %v4547, 32
      %v11594 = vpop.permute.xlu0 %11593
      %11595 = vrot.lane.b32.xlu0 %v4548, 32
      %v11596 = vpop.permute.xlu0 %11595
      %11597 = vrot.lane.b32.xlu0 %v4549, 32
      %v11598 = vpop.permute.xlu0 %11597
      %11599 = vrot.lane.b32.xlu0 %v4550, 32
      %v11600 = vpop.permute.xlu0 %11599
      %11601 = vrot.lane.b32.xlu0 %v4551, 32
      %v11602 = vpop.permute.xlu0 %11601
      %11603 = vrot.lane.b32.xlu0 %v4552, 32
      %v11604 = vpop.permute.xlu0 %11603
      %11605 = vrot.lane.b32.xlu0 %v4553, 32
      %v11606 = vpop.permute.xlu0 %11605
      %11607 = vrot.lane.b32.xlu0 %v4554, 32
      %v11608 = vpop.permute.xlu0 %11607
      %11609 = vrot.lane.b32.xlu0 %v4555, 32
      %v11610 = vpop.permute.xlu0 %11609
      %11611 = vrot.lane.b32.xlu0 %v4556, 32
      %v11612 = vpop.permute.xlu0 %11611
      %11613 = vrot.lane.b32.xlu0 %v4557, 32
      %v11614 = vpop.permute.xlu0 %11613
      %11615 = vrot.lane.b32.xlu0 %v4558, 32
      %v11616 = vpop.permute.xlu0 %11615
      %11617 = vrot.lane.b32.xlu0 %v4559, 32
      %v11618 = vpop.permute.xlu0 %11617
      %11619 = vrot.lane.b32.xlu0 %v4560, 32
      %v11620 = vpop.permute.xlu0 %11619
      %11621 = vrot.lane.b32.xlu0 %v4561, 32
      %v11622 = vpop.permute.xlu0 %11621
      %11623 = vrot.lane.b32.xlu0 %v4562, 32
      %v11624 = vpop.permute.xlu0 %11623
      %11625 = vrot.lane.b32.xlu0 %v4563, 32
      %v11626 = vpop.permute.xlu0 %11625
      %11627 = vrot.lane.b32.xlu0 %v4564, 32
      %v11628 = vpop.permute.xlu0 %11627
      %11725 = vrot.lane.b32.xlu0 %v9175, 80
      %v11726 = vpop.permute.xlu0 %11725
      %11727 = vrot.lane.b32.xlu0 %v9176, 80
      %v11728 = vpop.permute.xlu0 %11727
      %11729 = vrot.lane.b32.xlu0 %v9177, 80
      %v11730 = vpop.permute.xlu0 %11729
      %11731 = vrot.lane.b32.xlu0 %v9178, 80
      %v11732 = vpop.permute.xlu0 %11731
      %11733 = vrot.lane.b32.xlu0 %v9179, 80
      %v11734 = vpop.permute.xlu0 %11733
      %11735 = vrot.lane.b32.xlu0 %v9180, 80
      %v11736 = vpop.permute.xlu0 %11735
      %11737 = vrot.lane.b32.xlu0 %v9181, 80
      %v11738 = vpop.permute.xlu0 %11737
      %11739 = vrot.lane.b32.xlu0 %v9182, 80
      %v11740 = vpop.permute.xlu0 %11739
      %11741 = vrot.lane.b32.xlu0 %v9183, 80
      %v11742 = vpop.permute.xlu0 %11741
      %11743 = vrot.lane.b32.xlu0 %v9184, 80
      %v11744 = vpop.permute.xlu0 %11743
      %11745 = vrot.lane.b32.xlu0 %v9185, 80
      %v11746 = vpop.permute.xlu0 %11745
      %11747 = vrot.lane.b32.xlu0 %v9186, 80
      %v11748 = vpop.permute.xlu0 %11747
      %11749 = vrot.lane.b32.xlu0 %v9187, 80
      %v11750 = vpop.permute.xlu0 %11749
      %11751 = vrot.lane.b32.xlu0 %v9188, 80
      %v11752 = vpop.permute.xlu0 %11751
      %11753 = vrot.lane.b32.xlu0 %v9189, 80
      %v11754 = vpop.permute.xlu0 %11753
      %11755 = vrot.lane.b32.xlu0 %v9190, 80
      %v11756 = vpop.permute.xlu0 %11755
      %11757 = vrot.lane.b32.xlu0 %v9191, 80
      %v11758 = vpop.permute.xlu0 %11757
      %11759 = vrot.lane.b32.xlu0 %v9192, 80
      %v11760 = vpop.permute.xlu0 %11759
      %11761 = vrot.lane.b32.xlu0 %v9193, 80
      %v11762 = vpop.permute.xlu0 %11761
      %11763 = vrot.lane.b32.xlu0 %v9194, 80
      %v11764 = vpop.permute.xlu0 %11763
      %11765 = vrot.lane.b32.xlu0 %v9195, 80
      %v11766 = vpop.permute.xlu0 %11765
      %11767 = vrot.lane.b32.xlu0 %v9196, 80
      %v11768 = vpop.permute.xlu0 %11767
      %11769 = vrot.lane.b32.xlu0 %v9197, 80
      %v11770 = vpop.permute.xlu0 %11769
      %11771 = vrot.lane.b32.xlu0 %v9198, 80
      %v11772 = vpop.permute.xlu0 %11771
      %11773 = vrot.lane.b32.xlu0 %v9199, 80
      %v11774 = vpop.permute.xlu0 %11773
      %11775 = vrot.lane.b32.xlu0 %v9200, 80
      %v11776 = vpop.permute.xlu0 %11775
      %11777 = vrot.lane.b32.xlu0 %v9201, 80
      %v11778 = vpop.permute.xlu0 %11777
      %11779 = vrot.lane.b32.xlu0 %v9202, 80
      %v11780 = vpop.permute.xlu0 %11779
      %11781 = vrot.lane.b32.xlu0 %v9203, 80
      %v11782 = vpop.permute.xlu0 %11781
      %11783 = vrot.lane.b32.xlu0 %v9204, 80
      %v11784 = vpop.permute.xlu0 %11783
      %11785 = vrot.lane.b32.xlu0 %v9205, 80
      %v11786 = vpop.permute.xlu0 %11785
      %11787 = vrot.lane.b32.xlu0 %v9206, 80
      %v11788 = vpop.permute.xlu0 %11787
      %11789 = vrot.lane.b32.xlu0 %v9207, 80
      %v11790 = vpop.permute.xlu0 %11789
      %11791 = vrot.lane.b32.xlu0 %v9208, 80
      %v11792 = vpop.permute.xlu0 %11791
      %11793 = vrot.lane.b32.xlu0 %v9209, 80
      %v11794 = vpop.permute.xlu0 %11793
      %11795 = vrot.lane.b32.xlu0 %v9210, 80
      %v11796 = vpop.permute.xlu0 %11795
      %11797 = vrot.lane.b32.xlu0 %v9211, 80
      %v11798 = vpop.permute.xlu0 %11797
      %11799 = vrot.lane.b32.xlu0 %v9212, 80
      %v11800 = vpop.permute.xlu0 %11799
      %11801 = vrot.lane.b32.xlu0 %v9213, 80
      %v11802 = vpop.permute.xlu0 %11801
      %11803 = vrot.lane.b32.xlu0 %v9214, 80
      %v11804 = vpop.permute.xlu0 %11803
      %11805 = vrot.lane.b32.xlu0 %v9215, 80
      %v11806 = vpop.permute.xlu0 %11805
      %11807 = vrot.lane.b32.xlu0 %v9216, 80
      %v11808 = vpop.permute.xlu0 %11807
      %11809 = vrot.lane.b32.xlu0 %v9217, 80
      %v11810 = vpop.permute.xlu0 %11809
      %11811 = vrot.lane.b32.xlu0 %v9218, 80
      %v11812 = vpop.permute.xlu0 %11811
      %11813 = vrot.lane.b32.xlu0 %v9219, 80
      %v11814 = vpop.permute.xlu0 %11813
      %11815 = vrot.lane.b32.xlu0 %v9220, 80
      %v11816 = vpop.permute.xlu0 %11815
      %11817 = vrot.lane.b32.xlu0 %v9221, 80
      %v11818 = vpop.permute.xlu0 %11817
      %11819 = vrot.lane.b32.xlu0 %v9222, 80
      %v11820 = vpop.permute.xlu0 %11819
      %11917 = vrot.lane.b32.xlu0 %v11437, 96
      %v11918 = vpop.permute.xlu0 %11917
      %11919 = vrot.lane.b32.xlu0 %v11438, 96
      %v11920 = vpop.permute.xlu0 %11919
      %11921 = vrot.lane.b32.xlu0 %v11439, 96
      %v11922 = vpop.permute.xlu0 %11921
      %11923 = vrot.lane.b32.xlu0 %v11440, 96
      %v11924 = vpop.permute.xlu0 %11923
      %11925 = vrot.lane.b32.xlu0 %v11441, 96
      %v11926 = vpop.permute.xlu0 %11925
      %11927 = vrot.lane.b32.xlu0 %v11442, 96
      %v11928 = vpop.permute.xlu0 %11927
      %11929 = vrot.lane.b32.xlu0 %v11443, 96
      %v11930 = vpop.permute.xlu0 %11929
      %11931 = vrot.lane.b32.xlu0 %v11444, 96
      %v11932 = vpop.permute.xlu0 %11931
      %11933 = vrot.lane.b32.xlu0 %v11445, 96
      %v11934 = vpop.permute.xlu0 %11933
      %11935 = vrot.lane.b32.xlu0 %v11446, 96
      %v11936 = vpop.permute.xlu0 %11935
      %11937 = vrot.lane.b32.xlu0 %v11447, 96
      %v11938 = vpop.permute.xlu0 %11937
      %11939 = vrot.lane.b32.xlu0 %v11448, 96
      %v11940 = vpop.permute.xlu0 %11939
      %11941 = vrot.lane.b32.xlu0 %v11449, 96
      %v11942 = vpop.permute.xlu0 %11941
      %11943 = vrot.lane.b32.xlu0 %v11450, 96
      %v11944 = vpop.permute.xlu0 %11943
      %11945 = vrot.lane.b32.xlu0 %v11451, 96
      %v11946 = vpop.permute.xlu0 %11945
      %11947 = vrot.lane.b32.xlu0 %v11452, 96
      %v11948 = vpop.permute.xlu0 %11947
      %11949 = vrot.lane.b32.xlu0 %v11453, 96
      %v11950 = vpop.permute.xlu0 %11949
      %11951 = vrot.lane.b32.xlu0 %v11454, 96
      %v11952 = vpop.permute.xlu0 %11951
      %11953 = vrot.lane.b32.xlu0 %v11455, 96
      %v11954 = vpop.permute.xlu0 %11953
      %11955 = vrot.lane.b32.xlu0 %v11456, 96
      %v11956 = vpop.permute.xlu0 %11955
      %11957 = vrot.lane.b32.xlu0 %v11457, 96
      %v11958 = vpop.permute.xlu0 %11957
      %11959 = vrot.lane.b32.xlu0 %v11458, 96
      %v11960 = vpop.permute.xlu0 %11959
      %11961 = vrot.lane.b32.xlu0 %v11459, 96
      %v11962 = vpop.permute.xlu0 %11961
      %11963 = vrot.lane.b32.xlu0 %v11460, 96
      %v11964 = vpop.permute.xlu0 %11963
      %11965 = vrot.lane.b32.xlu0 %v11461, 96
      %v11966 = vpop.permute.xlu0 %11965
      %11967 = vrot.lane.b32.xlu0 %v11462, 96
      %v11968 = vpop.permute.xlu0 %11967
      %11969 = vrot.lane.b32.xlu0 %v11463, 96
      %v11970 = vpop.permute.xlu0 %11969
      %11971 = vrot.lane.b32.xlu0 %v11464, 96
      %v11972 = vpop.permute.xlu0 %11971
      %11973 = vrot.lane.b32.xlu0 %v11465, 96
      %v11974 = vpop.permute.xlu0 %11973
      %11975 = vrot.lane.b32.xlu0 %v11466, 96
      %v11976 = vpop.permute.xlu0 %11975
      %11977 = vrot.lane.b32.xlu0 %v11467, 96
      %v11978 = vpop.permute.xlu0 %11977
      %11979 = vrot.lane.b32.xlu0 %v11468, 96
      %v11980 = vpop.permute.xlu0 %11979
      %11981 = vrot.lane.b32.xlu0 %v11469, 96
      %v11982 = vpop.permute.xlu0 %11981
      %11983 = vrot.lane.b32.xlu0 %v11470, 96
      %v11984 = vpop.permute.xlu0 %11983
      %11985 = vrot.lane.b32.xlu0 %v11471, 96
      %v11986 = vpop.permute.xlu0 %11985
      %11987 = vrot.lane.b32.xlu0 %v11472, 96
      %v11988 = vpop.permute.xlu0 %11987
      %11989 = vrot.lane.b32.xlu0 %v11473, 96
      %v11990 = vpop.permute.xlu0 %11989
      %11991 = vrot.lane.b32.xlu0 %v11474, 96
      %v11992 = vpop.permute.xlu0 %11991
      %11993 = vrot.lane.b32.xlu0 %v11475, 96
      %v11994 = vpop.permute.xlu0 %11993
      %11995 = vrot.lane.b32.xlu0 %v11476, 96
      %v11996 = vpop.permute.xlu0 %11995
      %11997 = vrot.lane.b32.xlu0 %v11477, 96
      %v11998 = vpop.permute.xlu0 %11997
      %11999 = vrot.lane.b32.xlu0 %v11478, 96
      %v12000 = vpop.permute.xlu0 %11999
      %12001 = vrot.lane.b32.xlu0 %v11479, 96
      %v12002 = vpop.permute.xlu0 %12001
      %12003 = vrot.lane.b32.xlu0 %v11480, 96
      %v12004 = vpop.permute.xlu0 %12003
      %12005 = vrot.lane.b32.xlu0 %v11481, 96
      %v12006 = vpop.permute.xlu0 %12005
      %12007 = vrot.lane.b32.xlu0 %v11482, 96
      %v12008 = vpop.permute.xlu0 %12007
      %12009 = vrot.lane.b32.xlu0 %v11483, 96
      %v12010 = vpop.permute.xlu0 %12009
      %12011 = vrot.lane.b32.xlu0 %v11484, 96
      %v12012 = vpop.permute.xlu0 %12011
      %v12061 = vsel %vm3357, %v1059, %v11534
      %v12062 = vsel %vm3357, %v1060, %v11536
      %v12063 = vsel %vm3357, %v1061, %v11538
      %v12064 = vsel %vm3357, %v1062, %v11540
      %v12065 = vsel %vm3357, %v1063, %v11542
      %v12066 = vsel %vm3357, %v1064, %v11544
      %v12067 = vsel %vm3357, %v1065, %v11546
      %v12068 = vsel %vm3357, %v1066, %v11548
      %v12069 = vsel %vm3357, %v1067, %v11550
      %v12070 = vsel %vm3357, %v1068, %v11552
      %v12071 = vsel %vm3357, %v1069, %v11554
      %v12072 = vsel %vm3357, %v1070, %v11556
      %v12073 = vsel %vm3357, %v1071, %v11558
      %v12074 = vsel %vm3357, %v1072, %v11560
      %v12075 = vsel %vm3357, %v1073, %v11562
      %v12076 = vsel %vm3357, %v1074, %v11564
      %v12077 = vsel %vm3357, %v1075, %v11566
      %v12078 = vsel %vm3357, %v1076, %v11568
      %v12079 = vsel %vm3357, %v1077, %v11570
      %v12080 = vsel %vm3357, %v1078, %v11572
      %v12081 = vsel %vm3357, %v1079, %v11574
      %v12082 = vsel %vm3357, %v1080, %v11576
      %v12083 = vsel %vm3357, %v1081, %v11578
      %v12084 = vsel %vm3357, %v1082, %v11580
      %v12085 = vsel %vm3357, %v1083, %v11582
      %v12086 = vsel %vm3357, %v1084, %v11584
      %v12087 = vsel %vm3357, %v1085, %v11586
      %v12088 = vsel %vm3357, %v1086, %v11588
      %v12089 = vsel %vm3357, %v1087, %v11590
      %v12090 = vsel %vm3357, %v1088, %v11592
      %v12091 = vsel %vm3357, %v1089, %v11594
      %v12092 = vsel %vm3357, %v1090, %v11596
      %v12093 = vsel %vm3357, %v1091, %v11598
      %v12094 = vsel %vm3357, %v1092, %v11600
      %v12095 = vsel %vm3357, %v1093, %v11602
      %v12096 = vsel %vm3357, %v1094, %v11604
      %v12097 = vsel %vm3357, %v1095, %v11606
      %v12098 = vsel %vm3357, %v1096, %v11608
      %v12099 = vsel %vm3357, %v1097, %v11610
      %v12100 = vsel %vm3357, %v1098, %v11612
      %v12101 = vsel %vm3357, %v1099, %v11614
      %v12102 = vsel %vm3357, %v1100, %v11616
      %v12103 = vsel %vm3357, %v1101, %v11618
      %v12104 = vsel %vm3357, %v1102, %v11620
      %v12105 = vsel %vm3357, %v1103, %v11622
      %v12106 = vsel %vm3357, %v1104, %v11624
      %v12107 = vsel %vm3357, %v1105, %v11626
      %v12108 = vsel %vm3357, %v1106, %v11628
      %v12109 = vsel %vm3510, %v12061, %v11726
      %v12110 = vsel %vm3510, %v12062, %v11728
      %v12111 = vsel %vm3510, %v12063, %v11730
      %v12112 = vsel %vm3510, %v12064, %v11732
      %v12113 = vsel %vm3510, %v12065, %v11734
      %v12114 = vsel %vm3510, %v12066, %v11736
      %v12115 = vsel %vm3510, %v12067, %v11738
      %v12116 = vsel %vm3510, %v12068, %v11740
      %v12117 = vsel %vm3510, %v12069, %v11742
      %v12118 = vsel %vm3510, %v12070, %v11744
      %v12119 = vsel %vm3510, %v12071, %v11746
      %v12120 = vsel %vm3510, %v12072, %v11748
      %v12121 = vsel %vm3510, %v12073, %v11750
      %v12122 = vsel %vm3510, %v12074, %v11752
      %v12123 = vsel %vm3510, %v12075, %v11754
      %v12124 = vsel %vm3510, %v12076, %v11756
      %v12125 = vsel %vm3510, %v12077, %v11758
      %v12126 = vsel %vm3510, %v12078, %v11760
      %v12127 = vsel %vm3510, %v12079, %v11762
      %v12128 = vsel %vm3510, %v12080, %v11764
      %v12129 = vsel %vm3510, %v12081, %v11766
      %v12130 = vsel %vm3510, %v12082, %v11768
      %v12131 = vsel %vm3510, %v12083, %v11770
      %v12132 = vsel %vm3510, %v12084, %v11772
      %v12133 = vsel %vm3510, %v12085, %v11774
      %v12134 = vsel %vm3510, %v12086, %v11776
      %v12135 = vsel %vm3510, %v12087, %v11778
      %v12136 = vsel %vm3510, %v12088, %v11780
      %v12137 = vsel %vm3510, %v12089, %v11782
      %v12138 = vsel %vm3510, %v12090, %v11784
      %v12139 = vsel %vm3510, %v12091, %v11786
      %v12140 = vsel %vm3510, %v12092, %v11788
      %v12141 = vsel %vm3510, %v12093, %v11790
      %v12142 = vsel %vm3510, %v12094, %v11792
      %v12143 = vsel %vm3510, %v12095, %v11794
      %v12144 = vsel %vm3510, %v12096, %v11796
      %v12145 = vsel %vm3510, %v12097, %v11798
      %v12146 = vsel %vm3510, %v12098, %v11800
      %v12147 = vsel %vm3510, %v12099, %v11802
      %v12148 = vsel %vm3510, %v12100, %v11804
      %v12149 = vsel %vm3510, %v12101, %v11806
      %v12150 = vsel %vm3510, %v12102, %v11808
      %v12151 = vsel %vm3510, %v12103, %v11810
      %v12152 = vsel %vm3510, %v12104, %v11812
      %v12153 = vsel %vm3510, %v12105, %v11814
      %v12154 = vsel %vm3510, %v12106, %v11816
      %v12155 = vsel %vm3510, %v12107, %v11818
      %v12156 = vsel %vm3510, %v12108, %v11820
      %v12157 = vsel %vm3561, %v12109, %v11918
      %v12158 = vsel %vm3561, %v12110, %v11920
      %v12159 = vsel %vm3561, %v12111, %v11922
      %v12160 = vsel %vm3561, %v12112, %v11924
      %v12161 = vsel %vm3561, %v12113, %v11926
      %v12162 = vsel %vm3561, %v12114, %v11928
      %v12163 = vsel %vm3561, %v12115, %v11930
      %v12164 = vsel %vm3561, %v12116, %v11932
      %v12165 = vsel %vm3561, %v12117, %v11934
      %v12166 = vsel %vm3561, %v12118, %v11936
      %v12167 = vsel %vm3561, %v12119, %v11938
      %v12168 = vsel %vm3561, %v12120, %v11940
      %v12169 = vsel %vm3561, %v12121, %v11942
      %v12170 = vsel %vm3561, %v12122, %v11944
      %v12171 = vsel %vm3561, %v12123, %v11946
      %v12172 = vsel %vm3561, %v12124, %v11948
      %v12173 = vsel %vm3561, %v12125, %v11950
      %v12174 = vsel %vm3561, %v12126, %v11952
      %v12175 = vsel %vm3561, %v12127, %v11954
      %v12176 = vsel %vm3561, %v12128, %v11956
      %v12177 = vsel %vm3561, %v12129, %v11958
      %v12178 = vsel %vm3561, %v12130, %v11960
      %v12179 = vsel %vm3561, %v12131, %v11962
      %v12180 = vsel %vm3561, %v12132, %v11964
      %v12181 = vsel %vm3561, %v12133, %v11966
      %v12182 = vsel %vm3561, %v12134, %v11968
      %v12183 = vsel %vm3561, %v12135, %v11970
      %v12184 = vsel %vm3561, %v12136, %v11972
      %v12185 = vsel %vm3561, %v12137, %v11974
      %v12186 = vsel %vm3561, %v12138, %v11976
      %v12187 = vsel %vm3561, %v12139, %v11978
      %v12188 = vsel %vm3561, %v12140, %v11980
      %v12189 = vsel %vm3561, %v12141, %v11982
      %v12190 = vsel %vm3561, %v12142, %v11984
      %v12191 = vsel %vm3561, %v12143, %v11986
      %v12192 = vsel %vm3561, %v12144, %v11988
      %v12193 = vsel %vm3561, %v12145, %v11990
      %v12194 = vsel %vm3561, %v12146, %v11992
      %v12195 = vsel %vm3561, %v12147, %v11994
      %v12196 = vsel %vm3561, %v12148, %v11996
      %v12197 = vsel %vm3561, %v12149, %v11998
      %v12198 = vsel %vm3561, %v12150, %v12000
      %v12199 = vsel %vm3561, %v12151, %v12002
      %v12200 = vsel %vm3561, %v12152, %v12004
      %v12201 = vsel %vm3561, %v12153, %v12006
      %v12202 = vsel %vm3561, %v12154, %v12008
      %v12203 = vsel %vm3561, %v12155, %v12010
      %v12204 = vsel %vm3561, %v12156, %v12012
      %v12205 = vpack.c.bf16 %v12157, %v12157
      %v12206 = vpack.c.bf16 %v12158, %v12158
      %v12207 = vpack.c.bf16 %v12159, %v12159
      %v12208 = vpack.c.bf16 %v12160, %v12160
      %v12209 = vpack.c.bf16 %v12161, %v12161
      %v12210 = vpack.c.bf16 %v12162, %v12162
      %v12211 = vpack.c.bf16 %v12163, %v12163
      %v12212 = vpack.c.bf16 %v12164, %v12164
      %v12213 = vpack.c.bf16 %v12165, %v12165
      %v12214 = vpack.c.bf16 %v12166, %v12166
      %v12215 = vpack.c.bf16 %v12167, %v12167
      %v12216 = vpack.c.bf16 %v12168, %v12168
      %v12217 = vpack.c.bf16 %v12169, %v12169
      %v12218 = vpack.c.bf16 %v12170, %v12170
      %v12219 = vpack.c.bf16 %v12171, %v12171
      %v12220 = vpack.c.bf16 %v12172, %v12172
      %v12221 = vpack.c.bf16 %v12173, %v12173
      %v12222 = vpack.c.bf16 %v12174, %v12174
      %v12223 = vpack.c.bf16 %v12175, %v12175
      %v12224 = vpack.c.bf16 %v12176, %v12176
      %v12225 = vpack.c.bf16 %v12177, %v12177
      %v12226 = vpack.c.bf16 %v12178, %v12178
      %v12227 = vpack.c.bf16 %v12179, %v12179
      %v12228 = vpack.c.bf16 %v12180, %v12180
      %v12229 = vpack.c.bf16 %v12181, %v12181
      %v12230 = vpack.c.bf16 %v12182, %v12182
      %v12231 = vpack.c.bf16 %v12183, %v12183
      %v12232 = vpack.c.bf16 %v12184, %v12184
      %v12233 = vpack.c.bf16 %v12185, %v12185
      %v12234 = vpack.c.bf16 %v12186, %v12186
      %v12235 = vpack.c.bf16 %v12187, %v12187
      %v12236 = vpack.c.bf16 %v12188, %v12188
      %v12237 = vpack.c.bf16 %v12189, %v12189
      %v12238 = vpack.c.bf16 %v12190, %v12190
      %v12239 = vpack.c.bf16 %v12191, %v12191
      %v12240 = vpack.c.bf16 %v12192, %v12192
      %v12241 = vpack.c.bf16 %v12193, %v12193
      %v12242 = vpack.c.bf16 %v12194, %v12194
      %v12243 = vpack.c.bf16 %v12195, %v12195
      %v12244 = vpack.c.bf16 %v12196, %v12196
      %v12245 = vpack.c.bf16 %v12197, %v12197
      %v12246 = vpack.c.bf16 %v12198, %v12198
      %v12247 = vpack.c.bf16 %v12199, %v12199
      %v12248 = vpack.c.bf16 %v12200, %v12200
      %v12249 = vpack.c.bf16 %v12201, %v12201
      %v12250 = vpack.c.bf16 %v12202, %v12202
      %v12251 = vpack.c.bf16 %v12203, %v12203
      %v12252 = vpack.c.bf16 %v12204, %v12204
      %12253 = vst [vmem:[%s413] sm:$0xf] %v12205
      %12254 = vst [vmem:[%s413 + $0x4] sm:$0xf] %v12206
      %12255 = vst [vmem:[%s413 + $0x8] sm:$0xf] %v12207
      %12256 = vst [vmem:[%s413 + $0xc] sm:$0xf] %v12208
      %12257 = vst [vmem:[%s413 + $0x10] sm:$0xf] %v12209
      %12258 = vst [vmem:[%s413 + $0x14] sm:$0xf] %v12210
      %12259 = vst [vmem:[%s413 + $0x18] sm:$0xf] %v12211
      %12260 = vst [vmem:[%s413 + $0x1c] sm:$0xf] %v12212
      %12261 = vst [vmem:[%s413 + $0x20] sm:$0xf] %v12213
      %12262 = vst [vmem:[%s413 + $0x24] sm:$0xf] %v12214
      %12263 = vst [vmem:[%s413 + $0x28] sm:$0xf] %v12215
      %12264 = vst [vmem:[%s413 + $0x2c] sm:$0xf] %v12216
      %12265 = vst [vmem:[%s413 + $0x30] sm:$0xf] %v12217
      %12266 = vst [vmem:[%s413 + $0x34] sm:$0xf] %v12218
      %12267 = vst [vmem:[%s413 + $0x38] sm:$0xf] %v12219
      %12268 = vst [vmem:[%s413 + $0x3c] sm:$0xf] %v12220
      %12269 = vst [vmem:[%s413 + $0x40] sm:$0xf] %v12221
      %12270 = vst [vmem:[%s413 + $0x44] sm:$0xf] %v12222
      %12271 = vst [vmem:[%s413 + $0x48] sm:$0xf] %v12223
      %12272 = vst [vmem:[%s413 + $0x4c] sm:$0xf] %v12224
      %12273 = vst [vmem:[%s413 + $0x50] sm:$0xf] %v12225
      %12274 = vst [vmem:[%s413 + $0x54] sm:$0xf] %v12226
      %12275 = vst [vmem:[%s413 + $0x58] sm:$0xf] %v12227
      %12276 = vst [vmem:[%s413 + $0x5c] sm:$0xf] %v12228
      %12277 = vst [vmem:[%s413 + $0x60] sm:$0xf] %v12229
      %12278 = vst [vmem:[%s413 + $0x64] sm:$0xf] %v12230
      %12279 = vst [vmem:[%s413 + $0x68] sm:$0xf] %v12231
      %12280 = vst [vmem:[%s413 + $0x6c] sm:$0xf] %v12232
      %12281 = vst [vmem:[%s413 + $0x70] sm:$0xf] %v12233
      %12282 = vst [vmem:[%s413 + $0x74] sm:$0xf] %v12234
      %12283 = vst [vmem:[%s413 + $0x78] sm:$0xf] %v12235
      %12284 = vst [vmem:[%s413 + $0x7c] sm:$0xf] %v12236
      %12285 = vst [vmem:[%s413 + $0x80] sm:$0xf] %v12237
      %12286 = vst [vmem:[%s413 + $0x84] sm:$0xf] %v12238
      %12287 = vst [vmem:[%s413 + $0x88] sm:$0xf] %v12239
      %12288 = vst [vmem:[%s413 + $0x8c] sm:$0xf] %v12240
      %12289 = vst [vmem:[%s413 + $0x90] sm:$0xf] %v12241
      %12290 = vst [vmem:[%s413 + $0x94] sm:$0xf] %v12242
      %12291 = vst [vmem:[%s413 + $0x98] sm:$0xf] %v12243
      %12292 = vst [vmem:[%s413 + $0x9c] sm:$0xf] %v12244
      %12293 = vst [vmem:[%s413 + $0xa0] sm:$0xf] %v12245
      %12294 = vst [vmem:[%s413 + $0xa4] sm:$0xf] %v12246
      %12295 = vst [vmem:[%s413 + $0xa8] sm:$0xf] %v12247
      %12296 = vst [vmem:[%s413 + $0xac] sm:$0xf] %v12248
      %12297 = vst [vmem:[%s413 + $0xb0] sm:$0xf] %v12249
      %12298 = vst [vmem:[%s413 + $0xb4] sm:$0xf] %v12250
      %12299 = vst [vmem:[%s413 + $0xb8] sm:$0xf] %v12251
      %12300 = vst [vmem:[%s413 + $0xbc] sm:$0xf] %v12252
      %p12301 = scmp.lt.s32.totalorder %s23, 1
      %s12302 = scalar_select %p12301, %s23, 1
      %s12303 = smul.addr %s12302, 48
      %s12304 = smul.addr %s12303, 4
      %s12305 = scalar_lea.vmem %s12, %s12304
      // Predicated region
      $region69: #{forward.1} parent=67 // pred_check
        %p12306 = pneg %p298
      $region70: #{forward.1} parent=67 // pred_check_branch
        %12308 = sbr.rel (%p12306) target = $region72
      $region71: #{forward.1} parent=67 // pred_region
        _
      $region72: #{forward.1} parent=67 // pred_fallthru
        _
    $region68: #{forward.1} parent=5 // pred_fallthru
      _
    %p12309 = scmp.le.s32.totalorder 2, %s18
    // Predicated region
    $region73: #{forward.1} parent=5 // pred_check
      %p12310 = pneg %p12309
    $region74: #{forward.1} parent=5 // pred_check_branch
      %12312 = sbr.rel (%p12310) target = $region76
    $region75: #{forward.1} parent=5 // pred_region
      %s12313 = ssub.s32 %s18, 2
      // Predicated region
      $region77: #{forward.1} parent=75 // pred_check
        %p12314 = pneg %p304
      $region78: #{forward.1} parent=75 // pred_check_branch
        %12316 = sbr.rel (%p12314) target = $region80
      $region79: #{forward.1} parent=75 // pred_region
        %p12317 = scmp.lt.s32.totalorder %s24, 1
        %s12318 = scalar_select %p12317, %s24, 1
        %s12319 = smul.addr %s12318, 48
        %s12320 = smul.addr %s12319, 4
        %s12321 = scalar_lea.vmem %s12, %s12320
      $region80: #{forward.1} parent=75 // pred_fallthru
        _
    $region76: #{forward.1} parent=5 // pred_fallthru
      _
  $region6: #{forward.1} parent=0 // loop_footer
    %s22 = sadd.s32 1, %s18
  $region7: #{forward.1} parent=0 // loop_footer_branch
    %17 = sbr.rel target = $region3
  $region8: #{forward.1} parent=0 // loop_exit
    _

</llo_original>
